<compile_context>
chip_gen: v5e
topology: v5e:2x2
jax: 0.10.0
libtpu: 0.0.40
codegen_flags: <defaults>
</compile_context>

<pallas_src>
import numpy as np
import jax
import jax.numpy as jnp
from jax import lax
from jax.experimental import pallas as pl
from jax.experimental.pallas import tpu as pltpu


BT_DEFAULT = 4   # 4 -> ~128 MXU rows in flight (v5e); use 8 for v6e/v7x (~256)


# ---------------------------------------------------------------------------
# Fused forward kernel: BT samples per grid step
# ---------------------------------------------------------------------------
def net_kernel(xf_ref, rs1_ref, w1b_ref, b1p_ref, rs2_ref, w2b_ref, b2p_ref,
               fc1w_ref, hmask_ref, ffold_ref, fc1b_ref, fc2w_ref, fc2b_ref,
               o_ref):
    def bdot(a, b):
        # bf16 MXU operands, f32 accumulation.
        return jnp.dot(a.astype(jnp.bfloat16), b.astype(jnp.bfloat16),
                       preferred_element_type=jnp.float32)

    def conv_pool(x, rs_ref, wb_ref, bias, half):
        # x: (Hin, Cin*Win), lanes = ci*Win + iw.  Returns the pooled, tanh'd
        # map (Hin//2, Cout*(Win//2)), lanes = co*(Win//2) + q, which is
        # exactly the next stage's expected lane-dense input layout.
        pooled = None
        for dr in range(2):                          # output-row parity
            acc = None
            for kh in range(3):                      # conv tap rows
                rows = bdot(rs_ref[kh * 2 + dr], x)  # row select (+ H zero pad)
                term = bdot(rows, wb_ref[kh])        # banded conv tap
                acc = term if acc is None else acc + term
            # width-parity max: columns are [dc=0 | dc=1] blocks of size half.
            m = jnp.maximum(acc[:, :half], acc[:, half:])
            pooled = m if pooled is None else jnp.maximum(pooled, m)
        # bias/tanh after pooling (tanh monotonic, bias per-channel constant).
        return jnp.tanh(pooled + bias)

    bt = xf_ref.shape[0]
    for i in range(bt):                      # static unroll: BT indep. chains
        x0 = xf_ref[i]                                             # (32, 96)
        y1 = conv_pool(x0, rs1_ref, w1b_ref, b1p_ref[...], 256)    # (16, 256)
        p2 = conv_pool(y1, rs2_ref, w2b_ref, b2p_ref[...], 64)     # (8, 64)

        # fc1: lanes contracted against the NCHW-flatten-permuted weight; the
        # remaining row (h) dim is folded with a masked block-diagonal reduce.
        t = bdot(p2, fc1w_ref[...]) * hmask_ref[...]               # (8, 256)
        z = jnp.sum(bdot(t, ffold_ref[...]), axis=0, keepdims=True)  # (1, 32)
        h3 = jnp.tanh(z + fc1b_ref[...])

        # fc2 -> per-sample row of the (BT, 1, 10) output block.
        o_ref[i] = (bdot(h3, fc2w_ref[...]) + fc2b_ref[...]).astype(o_ref.dtype)


# ---------------------------------------------------------------------------
# One-time host-side parameter preparation
# ---------------------------------------------------------------------------
def prepare_params(p):
    """Build parity row selectors, pooled-layout banded conv weights, pooled
    biases and the NCHW-flatten-aware fc1 weight.  Runs once on the host."""
    w1 = np.asarray(p["conv1_w"], np.float32)   # (16, 3, 3, 3)  OIHW
    b1 = np.asarray(p["conv1_b"], np.float32)   # (16,)
    w2 = np.asarray(p["conv2_w"], np.float32)   # (8, 16, 3, 3)
    b2 = np.asarray(p["conv2_b"], np.float32)   # (8,)
    f1w = np.asarray(p["fc1_w"], np.float32)    # (32, 512)
    f1b = np.asarray(p["fc1_b"], np.float32)    # (32,)
    f2w = np.asarray(p["fc2_w"], np.float32)    # (10, 32)
    f2b = np.asarray(p["fc2_b"], np.float32)    # (10,)

    def row_selectors(h_in):
        # rs[kh*2+dr][op, ih] = 1 iff ih == 2*op + dr + kh - 1 (else 0):
        # picks the conv input row for pooled output row `op`, row parity `dr`
        # and tap `kh`; out-of-range rows stay all-zero (= H zero padding).
        h_out = h_in // 2
        rs = np.zeros((6, h_out, h_in), np.float32)
        for kh in range(3):
            for dr in range(2):
                for op in range(h_out):
                    ih = 2 * op + dr + kh - 1
                    if 0 <= ih < h_in:
                        rs[kh * 2 + dr, op, ih] = 1.0
        return rs

    def banded_pooled(w, cin, cout, w_in):
        # wb[kh][ci*w_in + iw, dc*cout*wh + co*wh + q] = w[co, ci, kh, kw]
        # with iw = 2*q + dc + kw - 1 (skipped when out of range -> W zero
        # padding), wh = w_in // 2.  Columns are ordered [dc=0 | dc=1] so the
        # width-pair max is an elementwise max of two lane slices, and the
        # result (lanes co*wh + q) is directly the next conv's input layout.
        wh = w_in // 2
        wb = np.zeros((3, cin * w_in, 2 * cout * wh), np.float32)
        for kh in range(3):
            for kw in range(3):
                for ci in range(cin):
                    for co in range(cout):
                        for dc in range(2):
                            for q in range(wh):
                                iw = 2 * q + dc + kw - 1
                                if 0 <= iw < w_in:
                                    wb[kh, ci * w_in + iw,
                                       dc * cout * wh + co * wh + q] = \
                                        w[co, ci, kh, kw]
        return wb

    rs1 = row_selectors(32)                     # (6, 16, 32)
    rs2 = row_selectors(16)                     # (6, 8, 16)
    w1b = banded_pooled(w1, 3, 16, 32)          # (3, 96, 512)
    w2b = banded_pooled(w2, 16, 8, 16)          # (3, 256, 128)
    b1p = np.repeat(b1, 16)[None, :]            # (1, 256): lane co*16+q -> b1[co]
    b2p = np.repeat(b2, 8)[None, :]             # (1, 64)

    # fc1: absorb torch's NCHW flatten (feature = c*64 + h*8 + w); p2 lanes
    # are (c*8 + w), rows are h.  hmask keeps the h == row block; ffold folds
    # the 8 blocks of 32 back down to 32.
    fc1_wcat = f1w.reshape(32, 8, 8, 8).transpose(1, 3, 2, 0).reshape(64, 256)
    hmask = np.zeros((8, 256), np.float32)
    for h in range(8):
        hmask[h, h * 32:(h + 1) * 32] = 1.0
    ffold = np.tile(np.eye(32, dtype=np.float32), (8, 1))        # (256, 32)

    bf16 = jnp.bfloat16
    return {
        # 0/1 selectors (exact in bf16) and conv/fc weights in bf16 for
        # single-pass MXU issue; VPU-side biases/masks stay f32.
        "rs1": jnp.asarray(rs1, bf16), "w1b": jnp.asarray(w1b, bf16),
        "b1p": jnp.asarray(b1p, jnp.float32),
        "rs2": jnp.asarray(rs2, bf16), "w2b": jnp.asarray(w2b, bf16),
        "b2p": jnp.asarray(b2p, jnp.float32),
        "fc1w": jnp.asarray(fc1_wcat, bf16),
        "hmask": jnp.asarray(hmask, jnp.float32),
        "ffold": jnp.asarray(ffold, bf16),
        "fc1b": jnp.asarray(f1b[None, :], jnp.float32),
        "fc2w": jnp.asarray(np.ascontiguousarray(f2w.T), bf16),
        "fc2b": jnp.asarray(f2b[None, :], jnp.float32),
    }


_CONST_ORDER = ("rs1", "w1b", "b1p", "rs2", "w2b", "b2p",
                "fc1w", "hmask", "ffold", "fc1b", "fc2w", "fc2b")


def _const_spec(shape):
    # Full-array block with a constant index_map: Pallas DMAs each constant
    # once and skips re-copies on later grid steps (block index never changes).
    if len(shape) == 2:
        return pl.BlockSpec(shape, lambda b: (0, 0))
    return pl.BlockSpec(shape, lambda b: (0, 0, 0))


def net_forward(x_nchw, prep, *, bt=BT_DEFAULT):
    """Fused Pallas forward pass matching Net.forward semantics.

    bt = samples per grid step: 4 targets v5e (~128 MXU LHS rows in flight),
    8 targets v6e/v7x (~256 rows).  Keep the grid length even so
    dimension_semantics=("parallel",) gives both v7x TensorCores equal work.
    """
    n = x_nchw.shape[0]
    n_pad = ((n + bt - 1) // bt) * bt

    # Tiny input layout prep stays in XLA: NCHW -> rows=h, lanes=(c, w), bf16.
    # No spatial zero-padding needed (selectors / banded weights provide it).
    xf = jnp.transpose(x_nchw, (0, 2, 1, 3)).reshape(n, 32, 3 * 32)
    xf = xf.astype(jnp.bfloat16)
    if n_pad != n:
        xf = jnp.pad(xf, ((0, n_pad - n), (0, 0), (0, 0)))

    consts = [prep[k] for k in _CONST_ORDER]
    in_specs = [pl.BlockSpec((bt, 32, 96), lambda b: (b, 0, 0))]
    in_specs += [_const_spec(c.shape) for c in consts]

    out = pl.pallas_call(
        net_kernel,
        out_shape=jax.ShapeDtypeStruct((n_pad, 1, 10), jnp.float32),
        grid=(n_pad // bt,),
        in_specs=in_specs,
        out_specs=pl.BlockSpec((bt, 1, 10), lambda b: (b, 0, 0)),
        compiler_params=pltpu.CompilerParams(
            dimension_semantics=("parallel",),
            vmem_limit_bytes=32 * 1024 * 1024),
    )(xf, *consts)
    return out.reshape(n_pad, 10)[:n]


# ---------------------------------------------------------------------------
# Pure-JAX reference (for correctness check)
# ---------------------------------------------------------------------------
def ref_forward(x_nchw, p):
    hp = lax.Precision.HIGHEST

    def conv(x, w, b):
        y = lax.conv_general_dilated(
            x, w, window_strides=(1, 1), padding=((1, 1), (1, 1)),
            dimension_numbers=("NCHW", "OIHW", "NCHW"), precision=hp)
        return y + b[None, :, None, None]

    def pool2(y):
        n, c, h, w = y.shape
        return y.reshape(n, c, h // 2, 2, w // 2, 2).max(axis=(3, 5))

    y = pool2(jnp.tanh(conv(x_nchw, p["conv1_w"], p["conv1_b"])))
    y = pool2(jnp.tanh(conv(y, p["conv2_w"], p["conv2_b"])))
    y = y.reshape(y.shape[0], -1)
    y = jnp.tanh(jnp.dot(y, p["fc1_w"].T, precision=hp) + p["fc1_b"])
    return jnp.dot(y, p["fc2_w"].T, precision=hp) + p["fc2_b"]


# ---------------------------------------------------------------------------
# Main
# ---------------------------------------------------------------------------
if __name__ == "__main__":
    key = jax.random.PRNGKey(0)
    ks = jax.random.split(key, 9)

    params = {
        "conv1_w": 0.10 * jax.random.normal(ks[0], (16, 3, 3, 3), jnp.float32),
        "conv1_b": 0.10 * jax.random.normal(ks[1], (16,), jnp.float32),
        "conv2_w": 0.05 * jax.random.normal(ks[2], (8, 16, 3, 3), jnp.float32),
        "conv2_b": 0.05 * jax.random.normal(ks[3], (8,), jnp.float32),
        "fc1_w": 0.05 * jax.random.normal(ks[4], (32, 512), jnp.float32),
        "fc1_b": 0.05 * jax.random.normal(ks[5], (32,), jnp.float32),
        "fc2_w": 0.10 * jax.random.normal(ks[6], (10, 32), jnp.float32),
        "fc2_b": 0.10 * jax.random.normal(ks[7], (10,), jnp.float32),
    }
    prep = prepare_params(params)

    # PyTorch-style NCHW input: batch 8, BT=4 -> grid=(2,) (even: both v7x
    # TensorCores get one step).  Use bt=8 on v6e/v7x for ~256 rows in flight.
    x = jax.random.normal(ks[8], (8, 3, 32, 32), jnp.float32)

    fwd = jax.jit(net_forward, static_argnames=("bt",))
    out = jax.block_until_ready(fwd(x, prep, bt=4))
    assert out.shape == (8, 10), out.shape

    ref = jax.block_until_ready(ref_forward(x, params))
    max_err = float(jnp.max(jnp.abs(out - ref)))
    # bf16 MXU operands (f32 accumulation): expected max abs error ~1e-2.
    assert max_err < 3e-2, f"mismatch vs reference: {max_err}"

    print("KERNEL_OK")
</pallas_src>

<mosaic_0001>
module attributes {stable_mosaic.version = 11 : i64} {
  func.func @net_kernel(%arg0: i32, %arg1: memref<4x32x96xbf16, #tpu.memory_space<vmem>>, %arg2: memref<6x16x32xbf16, #tpu.memory_space<vmem>>, %arg3: memref<3x96x512xbf16, #tpu.memory_space<vmem>>, %arg4: memref<1x256xf32, #tpu.memory_space<vmem>>, %arg5: memref<6x8x16xbf16, #tpu.memory_space<vmem>>, %arg6: memref<3x256x128xbf16, #tpu.memory_space<vmem>>, %arg7: memref<1x64xf32, #tpu.memory_space<vmem>>, %arg8: memref<64x256xbf16, #tpu.memory_space<vmem>>, %arg9: memref<8x256xf32, #tpu.memory_space<vmem>>, %arg10: memref<256x32xbf16, #tpu.memory_space<vmem>>, %arg11: memref<1x32xf32, #tpu.memory_space<vmem>>, %arg12: memref<32x10xbf16, #tpu.memory_space<vmem>>, %arg13: memref<1x10xf32, #tpu.memory_space<vmem>>, %arg14: memref<4x1x10xf32, #tpu.memory_space<vmem>>) attributes {dimension_semantics = [#tpu.dimension_semantics<parallel>], iteration_bounds = array<i64: 2>, scalar_prefetch = 0 : i64, scratch_operands = 0 : i64, tpu.core_type = #tpu.core_type<tc>, window_params = [{transform_indices = @transform_0, window_bounds = array<i64: 4, 32, 96>}, {pipeline_mode = #tpu.pipeline_mode<synchronous>, transform_indices = @transform_1, window_bounds = array<i64: 6, 16, 32>}, {pipeline_mode = #tpu.pipeline_mode<synchronous>, transform_indices = @transform_2, window_bounds = array<i64: 3, 96, 512>}, {pipeline_mode = #tpu.pipeline_mode<synchronous>, transform_indices = @transform_3, window_bounds = array<i64: 1, 256>}, {pipeline_mode = #tpu.pipeline_mode<synchronous>, transform_indices = @transform_4, window_bounds = array<i64: 6, 8, 16>}, {pipeline_mode = #tpu.pipeline_mode<synchronous>, transform_indices = @transform_5, window_bounds = array<i64: 3, 256, 128>}, {pipeline_mode = #tpu.pipeline_mode<synchronous>, transform_indices = @transform_6, window_bounds = array<i64: 1, 64>}, {pipeline_mode = #tpu.pipeline_mode<synchronous>, transform_indices = @transform_7, window_bounds = array<i64: 64, 256>}, {pipeline_mode = #tpu.pipeline_mode<synchronous>, transform_indices = @transform_8, window_bounds = array<i64: 8, 256>}, {pipeline_mode = #tpu.pipeline_mode<synchronous>, transform_indices = @transform_9, window_bounds = array<i64: 256, 32>}, {pipeline_mode = #tpu.pipeline_mode<synchronous>, transform_indices = @transform_10, window_bounds = array<i64: 1, 32>}, {pipeline_mode = #tpu.pipeline_mode<synchronous>, transform_indices = @transform_11, window_bounds = array<i64: 32, 10>}, {pipeline_mode = #tpu.pipeline_mode<synchronous>, transform_indices = @transform_12, window_bounds = array<i64: 1, 10>}, {transform_indices = @transform_13, window_bounds = array<i64: 4, 1, 10>}]} {
    %c0 = arith.constant 0 : index
    %c0_0 = arith.constant 0 : index
    %c0_1 = arith.constant 0 : index
    %0 = vector.load %arg1[%c0, %c0_0, %c0_1] : memref<4x32x96xbf16, #tpu.memory_space<vmem>>, vector<1x32x96xbf16>
    %1 = vector.shape_cast %0 : vector<1x32x96xbf16> to vector<32x96xbf16>
    %c0_2 = arith.constant 0 : index
    %c0_3 = arith.constant 0 : index
    %2 = vector.load %arg4[%c0_2, %c0_3] : memref<1x256xf32, #tpu.memory_space<vmem>>, vector<1x256xf32>
    %c0_4 = arith.constant 0 : index
    %c0_5 = arith.constant 0 : index
    %c0_6 = arith.constant 0 : index
    %3 = vector.load %arg2[%c0_4, %c0_5, %c0_6] : memref<6x16x32xbf16, #tpu.memory_space<vmem>>, vector<1x16x32xbf16>
    %4 = vector.shape_cast %3 : vector<1x16x32xbf16> to vector<16x32xbf16>
    %cst = arith.constant dense<0.000000e+00> : vector<16x96xf32>
    %5 = tpu.matmul %4, %1, %cst {dimension_numbers = #tpu.dot_dimension_numbers<[1], [0], [0], [1], [0, 0, 1, 1], [], []>} : vector<16x32xbf16>, vector<32x96xbf16>, vector<16x96xf32> -> vector<16x96xf32>
    %c0_7 = arith.constant 0 : index
    %c0_8 = arith.constant 0 : index
    %c0_9 = arith.constant 0 : index
    %6 = vector.load %arg3[%c0_7, %c0_8, %c0_9] : memref<3x96x512xbf16, #tpu.memory_space<vmem>>, vector<1x96x512xbf16>
    %7 = vector.shape_cast %6 : vector<1x96x512xbf16> to vector<96x512xbf16>
    %8 = arith.truncf %5 : vector<16x96xf32> to vector<16x96xbf16>
    %cst_10 = arith.constant dense<0.000000e+00> : vector<16x512xf32>
    %9 = tpu.matmul %8, %7, %cst_10 {dimension_numbers = #tpu.dot_dimension_numbers<[1], [0], [0], [1], [0, 0, 1, 1], [], []>} : vector<16x96xbf16>, vector<96x512xbf16>, vector<16x512xf32> -> vector<16x512xf32>
    %c2 = arith.constant 2 : index
    %c0_11 = arith.constant 0 : index
    %c0_12 = arith.constant 0 : index
    %10 = vector.load %arg2[%c2, %c0_11, %c0_12] : memref<6x16x32xbf16, #tpu.memory_space<vmem>>, vector<1x16x32xbf16>
    %11 = vector.shape_cast %10 : vector<1x16x32xbf16> to vector<16x32xbf16>
    %cst_13 = arith.constant dense<0.000000e+00> : vector<16x96xf32>
    %12 = tpu.matmul %11, %1, %cst_13 {dimension_numbers = #tpu.dot_dimension_numbers<[1], [0], [0], [1], [0, 0, 1, 1], [], []>} : vector<16x32xbf16>, vector<32x96xbf16>, vector<16x96xf32> -> vector<16x96xf32>
    %c1 = arith.constant 1 : index
    %c0_14 = arith.constant 0 : index
    %c0_15 = arith.constant 0 : index
    %13 = vector.load %arg3[%c1, %c0_14, %c0_15] : memref<3x96x512xbf16, #tpu.memory_space<vmem>>, vector<1x96x512xbf16>
    %14 = vector.shape_cast %13 : vector<1x96x512xbf16> to vector<96x512xbf16>
    %15 = arith.truncf %12 : vector<16x96xf32> to vector<16x96xbf16>
    %cst_16 = arith.constant dense<0.000000e+00> : vector<16x512xf32>
    %16 = tpu.matmul %15, %14, %cst_16 {dimension_numbers = #tpu.dot_dimension_numbers<[1], [0], [0], [1], [0, 0, 1, 1], [], []>} : vector<16x96xbf16>, vector<96x512xbf16>, vector<16x512xf32> -> vector<16x512xf32>
    %17 = arith.addf %9, %16 : vector<16x512xf32>
    %c4 = arith.constant 4 : index
    %c0_17 = arith.constant 0 : index
    %c0_18 = arith.constant 0 : index
    %18 = vector.load %arg2[%c4, %c0_17, %c0_18] : memref<6x16x32xbf16, #tpu.memory_space<vmem>>, vector<1x16x32xbf16>
    %19 = vector.shape_cast %18 : vector<1x16x32xbf16> to vector<16x32xbf16>
    %cst_19 = arith.constant dense<0.000000e+00> : vector<16x96xf32>
    %20 = tpu.matmul %19, %1, %cst_19 {dimension_numbers = #tpu.dot_dimension_numbers<[1], [0], [0], [1], [0, 0, 1, 1], [], []>} : vector<16x32xbf16>, vector<32x96xbf16>, vector<16x96xf32> -> vector<16x96xf32>
    %c2_20 = arith.constant 2 : index
    %c0_21 = arith.constant 0 : index
    %c0_22 = arith.constant 0 : index
    %21 = vector.load %arg3[%c2_20, %c0_21, %c0_22] : memref<3x96x512xbf16, #tpu.memory_space<vmem>>, vector<1x96x512xbf16>
    %22 = vector.shape_cast %21 : vector<1x96x512xbf16> to vector<96x512xbf16>
    %23 = arith.truncf %20 : vector<16x96xf32> to vector<16x96xbf16>
    %cst_23 = arith.constant dense<0.000000e+00> : vector<16x512xf32>
    %24 = tpu.matmul %23, %22, %cst_23 {dimension_numbers = #tpu.dot_dimension_numbers<[1], [0], [0], [1], [0, 0, 1, 1], [], []>} : vector<16x96xbf16>, vector<96x512xbf16>, vector<16x512xf32> -> vector<16x512xf32>
    %25 = arith.addf %17, %24 : vector<16x512xf32>
    %26 = vector.extract_strided_slice %25 {offsets = [0, 0], sizes = [16, 256], strides = [1, 1]} : vector<16x512xf32> to vector<16x256xf32>
    %27 = vector.extract_strided_slice %25 {offsets = [0, 256], sizes = [16, 256], strides = [1, 1]} : vector<16x512xf32> to vector<16x256xf32>
    %28 = arith.maximumf %26, %27 : vector<16x256xf32>
    %c1_24 = arith.constant 1 : index
    %c0_25 = arith.constant 0 : index
    %c0_26 = arith.constant 0 : index
    %29 = vector.load %arg2[%c1_24, %c0_25, %c0_26] : memref<6x16x32xbf16, #tpu.memory_space<vmem>>, vector<1x16x32xbf16>
    %30 = vector.shape_cast %29 : vector<1x16x32xbf16> to vector<16x32xbf16>
    %cst_27 = arith.constant dense<0.000000e+00> : vector<16x96xf32>
    %31 = tpu.matmul %30, %1, %cst_27 {dimension_numbers = #tpu.dot_dimension_numbers<[1], [0], [0], [1], [0, 0, 1, 1], [], []>} : vector<16x32xbf16>, vector<32x96xbf16>, vector<16x96xf32> -> vector<16x96xf32>
    %c0_28 = arith.constant 0 : index
    %c0_29 = arith.constant 0 : index
    %c0_30 = arith.constant 0 : index
    %32 = vector.load %arg3[%c0_28, %c0_29, %c0_30] : memref<3x96x512xbf16, #tpu.memory_space<vmem>>, vector<1x96x512xbf16>
    %33 = vector.shape_cast %32 : vector<1x96x512xbf16> to vector<96x512xbf16>
    %34 = arith.truncf %31 : vector<16x96xf32> to vector<16x96xbf16>
    %cst_31 = arith.constant dense<0.000000e+00> : vector<16x512xf32>
    %35 = tpu.matmul %34, %33, %cst_31 {dimension_numbers = #tpu.dot_dimension_numbers<[1], [0], [0], [1], [0, 0, 1, 1], [], []>} : vector<16x96xbf16>, vector<96x512xbf16>, vector<16x512xf32> -> vector<16x512xf32>
    %c3 = arith.constant 3 : index
    %c0_32 = arith.constant 0 : index
    %c0_33 = arith.constant 0 : index
    %36 = vector.load %arg2[%c3, %c0_32, %c0_33] : memref<6x16x32xbf16, #tpu.memory_space<vmem>>, vector<1x16x32xbf16>
    %37 = vector.shape_cast %36 : vector<1x16x32xbf16> to vector<16x32xbf16>
    %cst_34 = arith.constant dense<0.000000e+00> : vector<16x96xf32>
    %38 = tpu.matmul %37, %1, %cst_34 {dimension_numbers = #tpu.dot_dimension_numbers<[1], [0], [0], [1], [0, 0, 1, 1], [], []>} : vector<16x32xbf16>, vector<32x96xbf16>, vector<16x96xf32> -> vector<16x96xf32>
    %c1_35 = arith.constant 1 : index
    %c0_36 = arith.constant 0 : index
    %c0_37 = arith.constant 0 : index
    %39 = vector.load %arg3[%c1_35, %c0_36, %c0_37] : memref<3x96x512xbf16, #tpu.memory_space<vmem>>, vector<1x96x512xbf16>
    %40 = vector.shape_cast %39 : vector<1x96x512xbf16> to vector<96x512xbf16>
    %41 = arith.truncf %38 : vector<16x96xf32> to vector<16x96xbf16>
    %cst_38 = arith.constant dense<0.000000e+00> : vector<16x512xf32>
    %42 = tpu.matmul %41, %40, %cst_38 {dimension_numbers = #tpu.dot_dimension_numbers<[1], [0], [0], [1], [0, 0, 1, 1], [], []>} : vector<16x96xbf16>, vector<96x512xbf16>, vector<16x512xf32> -> vector<16x512xf32>
    %43 = arith.addf %35, %42 : vector<16x512xf32>
    %c5 = arith.constant 5 : index
    %c0_39 = arith.constant 0 : index
    %c0_40 = arith.constant 0 : index
    %44 = vector.load %arg2[%c5, %c0_39, %c0_40] : memref<6x16x32xbf16, #tpu.memory_space<vmem>>, vector<1x16x32xbf16>
    %45 = vector.shape_cast %44 : vector<1x16x32xbf16> to vector<16x32xbf16>
    %cst_41 = arith.constant dense<0.000000e+00> : vector<16x96xf32>
    %46 = tpu.matmul %45, %1, %cst_41 {dimension_numbers = #tpu.dot_dimension_numbers<[1], [0], [0], [1], [0, 0, 1, 1], [], []>} : vector<16x32xbf16>, vector<32x96xbf16>, vector<16x96xf32> -> vector<16x96xf32>
    %c2_42 = arith.constant 2 : index
    %c0_43 = arith.constant 0 : index
    %c0_44 = arith.constant 0 : index
    %47 = vector.load %arg3[%c2_42, %c0_43, %c0_44] : memref<3x96x512xbf16, #tpu.memory_space<vmem>>, vector<1x96x512xbf16>
    %48 = vector.shape_cast %47 : vector<1x96x512xbf16> to vector<96x512xbf16>
    %49 = arith.truncf %46 : vector<16x96xf32> to vector<16x96xbf16>
    %cst_45 = arith.constant dense<0.000000e+00> : vector<16x512xf32>
    %50 = tpu.matmul %49, %48, %cst_45 {dimension_numbers = #tpu.dot_dimension_numbers<[1], [0], [0], [1], [0, 0, 1, 1], [], []>} : vector<16x96xbf16>, vector<96x512xbf16>, vector<16x512xf32> -> vector<16x512xf32>
    %51 = arith.addf %43, %50 : vector<16x512xf32>
    %52 = vector.extract_strided_slice %51 {offsets = [0, 0], sizes = [16, 256], strides = [1, 1]} : vector<16x512xf32> to vector<16x256xf32>
    %53 = vector.extract_strided_slice %51 {offsets = [0, 256], sizes = [16, 256], strides = [1, 1]} : vector<16x512xf32> to vector<16x256xf32>
    %54 = arith.maximumf %52, %53 : vector<16x256xf32>
    %55 = arith.maximumf %28, %54 : vector<16x256xf32>
    %56 = vector.broadcast %2 : vector<1x256xf32> to vector<16x256xf32>
    %57 = arith.addf %55, %56 : vector<16x256xf32>
    %58 = math.tanh %57 : vector<16x256xf32>
    %c0_46 = arith.constant 0 : index
    %c0_47 = arith.constant 0 : index
    %59 = vector.load %arg7[%c0_46, %c0_47] : memref<1x64xf32, #tpu.memory_space<vmem>>, vector<1x64xf32>
    %c0_48 = arith.constant 0 : index
    %c0_49 = arith.constant 0 : index
    %c0_50 = arith.constant 0 : index
    %60 = vector.load %arg5[%c0_48, %c0_49, %c0_50] : memref<6x8x16xbf16, #tpu.memory_space<vmem>>, vector<1x8x16xbf16>
    %61 = vector.shape_cast %60 : vector<1x8x16xbf16> to vector<8x16xbf16>
    %62 = arith.truncf %58 : vector<16x256xf32> to vector<16x256xbf16>
    %cst_51 = arith.constant dense<0.000000e+00> : vector<8x256xf32>
    %63 = tpu.matmul %61, %62, %cst_51 {dimension_numbers = #tpu.dot_dimension_numbers<[1], [0], [0], [1], [0, 0, 1, 1], [], []>} : vector<8x16xbf16>, vector<16x256xbf16>, vector<8x256xf32> -> vector<8x256xf32>
    %c0_52 = arith.constant 0 : index
    %c0_53 = arith.constant 0 : index
    %c0_54 = arith.constant 0 : index
    %64 = vector.load %arg6[%c0_52, %c0_53, %c0_54] : memref<3x256x128xbf16, #tpu.memory_space<vmem>>, vector<1x256x128xbf16>
    %65 = vector.shape_cast %64 : vector<1x256x128xbf16> to vector<256x128xbf16>
    %66 = arith.truncf %63 : vector<8x256xf32> to vector<8x256xbf16>
    %cst_55 = arith.constant dense<0.000000e+00> : vector<8x128xf32>
    %67 = tpu.matmul %66, %65, %cst_55 {dimension_numbers = #tpu.dot_dimension_numbers<[1], [0], [0], [1], [0, 0, 1, 1], [], []>} : vector<8x256xbf16>, vector<256x128xbf16>, vector<8x128xf32> -> vector<8x128xf32>
    %c2_56 = arith.constant 2 : index
    %c0_57 = arith.constant 0 : index
    %c0_58 = arith.constant 0 : index
    %68 = vector.load %arg5[%c2_56, %c0_57, %c0_58] : memref<6x8x16xbf16, #tpu.memory_space<vmem>>, vector<1x8x16xbf16>
    %69 = vector.shape_cast %68 : vector<1x8x16xbf16> to vector<8x16xbf16>
    %70 = arith.truncf %58 : vector<16x256xf32> to vector<16x256xbf16>
    %cst_59 = arith.constant dense<0.000000e+00> : vector<8x256xf32>
    %71 = tpu.matmul %69, %70, %cst_59 {dimension_numbers = #tpu.dot_dimension_numbers<[1], [0], [0], [1], [0, 0, 1, 1], [], []>} : vector<8x16xbf16>, vector<16x256xbf16>, vector<8x256xf32> -> vector<8x256xf32>
    %c1_60 = arith.constant 1 : index
    %c0_61 = arith.constant 0 : index
    %c0_62 = arith.constant 0 : index
    %72 = vector.load %arg6[%c1_60, %c0_61, %c0_62] : memref<3x256x128xbf16, #tpu.memory_space<vmem>>, vector<1x256x128xbf16>
    %73 = vector.shape_cast %72 : vector<1x256x128xbf16> to vector<256x128xbf16>
    %74 = arith.truncf %71 : vector<8x256xf32> to vector<8x256xbf16>
    %cst_63 = arith.constant dense<0.000000e+00> : vector<8x128xf32>
    %75 = tpu.matmul %74, %73, %cst_63 {dimension_numbers = #tpu.dot_dimension_numbers<[1], [0], [0], [1], [0, 0, 1, 1], [], []>} : vector<8x256xbf16>, vector<256x128xbf16>, vector<8x128xf32> -> vector<8x128xf32>
    %76 = arith.addf %67, %75 : vector<8x128xf32>
    %c4_64 = arith.constant 4 : index
    %c0_65 = arith.constant 0 : index
    %c0_66 = arith.constant 0 : index
    %77 = vector.load %arg5[%c4_64, %c0_65, %c0_66] : memref<6x8x16xbf16, #tpu.memory_space<vmem>>, vector<1x8x16xbf16>
    %78 = vector.shape_cast %77 : vector<1x8x16xbf16> to vector<8x16xbf16>
    %79 = arith.truncf %58 : vector<16x256xf32> to vector<16x256xbf16>
    %cst_67 = arith.constant dense<0.000000e+00> : vector<8x256xf32>
    %80 = tpu.matmul %78, %79, %cst_67 {dimension_numbers = #tpu.dot_dimension_numbers<[1], [0], [0], [1], [0, 0, 1, 1], [], []>} : vector<8x16xbf16>, vector<16x256xbf16>, vector<8x256xf32> -> vector<8x256xf32>
    %c2_68 = arith.constant 2 : index
    %c0_69 = arith.constant 0 : index
    %c0_70 = arith.constant 0 : index
    %81 = vector.load %arg6[%c2_68, %c0_69, %c0_70] : memref<3x256x128xbf16, #tpu.memory_space<vmem>>, vector<1x256x128xbf16>
    %82 = vector.shape_cast %81 : vector<1x256x128xbf16> to vector<256x128xbf16>
    %83 = arith.truncf %80 : vector<8x256xf32> to vector<8x256xbf16>
    %cst_71 = arith.constant dense<0.000000e+00> : vector<8x128xf32>
    %84 = tpu.matmul %83, %82, %cst_71 {dimension_numbers = #tpu.dot_dimension_numbers<[1], [0], [0], [1], [0, 0, 1, 1], [], []>} : vector<8x256xbf16>, vector<256x128xbf16>, vector<8x128xf32> -> vector<8x128xf32>
    %85 = arith.addf %76, %84 : vector<8x128xf32>
    %86 = vector.extract_strided_slice %85 {offsets = [0, 0], sizes = [8, 64], strides = [1, 1]} : vector<8x128xf32> to vector<8x64xf32>
    %87 = vector.extract_strided_slice %85 {offsets = [0, 64], sizes = [8, 64], strides = [1, 1]} : vector<8x128xf32> to vector<8x64xf32>
    %88 = arith.maximumf %86, %87 : vector<8x64xf32>
    %c1_72 = arith.constant 1 : index
    %c0_73 = arith.constant 0 : index
    %c0_74 = arith.constant 0 : index
    %89 = vector.load %arg5[%c1_72, %c0_73, %c0_74] : memref<6x8x16xbf16, #tpu.memory_space<vmem>>, vector<1x8x16xbf16>
    %90 = vector.shape_cast %89 : vector<1x8x16xbf16> to vector<8x16xbf16>
    %91 = arith.truncf %58 : vector<16x256xf32> to vector<16x256xbf16>
    %cst_75 = arith.constant dense<0.000000e+00> : vector<8x256xf32>
    %92 = tpu.matmul %90, %91, %cst_75 {dimension_numbers = #tpu.dot_dimension_numbers<[1], [0], [0], [1], [0, 0, 1, 1], [], []>} : vector<8x16xbf16>, vector<16x256xbf16>, vector<8x256xf32> -> vector<8x256xf32>
    %c0_76 = arith.constant 0 : index
    %c0_77 = arith.constant 0 : index
    %c0_78 = arith.constant 0 : index
    %93 = vector.load %arg6[%c0_76, %c0_77, %c0_78] : memref<3x256x128xbf16, #tpu.memory_space<vmem>>, vector<1x256x128xbf16>
    %94 = vector.shape_cast %93 : vector<1x256x128xbf16> to vector<256x128xbf16>
    %95 = arith.truncf %92 : vector<8x256xf32> to vector<8x256xbf16>
    %cst_79 = arith.constant dense<0.000000e+00> : vector<8x128xf32>
    %96 = tpu.matmul %95, %94, %cst_79 {dimension_numbers = #tpu.dot_dimension_numbers<[1], [0], [0], [1], [0, 0, 1, 1], [], []>} : vector<8x256xbf16>, vector<256x128xbf16>, vector<8x128xf32> -> vector<8x128xf32>
    %c3_80 = arith.constant 3 : index
    %c0_81 = arith.constant 0 : index
    %c0_82 = arith.constant 0 : index
    %97 = vector.load %arg5[%c3_80, %c0_81, %c0_82] : memref<6x8x16xbf16, #tpu.memory_space<vmem>>, vector<1x8x16xbf16>
    %98 = vector.shape_cast %97 : vector<1x8x16xbf16> to vector<8x16xbf16>
    %99 = arith.truncf %58 : vector<16x256xf32> to vector<16x256xbf16>
    %cst_83 = arith.constant dense<0.000000e+00> : vector<8x256xf32>
    %100 = tpu.matmul %98, %99, %cst_83 {dimension_numbers = #tpu.dot_dimension_numbers<[1], [0], [0], [1], [0, 0, 1, 1], [], []>} : vector<8x16xbf16>, vector<16x256xbf16>, vector<8x256xf32> -> vector<8x256xf32>
    %c1_84 = arith.constant 1 : index
    %c0_85 = arith.constant 0 : index
    %c0_86 = arith.constant 0 : index
    %101 = vector.load %arg6[%c1_84, %c0_85, %c0_86] : memref<3x256x128xbf16, #tpu.memory_space<vmem>>, vector<1x256x128xbf16>
    %102 = vector.shape_cast %101 : vector<1x256x128xbf16> to vector<256x128xbf16>
    %103 = arith.truncf %100 : vector<8x256xf32> to vector<8x256xbf16>
    %cst_87 = arith.constant dense<0.000000e+00> : vector<8x128xf32>
    %104 = tpu.matmul %103, %102, %cst_87 {dimension_numbers = #tpu.dot_dimension_numbers<[1], [0], [0], [1], [0, 0, 1, 1], [], []>} : vector<8x256xbf16>, vector<256x128xbf16>, vector<8x128xf32> -> vector<8x128xf32>
    %105 = arith.addf %96, %104 : vector<8x128xf32>
    %c5_88 = arith.constant 5 : index
    %c0_89 = arith.constant 0 : index
    %c0_90 = arith.constant 0 : index
    %106 = vector.load %arg5[%c5_88, %c0_89, %c0_90] : memref<6x8x16xbf16, #tpu.memory_space<vmem>>, vector<1x8x16xbf16>
    %107 = vector.shape_cast %106 : vector<1x8x16xbf16> to vector<8x16xbf16>
    %108 = arith.truncf %58 : vector<16x256xf32> to vector<16x256xbf16>
    %cst_91 = arith.constant dense<0.000000e+00> : vector<8x256xf32>
    %109 = tpu.matmul %107, %108, %cst_91 {dimension_numbers = #tpu.dot_dimension_numbers<[1], [0], [0], [1], [0, 0, 1, 1], [], []>} : vector<8x16xbf16>, vector<16x256xbf16>, vector<8x256xf32> -> vector<8x256xf32>
    %c2_92 = arith.constant 2 : index
    %c0_93 = arith.constant 0 : index
    %c0_94 = arith.constant 0 : index
    %110 = vector.load %arg6[%c2_92, %c0_93, %c0_94] : memref<3x256x128xbf16, #tpu.memory_space<vmem>>, vector<1x256x128xbf16>
    %111 = vector.shape_cast %110 : vector<1x256x128xbf16> to vector<256x128xbf16>
    %112 = arith.truncf %109 : vector<8x256xf32> to vector<8x256xbf16>
    %cst_95 = arith.constant dense<0.000000e+00> : vector<8x128xf32>
    %113 = tpu.matmul %112, %111, %cst_95 {dimension_numbers = #tpu.dot_dimension_numbers<[1], [0], [0], [1], [0, 0, 1, 1], [], []>} : vector<8x256xbf16>, vector<256x128xbf16>, vector<8x128xf32> -> vector<8x128xf32>
    %114 = arith.addf %105, %113 : vector<8x128xf32>
    %115 = vector.extract_strided_slice %114 {offsets = [0, 0], sizes = [8, 64], strides = [1, 1]} : vector<8x128xf32> to vector<8x64xf32>
    %116 = vector.extract_strided_slice %114 {offsets = [0, 64], sizes = [8, 64], strides = [1, 1]} : vector<8x128xf32> to vector<8x64xf32>
    %117 = arith.maximumf %115, %116 : vector<8x64xf32>
    %118 = arith.maximumf %88, %117 : vector<8x64xf32>
    %119 = vector.broadcast %59 : vector<1x64xf32> to vector<8x64xf32>
    %120 = arith.addf %118, %119 : vector<8x64xf32>
    %121 = math.tanh %120 : vector<8x64xf32>
    %c0_96 = arith.constant 0 : index
    %c0_97 = arith.constant 0 : index
    %122 = vector.load %arg8[%c0_96, %c0_97] : memref<64x256xbf16, #tpu.memory_space<vmem>>, vector<64x256xbf16>
    %123 = arith.truncf %121 : vector<8x64xf32> to vector<8x64xbf16>
    %cst_98 = arith.constant dense<0.000000e+00> : vector<8x256xf32>
    %124 = tpu.matmul %123, %122, %cst_98 {dimension_numbers = #tpu.dot_dimension_numbers<[1], [0], [0], [1], [0, 0, 1, 1], [], []>} : vector<8x64xbf16>, vector<64x256xbf16>, vector<8x256xf32> -> vector<8x256xf32>
    %c0_99 = arith.constant 0 : index
    %c0_100 = arith.constant 0 : index
    %125 = vector.load %arg9[%c0_99, %c0_100] : memref<8x256xf32, #tpu.memory_space<vmem>>, vector<8x256xf32>
    %126 = arith.mulf %124, %125 : vector<8x256xf32>
    %c0_101 = arith.constant 0 : index
    %c0_102 = arith.constant 0 : index
    %127 = vector.load %arg10[%c0_101, %c0_102] : memref<256x32xbf16, #tpu.memory_space<vmem>>, vector<256x32xbf16>
    %128 = arith.truncf %126 : vector<8x256xf32> to vector<8x256xbf16>
    %cst_103 = arith.constant dense<0.000000e+00> : vector<8x32xf32>
    %129 = tpu.matmul %128, %127, %cst_103 {dimension_numbers = #tpu.dot_dimension_numbers<[1], [0], [0], [1], [0, 0, 1, 1], [], []>} : vector<8x256xbf16>, vector<256x32xbf16>, vector<8x32xf32> -> vector<8x32xf32>
    %cst_104 = arith.constant dense<0.000000e+00> : vector<32xf32>
    %130 = vector.multi_reduction <add>, %129, %cst_104 [0] : vector<8x32xf32> to vector<32xf32>
    %131 = vector.shape_cast %130 : vector<32xf32> to vector<1x32xf32>
    %c0_105 = arith.constant 0 : index
    %c0_106 = arith.constant 0 : index
    %132 = vector.load %arg11[%c0_105, %c0_106] : memref<1x32xf32, #tpu.memory_space<vmem>>, vector<1x32xf32>
    %133 = arith.addf %131, %132 : vector<1x32xf32>
    %134 = math.tanh %133 : vector<1x32xf32>
    %c0_107 = arith.constant 0 : index
    %c0_108 = arith.constant 0 : index
    %135 = vector.load %arg12[%c0_107, %c0_108] : memref<32x10xbf16, #tpu.memory_space<vmem>>, vector<32x10xbf16>
    %136 = arith.truncf %134 : vector<1x32xf32> to vector<1x32xbf16>
    %cst_109 = arith.constant dense<0.000000e+00> : vector<1x10xf32>
    %137 = tpu.matmul %136, %135, %cst_109 {dimension_numbers = #tpu.dot_dimension_numbers<[1], [0], [0], [1], [0, 0, 1, 1], [], []>} : vector<1x32xbf16>, vector<32x10xbf16>, vector<1x10xf32> -> vector<1x10xf32>
    %c0_110 = arith.constant 0 : index
    %c0_111 = arith.constant 0 : index
    %138 = vector.load %arg13[%c0_110, %c0_111] : memref<1x10xf32, #tpu.memory_space<vmem>>, vector<1x10xf32>
    %139 = arith.addf %137, %138 : vector<1x10xf32>
    %c0_112 = arith.constant 0 : index
    %c0_113 = arith.constant 0 : index
    %c0_114 = arith.constant 0 : index
    %140 = vector.load %arg14[%c0_112, %c0_113, %c0_114] : memref<4x1x10xf32, #tpu.memory_space<vmem>>, vector<1x1x10xf32>
    %141 = vector.shape_cast %140 : vector<1x1x10xf32> to vector<1x10xf32>
    %142 = vector.shape_cast %139 : vector<1x10xf32> to vector<1x1x10xf32>
    tpu.vector_store %arg14[%c0_112, %c0_113, %c0_114], %142 {strides = array<i32>} : memref<4x1x10xf32, #tpu.memory_space<vmem>>, vector<1x1x10xf32>,
    %c1_115 = arith.constant 1 : index
    %c0_116 = arith.constant 0 : index
    %c0_117 = arith.constant 0 : index
    %143 = vector.load %arg1[%c1_115, %c0_116, %c0_117] : memref<4x32x96xbf16, #tpu.memory_space<vmem>>, vector<1x32x96xbf16>
    %144 = vector.shape_cast %143 : vector<1x32x96xbf16> to vector<32x96xbf16>
    %c0_118 = arith.constant 0 : index
    %c0_119 = arith.constant 0 : index
    %145 = vector.load %arg4[%c0_118, %c0_119] : memref<1x256xf32, #tpu.memory_space<vmem>>, vector<1x256xf32>
    %c0_120 = arith.constant 0 : index
    %c0_121 = arith.constant 0 : index
    %c0_122 = arith.constant 0 : index
    %146 = vector.load %arg2[%c0_120, %c0_121, %c0_122] : memref<6x16x32xbf16, #tpu.memory_space<vmem>>, vector<1x16x32xbf16>
    %147 = vector.shape_cast %146 : vector<1x16x32xbf16> to vector<16x32xbf16>
    %cst_123 = arith.constant dense<0.000000e+00> : vector<16x96xf32>
    %148 = tpu.matmul %147, %144, %cst_123 {dimension_numbers = #tpu.dot_dimension_numbers<[1], [0], [0], [1], [0, 0, 1, 1], [], []>} : vector<16x32xbf16>, vector<32x96xbf16>, vector<16x96xf32> -> vector<16x96xf32>
    %c0_124 = arith.constant 0 : index
    %c0_125 = arith.constant 0 : index
    %c0_126 = arith.constant 0 : index
    %149 = vector.load %arg3[%c0_124, %c0_125, %c0_126] : memref<3x96x512xbf16, #tpu.memory_space<vmem>>, vector<1x96x512xbf16>
    %150 = vector.shape_cast %149 : vector<1x96x512xbf16> to vector<96x512xbf16>
    %151 = arith.truncf %148 : vector<16x96xf32> to vector<16x96xbf16>
    %cst_127 = arith.constant dense<0.000000e+00> : vector<16x512xf32>
    %152 = tpu.matmul %151, %150, %cst_127 {dimension_numbers = #tpu.dot_dimension_numbers<[1], [0], [0], [1], [0, 0, 1, 1], [], []>} : vector<16x96xbf16>, vector<96x512xbf16>, vector<16x512xf32> -> vector<16x512xf32>
    %c2_128 = arith.constant 2 : index
    %c0_129 = arith.constant 0 : index
    %c0_130 = arith.constant 0 : index
    %153 = vector.load %arg2[%c2_128, %c0_129, %c0_130] : memref<6x16x32xbf16, #tpu.memory_space<vmem>>, vector<1x16x32xbf16>
    %154 = vector.shape_cast %153 : vector<1x16x32xbf16> to vector<16x32xbf16>
    %cst_131 = arith.constant dense<0.000000e+00> : vector<16x96xf32>
    %155 = tpu.matmul %154, %144, %cst_131 {dimension_numbers = #tpu.dot_dimension_numbers<[1], [0], [0], [1], [0, 0, 1, 1], [], []>} : vector<16x32xbf16>, vector<32x96xbf16>, vector<16x96xf32> -> vector<16x96xf32>
    %c1_132 = arith.constant 1 : index
    %c0_133 = arith.constant 0 : index
    %c0_134 = arith.constant 0 : index
    %156 = vector.load %arg3[%c1_132, %c0_133, %c0_134] : memref<3x96x512xbf16, #tpu.memory_space<vmem>>, vector<1x96x512xbf16>
    %157 = vector.shape_cast %156 : vector<1x96x512xbf16> to vector<96x512xbf16>
    %158 = arith.truncf %155 : vector<16x96xf32> to vector<16x96xbf16>
    %cst_135 = arith.constant dense<0.000000e+00> : vector<16x512xf32>
    %159 = tpu.matmul %158, %157, %cst_135 {dimension_numbers = #tpu.dot_dimension_numbers<[1], [0], [0], [1], [0, 0, 1, 1], [], []>} : vector<16x96xbf16>, vector<96x512xbf16>, vector<16x512xf32> -> vector<16x512xf32>
    %160 = arith.addf %152, %159 : vector<16x512xf32>
    %c4_136 = arith.constant 4 : index
    %c0_137 = arith.constant 0 : index
    %c0_138 = arith.constant 0 : index
    %161 = vector.load %arg2[%c4_136, %c0_137, %c0_138] : memref<6x16x32xbf16, #tpu.memory_space<vmem>>, vector<1x16x32xbf16>
    %162 = vector.shape_cast %161 : vector<1x16x32xbf16> to vector<16x32xbf16>
    %cst_139 = arith.constant dense<0.000000e+00> : vector<16x96xf32>
    %163 = tpu.matmul %162, %144, %cst_139 {dimension_numbers = #tpu.dot_dimension_numbers<[1], [0], [0], [1], [0, 0, 1, 1], [], []>} : vector<16x32xbf16>, vector<32x96xbf16>, vector<16x96xf32> -> vector<16x96xf32>
    %c2_140 = arith.constant 2 : index
    %c0_141 = arith.constant 0 : index
    %c0_142 = arith.constant 0 : index
    %164 = vector.load %arg3[%c2_140, %c0_141, %c0_142] : memref<3x96x512xbf16, #tpu.memory_space<vmem>>, vector<1x96x512xbf16>
    %165 = vector.shape_cast %164 : vector<1x96x512xbf16> to vector<96x512xbf16>
    %166 = arith.truncf %163 : vector<16x96xf32> to vector<16x96xbf16>
    %cst_143 = arith.constant dense<0.000000e+00> : vector<16x512xf32>
    %167 = tpu.matmul %166, %165, %cst_143 {dimension_numbers = #tpu.dot_dimension_numbers<[1], [0], [0], [1], [0, 0, 1, 1], [], []>} : vector<16x96xbf16>, vector<96x512xbf16>, vector<16x512xf32> -> vector<16x512xf32>
    %168 = arith.addf %160, %167 : vector<16x512xf32>
    %169 = vector.extract_strided_slice %168 {offsets = [0, 0], sizes = [16, 256], strides = [1, 1]} : vector<16x512xf32> to vector<16x256xf32>
    %170 = vector.extract_strided_slice %168 {offsets = [0, 256], sizes = [16, 256], strides = [1, 1]} : vector<16x512xf32> to vector<16x256xf32>
    %171 = arith.maximumf %169, %170 : vector<16x256xf32>
    %c1_144 = arith.constant 1 : index
    %c0_145 = arith.constant 0 : index
    %c0_146 = arith.constant 0 : index
    %172 = vector.load %arg2[%c1_144, %c0_145, %c0_146] : memref<6x16x32xbf16, #tpu.memory_space<vmem>>, vector<1x16x32xbf16>
    %173 = vector.shape_cast %172 : vector<1x16x32xbf16> to vector<16x32xbf16>
    %cst_147 = arith.constant dense<0.000000e+00> : vector<16x96xf32>
    %174 = tpu.matmul %173, %144, %cst_147 {dimension_numbers = #tpu.dot_dimension_numbers<[1], [0], [0], [1], [0, 0, 1, 1], [], []>} : vector<16x32xbf16>, vector<32x96xbf16>, vector<16x96xf32> -> vector<16x96xf32>
    %c0_148 = arith.constant 0 : index
    %c0_149 = arith.constant 0 : index
    %c0_150 = arith.constant 0 : index
    %175 = vector.load %arg3[%c0_148, %c0_149, %c0_150] : memref<3x96x512xbf16, #tpu.memory_space<vmem>>, vector<1x96x512xbf16>
    %176 = vector.shape_cast %175 : vector<1x96x512xbf16> to vector<96x512xbf16>
    %177 = arith.truncf %174 : vector<16x96xf32> to vector<16x96xbf16>
    %cst_151 = arith.constant dense<0.000000e+00> : vector<16x512xf32>
    %178 = tpu.matmul %177, %176, %cst_151 {dimension_numbers = #tpu.dot_dimension_numbers<[1], [0], [0], [1], [0, 0, 1, 1], [], []>} : vector<16x96xbf16>, vector<96x512xbf16>, vector<16x512xf32> -> vector<16x512xf32>
    %c3_152 = arith.constant 3 : index
    %c0_153 = arith.constant 0 : index
    %c0_154 = arith.constant 0 : index
    %179 = vector.load %arg2[%c3_152, %c0_153, %c0_154] : memref<6x16x32xbf16, #tpu.memory_space<vmem>>, vector<1x16x32xbf16>
    %180 = vector.shape_cast %179 : vector<1x16x32xbf16> to vector<16x32xbf16>
    %cst_155 = arith.constant dense<0.000000e+00> : vector<16x96xf32>
    %181 = tpu.matmul %180, %144, %cst_155 {dimension_numbers = #tpu.dot_dimension_numbers<[1], [0], [0], [1], [0, 0, 1, 1], [], []>} : vector<16x32xbf16>, vector<32x96xbf16>, vector<16x96xf32> -> vector<16x96xf32>
    %c1_156 = arith.constant 1 : index
    %c0_157 = arith.constant 0 : index
    %c0_158 = arith.constant 0 : index
    %182 = vector.load %arg3[%c1_156, %c0_157, %c0_158] : memref<3x96x512xbf16, #tpu.memory_space<vmem>>, vector<1x96x512xbf16>
    %183 = vector.shape_cast %182 : vector<1x96x512xbf16> to vector<96x512xbf16>
    %184 = arith.truncf %181 : vector<16x96xf32> to vector<16x96xbf16>
    %cst_159 = arith.constant dense<0.000000e+00> : vector<16x512xf32>
    %185 = tpu.matmul %184, %183, %cst_159 {dimension_numbers = #tpu.dot_dimension_numbers<[1], [0], [0], [1], [0, 0, 1, 1], [], []>} : vector<16x96xbf16>, vector<96x512xbf16>, vector<16x512xf32> -> vector<16x512xf32>
    %186 = arith.addf %178, %185 : vector<16x512xf32>
    %c5_160 = arith.constant 5 : index
    %c0_161 = arith.constant 0 : index
    %c0_162 = arith.constant 0 : index
    %187 = vector.load %arg2[%c5_160, %c0_161, %c0_162] : memref<6x16x32xbf16, #tpu.memory_space<vmem>>, vector<1x16x32xbf16>
    %188 = vector.shape_cast %187 : vector<1x16x32xbf16> to vector<16x32xbf16>
    %cst_163 = arith.constant dense<0.000000e+00> : vector<16x96xf32>
    %189 = tpu.matmul %188, %144, %cst_163 {dimension_numbers = #tpu.dot_dimension_numbers<[1], [0], [0], [1], [0, 0, 1, 1], [], []>} : vector<16x32xbf16>, vector<32x96xbf16>, vector<16x96xf32> -> vector<16x96xf32>
    %c2_164 = arith.constant 2 : index
    %c0_165 = arith.constant 0 : index
    %c0_166 = arith.constant 0 : index
    %190 = vector.load %arg3[%c2_164, %c0_165, %c0_166] : memref<3x96x512xbf16, #tpu.memory_space<vmem>>, vector<1x96x512xbf16>
    %191 = vector.shape_cast %190 : vector<1x96x512xbf16> to vector<96x512xbf16>
    %192 = arith.truncf %189 : vector<16x96xf32> to vector<16x96xbf16>
    %cst_167 = arith.constant dense<0.000000e+00> : vector<16x512xf32>
    %193 = tpu.matmul %192, %191, %cst_167 {dimension_numbers = #tpu.dot_dimension_numbers<[1], [0], [0], [1], [0, 0, 1, 1], [], []>} : vector<16x96xbf16>, vector<96x512xbf16>, vector<16x512xf32> -> vector<16x512xf32>
    %194 = arith.addf %186, %193 : vector<16x512xf32>
    %195 = vector.extract_strided_slice %194 {offsets = [0, 0], sizes = [16, 256], strides = [1, 1]} : vector<16x512xf32> to vector<16x256xf32>
    %196 = vector.extract_strided_slice %194 {offsets = [0, 256], sizes = [16, 256], strides = [1, 1]} : vector<16x512xf32> to vector<16x256xf32>
    %197 = arith.maximumf %195, %196 : vector<16x256xf32>
    %198 = arith.maximumf %171, %197 : vector<16x256xf32>
    %199 = vector.broadcast %145 : vector<1x256xf32> to vector<16x256xf32>
    %200 = arith.addf %198, %199 : vector<16x256xf32>
    %201 = math.tanh %200 : vector<16x256xf32>
    %c0_168 = arith.constant 0 : index
    %c0_169 = arith.constant 0 : index
    %202 = vector.load %arg7[%c0_168, %c0_169] : memref<1x64xf32, #tpu.memory_space<vmem>>, vector<1x64xf32>
    %c0_170 = arith.constant 0 : index
    %c0_171 = arith.constant 0 : index
    %c0_172 = arith.constant 0 : index
    %203 = vector.load %arg5[%c0_170, %c0_171, %c0_172] : memref<6x8x16xbf16, #tpu.memory_space<vmem>>, vector<1x8x16xbf16>
    %204 = vector.shape_cast %203 : vector<1x8x16xbf16> to vector<8x16xbf16>
    %205 = arith.truncf %201 : vector<16x256xf32> to vector<16x256xbf16>
    %cst_173 = arith.constant dense<0.000000e+00> : vector<8x256xf32>
    %206 = tpu.matmul %204, %205, %cst_173 {dimension_numbers = #tpu.dot_dimension_numbers<[1], [0], [0], [1], [0, 0, 1, 1], [], []>} : vector<8x16xbf16>, vector<16x256xbf16>, vector<8x256xf32> -> vector<8x256xf32>
    %c0_174 = arith.constant 0 : index
    %c0_175 = arith.constant 0 : index
    %c0_176 = arith.constant 0 : index
    %207 = vector.load %arg6[%c0_174, %c0_175, %c0_176] : memref<3x256x128xbf16, #tpu.memory_space<vmem>>, vector<1x256x128xbf16>
    %208 = vector.shape_cast %207 : vector<1x256x128xbf16> to vector<256x128xbf16>
    %209 = arith.truncf %206 : vector<8x256xf32> to vector<8x256xbf16>
    %cst_177 = arith.constant dense<0.000000e+00> : vector<8x128xf32>
    %210 = tpu.matmul %209, %208, %cst_177 {dimension_numbers = #tpu.dot_dimension_numbers<[1], [0], [0], [1], [0, 0, 1, 1], [], []>} : vector<8x256xbf16>, vector<256x128xbf16>, vector<8x128xf32> -> vector<8x128xf32>
    %c2_178 = arith.constant 2 : index
    %c0_179 = arith.constant 0 : index
    %c0_180 = arith.constant 0 : index
    %211 = vector.load %arg5[%c2_178, %c0_179, %c0_180] : memref<6x8x16xbf16, #tpu.memory_space<vmem>>, vector<1x8x16xbf16>
    %212 = vector.shape_cast %211 : vector<1x8x16xbf16> to vector<8x16xbf16>
    %213 = arith.truncf %201 : vector<16x256xf32> to vector<16x256xbf16>
    %cst_181 = arith.constant dense<0.000000e+00> : vector<8x256xf32>
    %214 = tpu.matmul %212, %213, %cst_181 {dimension_numbers = #tpu.dot_dimension_numbers<[1], [0], [0], [1], [0, 0, 1, 1], [], []>} : vector<8x16xbf16>, vector<16x256xbf16>, vector<8x256xf32> -> vector<8x256xf32>
    %c1_182 = arith.constant 1 : index
    %c0_183 = arith.constant 0 : index
    %c0_184 = arith.constant 0 : index
    %215 = vector.load %arg6[%c1_182, %c0_183, %c0_184] : memref<3x256x128xbf16, #tpu.memory_space<vmem>>, vector<1x256x128xbf16>
    %216 = vector.shape_cast %215 : vector<1x256x128xbf16> to vector<256x128xbf16>
    %217 = arith.truncf %214 : vector<8x256xf32> to vector<8x256xbf16>
    %cst_185 = arith.constant dense<0.000000e+00> : vector<8x128xf32>
    %218 = tpu.matmul %217, %216, %cst_185 {dimension_numbers = #tpu.dot_dimension_numbers<[1], [0], [0], [1], [0, 0, 1, 1], [], []>} : vector<8x256xbf16>, vector<256x128xbf16>, vector<8x128xf32> -> vector<8x128xf32>
    %219 = arith.addf %210, %218 : vector<8x128xf32>
    %c4_186 = arith.constant 4 : index
    %c0_187 = arith.constant 0 : index
    %c0_188 = arith.constant 0 : index
    %220 = vector.load %arg5[%c4_186, %c0_187, %c0_188] : memref<6x8x16xbf16, #tpu.memory_space<vmem>>, vector<1x8x16xbf16>
    %221 = vector.shape_cast %220 : vector<1x8x16xbf16> to vector<8x16xbf16>
    %222 = arith.truncf %201 : vector<16x256xf32> to vector<16x256xbf16>
    %cst_189 = arith.constant dense<0.000000e+00> : vector<8x256xf32>
    %223 = tpu.matmul %221, %222, %cst_189 {dimension_numbers = #tpu.dot_dimension_numbers<[1], [0], [0], [1], [0, 0, 1, 1], [], []>} : vector<8x16xbf16>, vector<16x256xbf16>, vector<8x256xf32> -> vector<8x256xf32>
    %c2_190 = arith.constant 2 : index
    %c0_191 = arith.constant 0 : index
    %c0_192 = arith.constant 0 : index
    %224 = vector.load %arg6[%c2_190, %c0_191, %c0_192] : memref<3x256x128xbf16, #tpu.memory_space<vmem>>, vector<1x256x128xbf16>
    %225 = vector.shape_cast %224 : vector<1x256x128xbf16> to vector<256x128xbf16>
    %226 = arith.truncf %223 : vector<8x256xf32> to vector<8x256xbf16>
    %cst_193 = arith.constant dense<0.000000e+00> : vector<8x128xf32>
    %227 = tpu.matmul %226, %225, %cst_193 {dimension_numbers = #tpu.dot_dimension_numbers<[1], [0], [0], [1], [0, 0, 1, 1], [], []>} : vector<8x256xbf16>, vector<256x128xbf16>, vector<8x128xf32> -> vector<8x128xf32>
    %228 = arith.addf %219, %227 : vector<8x128xf32>
    %229 = vector.extract_strided_slice %228 {offsets = [0, 0], sizes = [8, 64], strides = [1, 1]} : vector<8x128xf32> to vector<8x64xf32>
    %230 = vector.extract_strided_slice %228 {offsets = [0, 64], sizes = [8, 64], strides = [1, 1]} : vector<8x128xf32> to vector<8x64xf32>
    %231 = arith.maximumf %229, %230 : vector<8x64xf32>
    %c1_194 = arith.constant 1 : index
    %c0_195 = arith.constant 0 : index
    %c0_196 = arith.constant 0 : index
    %232 = vector.load %arg5[%c1_194, %c0_195, %c0_196] : memref<6x8x16xbf16, #tpu.memory_space<vmem>>, vector<1x8x16xbf16>
    %233 = vector.shape_cast %232 : vector<1x8x16xbf16> to vector<8x16xbf16>
    %234 = arith.truncf %201 : vector<16x256xf32> to vector<16x256xbf16>
    %cst_197 = arith.constant dense<0.000000e+00> : vector<8x256xf32>
    %235 = tpu.matmul %233, %234, %cst_197 {dimension_numbers = #tpu.dot_dimension_numbers<[1], [0], [0], [1], [0, 0, 1, 1], [], []>} : vector<8x16xbf16>, vector<16x256xbf16>, vector<8x256xf32> -> vector<8x256xf32>
    %c0_198 = arith.constant 0 : index
    %c0_199 = arith.constant 0 : index
    %c0_200 = arith.constant 0 : index
    %236 = vector.load %arg6[%c0_198, %c0_199, %c0_200] : memref<3x256x128xbf16, #tpu.memory_space<vmem>>, vector<1x256x128xbf16>
    %237 = vector.shape_cast %236 : vector<1x256x128xbf16> to vector<256x128xbf16>
    %238 = arith.truncf %235 : vector<8x256xf32> to vector<8x256xbf16>
    %cst_201 = arith.constant dense<0.000000e+00> : vector<8x128xf32>
    %239 = tpu.matmul %238, %237, %cst_201 {dimension_numbers = #tpu.dot_dimension_numbers<[1], [0], [0], [1], [0, 0, 1, 1], [], []>} : vector<8x256xbf16>, vector<256x128xbf16>, vector<8x128xf32> -> vector<8x128xf32>
    %c3_202 = arith.constant 3 : index
    %c0_203 = arith.constant 0 : index
    %c0_204 = arith.constant 0 : index
    %240 = vector.load %arg5[%c3_202, %c0_203, %c0_204] : memref<6x8x16xbf16, #tpu.memory_space<vmem>>, vector<1x8x16xbf16>
    %241 = vector.shape_cast %240 : vector<1x8x16xbf16> to vector<8x16xbf16>
    %242 = arith.truncf %201 : vector<16x256xf32> to vector<16x256xbf16>
    %cst_205 = arith.constant dense<0.000000e+00> : vector<8x256xf32>
    %243 = tpu.matmul %241, %242, %cst_205 {dimension_numbers = #tpu.dot_dimension_numbers<[1], [0], [0], [1], [0, 0, 1, 1], [], []>} : vector<8x16xbf16>, vector<16x256xbf16>, vector<8x256xf32> -> vector<8x256xf32>
    %c1_206 = arith.constant 1 : index
    %c0_207 = arith.constant 0 : index
    %c0_208 = arith.constant 0 : index
    %244 = vector.load %arg6[%c1_206, %c0_207, %c0_208] : memref<3x256x128xbf16, #tpu.memory_space<vmem>>, vector<1x256x128xbf16>
    %245 = vector.shape_cast %244 : vector<1x256x128xbf16> to vector<256x128xbf16>
    %246 = arith.truncf %243 : vector<8x256xf32> to vector<8x256xbf16>
    %cst_209 = arith.constant dense<0.000000e+00> : vector<8x128xf32>
    %247 = tpu.matmul %246, %245, %cst_209 {dimension_numbers = #tpu.dot_dimension_numbers<[1], [0], [0], [1], [0, 0, 1, 1], [], []>} : vector<8x256xbf16>, vector<256x128xbf16>, vector<8x128xf32> -> vector<8x128xf32>
    %248 = arith.addf %239, %247 : vector<8x128xf32>
    %c5_210 = arith.constant 5 : index
    %c0_211 = arith.constant 0 : index
    %c0_212 = arith.constant 0 : index
    %249 = vector.load %arg5[%c5_210, %c0_211, %c0_212] : memref<6x8x16xbf16, #tpu.memory_space<vmem>>, vector<1x8x16xbf16>
    %250 = vector.shape_cast %249 : vector<1x8x16xbf16> to vector<8x16xbf16>
    %251 = arith.truncf %201 : vector<16x256xf32> to vector<16x256xbf16>
    %cst_213 = arith.constant dense<0.000000e+00> : vector<8x256xf32>
    %252 = tpu.matmul %250, %251, %cst_213 {dimension_numbers = #tpu.dot_dimension_numbers<[1], [0], [0], [1], [0, 0, 1, 1], [], []>} : vector<8x16xbf16>, vector<16x256xbf16>, vector<8x256xf32> -> vector<8x256xf32>
    %c2_214 = arith.constant 2 : index
    %c0_215 = arith.constant 0 : index
    %c0_216 = arith.constant 0 : index
    %253 = vector.load %arg6[%c2_214, %c0_215, %c0_216] : memref<3x256x128xbf16, #tpu.memory_space<vmem>>, vector<1x256x128xbf16>
    %254 = vector.shape_cast %253 : vector<1x256x128xbf16> to vector<256x128xbf16>
    %255 = arith.truncf %252 : vector<8x256xf32> to vector<8x256xbf16>
    %cst_217 = arith.constant dense<0.000000e+00> : vector<8x128xf32>
    %256 = tpu.matmul %255, %254, %cst_217 {dimension_numbers = #tpu.dot_dimension_numbers<[1], [0], [0], [1], [0, 0, 1, 1], [], []>} : vector<8x256xbf16>, vector<256x128xbf16>, vector<8x128xf32> -> vector<8x128xf32>
    %257 = arith.addf %248, %256 : vector<8x128xf32>
    %258 = vector.extract_strided_slice %257 {offsets = [0, 0], sizes = [8, 64], strides = [1, 1]} : vector<8x128xf32> to vector<8x64xf32>
    %259 = vector.extract_strided_slice %257 {offsets = [0, 64], sizes = [8, 64], strides = [1, 1]} : vector<8x128xf32> to vector<8x64xf32>
    %260 = arith.maximumf %258, %259 : vector<8x64xf32>
    %261 = arith.maximumf %231, %260 : vector<8x64xf32>
    %262 = vector.broadcast %202 : vector<1x64xf32> to vector<8x64xf32>
    %263 = arith.addf %261, %262 : vector<8x64xf32>
    %264 = math.tanh %263 : vector<8x64xf32>
    %c0_218 = arith.constant 0 : index
    %c0_219 = arith.constant 0 : index
    %265 = vector.load %arg8[%c0_218, %c0_219] : memref<64x256xbf16, #tpu.memory_space<vmem>>, vector<64x256xbf16>
    %266 = arith.truncf %264 : vector<8x64xf32> to vector<8x64xbf16>
    %cst_220 = arith.constant dense<0.000000e+00> : vector<8x256xf32>
    %267 = tpu.matmul %266, %265, %cst_220 {dimension_numbers = #tpu.dot_dimension_numbers<[1], [0], [0], [1], [0, 0, 1, 1], [], []>} : vector<8x64xbf16>, vector<64x256xbf16>, vector<8x256xf32> -> vector<8x256xf32>
    %c0_221 = arith.constant 0 : index
    %c0_222 = arith.constant 0 : index
    %268 = vector.load %arg9[%c0_221, %c0_222] : memref<8x256xf32, #tpu.memory_space<vmem>>, vector<8x256xf32>
    %269 = arith.mulf %267, %268 : vector<8x256xf32>
    %c0_223 = arith.constant 0 : index
    %c0_224 = arith.constant 0 : index
    %270 = vector.load %arg10[%c0_223, %c0_224] : memref<256x32xbf16, #tpu.memory_space<vmem>>, vector<256x32xbf16>
    %271 = arith.truncf %269 : vector<8x256xf32> to vector<8x256xbf16>
    %cst_225 = arith.constant dense<0.000000e+00> : vector<8x32xf32>
    %272 = tpu.matmul %271, %270, %cst_225 {dimension_numbers = #tpu.dot_dimension_numbers<[1], [0], [0], [1], [0, 0, 1, 1], [], []>} : vector<8x256xbf16>, vector<256x32xbf16>, vector<8x32xf32> -> vector<8x32xf32>
    %cst_226 = arith.constant dense<0.000000e+00> : vector<32xf32>
    %273 = vector.multi_reduction <add>, %272, %cst_226 [0] : vector<8x32xf32> to vector<32xf32>
    %274 = vector.shape_cast %273 : vector<32xf32> to vector<1x32xf32>
    %c0_227 = arith.constant 0 : index
    %c0_228 = arith.constant 0 : index
    %275 = vector.load %arg11[%c0_227, %c0_228] : memref<1x32xf32, #tpu.memory_space<vmem>>, vector<1x32xf32>
    %276 = arith.addf %274, %275 : vector<1x32xf32>
    %277 = math.tanh %276 : vector<1x32xf32>
    %c0_229 = arith.constant 0 : index
    %c0_230 = arith.constant 0 : index
    %278 = vector.load %arg12[%c0_229, %c0_230] : memref<32x10xbf16, #tpu.memory_space<vmem>>, vector<32x10xbf16>
    %279 = arith.truncf %277 : vector<1x32xf32> to vector<1x32xbf16>
    %cst_231 = arith.constant dense<0.000000e+00> : vector<1x10xf32>
    %280 = tpu.matmul %279, %278, %cst_231 {dimension_numbers = #tpu.dot_dimension_numbers<[1], [0], [0], [1], [0, 0, 1, 1], [], []>} : vector<1x32xbf16>, vector<32x10xbf16>, vector<1x10xf32> -> vector<1x10xf32>
    %c0_232 = arith.constant 0 : index
    %c0_233 = arith.constant 0 : index
    %281 = vector.load %arg13[%c0_232, %c0_233] : memref<1x10xf32, #tpu.memory_space<vmem>>, vector<1x10xf32>
    %282 = arith.addf %280, %281 : vector<1x10xf32>
    %c1_234 = arith.constant 1 : index
    %c0_235 = arith.constant 0 : index
    %c0_236 = arith.constant 0 : index
    %283 = vector.load %arg14[%c1_234, %c0_235, %c0_236] : memref<4x1x10xf32, #tpu.memory_space<vmem>>, vector<1x1x10xf32>
    %284 = vector.shape_cast %283 : vector<1x1x10xf32> to vector<1x10xf32>
    %285 = vector.shape_cast %282 : vector<1x10xf32> to vector<1x1x10xf32>
    tpu.vector_store %arg14[%c1_234, %c0_235, %c0_236], %285 {strides = array<i32>} : memref<4x1x10xf32, #tpu.memory_space<vmem>>, vector<1x1x10xf32>,
    %c2_237 = arith.constant 2 : index
    %c0_238 = arith.constant 0 : index
    %c0_239 = arith.constant 0 : index
    %286 = vector.load %arg1[%c2_237, %c0_238, %c0_239] : memref<4x32x96xbf16, #tpu.memory_space<vmem>>, vector<1x32x96xbf16>
    %287 = vector.shape_cast %286 : vector<1x32x96xbf16> to vector<32x96xbf16>
    %c0_240 = arith.constant 0 : index
    %c0_241 = arith.constant 0 : index
    %288 = vector.load %arg4[%c0_240, %c0_241] : memref<1x256xf32, #tpu.memory_space<vmem>>, vector<1x256xf32>
    %c0_242 = arith.constant 0 : index
    %c0_243 = arith.constant 0 : index
    %c0_244 = arith.constant 0 : index
    %289 = vector.load %arg2[%c0_242, %c0_243, %c0_244] : memref<6x16x32xbf16, #tpu.memory_space<vmem>>, vector<1x16x32xbf16>
    %290 = vector.shape_cast %289 : vector<1x16x32xbf16> to vector<16x32xbf16>
    %cst_245 = arith.constant dense<0.000000e+00> : vector<16x96xf32>
    %291 = tpu.matmul %290, %287, %cst_245 {dimension_numbers = #tpu.dot_dimension_numbers<[1], [0], [0], [1], [0, 0, 1, 1], [], []>} : vector<16x32xbf16>, vector<32x96xbf16>, vector<16x96xf32> -> vector<16x96xf32>
    %c0_246 = arith.constant 0 : index
    %c0_247 = arith.constant 0 : index
    %c0_248 = arith.constant 0 : index
    %292 = vector.load %arg3[%c0_246, %c0_247, %c0_248] : memref<3x96x512xbf16, #tpu.memory_space<vmem>>, vector<1x96x512xbf16>
    %293 = vector.shape_cast %292 : vector<1x96x512xbf16> to vector<96x512xbf16>
    %294 = arith.truncf %291 : vector<16x96xf32> to vector<16x96xbf16>
    %cst_249 = arith.constant dense<0.000000e+00> : vector<16x512xf32>
    %295 = tpu.matmul %294, %293, %cst_249 {dimension_numbers = #tpu.dot_dimension_numbers<[1], [0], [0], [1], [0, 0, 1, 1], [], []>} : vector<16x96xbf16>, vector<96x512xbf16>, vector<16x512xf32> -> vector<16x512xf32>
    %c2_250 = arith.constant 2 : index
    %c0_251 = arith.constant 0 : index
    %c0_252 = arith.constant 0 : index
    %296 = vector.load %arg2[%c2_250, %c0_251, %c0_252] : memref<6x16x32xbf16, #tpu.memory_space<vmem>>, vector<1x16x32xbf16>
    %297 = vector.shape_cast %296 : vector<1x16x32xbf16> to vector<16x32xbf16>
    %cst_253 = arith.constant dense<0.000000e+00> : vector<16x96xf32>
    %298 = tpu.matmul %297, %287, %cst_253 {dimension_numbers = #tpu.dot_dimension_numbers<[1], [0], [0], [1], [0, 0, 1, 1], [], []>} : vector<16x32xbf16>, vector<32x96xbf16>, vector<16x96xf32> -> vector<16x96xf32>
    %c1_254 = arith.constant 1 : index
    %c0_255 = arith.constant 0 : index
    %c0_256 = arith.constant 0 : index
    %299 = vector.load %arg3[%c1_254, %c0_255, %c0_256] : memref<3x96x512xbf16, #tpu.memory_space<vmem>>, vector<1x96x512xbf16>
    %300 = vector.shape_cast %299 : vector<1x96x512xbf16> to vector<96x512xbf16>
    %301 = arith.truncf %298 : vector<16x96xf32> to vector<16x96xbf16>
    %cst_257 = arith.constant dense<0.000000e+00> : vector<16x512xf32>
    %302 = tpu.matmul %301, %300, %cst_257 {dimension_numbers = #tpu.dot_dimension_numbers<[1], [0], [0], [1], [0, 0, 1, 1], [], []>} : vector<16x96xbf16>, vector<96x512xbf16>, vector<16x512xf32> -> vector<16x512xf32>
    %303 = arith.addf %295, %302 : vector<16x512xf32>
    %c4_258 = arith.constant 4 : index
    %c0_259 = arith.constant 0 : index
    %c0_260 = arith.constant 0 : index
    %304 = vector.load %arg2[%c4_258, %c0_259, %c0_260] : memref<6x16x32xbf16, #tpu.memory_space<vmem>>, vector<1x16x32xbf16>
    %305 = vector.shape_cast %304 : vector<1x16x32xbf16> to vector<16x32xbf16>
    %cst_261 = arith.constant dense<0.000000e+00> : vector<16x96xf32>
    %306 = tpu.matmul %305, %287, %cst_261 {dimension_numbers = #tpu.dot_dimension_numbers<[1], [0], [0], [1], [0, 0, 1, 1], [], []>} : vector<16x32xbf16>, vector<32x96xbf16>, vector<16x96xf32> -> vector<16x96xf32>
    %c2_262 = arith.constant 2 : index
    %c0_263 = arith.constant 0 : index
    %c0_264 = arith.constant 0 : index
    %307 = vector.load %arg3[%c2_262, %c0_263, %c0_264] : memref<3x96x512xbf16, #tpu.memory_space<vmem>>, vector<1x96x512xbf16>
    %308 = vector.shape_cast %307 : vector<1x96x512xbf16> to vector<96x512xbf16>
    %309 = arith.truncf %306 : vector<16x96xf32> to vector<16x96xbf16>
    %cst_265 = arith.constant dense<0.000000e+00> : vector<16x512xf32>
    %310 = tpu.matmul %309, %308, %cst_265 {dimension_numbers = #tpu.dot_dimension_numbers<[1], [0], [0], [1], [0, 0, 1, 1], [], []>} : vector<16x96xbf16>, vector<96x512xbf16>, vector<16x512xf32> -> vector<16x512xf32>
    %311 = arith.addf %303, %310 : vector<16x512xf32>
    %312 = vector.extract_strided_slice %311 {offsets = [0, 0], sizes = [16, 256], strides = [1, 1]} : vector<16x512xf32> to vector<16x256xf32>
    %313 = vector.extract_strided_slice %311 {offsets = [0, 256], sizes = [16, 256], strides = [1, 1]} : vector<16x512xf32> to vector<16x256xf32>
    %314 = arith.maximumf %312, %313 : vector<16x256xf32>
    %c1_266 = arith.constant 1 : index
    %c0_267 = arith.constant 0 : index
    %c0_268 = arith.constant 0 : index
    %315 = vector.load %arg2[%c1_266, %c0_267, %c0_268] : memref<6x16x32xbf16, #tpu.memory_space<vmem>>, vector<1x16x32xbf16>
    %316 = vector.shape_cast %315 : vector<1x16x32xbf16> to vector<16x32xbf16>
    %cst_269 = arith.constant dense<0.000000e+00> : vector<16x96xf32>
    %317 = tpu.matmul %316, %287, %cst_269 {dimension_numbers = #tpu.dot_dimension_numbers<[1], [0], [0], [1], [0, 0, 1, 1], [], []>} : vector<16x32xbf16>, vector<32x96xbf16>, vector<16x96xf32> -> vector<16x96xf32>
    %c0_270 = arith.constant 0 : index
    %c0_271 = arith.constant 0 : index
    %c0_272 = arith.constant 0 : index
    %318 = vector.load %arg3[%c0_270, %c0_271, %c0_272] : memref<3x96x512xbf16, #tpu.memory_space<vmem>>, vector<1x96x512xbf16>
    %319 = vector.shape_cast %318 : vector<1x96x512xbf16> to vector<96x512xbf16>
    %320 = arith.truncf %317 : vector<16x96xf32> to vector<16x96xbf16>
    %cst_273 = arith.constant dense<0.000000e+00> : vector<16x512xf32>
    %321 = tpu.matmul %320, %319, %cst_273 {dimension_numbers = #tpu.dot_dimension_numbers<[1], [0], [0], [1], [0, 0, 1, 1], [], []>} : vector<16x96xbf16>, vector<96x512xbf16>, vector<16x512xf32> -> vector<16x512xf32>
    %c3_274 = arith.constant 3 : index
    %c0_275 = arith.constant 0 : index
    %c0_276 = arith.constant 0 : index
    %322 = vector.load %arg2[%c3_274, %c0_275, %c0_276] : memref<6x16x32xbf16, #tpu.memory_space<vmem>>, vector<1x16x32xbf16>
    %323 = vector.shape_cast %322 : vector<1x16x32xbf16> to vector<16x32xbf16>
    %cst_277 = arith.constant dense<0.000000e+00> : vector<16x96xf32>
    %324 = tpu.matmul %323, %287, %cst_277 {dimension_numbers = #tpu.dot_dimension_numbers<[1], [0], [0], [1], [0, 0, 1, 1], [], []>} : vector<16x32xbf16>, vector<32x96xbf16>, vector<16x96xf32> -> vector<16x96xf32>
    %c1_278 = arith.constant 1 : index
    %c0_279 = arith.constant 0 : index
    %c0_280 = arith.constant 0 : index
    %325 = vector.load %arg3[%c1_278, %c0_279, %c0_280] : memref<3x96x512xbf16, #tpu.memory_space<vmem>>, vector<1x96x512xbf16>
    %326 = vector.shape_cast %325 : vector<1x96x512xbf16> to vector<96x512xbf16>
    %327 = arith.truncf %324 : vector<16x96xf32> to vector<16x96xbf16>
    %cst_281 = arith.constant dense<0.000000e+00> : vector<16x512xf32>
    %328 = tpu.matmul %327, %326, %cst_281 {dimension_numbers = #tpu.dot_dimension_numbers<[1], [0], [0], [1], [0, 0, 1, 1], [], []>} : vector<16x96xbf16>, vector<96x512xbf16>, vector<16x512xf32> -> vector<16x512xf32>
    %329 = arith.addf %321, %328 : vector<16x512xf32>
    %c5_282 = arith.constant 5 : index
    %c0_283 = arith.constant 0 : index
    %c0_284 = arith.constant 0 : index
    %330 = vector.load %arg2[%c5_282, %c0_283, %c0_284] : memref<6x16x32xbf16, #tpu.memory_space<vmem>>, vector<1x16x32xbf16>
    %331 = vector.shape_cast %330 : vector<1x16x32xbf16> to vector<16x32xbf16>
    %cst_285 = arith.constant dense<0.000000e+00> : vector<16x96xf32>
    %332 = tpu.matmul %331, %287, %cst_285 {dimension_numbers = #tpu.dot_dimension_numbers<[1], [0], [0], [1], [0, 0, 1, 1], [], []>} : vector<16x32xbf16>, vector<32x96xbf16>, vector<16x96xf32> -> vector<16x96xf32>
    %c2_286 = arith.constant 2 : index
    %c0_287 = arith.constant 0 : index
    %c0_288 = arith.constant 0 : index
    %333 = vector.load %arg3[%c2_286, %c0_287, %c0_288] : memref<3x96x512xbf16, #tpu.memory_space<vmem>>, vector<1x96x512xbf16>
    %334 = vector.shape_cast %333 : vector<1x96x512xbf16> to vector<96x512xbf16>
    %335 = arith.truncf %332 : vector<16x96xf32> to vector<16x96xbf16>
    %cst_289 = arith.constant dense<0.000000e+00> : vector<16x512xf32>
    %336 = tpu.matmul %335, %334, %cst_289 {dimension_numbers = #tpu.dot_dimension_numbers<[1], [0], [0], [1], [0, 0, 1, 1], [], []>} : vector<16x96xbf16>, vector<96x512xbf16>, vector<16x512xf32> -> vector<16x512xf32>
    %337 = arith.addf %329, %336 : vector<16x512xf32>
    %338 = vector.extract_strided_slice %337 {offsets = [0, 0], sizes = [16, 256], strides = [1, 1]} : vector<16x512xf32> to vector<16x256xf32>
    %339 = vector.extract_strided_slice %337 {offsets = [0, 256], sizes = [16, 256], strides = [1, 1]} : vector<16x512xf32> to vector<16x256xf32>
    %340 = arith.maximumf %338, %339 : vector<16x256xf32>
    %341 = arith.maximumf %314, %340 : vector<16x256xf32>
    %342 = vector.broadcast %288 : vector<1x256xf32> to vector<16x256xf32>
    %343 = arith.addf %341, %342 : vector<16x256xf32>
    %344 = math.tanh %343 : vector<16x256xf32>
    %c0_290 = arith.constant 0 : index
    %c0_291 = arith.constant 0 : index
    %345 = vector.load %arg7[%c0_290, %c0_291] : memref<1x64xf32, #tpu.memory_space<vmem>>, vector<1x64xf32>
    %c0_292 = arith.constant 0 : index
    %c0_293 = arith.constant 0 : index
    %c0_294 = arith.constant 0 : index
    %346 = vector.load %arg5[%c0_292, %c0_293, %c0_294] : memref<6x8x16xbf16, #tpu.memory_space<vmem>>, vector<1x8x16xbf16>
    %347 = vector.shape_cast %346 : vector<1x8x16xbf16> to vector<8x16xbf16>
    %348 = arith.truncf %344 : vector<16x256xf32> to vector<16x256xbf16>
    %cst_295 = arith.constant dense<0.000000e+00> : vector<8x256xf32>
    %349 = tpu.matmul %347, %348, %cst_295 {dimension_numbers = #tpu.dot_dimension_numbers<[1], [0], [0], [1], [0, 0, 1, 1], [], []>} : vector<8x16xbf16>, vector<16x256xbf16>, vector<8x256xf32> -> vector<8x256xf32>
    %c0_296 = arith.constant 0 : index
    %c0_297 = arith.constant 0 : index
    %c0_298 = arith.constant 0 : index
    %350 = vector.load %arg6[%c0_296, %c0_297, %c0_298] : memref<3x256x128xbf16, #tpu.memory_space<vmem>>, vector<1x256x128xbf16>
    %351 = vector.shape_cast %350 : vector<1x256x128xbf16> to vector<256x128xbf16>
    %352 = arith.truncf %349 : vector<8x256xf32> to vector<8x256xbf16>
    %cst_299 = arith.constant dense<0.000000e+00> : vector<8x128xf32>
    %353 = tpu.matmul %352, %351, %cst_299 {dimension_numbers = #tpu.dot_dimension_numbers<[1], [0], [0], [1], [0, 0, 1, 1], [], []>} : vector<8x256xbf16>, vector<256x128xbf16>, vector<8x128xf32> -> vector<8x128xf32>
    %c2_300 = arith.constant 2 : index
    %c0_301 = arith.constant 0 : index
    %c0_302 = arith.constant 0 : index
    %354 = vector.load %arg5[%c2_300, %c0_301, %c0_302] : memref<6x8x16xbf16, #tpu.memory_space<vmem>>, vector<1x8x16xbf16>
    %355 = vector.shape_cast %354 : vector<1x8x16xbf16> to vector<8x16xbf16>
    %356 = arith.truncf %344 : vector<16x256xf32> to vector<16x256xbf16>
    %cst_303 = arith.constant dense<0.000000e+00> : vector<8x256xf32>
    %357 = tpu.matmul %355, %356, %cst_303 {dimension_numbers = #tpu.dot_dimension_numbers<[1], [0], [0], [1], [0, 0, 1, 1], [], []>} : vector<8x16xbf16>, vector<16x256xbf16>, vector<8x256xf32> -> vector<8x256xf32>
    %c1_304 = arith.constant 1 : index
    %c0_305 = arith.constant 0 : index
    %c0_306 = arith.constant 0 : index
    %358 = vector.load %arg6[%c1_304, %c0_305, %c0_306] : memref<3x256x128xbf16, #tpu.memory_space<vmem>>, vector<1x256x128xbf16>
    %359 = vector.shape_cast %358 : vector<1x256x128xbf16> to vector<256x128xbf16>
    %360 = arith.truncf %357 : vector<8x256xf32> to vector<8x256xbf16>
    %cst_307 = arith.constant dense<0.000000e+00> : vector<8x128xf32>
    %361 = tpu.matmul %360, %359, %cst_307 {dimension_numbers = #tpu.dot_dimension_numbers<[1], [0], [0], [1], [0, 0, 1, 1], [], []>} : vector<8x256xbf16>, vector<256x128xbf16>, vector<8x128xf32> -> vector<8x128xf32>
    %362 = arith.addf %353, %361 : vector<8x128xf32>
    %c4_308 = arith.constant 4 : index
    %c0_309 = arith.constant 0 : index
    %c0_310 = arith.constant 0 : index
    %363 = vector.load %arg5[%c4_308, %c0_309, %c0_310] : memref<6x8x16xbf16, #tpu.memory_space<vmem>>, vector<1x8x16xbf16>
    %364 = vector.shape_cast %363 : vector<1x8x16xbf16> to vector<8x16xbf16>
    %365 = arith.truncf %344 : vector<16x256xf32> to vector<16x256xbf16>
    %cst_311 = arith.constant dense<0.000000e+00> : vector<8x256xf32>
    %366 = tpu.matmul %364, %365, %cst_311 {dimension_numbers = #tpu.dot_dimension_numbers<[1], [0], [0], [1], [0, 0, 1, 1], [], []>} : vector<8x16xbf16>, vector<16x256xbf16>, vector<8x256xf32> -> vector<8x256xf32>
    %c2_312 = arith.constant 2 : index
    %c0_313 = arith.constant 0 : index
    %c0_314 = arith.constant 0 : index
    %367 = vector.load %arg6[%c2_312, %c0_313, %c0_314] : memref<3x256x128xbf16, #tpu.memory_space<vmem>>, vector<1x256x128xbf16>
    %368 = vector.shape_cast %367 : vector<1x256x128xbf16> to vector<256x128xbf16>
    %369 = arith.truncf %366 : vector<8x256xf32> to vector<8x256xbf16>
    %cst_315 = arith.constant dense<0.000000e+00> : vector<8x128xf32>
    %370 = tpu.matmul %369, %368, %cst_315 {dimension_numbers = #tpu.dot_dimension_numbers<[1], [0], [0], [1], [0, 0, 1, 1], [], []>} : vector<8x256xbf16>, vector<256x128xbf16>, vector<8x128xf32> -> vector<8x128xf32>
    %371 = arith.addf %362, %370 : vector<8x128xf32>
    %372 = vector.extract_strided_slice %371 {offsets = [0, 0], sizes = [8, 64], strides = [1, 1]} : vector<8x128xf32> to vector<8x64xf32>
    %373 = vector.extract_strided_slice %371 {offsets = [0, 64], sizes = [8, 64], strides = [1, 1]} : vector<8x128xf32> to vector<8x64xf32>
    %374 = arith.maximumf %372, %373 : vector<8x64xf32>
    %c1_316 = arith.constant 1 : index
    %c0_317 = arith.constant 0 : index
    %c0_318 = arith.constant 0 : index
    %375 = vector.load %arg5[%c1_316, %c0_317, %c0_318] : memref<6x8x16xbf16, #tpu.memory_space<vmem>>, vector<1x8x16xbf16>
    %376 = vector.shape_cast %375 : vector<1x8x16xbf16> to vector<8x16xbf16>
    %377 = arith.truncf %344 : vector<16x256xf32> to vector<16x256xbf16>
    %cst_319 = arith.constant dense<0.000000e+00> : vector<8x256xf32>
    %378 = tpu.matmul %376, %377, %cst_319 {dimension_numbers = #tpu.dot_dimension_numbers<[1], [0], [0], [1], [0, 0, 1, 1], [], []>} : vector<8x16xbf16>, vector<16x256xbf16>, vector<8x256xf32> -> vector<8x256xf32>
    %c0_320 = arith.constant 0 : index
    %c0_321 = arith.constant 0 : index
    %c0_322 = arith.constant 0 : index
    %379 = vector.load %arg6[%c0_320, %c0_321, %c0_322] : memref<3x256x128xbf16, #tpu.memory_space<vmem>>, vector<1x256x128xbf16>
    %380 = vector.shape_cast %379 : vector<1x256x128xbf16> to vector<256x128xbf16>
    %381 = arith.truncf %378 : vector<8x256xf32> to vector<8x256xbf16>
    %cst_323 = arith.constant dense<0.000000e+00> : vector<8x128xf32>
    %382 = tpu.matmul %381, %380, %cst_323 {dimension_numbers = #tpu.dot_dimension_numbers<[1], [0], [0], [1], [0, 0, 1, 1], [], []>} : vector<8x256xbf16>, vector<256x128xbf16>, vector<8x128xf32> -> vector<8x128xf32>
    %c3_324 = arith.constant 3 : index
    %c0_325 = arith.constant 0 : index
    %c0_326 = arith.constant 0 : index
    %383 = vector.load %arg5[%c3_324, %c0_325, %c0_326] : memref<6x8x16xbf16, #tpu.memory_space<vmem>>, vector<1x8x16xbf16>
    %384 = vector.shape_cast %383 : vector<1x8x16xbf16> to vector<8x16xbf16>
    %385 = arith.truncf %344 : vector<16x256xf32> to vector<16x256xbf16>
    %cst_327 = arith.constant dense<0.000000e+00> : vector<8x256xf32>
    %386 = tpu.matmul %384, %385, %cst_327 {dimension_numbers = #tpu.dot_dimension_numbers<[1], [0], [0], [1], [0, 0, 1, 1], [], []>} : vector<8x16xbf16>, vector<16x256xbf16>, vector<8x256xf32> -> vector<8x256xf32>
    %c1_328 = arith.constant 1 : index
    %c0_329 = arith.constant 0 : index
    %c0_330 = arith.constant 0 : index
    %387 = vector.load %arg6[%c1_328, %c0_329, %c0_330] : memref<3x256x128xbf16, #tpu.memory_space<vmem>>, vector<1x256x128xbf16>
    %388 = vector.shape_cast %387 : vector<1x256x128xbf16> to vector<256x128xbf16>
    %389 = arith.truncf %386 : vector<8x256xf32> to vector<8x256xbf16>
    %cst_331 = arith.constant dense<0.000000e+00> : vector<8x128xf32>
    %390 = tpu.matmul %389, %388, %cst_331 {dimension_numbers = #tpu.dot_dimension_numbers<[1], [0], [0], [1], [0, 0, 1, 1], [], []>} : vector<8x256xbf16>, vector<256x128xbf16>, vector<8x128xf32> -> vector<8x128xf32>
    %391 = arith.addf %382, %390 : vector<8x128xf32>
    %c5_332 = arith.constant 5 : index
    %c0_333 = arith.constant 0 : index
    %c0_334 = arith.constant 0 : index
    %392 = vector.load %arg5[%c5_332, %c0_333, %c0_334] : memref<6x8x16xbf16, #tpu.memory_space<vmem>>, vector<1x8x16xbf16>
    %393 = vector.shape_cast %392 : vector<1x8x16xbf16> to vector<8x16xbf16>
    %394 = arith.truncf %344 : vector<16x256xf32> to vector<16x256xbf16>
    %cst_335 = arith.constant dense<0.000000e+00> : vector<8x256xf32>
    %395 = tpu.matmul %393, %394, %cst_335 {dimension_numbers = #tpu.dot_dimension_numbers<[1], [0], [0], [1], [0, 0, 1, 1], [], []>} : vector<8x16xbf16>, vector<16x256xbf16>, vector<8x256xf32> -> vector<8x256xf32>
    %c2_336 = arith.constant 2 : index
    %c0_337 = arith.constant 0 : index
    %c0_338 = arith.constant 0 : index
    %396 = vector.load %arg6[%c2_336, %c0_337, %c0_338] : memref<3x256x128xbf16, #tpu.memory_space<vmem>>, vector<1x256x128xbf16>
    %397 = vector.shape_cast %396 : vector<1x256x128xbf16> to vector<256x128xbf16>
    %398 = arith.truncf %395 : vector<8x256xf32> to vector<8x256xbf16>
    %cst_339 = arith.constant dense<0.000000e+00> : vector<8x128xf32>
    %399 = tpu.matmul %398, %397, %cst_339 {dimension_numbers = #tpu.dot_dimension_numbers<[1], [0], [0], [1], [0, 0, 1, 1], [], []>} : vector<8x256xbf16>, vector<256x128xbf16>, vector<8x128xf32> -> vector<8x128xf32>
    %400 = arith.addf %391, %399 : vector<8x128xf32>
    %401 = vector.extract_strided_slice %400 {offsets = [0, 0], sizes = [8, 64], strides = [1, 1]} : vector<8x128xf32> to vector<8x64xf32>
    %402 = vector.extract_strided_slice %400 {offsets = [0, 64], sizes = [8, 64], strides = [1, 1]} : vector<8x128xf32> to vector<8x64xf32>
    %403 = arith.maximumf %401, %402 : vector<8x64xf32>
    %404 = arith.maximumf %374, %403 : vector<8x64xf32>
    %405 = vector.broadcast %345 : vector<1x64xf32> to vector<8x64xf32>
    %406 = arith.addf %404, %405 : vector<8x64xf32>
    %407 = math.tanh %406 : vector<8x64xf32>
    %c0_340 = arith.constant 0 : index
    %c0_341 = arith.constant 0 : index
    %408 = vector.load %arg8[%c0_340, %c0_341] : memref<64x256xbf16, #tpu.memory_space<vmem>>, vector<64x256xbf16>
    %409 = arith.truncf %407 : vector<8x64xf32> to vector<8x64xbf16>
    %cst_342 = arith.constant dense<0.000000e+00> : vector<8x256xf32>
    %410 = tpu.matmul %409, %408, %cst_342 {dimension_numbers = #tpu.dot_dimension_numbers<[1], [0], [0], [1], [0, 0, 1, 1], [], []>} : vector<8x64xbf16>, vector<64x256xbf16>, vector<8x256xf32> -> vector<8x256xf32>
    %c0_343 = arith.constant 0 : index
    %c0_344 = arith.constant 0 : index
    %411 = vector.load %arg9[%c0_343, %c0_344] : memref<8x256xf32, #tpu.memory_space<vmem>>, vector<8x256xf32>
    %412 = arith.mulf %410, %411 : vector<8x256xf32>
    %c0_345 = arith.constant 0 : index
    %c0_346 = arith.constant 0 : index
    %413 = vector.load %arg10[%c0_345, %c0_346] : memref<256x32xbf16, #tpu.memory_space<vmem>>, vector<256x32xbf16>
    %414 = arith.truncf %412 : vector<8x256xf32> to vector<8x256xbf16>
    %cst_347 = arith.constant dense<0.000000e+00> : vector<8x32xf32>
    %415 = tpu.matmul %414, %413, %cst_347 {dimension_numbers = #tpu.dot_dimension_numbers<[1], [0], [0], [1], [0, 0, 1, 1], [], []>} : vector<8x256xbf16>, vector<256x32xbf16>, vector<8x32xf32> -> vector<8x32xf32>
    %cst_348 = arith.constant dense<0.000000e+00> : vector<32xf32>
    %416 = vector.multi_reduction <add>, %415, %cst_348 [0] : vector<8x32xf32> to vector<32xf32>
    %417 = vector.shape_cast %416 : vector<32xf32> to vector<1x32xf32>
    %c0_349 = arith.constant 0 : index
    %c0_350 = arith.constant 0 : index
    %418 = vector.load %arg11[%c0_349, %c0_350] : memref<1x32xf32, #tpu.memory_space<vmem>>, vector<1x32xf32>
    %419 = arith.addf %417, %418 : vector<1x32xf32>
    %420 = math.tanh %419 : vector<1x32xf32>
    %c0_351 = arith.constant 0 : index
    %c0_352 = arith.constant 0 : index
    %421 = vector.load %arg12[%c0_351, %c0_352] : memref<32x10xbf16, #tpu.memory_space<vmem>>, vector<32x10xbf16>
    %422 = arith.truncf %420 : vector<1x32xf32> to vector<1x32xbf16>
    %cst_353 = arith.constant dense<0.000000e+00> : vector<1x10xf32>
    %423 = tpu.matmul %422, %421, %cst_353 {dimension_numbers = #tpu.dot_dimension_numbers<[1], [0], [0], [1], [0, 0, 1, 1], [], []>} : vector<1x32xbf16>, vector<32x10xbf16>, vector<1x10xf32> -> vector<1x10xf32>
    %c0_354 = arith.constant 0 : index
    %c0_355 = arith.constant 0 : index
    %424 = vector.load %arg13[%c0_354, %c0_355] : memref<1x10xf32, #tpu.memory_space<vmem>>, vector<1x10xf32>
    %425 = arith.addf %423, %424 : vector<1x10xf32>
    %c2_356 = arith.constant 2 : index
    %c0_357 = arith.constant 0 : index
    %c0_358 = arith.constant 0 : index
    %426 = vector.load %arg14[%c2_356, %c0_357, %c0_358] : memref<4x1x10xf32, #tpu.memory_space<vmem>>, vector<1x1x10xf32>
    %427 = vector.shape_cast %426 : vector<1x1x10xf32> to vector<1x10xf32>
    %428 = vector.shape_cast %425 : vector<1x10xf32> to vector<1x1x10xf32>
    tpu.vector_store %arg14[%c2_356, %c0_357, %c0_358], %428 {strides = array<i32>} : memref<4x1x10xf32, #tpu.memory_space<vmem>>, vector<1x1x10xf32>,
    %c3_359 = arith.constant 3 : index
    %c0_360 = arith.constant 0 : index
    %c0_361 = arith.constant 0 : index
    %429 = vector.load %arg1[%c3_359, %c0_360, %c0_361] : memref<4x32x96xbf16, #tpu.memory_space<vmem>>, vector<1x32x96xbf16>
    %430 = vector.shape_cast %429 : vector<1x32x96xbf16> to vector<32x96xbf16>
    %c0_362 = arith.constant 0 : index
    %c0_363 = arith.constant 0 : index
    %431 = vector.load %arg4[%c0_362, %c0_363] : memref<1x256xf32, #tpu.memory_space<vmem>>, vector<1x256xf32>
    %c0_364 = arith.constant 0 : index
    %c0_365 = arith.constant 0 : index
    %c0_366 = arith.constant 0 : index
    %432 = vector.load %arg2[%c0_364, %c0_365, %c0_366] : memref<6x16x32xbf16, #tpu.memory_space<vmem>>, vector<1x16x32xbf16>
    %433 = vector.shape_cast %432 : vector<1x16x32xbf16> to vector<16x32xbf16>
    %cst_367 = arith.constant dense<0.000000e+00> : vector<16x96xf32>
    %434 = tpu.matmul %433, %430, %cst_367 {dimension_numbers = #tpu.dot_dimension_numbers<[1], [0], [0], [1], [0, 0, 1, 1], [], []>} : vector<16x32xbf16>, vector<32x96xbf16>, vector<16x96xf32> -> vector<16x96xf32>
    %c0_368 = arith.constant 0 : index
    %c0_369 = arith.constant 0 : index
    %c0_370 = arith.constant 0 : index
    %435 = vector.load %arg3[%c0_368, %c0_369, %c0_370] : memref<3x96x512xbf16, #tpu.memory_space<vmem>>, vector<1x96x512xbf16>
    %436 = vector.shape_cast %435 : vector<1x96x512xbf16> to vector<96x512xbf16>
    %437 = arith.truncf %434 : vector<16x96xf32> to vector<16x96xbf16>
    %cst_371 = arith.constant dense<0.000000e+00> : vector<16x512xf32>
    %438 = tpu.matmul %437, %436, %cst_371 {dimension_numbers = #tpu.dot_dimension_numbers<[1], [0], [0], [1], [0, 0, 1, 1], [], []>} : vector<16x96xbf16>, vector<96x512xbf16>, vector<16x512xf32> -> vector<16x512xf32>
    %c2_372 = arith.constant 2 : index
    %c0_373 = arith.constant 0 : index
    %c0_374 = arith.constant 0 : index
    %439 = vector.load %arg2[%c2_372, %c0_373, %c0_374] : memref<6x16x32xbf16, #tpu.memory_space<vmem>>, vector<1x16x32xbf16>
    %440 = vector.shape_cast %439 : vector<1x16x32xbf16> to vector<16x32xbf16>
    %cst_375 = arith.constant dense<0.000000e+00> : vector<16x96xf32>
    %441 = tpu.matmul %440, %430, %cst_375 {dimension_numbers = #tpu.dot_dimension_numbers<[1], [0], [0], [1], [0, 0, 1, 1], [], []>} : vector<16x32xbf16>, vector<32x96xbf16>, vector<16x96xf32> -> vector<16x96xf32>
    %c1_376 = arith.constant 1 : index
    %c0_377 = arith.constant 0 : index
    %c0_378 = arith.constant 0 : index
    %442 = vector.load %arg3[%c1_376, %c0_377, %c0_378] : memref<3x96x512xbf16, #tpu.memory_space<vmem>>, vector<1x96x512xbf16>
    %443 = vector.shape_cast %442 : vector<1x96x512xbf16> to vector<96x512xbf16>
    %444 = arith.truncf %441 : vector<16x96xf32> to vector<16x96xbf16>
    %cst_379 = arith.constant dense<0.000000e+00> : vector<16x512xf32>
    %445 = tpu.matmul %444, %443, %cst_379 {dimension_numbers = #tpu.dot_dimension_numbers<[1], [0], [0], [1], [0, 0, 1, 1], [], []>} : vector<16x96xbf16>, vector<96x512xbf16>, vector<16x512xf32> -> vector<16x512xf32>
    %446 = arith.addf %438, %445 : vector<16x512xf32>
    %c4_380 = arith.constant 4 : index
    %c0_381 = arith.constant 0 : index
    %c0_382 = arith.constant 0 : index
    %447 = vector.load %arg2[%c4_380, %c0_381, %c0_382] : memref<6x16x32xbf16, #tpu.memory_space<vmem>>, vector<1x16x32xbf16>
    %448 = vector.shape_cast %447 : vector<1x16x32xbf16> to vector<16x32xbf16>
    %cst_383 = arith.constant dense<0.000000e+00> : vector<16x96xf32>
    %449 = tpu.matmul %448, %430, %cst_383 {dimension_numbers = #tpu.dot_dimension_numbers<[1], [0], [0], [1], [0, 0, 1, 1], [], []>} : vector<16x32xbf16>, vector<32x96xbf16>, vector<16x96xf32> -> vector<16x96xf32>
    %c2_384 = arith.constant 2 : index
    %c0_385 = arith.constant 0 : index
    %c0_386 = arith.constant 0 : index
    %450 = vector.load %arg3[%c2_384, %c0_385, %c0_386] : memref<3x96x512xbf16, #tpu.memory_space<vmem>>, vector<1x96x512xbf16>
    %451 = vector.shape_cast %450 : vector<1x96x512xbf16> to vector<96x512xbf16>
    %452 = arith.truncf %449 : vector<16x96xf32> to vector<16x96xbf16>
    %cst_387 = arith.constant dense<0.000000e+00> : vector<16x512xf32>
    %453 = tpu.matmul %452, %451, %cst_387 {dimension_numbers = #tpu.dot_dimension_numbers<[1], [0], [0], [1], [0, 0, 1, 1], [], []>} : vector<16x96xbf16>, vector<96x512xbf16>, vector<16x512xf32> -> vector<16x512xf32>
    %454 = arith.addf %446, %453 : vector<16x512xf32>
    %455 = vector.extract_strided_slice %454 {offsets = [0, 0], sizes = [16, 256], strides = [1, 1]} : vector<16x512xf32> to vector<16x256xf32>
    %456 = vector.extract_strided_slice %454 {offsets = [0, 256], sizes = [16, 256], strides = [1, 1]} : vector<16x512xf32> to vector<16x256xf32>
    %457 = arith.maximumf %455, %456 : vector<16x256xf32>
    %c1_388 = arith.constant 1 : index
    %c0_389 = arith.constant 0 : index
    %c0_390 = arith.constant 0 : index
    %458 = vector.load %arg2[%c1_388, %c0_389, %c0_390] : memref<6x16x32xbf16, #tpu.memory_space<vmem>>, vector<1x16x32xbf16>
    %459 = vector.shape_cast %458 : vector<1x16x32xbf16> to vector<16x32xbf16>
    %cst_391 = arith.constant dense<0.000000e+00> : vector<16x96xf32>
    %460 = tpu.matmul %459, %430, %cst_391 {dimension_numbers = #tpu.dot_dimension_numbers<[1], [0], [0], [1], [0, 0, 1, 1], [], []>} : vector<16x32xbf16>, vector<32x96xbf16>, vector<16x96xf32> -> vector<16x96xf32>
    %c0_392 = arith.constant 0 : index
    %c0_393 = arith.constant 0 : index
    %c0_394 = arith.constant 0 : index
    %461 = vector.load %arg3[%c0_392, %c0_393, %c0_394] : memref<3x96x512xbf16, #tpu.memory_space<vmem>>, vector<1x96x512xbf16>
    %462 = vector.shape_cast %461 : vector<1x96x512xbf16> to vector<96x512xbf16>
    %463 = arith.truncf %460 : vector<16x96xf32> to vector<16x96xbf16>
    %cst_395 = arith.constant dense<0.000000e+00> : vector<16x512xf32>
    %464 = tpu.matmul %463, %462, %cst_395 {dimension_numbers = #tpu.dot_dimension_numbers<[1], [0], [0], [1], [0, 0, 1, 1], [], []>} : vector<16x96xbf16>, vector<96x512xbf16>, vector<16x512xf32> -> vector<16x512xf32>
    %c3_396 = arith.constant 3 : index
    %c0_397 = arith.constant 0 : index
    %c0_398 = arith.constant 0 : index
    %465 = vector.load %arg2[%c3_396, %c0_397, %c0_398] : memref<6x16x32xbf16, #tpu.memory_space<vmem>>, vector<1x16x32xbf16>
    %466 = vector.shape_cast %465 : vector<1x16x32xbf16> to vector<16x32xbf16>
    %cst_399 = arith.constant dense<0.000000e+00> : vector<16x96xf32>
    %467 = tpu.matmul %466, %430, %cst_399 {dimension_numbers = #tpu.dot_dimension_numbers<[1], [0], [0], [1], [0, 0, 1, 1], [], []>} : vector<16x32xbf16>, vector<32x96xbf16>, vector<16x96xf32> -> vector<16x96xf32>
    %c1_400 = arith.constant 1 : index
    %c0_401 = arith.constant 0 : index
    %c0_402 = arith.constant 0 : index
    %468 = vector.load %arg3[%c1_400, %c0_401, %c0_402] : memref<3x96x512xbf16, #tpu.memory_space<vmem>>, vector<1x96x512xbf16>
    %469 = vector.shape_cast %468 : vector<1x96x512xbf16> to vector<96x512xbf16>
    %470 = arith.truncf %467 : vector<16x96xf32> to vector<16x96xbf16>
    %cst_403 = arith.constant dense<0.000000e+00> : vector<16x512xf32>
    %471 = tpu.matmul %470, %469, %cst_403 {dimension_numbers = #tpu.dot_dimension_numbers<[1], [0], [0], [1], [0, 0, 1, 1], [], []>} : vector<16x96xbf16>, vector<96x512xbf16>, vector<16x512xf32> -> vector<16x512xf32>
    %472 = arith.addf %464, %471 : vector<16x512xf32>
    %c5_404 = arith.constant 5 : index
    %c0_405 = arith.constant 0 : index
    %c0_406 = arith.constant 0 : index
    %473 = vector.load %arg2[%c5_404, %c0_405, %c0_406] : memref<6x16x32xbf16, #tpu.memory_space<vmem>>, vector<1x16x32xbf16>
    %474 = vector.shape_cast %473 : vector<1x16x32xbf16> to vector<16x32xbf16>
    %cst_407 = arith.constant dense<0.000000e+00> : vector<16x96xf32>
    %475 = tpu.matmul %474, %430, %cst_407 {dimension_numbers = #tpu.dot_dimension_numbers<[1], [0], [0], [1], [0, 0, 1, 1], [], []>} : vector<16x32xbf16>, vector<32x96xbf16>, vector<16x96xf32> -> vector<16x96xf32>
    %c2_408 = arith.constant 2 : index
    %c0_409 = arith.constant 0 : index
    %c0_410 = arith.constant 0 : index
    %476 = vector.load %arg3[%c2_408, %c0_409, %c0_410] : memref<3x96x512xbf16, #tpu.memory_space<vmem>>, vector<1x96x512xbf16>
    %477 = vector.shape_cast %476 : vector<1x96x512xbf16> to vector<96x512xbf16>
    %478 = arith.truncf %475 : vector<16x96xf32> to vector<16x96xbf16>
    %cst_411 = arith.constant dense<0.000000e+00> : vector<16x512xf32>
    %479 = tpu.matmul %478, %477, %cst_411 {dimension_numbers = #tpu.dot_dimension_numbers<[1], [0], [0], [1], [0, 0, 1, 1], [], []>} : vector<16x96xbf16>, vector<96x512xbf16>, vector<16x512xf32> -> vector<16x512xf32>
    %480 = arith.addf %472, %479 : vector<16x512xf32>
    %481 = vector.extract_strided_slice %480 {offsets = [0, 0], sizes = [16, 256], strides = [1, 1]} : vector<16x512xf32> to vector<16x256xf32>
    %482 = vector.extract_strided_slice %480 {offsets = [0, 256], sizes = [16, 256], strides = [1, 1]} : vector<16x512xf32> to vector<16x256xf32>
    %483 = arith.maximumf %481, %482 : vector<16x256xf32>
    %484 = arith.maximumf %457, %483 : vector<16x256xf32>
    %485 = vector.broadcast %431 : vector<1x256xf32> to vector<16x256xf32>
    %486 = arith.addf %484, %485 : vector<16x256xf32>
    %487 = math.tanh %486 : vector<16x256xf32>
    %c0_412 = arith.constant 0 : index
    %c0_413 = arith.constant 0 : index
    %488 = vector.load %arg7[%c0_412, %c0_413] : memref<1x64xf32, #tpu.memory_space<vmem>>, vector<1x64xf32>
    %c0_414 = arith.constant 0 : index
    %c0_415 = arith.constant 0 : index
    %c0_416 = arith.constant 0 : index
    %489 = vector.load %arg5[%c0_414, %c0_415, %c0_416] : memref<6x8x16xbf16, #tpu.memory_space<vmem>>, vector<1x8x16xbf16>
    %490 = vector.shape_cast %489 : vector<1x8x16xbf16> to vector<8x16xbf16>
    %491 = arith.truncf %487 : vector<16x256xf32> to vector<16x256xbf16>
    %cst_417 = arith.constant dense<0.000000e+00> : vector<8x256xf32>
    %492 = tpu.matmul %490, %491, %cst_417 {dimension_numbers = #tpu.dot_dimension_numbers<[1], [0], [0], [1], [0, 0, 1, 1], [], []>} : vector<8x16xbf16>, vector<16x256xbf16>, vector<8x256xf32> -> vector<8x256xf32>
    %c0_418 = arith.constant 0 : index
    %c0_419 = arith.constant 0 : index
    %c0_420 = arith.constant 0 : index
    %493 = vector.load %arg6[%c0_418, %c0_419, %c0_420] : memref<3x256x128xbf16, #tpu.memory_space<vmem>>, vector<1x256x128xbf16>
    %494 = vector.shape_cast %493 : vector<1x256x128xbf16> to vector<256x128xbf16>
    %495 = arith.truncf %492 : vector<8x256xf32> to vector<8x256xbf16>
    %cst_421 = arith.constant dense<0.000000e+00> : vector<8x128xf32>
    %496 = tpu.matmul %495, %494, %cst_421 {dimension_numbers = #tpu.dot_dimension_numbers<[1], [0], [0], [1], [0, 0, 1, 1], [], []>} : vector<8x256xbf16>, vector<256x128xbf16>, vector<8x128xf32> -> vector<8x128xf32>
    %c2_422 = arith.constant 2 : index
    %c0_423 = arith.constant 0 : index
    %c0_424 = arith.constant 0 : index
    %497 = vector.load %arg5[%c2_422, %c0_423, %c0_424] : memref<6x8x16xbf16, #tpu.memory_space<vmem>>, vector<1x8x16xbf16>
    %498 = vector.shape_cast %497 : vector<1x8x16xbf16> to vector<8x16xbf16>
    %499 = arith.truncf %487 : vector<16x256xf32> to vector<16x256xbf16>
    %cst_425 = arith.constant dense<0.000000e+00> : vector<8x256xf32>
    %500 = tpu.matmul %498, %499, %cst_425 {dimension_numbers = #tpu.dot_dimension_numbers<[1], [0], [0], [1], [0, 0, 1, 1], [], []>} : vector<8x16xbf16>, vector<16x256xbf16>, vector<8x256xf32> -> vector<8x256xf32>
    %c1_426 = arith.constant 1 : index
    %c0_427 = arith.constant 0 : index
    %c0_428 = arith.constant 0 : index
    %501 = vector.load %arg6[%c1_426, %c0_427, %c0_428] : memref<3x256x128xbf16, #tpu.memory_space<vmem>>, vector<1x256x128xbf16>
    %502 = vector.shape_cast %501 : vector<1x256x128xbf16> to vector<256x128xbf16>
    %503 = arith.truncf %500 : vector<8x256xf32> to vector<8x256xbf16>
    %cst_429 = arith.constant dense<0.000000e+00> : vector<8x128xf32>
    %504 = tpu.matmul %503, %502, %cst_429 {dimension_numbers = #tpu.dot_dimension_numbers<[1], [0], [0], [1], [0, 0, 1, 1], [], []>} : vector<8x256xbf16>, vector<256x128xbf16>, vector<8x128xf32> -> vector<8x128xf32>
    %505 = arith.addf %496, %504 : vector<8x128xf32>
    %c4_430 = arith.constant 4 : index
    %c0_431 = arith.constant 0 : index
    %c0_432 = arith.constant 0 : index
    %506 = vector.load %arg5[%c4_430, %c0_431, %c0_432] : memref<6x8x16xbf16, #tpu.memory_space<vmem>>, vector<1x8x16xbf16>
    %507 = vector.shape_cast %506 : vector<1x8x16xbf16> to vector<8x16xbf16>
    %508 = arith.truncf %487 : vector<16x256xf32> to vector<16x256xbf16>
    %cst_433 = arith.constant dense<0.000000e+00> : vector<8x256xf32>
    %509 = tpu.matmul %507, %508, %cst_433 {dimension_numbers = #tpu.dot_dimension_numbers<[1], [0], [0], [1], [0, 0, 1, 1], [], []>} : vector<8x16xbf16>, vector<16x256xbf16>, vector<8x256xf32> -> vector<8x256xf32>
    %c2_434 = arith.constant 2 : index
    %c0_435 = arith.constant 0 : index
    %c0_436 = arith.constant 0 : index
    %510 = vector.load %arg6[%c2_434, %c0_435, %c0_436] : memref<3x256x128xbf16, #tpu.memory_space<vmem>>, vector<1x256x128xbf16>
    %511 = vector.shape_cast %510 : vector<1x256x128xbf16> to vector<256x128xbf16>
    %512 = arith.truncf %509 : vector<8x256xf32> to vector<8x256xbf16>
    %cst_437 = arith.constant dense<0.000000e+00> : vector<8x128xf32>
    %513 = tpu.matmul %512, %511, %cst_437 {dimension_numbers = #tpu.dot_dimension_numbers<[1], [0], [0], [1], [0, 0, 1, 1], [], []>} : vector<8x256xbf16>, vector<256x128xbf16>, vector<8x128xf32> -> vector<8x128xf32>
    %514 = arith.addf %505, %513 : vector<8x128xf32>
    %515 = vector.extract_strided_slice %514 {offsets = [0, 0], sizes = [8, 64], strides = [1, 1]} : vector<8x128xf32> to vector<8x64xf32>
    %516 = vector.extract_strided_slice %514 {offsets = [0, 64], sizes = [8, 64], strides = [1, 1]} : vector<8x128xf32> to vector<8x64xf32>
    %517 = arith.maximumf %515, %516 : vector<8x64xf32>
    %c1_438 = arith.constant 1 : index
    %c0_439 = arith.constant 0 : index
    %c0_440 = arith.constant 0 : index
    %518 = vector.load %arg5[%c1_438, %c0_439, %c0_440] : memref<6x8x16xbf16, #tpu.memory_space<vmem>>, vector<1x8x16xbf16>
    %519 = vector.shape_cast %518 : vector<1x8x16xbf16> to vector<8x16xbf16>
    %520 = arith.truncf %487 : vector<16x256xf32> to vector<16x256xbf16>
    %cst_441 = arith.constant dense<0.000000e+00> : vector<8x256xf32>
    %521 = tpu.matmul %519, %520, %cst_441 {dimension_numbers = #tpu.dot_dimension_numbers<[1], [0], [0], [1], [0, 0, 1, 1], [], []>} : vector<8x16xbf16>, vector<16x256xbf16>, vector<8x256xf32> -> vector<8x256xf32>
    %c0_442 = arith.constant 0 : index
    %c0_443 = arith.constant 0 : index
    %c0_444 = arith.constant 0 : index
    %522 = vector.load %arg6[%c0_442, %c0_443, %c0_444] : memref<3x256x128xbf16, #tpu.memory_space<vmem>>, vector<1x256x128xbf16>
    %523 = vector.shape_cast %522 : vector<1x256x128xbf16> to vector<256x128xbf16>
    %524 = arith.truncf %521 : vector<8x256xf32> to vector<8x256xbf16>
    %cst_445 = arith.constant dense<0.000000e+00> : vector<8x128xf32>
    %525 = tpu.matmul %524, %523, %cst_445 {dimension_numbers = #tpu.dot_dimension_numbers<[1], [0], [0], [1], [0, 0, 1, 1], [], []>} : vector<8x256xbf16>, vector<256x128xbf16>, vector<8x128xf32> -> vector<8x128xf32>
    %c3_446 = arith.constant 3 : index
    %c0_447 = arith.constant 0 : index
    %c0_448 = arith.constant 0 : index
    %526 = vector.load %arg5[%c3_446, %c0_447, %c0_448] : memref<6x8x16xbf16, #tpu.memory_space<vmem>>, vector<1x8x16xbf16>
    %527 = vector.shape_cast %526 : vector<1x8x16xbf16> to vector<8x16xbf16>
    %528 = arith.truncf %487 : vector<16x256xf32> to vector<16x256xbf16>
    %cst_449 = arith.constant dense<0.000000e+00> : vector<8x256xf32>
    %529 = tpu.matmul %527, %528, %cst_449 {dimension_numbers = #tpu.dot_dimension_numbers<[1], [0], [0], [1], [0, 0, 1, 1], [], []>} : vector<8x16xbf16>, vector<16x256xbf16>, vector<8x256xf32> -> vector<8x256xf32>
    %c1_450 = arith.constant 1 : index
    %c0_451 = arith.constant 0 : index
    %c0_452 = arith.constant 0 : index
    %530 = vector.load %arg6[%c1_450, %c0_451, %c0_452] : memref<3x256x128xbf16, #tpu.memory_space<vmem>>, vector<1x256x128xbf16>
    %531 = vector.shape_cast %530 : vector<1x256x128xbf16> to vector<256x128xbf16>
    %532 = arith.truncf %529 : vector<8x256xf32> to vector<8x256xbf16>
    %cst_453 = arith.constant dense<0.000000e+00> : vector<8x128xf32>
    %533 = tpu.matmul %532, %531, %cst_453 {dimension_numbers = #tpu.dot_dimension_numbers<[1], [0], [0], [1], [0, 0, 1, 1], [], []>} : vector<8x256xbf16>, vector<256x128xbf16>, vector<8x128xf32> -> vector<8x128xf32>
    %534 = arith.addf %525, %533 : vector<8x128xf32>
    %c5_454 = arith.constant 5 : index
    %c0_455 = arith.constant 0 : index
    %c0_456 = arith.constant 0 : index
    %535 = vector.load %arg5[%c5_454, %c0_455, %c0_456] : memref<6x8x16xbf16, #tpu.memory_space<vmem>>, vector<1x8x16xbf16>
    %536 = vector.shape_cast %535 : vector<1x8x16xbf16> to vector<8x16xbf16>
    %537 = arith.truncf %487 : vector<16x256xf32> to vector<16x256xbf16>
    %cst_457 = arith.constant dense<0.000000e+00> : vector<8x256xf32>
    %538 = tpu.matmul %536, %537, %cst_457 {dimension_numbers = #tpu.dot_dimension_numbers<[1], [0], [0], [1], [0, 0, 1, 1], [], []>} : vector<8x16xbf16>, vector<16x256xbf16>, vector<8x256xf32> -> vector<8x256xf32>
    %c2_458 = arith.constant 2 : index
    %c0_459 = arith.constant 0 : index
    %c0_460 = arith.constant 0 : index
    %539 = vector.load %arg6[%c2_458, %c0_459, %c0_460] : memref<3x256x128xbf16, #tpu.memory_space<vmem>>, vector<1x256x128xbf16>
    %540 = vector.shape_cast %539 : vector<1x256x128xbf16> to vector<256x128xbf16>
    %541 = arith.truncf %538 : vector<8x256xf32> to vector<8x256xbf16>
    %cst_461 = arith.constant dense<0.000000e+00> : vector<8x128xf32>
    %542 = tpu.matmul %541, %540, %cst_461 {dimension_numbers = #tpu.dot_dimension_numbers<[1], [0], [0], [1], [0, 0, 1, 1], [], []>} : vector<8x256xbf16>, vector<256x128xbf16>, vector<8x128xf32> -> vector<8x128xf32>
    %543 = arith.addf %534, %542 : vector<8x128xf32>
    %544 = vector.extract_strided_slice %543 {offsets = [0, 0], sizes = [8, 64], strides = [1, 1]} : vector<8x128xf32> to vector<8x64xf32>
    %545 = vector.extract_strided_slice %543 {offsets = [0, 64], sizes = [8, 64], strides = [1, 1]} : vector<8x128xf32> to vector<8x64xf32>
    %546 = arith.maximumf %544, %545 : vector<8x64xf32>
    %547 = arith.maximumf %517, %546 : vector<8x64xf32>
    %548 = vector.broadcast %488 : vector<1x64xf32> to vector<8x64xf32>
    %549 = arith.addf %547, %548 : vector<8x64xf32>
    %550 = math.tanh %549 : vector<8x64xf32>
    %c0_462 = arith.constant 0 : index
    %c0_463 = arith.constant 0 : index
    %551 = vector.load %arg8[%c0_462, %c0_463] : memref<64x256xbf16, #tpu.memory_space<vmem>>, vector<64x256xbf16>
    %552 = arith.truncf %550 : vector<8x64xf32> to vector<8x64xbf16>
    %cst_464 = arith.constant dense<0.000000e+00> : vector<8x256xf32>
    %553 = tpu.matmul %552, %551, %cst_464 {dimension_numbers = #tpu.dot_dimension_numbers<[1], [0], [0], [1], [0, 0, 1, 1], [], []>} : vector<8x64xbf16>, vector<64x256xbf16>, vector<8x256xf32> -> vector<8x256xf32>
    %c0_465 = arith.constant 0 : index
    %c0_466 = arith.constant 0 : index
    %554 = vector.load %arg9[%c0_465, %c0_466] : memref<8x256xf32, #tpu.memory_space<vmem>>, vector<8x256xf32>
    %555 = arith.mulf %553, %554 : vector<8x256xf32>
    %c0_467 = arith.constant 0 : index
    %c0_468 = arith.constant 0 : index
    %556 = vector.load %arg10[%c0_467, %c0_468] : memref<256x32xbf16, #tpu.memory_space<vmem>>, vector<256x32xbf16>
    %557 = arith.truncf %555 : vector<8x256xf32> to vector<8x256xbf16>
    %cst_469 = arith.constant dense<0.000000e+00> : vector<8x32xf32>
    %558 = tpu.matmul %557, %556, %cst_469 {dimension_numbers = #tpu.dot_dimension_numbers<[1], [0], [0], [1], [0, 0, 1, 1], [], []>} : vector<8x256xbf16>, vector<256x32xbf16>, vector<8x32xf32> -> vector<8x32xf32>
    %cst_470 = arith.constant dense<0.000000e+00> : vector<32xf32>
    %559 = vector.multi_reduction <add>, %558, %cst_470 [0] : vector<8x32xf32> to vector<32xf32>
    %560 = vector.shape_cast %559 : vector<32xf32> to vector<1x32xf32>
    %c0_471 = arith.constant 0 : index
    %c0_472 = arith.constant 0 : index
    %561 = vector.load %arg11[%c0_471, %c0_472] : memref<1x32xf32, #tpu.memory_space<vmem>>, vector<1x32xf32>
    %562 = arith.addf %560, %561 : vector<1x32xf32>
    %563 = math.tanh %562 : vector<1x32xf32>
    %c0_473 = arith.constant 0 : index
    %c0_474 = arith.constant 0 : index
    %564 = vector.load %arg12[%c0_473, %c0_474] : memref<32x10xbf16, #tpu.memory_space<vmem>>, vector<32x10xbf16>
    %565 = arith.truncf %563 : vector<1x32xf32> to vector<1x32xbf16>
    %cst_475 = arith.constant dense<0.000000e+00> : vector<1x10xf32>
    %566 = tpu.matmul %565, %564, %cst_475 {dimension_numbers = #tpu.dot_dimension_numbers<[1], [0], [0], [1], [0, 0, 1, 1], [], []>} : vector<1x32xbf16>, vector<32x10xbf16>, vector<1x10xf32> -> vector<1x10xf32>
    %c0_476 = arith.constant 0 : index
    %c0_477 = arith.constant 0 : index
    %567 = vector.load %arg13[%c0_476, %c0_477] : memref<1x10xf32, #tpu.memory_space<vmem>>, vector<1x10xf32>
    %568 = arith.addf %566, %567 : vector<1x10xf32>
    %c3_478 = arith.constant 3 : index
    %c0_479 = arith.constant 0 : index
    %c0_480 = arith.constant 0 : index
    %569 = vector.load %arg14[%c3_478, %c0_479, %c0_480] : memref<4x1x10xf32, #tpu.memory_space<vmem>>, vector<1x1x10xf32>
    %570 = vector.shape_cast %569 : vector<1x1x10xf32> to vector<1x10xf32>
    %571 = vector.shape_cast %568 : vector<1x10xf32> to vector<1x1x10xf32>
    tpu.vector_store %arg14[%c3_478, %c0_479, %c0_480], %571 {strides = array<i32>} : memref<4x1x10xf32, #tpu.memory_space<vmem>>, vector<1x1x10xf32>,
    return
  }
  func.func @transform_0(%arg0: i32) -> (i32, i32, i32) {
    %c0_i32 = arith.constant 0 : i32
    %c0_i32_0 = arith.constant 0 : i32
    %c0_i32_1 = arith.constant 0 : i32
    return %arg0, %c0_i32, %c0_i32_0 : i32, i32, i32
  }
  func.func @transform_1(%arg0: i32) -> (i32, i32, i32) {
    %c0_i32 = arith.constant 0 : i32
    %c0_i32_0 = arith.constant 0 : i32
    %c0_i32_1 = arith.constant 0 : i32
    %c0_i32_2 = arith.constant 0 : i32
    return %c0_i32, %c0_i32_0, %c0_i32_1 : i32, i32, i32
  }
  func.func @transform_2(%arg0: i32) -> (i32, i32, i32) {
    %c0_i32 = arith.constant 0 : i32
    %c0_i32_0 = arith.constant 0 : i32
    %c0_i32_1 = arith.constant 0 : i32
    %c0_i32_2 = arith.constant 0 : i32
    return %c0_i32, %c0_i32_0, %c0_i32_1 : i32, i32, i32
  }
  func.func @transform_3(%arg0: i32) -> (i32, i32) {
    %c0_i32 = arith.constant 0 : i32
    %c0_i32_0 = arith.constant 0 : i32
    %c0_i32_1 = arith.constant 0 : i32
    return %c0_i32, %c0_i32_0 : i32, i32
  }
  func.func @transform_4(%arg0: i32) -> (i32, i32, i32) {
    %c0_i32 = arith.constant 0 : i32
    %c0_i32_0 = arith.constant 0 : i32
    %c0_i32_1 = arith.constant 0 : i32
    %c0_i32_2 = arith.constant 0 : i32
    return %c0_i32, %c0_i32_0, %c0_i32_1 : i32, i32, i32
  }
  func.func @transform_5(%arg0: i32) -> (i32, i32, i32) {
    %c0_i32 = arith.constant 0 : i32
    %c0_i32_0 = arith.constant 0 : i32
    %c0_i32_1 = arith.constant 0 : i32
    %c0_i32_2 = arith.constant 0 : i32
    return %c0_i32, %c0_i32_0, %c0_i32_1 : i32, i32, i32
  }
  func.func @transform_6(%arg0: i32) -> (i32, i32) {
    %c0_i32 = arith.constant 0 : i32
    %c0_i32_0 = arith.constant 0 : i32
    %c0_i32_1 = arith.constant 0 : i32
    return %c0_i32, %c0_i32_0 : i32, i32
  }
  func.func @transform_7(%arg0: i32) -> (i32, i32) {
    %c0_i32 = arith.constant 0 : i32
    %c0_i32_0 = arith.constant 0 : i32
    %c0_i32_1 = arith.constant 0 : i32
    return %c0_i32, %c0_i32_0 : i32, i32
  }
  func.func @transform_8(%arg0: i32) -> (i32, i32) {
    %c0_i32 = arith.constant 0 : i32
    %c0_i32_0 = arith.constant 0 : i32
    %c0_i32_1 = arith.constant 0 : i32
    return %c0_i32, %c0_i32_0 : i32, i32
  }
  func.func @transform_9(%arg0: i32) -> (i32, i32) {
    %c0_i32 = arith.constant 0 : i32
    %c0_i32_0 = arith.constant 0 : i32
    %c0_i32_1 = arith.constant 0 : i32
    return %c0_i32, %c0_i32_0 : i32, i32
  }
  func.func @transform_10(%arg0: i32) -> (i32, i32) {
    %c0_i32 = arith.constant 0 : i32
    %c0_i32_0 = arith.constant 0 : i32
    %c0_i32_1 = arith.constant 0 : i32
    return %c0_i32, %c0_i32_0 : i32, i32
  }
  func.func @transform_11(%arg0: i32) -> (i32, i32) {
    %c0_i32 = arith.constant 0 : i32
    %c0_i32_0 = arith.constant 0 : i32
    %c0_i32_1 = arith.constant 0 : i32
    return %c0_i32, %c0_i32_0 : i32, i32
  }
  func.func @transform_12(%arg0: i32) -> (i32, i32) {
    %c0_i32 = arith.constant 0 : i32
    %c0_i32_0 = arith.constant 0 : i32
    %c0_i32_1 = arith.constant 0 : i32
    return %c0_i32, %c0_i32_0 : i32, i32
  }
  func.func @transform_13(%arg0: i32) -> (i32, i32, i32) {
    %c0_i32 = arith.constant 0 : i32
    %c0_i32_0 = arith.constant 0 : i32
    %c0_i32_1 = arith.constant 0 : i32
    return %arg0, %c0_i32, %c0_i32_0 : i32, i32, i32
  }
}

</mosaic_0001>

<llo_original>
// kernel: net_forward.1
$region0: #{net_forward.1}
  #allocation0 [shape = 'u32[]', space=smem, size = 0x4, offset = 0x4, fixed_abs, tag = 'smem constant byte address 0x4 - core index']
  #allocation1 [shape = 'u32[72,128]{1,0:T(1,128)}', space=vmem, size = 0x9000, scoped, tag = 'internal scratch']
  %s0 = inlined_call_operand.vmem [shape: bf16[8,32,96], index: 0, kind: input, shape index: {}]
  %s1 = inlined_call_operand.vmem [shape: bf16[6,16,32], index: 1, kind: input, shape index: {}]
  %s2 = inlined_call_operand.vmem [shape: bf16[3,96,512], index: 2, kind: input, shape index: {}]
  %s3 = inlined_call_operand.vmem [shape: f32[1,256], index: 3, kind: input, shape index: {}]
  %s4 = inlined_call_operand.vmem [shape: bf16[6,8,16], index: 4, kind: input, shape index: {}]
  %s5 = inlined_call_operand.vmem [shape: bf16[3,256,128], index: 5, kind: input, shape index: {}]
  %s6 = inlined_call_operand.vmem [shape: f32[1,64], index: 6, kind: input, shape index: {}]
  %s7 = inlined_call_operand.vmem [shape: bf16[64,256], index: 7, kind: input, shape index: {}]
  %s8 = inlined_call_operand.vmem [shape: f32[8,256], index: 8, kind: input, shape index: {}]
  %s9 = inlined_call_operand.vmem [shape: bf16[256,32], index: 9, kind: input, shape index: {}]
  %s10 = inlined_call_operand.vmem [shape: f32[1,32], index: 10, kind: input, shape index: {}]
  %s11 = inlined_call_operand.vmem [shape: bf16[32,10], index: 11, kind: input, shape index: {}]
  %s12 = inlined_call_operand.vmem [shape: f32[1,10], index: 12, kind: input, shape index: {}]
  %s13 = inlined_call_operand.hbm [shape: f32[8,1,10], index: 13, kind: output, shape index: {}]
  %s14 = sld [smem:[#allocation0]]
  $region85: #{net_forward.1} parent=0
    _
  %s16 = ssub.s32 1, %s14
  %s17 = scalar_select 0, %s16, %s14
  $region1: #{net_forward.1} parent=0
    #allocation2 [shape = 'u8[4096]{0}', space=vmem, size = 0x1000, scoped, tag = 'output window, operand 0']
    #allocation3 [shape = 's32[2]{0}', space=sflag, size = 0x8, scoped, tag = 'scoped memory for net_forward.1']
    %18 = vsyncpa [#allocation3], 0
    %s19 = scalar_lea.sflag [#allocation3], 1
    %20 = vsyncpa %s19, 0
    loop: start=0, step=1, limit=4
    $region2: #{net_forward.1} parent=1 // loop_pre_header
      _
    $region3: #{net_forward.1} parent=1 // loop_header
      %s22 = sphi 0, %s26
      %p23 = scmp.ge.s32.totalorder %s22, 4
      %s32 = sphi 0, %s34
      %s35 = sphi 0, %s32
      %s36 = sphi 0, %s35
      %s52 = sphi 0, %s36
      %s56 = sphi 0, %s56
      %s58 = sphi 0, %s56
      %s59 = sphi 0, %s58
      %s73 = sphi 0, %s59
      %s77 = sphi 0, %s77
      %s79 = sphi 0, %s77
      %s80 = sphi 0, %s79
      %s94 = sphi 0, %s80
      %s98 = sphi 0, %s98
      %s100 = sphi 0, %s98
      %s101 = sphi 0, %s100
      %s115 = sphi 0, %s101
      %s119 = sphi 0, %s119
      %s121 = sphi 0, %s119
      %s122 = sphi 0, %s121
      %s136 = sphi 0, %s122
      %s140 = sphi 0, %s140
      %s142 = sphi 0, %s140
      %s143 = sphi 0, %s142
      %s157 = sphi 0, %s143
      %s161 = sphi 0, %s161
      %s163 = sphi 0, %s161
      %s164 = sphi 0, %s163
      %s178 = sphi 0, %s164
      %s182 = sphi 0, %s182
      %s184 = sphi 0, %s182
      %s185 = sphi 0, %s184
      %s199 = sphi 0, %s185
      %s203 = sphi 0, %s203
      %s205 = sphi 0, %s203
      %s206 = sphi 0, %s205
      %s220 = sphi 0, %s206
      %s224 = sphi 0, %s224
      %s226 = sphi 0, %s224
      %s227 = sphi 0, %s226
      %s241 = sphi 0, %s227
      %s245 = sphi 0, %s245
      %s247 = sphi 0, %s245
      %s248 = sphi 0, %s247
      %s262 = sphi 0, %s248
      %s266 = sphi 0, %s266
      %s268 = sphi 0, %s266
      %s269 = sphi 0, %s268
      %s283 = sphi 0, %s269
      %s287 = sphi 0, %s287
      %s289 = sphi 0, %s287
      %s290 = sphi 0, %s289
      %s304 = sphi 0, %s290
      %s310 = sphi 0, %s312
      %s313 = sphi 0, %s310
      %s314 = sphi 0, %s313
      %s330 = sphi 0, %s314
    $region4: #{net_forward.1} parent=1 // loop_header_branch
      %25 = sbr.rel (%p23) target = $region8
    $region5: #{net_forward.1} parent=1 // loop_body
      %s27 = ssub.s32 %s22, 1
      %s28 = ssub.s32 %s22, 2
      %s29 = sadd.s32 %s22, 1
      %s30 = ssub.s32 %s22, %s29
      %p31 = scmp.eq.s32.totalorder %s30, 0
      %s33 = sadd.s32 %s32, 1
      %s34 = scalar_select %p31, %s32, %s33
      %p37 = pneg %p31
      %p38 = scmp.eq.s32.totalorder %s22, 1
      %p39 = por %p37, %p38
      %p40 = scmp.ne.s32.totalorder %s32, %s35
      %p41 = scmp.eq.s32.totalorder %s22, 0
      %p42 = por %p40, %p41
      %p43 = scmp.ne.s32.totalorder %s32, %s35
      %p44 = scmp.eq.s32.totalorder %s27, 1
      %p45 = por %p43, %p44
      %p46 = scmp.ne.s32.totalorder %s35, %s36
      %p47 = scmp.eq.s32.totalorder %s27, 0
      %p48 = por %p46, %p47
      %p49 = scmp.ne.s32.totalorder %s35, %s36
      %p50 = scmp.eq.s32.totalorder %s28, 1
      %p51 = por %p49, %p50
      %p53 = scmp.ne.s32.totalorder %s36, %s52
      %p54 = scmp.eq.s32.totalorder %s28, 0
      %p55 = por %p53, %p54
      %s57 = sadd.s32 %s56, 1
      %p60 = scmp.eq.s32.totalorder %s22, 1
      %p61 = scmp.ne.s32.totalorder %s56, %s58
      %p62 = scmp.eq.s32.totalorder %s22, 0
      %p63 = por %p61, %p62
      %p64 = scmp.ne.s32.totalorder %s56, %s58
      %p65 = scmp.eq.s32.totalorder %s27, 1
      %p66 = por %p64, %p65
      %p67 = scmp.ne.s32.totalorder %s58, %s59
      %p68 = scmp.eq.s32.totalorder %s27, 0
      %p69 = por %p67, %p68
      %p70 = scmp.ne.s32.totalorder %s58, %s59
      %p71 = scmp.eq.s32.totalorder %s28, 1
      %p72 = por %p70, %p71
      %p74 = scmp.ne.s32.totalorder %s59, %s73
      %p75 = scmp.eq.s32.totalorder %s28, 0
      %p76 = por %p74, %p75
      %s78 = sadd.s32 %s77, 1
      %p81 = scmp.eq.s32.totalorder %s22, 1
      %p82 = scmp.ne.s32.totalorder %s77, %s79
      %p83 = scmp.eq.s32.totalorder %s22, 0
      %p84 = por %p82, %p83
      %p85 = scmp.ne.s32.totalorder %s77, %s79
      %p86 = scmp.eq.s32.totalorder %s27, 1
      %p87 = por %p85, %p86
      %p88 = scmp.ne.s32.totalorder %s79, %s80
      %p89 = scmp.eq.s32.totalorder %s27, 0
      %p90 = por %p88, %p89
      %p91 = scmp.ne.s32.totalorder %s79, %s80
      %p92 = scmp.eq.s32.totalorder %s28, 1
      %p93 = por %p91, %p92
      %p95 = scmp.ne.s32.totalorder %s80, %s94
      %p96 = scmp.eq.s32.totalorder %s28, 0
      %p97 = por %p95, %p96
      %s99 = sadd.s32 %s98, 1
      %p102 = scmp.eq.s32.totalorder %s22, 1
      %p103 = scmp.ne.s32.totalorder %s98, %s100
      %p104 = scmp.eq.s32.totalorder %s22, 0
      %p105 = por %p103, %p104
      %p106 = scmp.ne.s32.totalorder %s98, %s100
      %p107 = scmp.eq.s32.totalorder %s27, 1
      %p108 = por %p106, %p107
      %p109 = scmp.ne.s32.totalorder %s100, %s101
      %p110 = scmp.eq.s32.totalorder %s27, 0
      %p111 = por %p109, %p110
      %p112 = scmp.ne.s32.totalorder %s100, %s101
      %p113 = scmp.eq.s32.totalorder %s28, 1
      %p114 = por %p112, %p113
      %p116 = scmp.ne.s32.totalorder %s101, %s115
      %p117 = scmp.eq.s32.totalorder %s28, 0
      %p118 = por %p116, %p117
      %s120 = sadd.s32 %s119, 1
      %p123 = scmp.eq.s32.totalorder %s22, 1
      %p124 = scmp.ne.s32.totalorder %s119, %s121
      %p125 = scmp.eq.s32.totalorder %s22, 0
      %p126 = por %p124, %p125
      %p127 = scmp.ne.s32.totalorder %s119, %s121
      %p128 = scmp.eq.s32.totalorder %s27, 1
      %p129 = por %p127, %p128
      %p130 = scmp.ne.s32.totalorder %s121, %s122
      %p131 = scmp.eq.s32.totalorder %s27, 0
      %p132 = por %p130, %p131
      %p133 = scmp.ne.s32.totalorder %s121, %s122
      %p134 = scmp.eq.s32.totalorder %s28, 1
      %p135 = por %p133, %p134
      %p137 = scmp.ne.s32.totalorder %s122, %s136
      %p138 = scmp.eq.s32.totalorder %s28, 0
      %p139 = por %p137, %p138
      %s141 = sadd.s32 %s140, 1
      %p144 = scmp.eq.s32.totalorder %s22, 1
      %p145 = scmp.ne.s32.totalorder %s140, %s142
      %p146 = scmp.eq.s32.totalorder %s22, 0
      %p147 = por %p145, %p146
      %p148 = scmp.ne.s32.totalorder %s140, %s142
      %p149 = scmp.eq.s32.totalorder %s27, 1
      %p150 = por %p148, %p149
      %p151 = scmp.ne.s32.totalorder %s142, %s143
      %p152 = scmp.eq.s32.totalorder %s27, 0
      %p153 = por %p151, %p152
      %p154 = scmp.ne.s32.totalorder %s142, %s143
      %p155 = scmp.eq.s32.totalorder %s28, 1
      %p156 = por %p154, %p155
      %p158 = scmp.ne.s32.totalorder %s143, %s157
      %p159 = scmp.eq.s32.totalorder %s28, 0
      %p160 = por %p158, %p159
      %s162 = sadd.s32 %s161, 1
      %p165 = scmp.eq.s32.totalorder %s22, 1
      %p166 = scmp.ne.s32.totalorder %s161, %s163
      %p167 = scmp.eq.s32.totalorder %s22, 0
      %p168 = por %p166, %p167
      %p169 = scmp.ne.s32.totalorder %s161, %s163
      %p170 = scmp.eq.s32.totalorder %s27, 1
      %p171 = por %p169, %p170
      %p172 = scmp.ne.s32.totalorder %s163, %s164
      %p173 = scmp.eq.s32.totalorder %s27, 0
      %p174 = por %p172, %p173
      %p175 = scmp.ne.s32.totalorder %s163, %s164
      %p176 = scmp.eq.s32.totalorder %s28, 1
      %p177 = por %p175, %p176
      %p179 = scmp.ne.s32.totalorder %s164, %s178
      %p180 = scmp.eq.s32.totalorder %s28, 0
      %p181 = por %p179, %p180
      %s183 = sadd.s32 %s182, 1
      %p186 = scmp.eq.s32.totalorder %s22, 1
      %p187 = scmp.ne.s32.totalorder %s182, %s184
      %p188 = scmp.eq.s32.totalorder %s22, 0
      %p189 = por %p187, %p188
      %p190 = scmp.ne.s32.totalorder %s182, %s184
      %p191 = scmp.eq.s32.totalorder %s27, 1
      %p192 = por %p190, %p191
      %p193 = scmp.ne.s32.totalorder %s184, %s185
      %p194 = scmp.eq.s32.totalorder %s27, 0
      %p195 = por %p193, %p194
      %p196 = scmp.ne.s32.totalorder %s184, %s185
      %p197 = scmp.eq.s32.totalorder %s28, 1
      %p198 = por %p196, %p197
      %p200 = scmp.ne.s32.totalorder %s185, %s199
      %p201 = scmp.eq.s32.totalorder %s28, 0
      %p202 = por %p200, %p201
      %s204 = sadd.s32 %s203, 1
      %p207 = scmp.eq.s32.totalorder %s22, 1
      %p208 = scmp.ne.s32.totalorder %s203, %s205
      %p209 = scmp.eq.s32.totalorder %s22, 0
      %p210 = por %p208, %p209
      %p211 = scmp.ne.s32.totalorder %s203, %s205
      %p212 = scmp.eq.s32.totalorder %s27, 1
      %p213 = por %p211, %p212
      %p214 = scmp.ne.s32.totalorder %s205, %s206
      %p215 = scmp.eq.s32.totalorder %s27, 0
      %p216 = por %p214, %p215
      %p217 = scmp.ne.s32.totalorder %s205, %s206
      %p218 = scmp.eq.s32.totalorder %s28, 1
      %p219 = por %p217, %p218
      %p221 = scmp.ne.s32.totalorder %s206, %s220
      %p222 = scmp.eq.s32.totalorder %s28, 0
      %p223 = por %p221, %p222
      %s225 = sadd.s32 %s224, 1
      %p228 = scmp.eq.s32.totalorder %s22, 1
      %p229 = scmp.ne.s32.totalorder %s224, %s226
      %p230 = scmp.eq.s32.totalorder %s22, 0
      %p231 = por %p229, %p230
      %p232 = scmp.ne.s32.totalorder %s224, %s226
      %p233 = scmp.eq.s32.totalorder %s27, 1
      %p234 = por %p232, %p233
      %p235 = scmp.ne.s32.totalorder %s226, %s227
      %p236 = scmp.eq.s32.totalorder %s27, 0
      %p237 = por %p235, %p236
      %p238 = scmp.ne.s32.totalorder %s226, %s227
      %p239 = scmp.eq.s32.totalorder %s28, 1
      %p240 = por %p238, %p239
      %p242 = scmp.ne.s32.totalorder %s227, %s241
      %p243 = scmp.eq.s32.totalorder %s28, 0
      %p244 = por %p242, %p243
      %s246 = sadd.s32 %s245, 1
      %p249 = scmp.eq.s32.totalorder %s22, 1
      %p250 = scmp.ne.s32.totalorder %s245, %s247
      %p251 = scmp.eq.s32.totalorder %s22, 0
      %p252 = por %p250, %p251
      %p253 = scmp.ne.s32.totalorder %s245, %s247
      %p254 = scmp.eq.s32.totalorder %s27, 1
      %p255 = por %p253, %p254
      %p256 = scmp.ne.s32.totalorder %s247, %s248
      %p257 = scmp.eq.s32.totalorder %s27, 0
      %p258 = por %p256, %p257
      %p259 = scmp.ne.s32.totalorder %s247, %s248
      %p260 = scmp.eq.s32.totalorder %s28, 1
      %p261 = por %p259, %p260
      %p263 = scmp.ne.s32.totalorder %s248, %s262
      %p264 = scmp.eq.s32.totalorder %s28, 0
      %p265 = por %p263, %p264
      %s267 = sadd.s32 %s266, 1
      %p270 = scmp.eq.s32.totalorder %s22, 1
      %p271 = scmp.ne.s32.totalorder %s266, %s268
      %p272 = scmp.eq.s32.totalorder %s22, 0
      %p273 = por %p271, %p272
      %p274 = scmp.ne.s32.totalorder %s266, %s268
      %p275 = scmp.eq.s32.totalorder %s27, 1
      %p276 = por %p274, %p275
      %p277 = scmp.ne.s32.totalorder %s268, %s269
      %p278 = scmp.eq.s32.totalorder %s27, 0
      %p279 = por %p277, %p278
      %p280 = scmp.ne.s32.totalorder %s268, %s269
      %p281 = scmp.eq.s32.totalorder %s28, 1
      %p282 = por %p280, %p281
      %p284 = scmp.ne.s32.totalorder %s269, %s283
      %p285 = scmp.eq.s32.totalorder %s28, 0
      %p286 = por %p284, %p285
      %s288 = sadd.s32 %s287, 1
      %p291 = scmp.eq.s32.totalorder %s22, 1
      %p292 = scmp.ne.s32.totalorder %s287, %s289
      %p293 = scmp.eq.s32.totalorder %s22, 0
      %p294 = por %p292, %p293
      %p295 = scmp.ne.s32.totalorder %s287, %s289
      %p296 = scmp.eq.s32.totalorder %s27, 1
      %p297 = por %p295, %p296
      %p298 = scmp.ne.s32.totalorder %s289, %s290
      %p299 = scmp.eq.s32.totalorder %s27, 0
      %p300 = por %p298, %p299
      %p301 = scmp.ne.s32.totalorder %s289, %s290
      %p302 = scmp.eq.s32.totalorder %s28, 1
      %p303 = por %p301, %p302
      %p305 = scmp.ne.s32.totalorder %s290, %s304
      %p306 = scmp.eq.s32.totalorder %s28, 0
      %p307 = por %p305, %p306
      %s308 = ssub.s32 %s22, %s29
      %p309 = scmp.eq.s32.totalorder %s308, 0
      %s311 = sadd.s32 %s310, 1
      %s312 = scalar_select %p309, %s310, %s311
      %p315 = pneg %p309
      %p316 = scmp.eq.s32.totalorder %s22, 1
      %p317 = por %p315, %p316
      %p318 = scmp.ne.s32.totalorder %s310, %s313
      %p319 = scmp.eq.s32.totalorder %s22, 0
      %p320 = por %p318, %p319
      %p321 = scmp.ne.s32.totalorder %s310, %s313
      %p322 = scmp.eq.s32.totalorder %s27, 1
      %p323 = por %p321, %p322
      %p324 = scmp.ne.s32.totalorder %s313, %s314
      %p325 = scmp.eq.s32.totalorder %s27, 0
      %p326 = por %p324, %p325
      %p327 = scmp.ne.s32.totalorder %s313, %s314
      %p328 = scmp.eq.s32.totalorder %s28, 1
      %p329 = por %p327, %p328
      %p331 = scmp.ne.s32.totalorder %s314, %s330
      %p332 = scmp.eq.s32.totalorder %s28, 0
      %p333 = por %p331, %p332
      %p334 = scmp.le.s32.totalorder 1, %s22
      %p335 = scmp.lt.s32.totalorder %s22, 3
      %p336 = pnand %p334, %p335
      %p337 = pneg %p336
      // Predicated region
      $region9: #{net_forward.1} parent=5 // pred_check
        _
      $region10: #{net_forward.1} parent=5 // pred_check_branch
        %339 = sbr.rel (%p336) target = $region12
      $region11: #{net_forward.1} parent=5 // pred_region
        %s340 = ssub.s32 %s22, 1
        // Predicated region
        $region13: #{net_forward.1} parent=11 // pred_check
          %p341 = pneg %p69
        $region14: #{net_forward.1} parent=11 // pred_check_branch
          %343 = sbr.rel (%p341) target = $region16
        $region15: #{net_forward.1} parent=11 // pred_region
          _
        $region16: #{net_forward.1} parent=11 // pred_fallthru
          _
        // Predicated region
        $region17: #{net_forward.1} parent=11 // pred_check
          %p344 = pneg %p90
        $region18: #{net_forward.1} parent=11 // pred_check_branch
          %346 = sbr.rel (%p344) target = $region20
        $region19: #{net_forward.1} parent=11 // pred_region
          _
        $region20: #{net_forward.1} parent=11 // pred_fallthru
          _
        // Predicated region
        $region21: #{net_forward.1} parent=11 // pred_check
          %p347 = pneg %p111
        $region22: #{net_forward.1} parent=11 // pred_check_branch
          %349 = sbr.rel (%p347) target = $region24
        $region23: #{net_forward.1} parent=11 // pred_region
          _
        $region24: #{net_forward.1} parent=11 // pred_fallthru
          _
        // Predicated region
        $region25: #{net_forward.1} parent=11 // pred_check
          %p350 = pneg %p132
        $region26: #{net_forward.1} parent=11 // pred_check_branch
          %352 = sbr.rel (%p350) target = $region28
        $region27: #{net_forward.1} parent=11 // pred_region
          _
        $region28: #{net_forward.1} parent=11 // pred_fallthru
          _
        // Predicated region
        $region29: #{net_forward.1} parent=11 // pred_check
          %p353 = pneg %p153
        $region30: #{net_forward.1} parent=11 // pred_check_branch
          %355 = sbr.rel (%p353) target = $region32
        $region31: #{net_forward.1} parent=11 // pred_region
          _
        $region32: #{net_forward.1} parent=11 // pred_fallthru
          _
        // Predicated region
        $region33: #{net_forward.1} parent=11 // pred_check
          %p356 = pneg %p174
        $region34: #{net_forward.1} parent=11 // pred_check_branch
          %358 = sbr.rel (%p356) target = $region36
        $region35: #{net_forward.1} parent=11 // pred_region
          _
        $region36: #{net_forward.1} parent=11 // pred_fallthru
          _
        // Predicated region
        $region37: #{net_forward.1} parent=11 // pred_check
          %p359 = pneg %p195
        $region38: #{net_forward.1} parent=11 // pred_check_branch
          %361 = sbr.rel (%p359) target = $region40
        $region39: #{net_forward.1} parent=11 // pred_region
          _
        $region40: #{net_forward.1} parent=11 // pred_fallthru
          _
        // Predicated region
        $region41: #{net_forward.1} parent=11 // pred_check
          %p362 = pneg %p216
        $region42: #{net_forward.1} parent=11 // pred_check_branch
          %364 = sbr.rel (%p362) target = $region44
        $region43: #{net_forward.1} parent=11 // pred_region
          _
        $region44: #{net_forward.1} parent=11 // pred_fallthru
          _
        // Predicated region
        $region45: #{net_forward.1} parent=11 // pred_check
          %p365 = pneg %p237
        $region46: #{net_forward.1} parent=11 // pred_check_branch
          %367 = sbr.rel (%p365) target = $region48
        $region47: #{net_forward.1} parent=11 // pred_region
          _
        $region48: #{net_forward.1} parent=11 // pred_fallthru
          _
        // Predicated region
        $region49: #{net_forward.1} parent=11 // pred_check
          %p368 = pneg %p258
        $region50: #{net_forward.1} parent=11 // pred_check_branch
          %370 = sbr.rel (%p368) target = $region52
        $region51: #{net_forward.1} parent=11 // pred_region
          _
        $region52: #{net_forward.1} parent=11 // pred_fallthru
          _
        // Predicated region
        $region53: #{net_forward.1} parent=11 // pred_check
          %p371 = pneg %p279
        $region54: #{net_forward.1} parent=11 // pred_check_branch
          %373 = sbr.rel (%p371) target = $region56
        $region55: #{net_forward.1} parent=11 // pred_region
          _
        $region56: #{net_forward.1} parent=11 // pred_fallthru
          _
        // Predicated region
        $region57: #{net_forward.1} parent=11 // pred_check
          %p374 = pneg %p300
        $region58: #{net_forward.1} parent=11 // pred_check_branch
          %376 = sbr.rel (%p374) target = $region60
        $region59: #{net_forward.1} parent=11 // pred_region
          _
        $region60: #{net_forward.1} parent=11 // pred_fallthru
          _
      $region12: #{net_forward.1} parent=5 // pred_fallthru
        _
      %p377 = scmp.lt.s32.totalorder %s22, 2
      // Predicated region
      $region61: #{net_forward.1} parent=5 // pred_check
        %p378 = pneg %p377
      $region62: #{net_forward.1} parent=5 // pred_check_branch
        %380 = sbr.rel (%p378) target = $region64
      $region63: #{net_forward.1} parent=5 // pred_region
        // Predicated region
        $region65: #{net_forward.1} parent=63 // pred_check
          %p381 = pneg %p42
        $region66: #{net_forward.1} parent=63 // pred_check_branch
          %383 = sbr.rel (%p381) target = $region68
        $region67: #{net_forward.1} parent=63 // pred_region
          %s384 = smul.u32 4, %s22
          %p385 = scmp.lt.s32.totalorder %s384, 7
          %s386 = scalar_select %p385, %s384, 7
          %s387 = smul.addr %s386, 4
          %s388 = smul.addr %s387, 4
          %s389 = scalar_lea.vmem %s0, %s388
          %s390 = smul.u32 4, %s22
        $region68: #{net_forward.1} parent=63 // pred_fallthru
          _
      $region64: #{net_forward.1} parent=5 // pred_fallthru
        _
      %p391 = scmp.le.s32.totalorder 1, %s22
      %p392 = scmp.lt.s32.totalorder %s22, 3
      %p393 = pnand %p391, %p392
      %p394 = pneg %p393
      // Predicated region
      $region69: #{net_forward.1} parent=5 // pred_check
        _
      $region70: #{net_forward.1} parent=5 // pred_check_branch
        %396 = sbr.rel (%p393) target = $region72
      $region71: #{net_forward.1} parent=5 // pred_region
        %s397 = ssub.s32 %s22, 1
        %s398 = smul.u32 4, %s27
        %p399 = scmp.lt.s32.totalorder %s398, 7
        %s400 = scalar_select %p399, %s398, 7
        %s401 = smul.addr %s400, 4
        %s402 = smul.addr %s401, 4
        %s403 = scalar_lea.vmem %s0, %s402
        %p404 = pneg %p48
        %p405 = pneg %p45
        %p406 = pneg %p69
        %p407 = pneg %p66
        %p408 = pneg %p90
        %p409 = pneg %p87
        %p410 = pneg %p111
        %p411 = pneg %p108
        %p412 = pneg %p132
        %p413 = pneg %p129
        %p414 = pneg %p153
        %p415 = pneg %p150
        %p416 = pneg %p174
        %p417 = pneg %p171
        %p418 = pneg %p195
        %p419 = pneg %p192
        %p420 = pneg %p216
        %p421 = pneg %p213
        %p422 = pneg %p237
        %p423 = pneg %p234
        %p424 = pneg %p258
        %p425 = pneg %p255
        %p426 = pneg %p279
        %p427 = pneg %p276
        %p428 = pneg %p300
        %p429 = pneg %p297
        %p430 = pneg %p326
        %p431 = pneg %p323
        %s432 = sand.u32 %s313, 1
        %s433 = scalar_lea.sflag [#allocation3], %s432
        %s434 = sand.u32 %s313, 1
        %s435 = smul.addr %s434, 4
        %s436 = scalar_lea.vmem [#allocation2], %s435
        %s437 = smul.u32 4, %s27
        %p438 = scmp.lt.s32.totalorder %s437, 7
        %s439 = scalar_select %p438, %s437, 7
        %s440 = smul.addr %s439, 4
        %s441 = smul.addr %s440, 4
        %s442 = scalar_lea.vmem %s0, %s441
        %s443 = smul.u32 4, %s27
        %s444 = smul.u32 4, %s27
        %v446 = vld [vmem:[%s442] sm:$0xf]
        %v447 = vld [vmem:[%s442 + $0x4] sm:$0xf]
        %v448 = vld [vmem:[%s442 + $0x8] sm:$0xf]
        %v449 = vld [vmem:[%s442 + $0xc] sm:$0xf]
        %v450 = vld [vmem:[%s3] sm:$0x3]
        %v451 = vld [vmem:[%s1] sm:$0xf]
        %v452 = vld [vmem:[%s1 + $0x4] sm:$0xf]
        %v455 = vunpack.c.l.b16 %v451
        %v456 = vunpack.c.l.b16 %v452
        %v457 = vpack.c.b16 %v456, %v455
        %v462 = vunpack.c.l.b16 %v446
        %v463 = vunpack.c.l.b16 %v447
        %v464 = vunpack.c.l.b16 %v448
        %v465 = vunpack.c.l.b16 %v449
        %v466 = vpack.c.b16 %v463, %v462
        %v467 = vpack.c.b16 %v465, %v464
        %vm470 = vcmask 261120
        %v472 = vsel %vm470, %v457, 0
        %474 = vmatpush.bf16.msra.mxu0 0
        %475 = vmatpush.bf16.msra.mxu0 0
        %476 = vmatpush.bf16.msra.mxu0 0
        %477 = vmatpush.bf16.msra.mxu0 0
        %478 = vmatpush.bf16.msra.mxu0 0
        %479 = vmatpush.bf16.msra.mxu0 0
        %480 = vmatpush.bf16.msra.mxu0 %v467
        %481 = vmatpush.bf16.msra.mxu0 %v466
        %482 = vmatmul.bf16.gmra.mxu0 %v472
        %v483 = vpop.f32.mrf.mxu0
        %v484 = vadd.f32 0.0, %v483
        %v485 = vpop.f32.mrf.mxu0
        %v486 = vadd.f32 0.0, %v485
        %487 = vdwg.mxu0
        %v488 = vld [vmem:[%s2] sm:$0xff]
        %v489 = vld [vmem:[%s2 + $0x8] sm:$0xff]
        %v490 = vld [vmem:[%s2 + $0x10] sm:$0xff]
        %v491 = vld [vmem:[%s2 + $0x18] sm:$0xff]
        %v492 = vld [vmem:[%s2 + $0x20] sm:$0xff]
        %v493 = vld [vmem:[%s2 + $0x28] sm:$0xff]
        %v494 = vld [vmem:[%s2 + $0x30] sm:$0xff]
        %v495 = vld [vmem:[%s2 + $0x38] sm:$0xff]
        %v496 = vld [vmem:[%s2 + $0x40] sm:$0xff]
        %v497 = vld [vmem:[%s2 + $0x48] sm:$0xff]
        %v498 = vld [vmem:[%s2 + $0x50] sm:$0xff]
        %v499 = vld [vmem:[%s2 + $0x58] sm:$0xff]
        %v500 = vld [vmem:[%s2 + $0x60] sm:$0xff]
        %v501 = vld [vmem:[%s2 + $0x68] sm:$0xff]
        %v502 = vld [vmem:[%s2 + $0x70] sm:$0xff]
        %v503 = vld [vmem:[%s2 + $0x78] sm:$0xff]
        %v504 = vld [vmem:[%s2 + $0x80] sm:$0xff]
        %v505 = vld [vmem:[%s2 + $0x88] sm:$0xff]
        %v506 = vld [vmem:[%s2 + $0x90] sm:$0xff]
        %v507 = vld [vmem:[%s2 + $0x98] sm:$0xff]
        %v508 = vld [vmem:[%s2 + $0xa0] sm:$0xff]
        %v509 = vld [vmem:[%s2 + $0xa8] sm:$0xff]
        %v510 = vld [vmem:[%s2 + $0xb0] sm:$0xff]
        %v511 = vld [vmem:[%s2 + $0xb8] sm:$0xff]
        %v512 = vpack.c.bf16 %v486, %v484
        %s513 = scalar_lea.vmem %s1, 16
        %v514 = vld [vmem:[%s513] sm:$0xf]
        %v515 = vld [vmem:[%s513 + $0x4] sm:$0xf]
        %v518 = vunpack.c.l.b16 %v514
        %v519 = vunpack.c.l.b16 %v515
        %v520 = vpack.c.b16 %v519, %v518
        %v522 = vsel %vm470, %v520, 0
        %524 = vmatpush.bf16.msra.mxu0 0
        %525 = vmatpush.bf16.msra.mxu0 0
        %526 = vmatpush.bf16.msra.mxu0 0
        %527 = vmatpush.bf16.msra.mxu0 0
        %528 = vmatpush.bf16.msra.mxu0 0
        %529 = vmatpush.bf16.msra.mxu0 0
        %530 = vmatpush.bf16.msra.mxu0 %v467
        %531 = vmatpush.bf16.msra.mxu0 %v466
        %532 = vmatmul.bf16.gmra.mxu0 %v522
        %v533 = vpop.f32.mrf.mxu0
        %v534 = vadd.f32 0.0, %v533
        %v535 = vpop.f32.mrf.mxu0
        %v536 = vadd.f32 0.0, %v535
        %537 = vdwg.mxu0
        %s538 = scalar_lea.vmem %s2, 192
        %v539 = vld [vmem:[%s538] sm:$0xff]
        %v540 = vld [vmem:[%s538 + $0x8] sm:$0xff]
        %v541 = vld [vmem:[%s538 + $0x10] sm:$0xff]
        %v542 = vld [vmem:[%s538 + $0x18] sm:$0xff]
        %v543 = vld [vmem:[%s538 + $0x20] sm:$0xff]
        %v544 = vld [vmem:[%s538 + $0x28] sm:$0xff]
        %v545 = vld [vmem:[%s538 + $0x30] sm:$0xff]
        %v546 = vld [vmem:[%s538 + $0x38] sm:$0xff]
        %v547 = vld [vmem:[%s538 + $0x40] sm:$0xff]
        %v548 = vld [vmem:[%s538 + $0x48] sm:$0xff]
        %v549 = vld [vmem:[%s538 + $0x50] sm:$0xff]
        %v550 = vld [vmem:[%s538 + $0x58] sm:$0xff]
        %v551 = vld [vmem:[%s538 + $0x60] sm:$0xff]
        %v552 = vld [vmem:[%s538 + $0x68] sm:$0xff]
        %v553 = vld [vmem:[%s538 + $0x70] sm:$0xff]
        %v554 = vld [vmem:[%s538 + $0x78] sm:$0xff]
        %v555 = vld [vmem:[%s538 + $0x80] sm:$0xff]
        %v556 = vld [vmem:[%s538 + $0x88] sm:$0xff]
        %v557 = vld [vmem:[%s538 + $0x90] sm:$0xff]
        %v558 = vld [vmem:[%s538 + $0x98] sm:$0xff]
        %v559 = vld [vmem:[%s538 + $0xa0] sm:$0xff]
        %v560 = vld [vmem:[%s538 + $0xa8] sm:$0xff]
        %v561 = vld [vmem:[%s538 + $0xb0] sm:$0xff]
        %v562 = vld [vmem:[%s538 + $0xb8] sm:$0xff]
        %v563 = vpack.c.bf16 %v536, %v534
        %v588 = vunpack.c.l.b16 %v539
        %v589 = vunpack.c.h.b16 %v539
        %v590 = vunpack.c.l.b16 %v540
        %v591 = vunpack.c.h.b16 %v540
        %v592 = vunpack.c.l.b16 %v541
        %v593 = vunpack.c.h.b16 %v541
        %v594 = vunpack.c.l.b16 %v542
        %v595 = vunpack.c.h.b16 %v542
        %v596 = vunpack.c.l.b16 %v543
        %v597 = vunpack.c.h.b16 %v543
        %v598 = vunpack.c.l.b16 %v544
        %v599 = vunpack.c.h.b16 %v544
        %v600 = vunpack.c.l.b16 %v545
        %v601 = vunpack.c.h.b16 %v545
        %v602 = vunpack.c.l.b16 %v546
        %v603 = vunpack.c.h.b16 %v546
        %v604 = vunpack.c.l.b16 %v547
        %v605 = vunpack.c.h.b16 %v547
        %v606 = vunpack.c.l.b16 %v548
        %v607 = vunpack.c.h.b16 %v548
        %v608 = vunpack.c.l.b16 %v549
        %v609 = vunpack.c.h.b16 %v549
        %v610 = vunpack.c.l.b16 %v550
        %v611 = vunpack.c.h.b16 %v550
        %v612 = vunpack.c.l.b16 %v551
        %v613 = vunpack.c.h.b16 %v551
        %v614 = vunpack.c.l.b16 %v552
        %v615 = vunpack.c.h.b16 %v552
        %v616 = vunpack.c.l.b16 %v553
        %v617 = vunpack.c.h.b16 %v553
        %v618 = vunpack.c.l.b16 %v554
        %v619 = vunpack.c.h.b16 %v554
        %v620 = vunpack.c.l.b16 %v555
        %v621 = vunpack.c.h.b16 %v555
        %v622 = vunpack.c.l.b16 %v556
        %v623 = vunpack.c.h.b16 %v556
        %v624 = vunpack.c.l.b16 %v557
        %v625 = vunpack.c.h.b16 %v557
        %v626 = vunpack.c.l.b16 %v558
        %v627 = vunpack.c.h.b16 %v558
        %v628 = vunpack.c.l.b16 %v559
        %v629 = vunpack.c.h.b16 %v559
        %v630 = vunpack.c.l.b16 %v560
        %v631 = vunpack.c.h.b16 %v560
        %v632 = vunpack.c.l.b16 %v561
        %v633 = vunpack.c.h.b16 %v561
        %v634 = vunpack.c.l.b16 %v562
        %v635 = vunpack.c.h.b16 %v562
        %v636 = vpack.c.b16 %v592, %v588
        %v637 = vpack.c.b16 %v593, %v589
        %v638 = vpack.c.b16 %v594, %v590
        %v639 = vpack.c.b16 %v595, %v591
        %v640 = vpack.c.b16 %v600, %v596
        %v641 = vpack.c.b16 %v601, %v597
        %v642 = vpack.c.b16 %v602, %v598
        %v643 = vpack.c.b16 %v603, %v599
        %v644 = vpack.c.b16 %v608, %v604
        %v645 = vpack.c.b16 %v609, %v605
        %v646 = vpack.c.b16 %v610, %v606
        %v647 = vpack.c.b16 %v611, %v607
        %v648 = vpack.c.b16 %v616, %v612
        %v649 = vpack.c.b16 %v617, %v613
        %v650 = vpack.c.b16 %v618, %v614
        %v651 = vpack.c.b16 %v619, %v615
        %v652 = vpack.c.b16 %v624, %v620
        %v653 = vpack.c.b16 %v625, %v621
        %v654 = vpack.c.b16 %v626, %v622
        %v655 = vpack.c.b16 %v627, %v623
        %v656 = vpack.c.b16 %v632, %v628
        %v657 = vpack.c.b16 %v633, %v629
        %v658 = vpack.c.b16 %v634, %v630
        %v659 = vpack.c.b16 %v635, %v631
        %vm684 = vcmask 785408
        %v686 = vsel %vm684, %v563, 0
        %688 = vmatpush.bf16.msra.mxu0 0
        %689 = vmatpush.bf16.msra.mxu0 0
        %690 = vmatpush.bf16.msra.mxu0 %v656
        %691 = vmatpush.bf16.msra.mxu0 %v652
        %692 = vmatpush.bf16.msra.mxu0 %v648
        %693 = vmatpush.bf16.msra.mxu0 %v644
        %694 = vmatpush.bf16.msra.mxu0 %v640
        %695 = vmatpush.bf16.msra.mxu0 %v636
        %696 = vmatmul.bf16.gmra.mxu0 %v686
        %v697 = vpop.f32.mrf.mxu0
        %v698 = vadd.f32 0.0, %v697
        %v699 = vpop.f32.mrf.mxu0
        %v700 = vadd.f32 0.0, %v699
        %701 = vdwg.mxu0
        %702 = vmatpush.bf16.msra.mxu0 0
        %703 = vmatpush.bf16.msra.mxu0 0
        %704 = vmatpush.bf16.msra.mxu0 %v657
        %705 = vmatpush.bf16.msra.mxu0 %v653
        %706 = vmatpush.bf16.msra.mxu0 %v649
        %707 = vmatpush.bf16.msra.mxu0 %v645
        %708 = vmatpush.bf16.msra.mxu0 %v641
        %709 = vmatpush.bf16.msra.mxu0 %v637
        %710 = vmatmul.bf16.gmra.mxu0 %v686
        %v711 = vpop.f32.mrf.mxu0
        %v712 = vadd.f32 0.0, %v711
        %v713 = vpop.f32.mrf.mxu0
        %v714 = vadd.f32 0.0, %v713
        %715 = vdwg.mxu0
        %716 = vmatpush.bf16.msra.mxu0 0
        %717 = vmatpush.bf16.msra.mxu0 0
        %718 = vmatpush.bf16.msra.mxu0 %v658
        %719 = vmatpush.bf16.msra.mxu0 %v654
        %720 = vmatpush.bf16.msra.mxu0 %v650
        %721 = vmatpush.bf16.msra.mxu0 %v646
        %722 = vmatpush.bf16.msra.mxu0 %v642
        %723 = vmatpush.bf16.msra.mxu0 %v638
        %724 = vmatmul.bf16.gmra.mxu0 %v686
        %v725 = vpop.f32.mrf.mxu0
        %v726 = vadd.f32 0.0, %v725
        %v727 = vpop.f32.mrf.mxu0
        %v728 = vadd.f32 0.0, %v727
        %729 = vdwg.mxu0
        %730 = vmatpush.bf16.msra.mxu0 0
        %731 = vmatpush.bf16.msra.mxu0 0
        %732 = vmatpush.bf16.msra.mxu0 %v659
        %733 = vmatpush.bf16.msra.mxu0 %v655
        %734 = vmatpush.bf16.msra.mxu0 %v651
        %735 = vmatpush.bf16.msra.mxu0 %v647
        %736 = vmatpush.bf16.msra.mxu0 %v643
        %737 = vmatpush.bf16.msra.mxu0 %v639
        %738 = vmatmul.bf16.gmra.mxu0 %v686
        %v739 = vpop.f32.mrf.mxu0
        %v740 = vadd.f32 0.0, %v739
        %v741 = vpop.f32.mrf.mxu0
        %v742 = vadd.f32 0.0, %v741
        %743 = vdwg.mxu0
        %v768 = vunpack.c.l.b16 %v488
        %v769 = vunpack.c.h.b16 %v488
        %v770 = vunpack.c.l.b16 %v489
        %v771 = vunpack.c.h.b16 %v489
        %v772 = vunpack.c.l.b16 %v490
        %v773 = vunpack.c.h.b16 %v490
        %v774 = vunpack.c.l.b16 %v491
        %v775 = vunpack.c.h.b16 %v491
        %v776 = vunpack.c.l.b16 %v492
        %v777 = vunpack.c.h.b16 %v492
        %v778 = vunpack.c.l.b16 %v493
        %v779 = vunpack.c.h.b16 %v493
        %v780 = vunpack.c.l.b16 %v494
        %v781 = vunpack.c.h.b16 %v494
        %v782 = vunpack.c.l.b16 %v495
        %v783 = vunpack.c.h.b16 %v495
        %v784 = vunpack.c.l.b16 %v496
        %v785 = vunpack.c.h.b16 %v496
        %v786 = vunpack.c.l.b16 %v497
        %v787 = vunpack.c.h.b16 %v497
        %v788 = vunpack.c.l.b16 %v498
        %v789 = vunpack.c.h.b16 %v498
        %v790 = vunpack.c.l.b16 %v499
        %v791 = vunpack.c.h.b16 %v499
        %v792 = vunpack.c.l.b16 %v500
        %v793 = vunpack.c.h.b16 %v500
        %v794 = vunpack.c.l.b16 %v501
        %v795 = vunpack.c.h.b16 %v501
        %v796 = vunpack.c.l.b16 %v502
        %v797 = vunpack.c.h.b16 %v502
        %v798 = vunpack.c.l.b16 %v503
        %v799 = vunpack.c.h.b16 %v503
        %v800 = vunpack.c.l.b16 %v504
        %v801 = vunpack.c.h.b16 %v504
        %v802 = vunpack.c.l.b16 %v505
        %v803 = vunpack.c.h.b16 %v505
        %v804 = vunpack.c.l.b16 %v506
        %v805 = vunpack.c.h.b16 %v506
        %v806 = vunpack.c.l.b16 %v507
        %v807 = vunpack.c.h.b16 %v507
        %v808 = vunpack.c.l.b16 %v508
        %v809 = vunpack.c.h.b16 %v508
        %v810 = vunpack.c.l.b16 %v509
        %v811 = vunpack.c.h.b16 %v509
        %v812 = vunpack.c.l.b16 %v510
        %v813 = vunpack.c.h.b16 %v510
        %v814 = vunpack.c.l.b16 %v511
        %v815 = vunpack.c.h.b16 %v511
        %v816 = vpack.c.b16 %v772, %v768
        %v817 = vpack.c.b16 %v773, %v769
        %v818 = vpack.c.b16 %v774, %v770
        %v819 = vpack.c.b16 %v775, %v771
        %v820 = vpack.c.b16 %v780, %v776
        %v821 = vpack.c.b16 %v781, %v777
        %v822 = vpack.c.b16 %v782, %v778
        %v823 = vpack.c.b16 %v783, %v779
        %v824 = vpack.c.b16 %v788, %v784
        %v825 = vpack.c.b16 %v789, %v785
        %v826 = vpack.c.b16 %v790, %v786
        %v827 = vpack.c.b16 %v791, %v787
        %v828 = vpack.c.b16 %v796, %v792
        %v829 = vpack.c.b16 %v797, %v793
        %v830 = vpack.c.b16 %v798, %v794
        %v831 = vpack.c.b16 %v799, %v795
        %v832 = vpack.c.b16 %v804, %v800
        %v833 = vpack.c.b16 %v805, %v801
        %v834 = vpack.c.b16 %v806, %v802
        %v835 = vpack.c.b16 %v807, %v803
        %v836 = vpack.c.b16 %v812, %v808
        %v837 = vpack.c.b16 %v813, %v809
        %v838 = vpack.c.b16 %v814, %v810
        %v839 = vpack.c.b16 %v815, %v811
        %v865 = vsel %vm684, %v512, 0
        %867 = vmatpush.bf16.msra.mxu0 0
        %868 = vmatpush.bf16.msra.mxu0 0
        %869 = vmatpush.bf16.msra.mxu0 %v836
        %870 = vmatpush.bf16.msra.mxu0 %v832
        %871 = vmatpush.bf16.msra.mxu0 %v828
        %872 = vmatpush.bf16.msra.mxu0 %v824
        %873 = vmatpush.bf16.msra.mxu0 %v820
        %874 = vmatpush.bf16.msra.mxu0 %v816
        %875 = vmatmul.bf16.gmra.mxu0 %v865
        %v876 = vpop.f32.mrf.mxu0
        %v877 = vadd.f32 %v698, %v876
        %v878 = vpop.f32.mrf.mxu0
        %v879 = vadd.f32 %v700, %v878
        %880 = vdwg.mxu0
        %881 = vmatpush.bf16.msra.mxu0 0
        %882 = vmatpush.bf16.msra.mxu0 0
        %883 = vmatpush.bf16.msra.mxu0 %v837
        %884 = vmatpush.bf16.msra.mxu0 %v833
        %885 = vmatpush.bf16.msra.mxu0 %v829
        %886 = vmatpush.bf16.msra.mxu0 %v825
        %887 = vmatpush.bf16.msra.mxu0 %v821
        %888 = vmatpush.bf16.msra.mxu0 %v817
        %889 = vmatmul.bf16.gmra.mxu0 %v865
        %v890 = vpop.f32.mrf.mxu0
        %v891 = vadd.f32 %v712, %v890
        %v892 = vpop.f32.mrf.mxu0
        %v893 = vadd.f32 %v714, %v892
        %894 = vdwg.mxu0
        %895 = vmatpush.bf16.msra.mxu0 0
        %896 = vmatpush.bf16.msra.mxu0 0
        %897 = vmatpush.bf16.msra.mxu0 %v838
        %898 = vmatpush.bf16.msra.mxu0 %v834
        %899 = vmatpush.bf16.msra.mxu0 %v830
        %900 = vmatpush.bf16.msra.mxu0 %v826
        %901 = vmatpush.bf16.msra.mxu0 %v822
        %902 = vmatpush.bf16.msra.mxu0 %v818
        %903 = vmatmul.bf16.gmra.mxu0 %v865
        %v904 = vpop.f32.mrf.mxu0
        %v905 = vadd.f32 %v726, %v904
        %v906 = vpop.f32.mrf.mxu0
        %v907 = vadd.f32 %v728, %v906
        %908 = vdwg.mxu0
        %909 = vmatpush.bf16.msra.mxu0 0
        %910 = vmatpush.bf16.msra.mxu0 0
        %911 = vmatpush.bf16.msra.mxu0 %v839
        %912 = vmatpush.bf16.msra.mxu0 %v835
        %913 = vmatpush.bf16.msra.mxu0 %v831
        %914 = vmatpush.bf16.msra.mxu0 %v827
        %915 = vmatpush.bf16.msra.mxu0 %v823
        %916 = vmatpush.bf16.msra.mxu0 %v819
        %917 = vmatmul.bf16.gmra.mxu0 %v865
        %v918 = vpop.f32.mrf.mxu0
        %v919 = vadd.f32 %v740, %v918
        %v920 = vpop.f32.mrf.mxu0
        %v921 = vadd.f32 %v742, %v920
        %922 = vdwg.mxu0
        %s923 = scalar_lea.vmem %s1, 32
        %v924 = vld [vmem:[%s923] sm:$0xf]
        %v925 = vld [vmem:[%s923 + $0x4] sm:$0xf]
        %v928 = vunpack.c.l.b16 %v924
        %v929 = vunpack.c.l.b16 %v925
        %v930 = vpack.c.b16 %v929, %v928
        %v932 = vsel %vm470, %v930, 0
        %934 = vmatpush.bf16.msra.mxu0 0
        %935 = vmatpush.bf16.msra.mxu0 0
        %936 = vmatpush.bf16.msra.mxu0 0
        %937 = vmatpush.bf16.msra.mxu0 0
        %938 = vmatpush.bf16.msra.mxu0 0
        %939 = vmatpush.bf16.msra.mxu0 0
        %940 = vmatpush.bf16.msra.mxu0 %v467
        %941 = vmatpush.bf16.msra.mxu0 %v466
        %942 = vmatmul.bf16.gmra.mxu0 %v932
        %v943 = vpop.f32.mrf.mxu0
        %v944 = vadd.f32 0.0, %v943
        %v945 = vpop.f32.mrf.mxu0
        %v946 = vadd.f32 0.0, %v945
        %947 = vdwg.mxu0
        %s948 = scalar_lea.vmem %s2, 384
        %v949 = vld [vmem:[%s948] sm:$0xff]
        %v950 = vld [vmem:[%s948 + $0x8] sm:$0xff]
        %v951 = vld [vmem:[%s948 + $0x10] sm:$0xff]
        %v952 = vld [vmem:[%s948 + $0x18] sm:$0xff]
        %v953 = vld [vmem:[%s948 + $0x20] sm:$0xff]
        %v954 = vld [vmem:[%s948 + $0x28] sm:$0xff]
        %v955 = vld [vmem:[%s948 + $0x30] sm:$0xff]
        %v956 = vld [vmem:[%s948 + $0x38] sm:$0xff]
        %v957 = vld [vmem:[%s948 + $0x40] sm:$0xff]
        %v958 = vld [vmem:[%s948 + $0x48] sm:$0xff]
        %v959 = vld [vmem:[%s948 + $0x50] sm:$0xff]
        %v960 = vld [vmem:[%s948 + $0x58] sm:$0xff]
        %v961 = vld [vmem:[%s948 + $0x60] sm:$0xff]
        %v962 = vld [vmem:[%s948 + $0x68] sm:$0xff]
        %v963 = vld [vmem:[%s948 + $0x70] sm:$0xff]
        %v964 = vld [vmem:[%s948 + $0x78] sm:$0xff]
        %v965 = vld [vmem:[%s948 + $0x80] sm:$0xff]
        %v966 = vld [vmem:[%s948 + $0x88] sm:$0xff]
        %v967 = vld [vmem:[%s948 + $0x90] sm:$0xff]
        %v968 = vld [vmem:[%s948 + $0x98] sm:$0xff]
        %v969 = vld [vmem:[%s948 + $0xa0] sm:$0xff]
        %v970 = vld [vmem:[%s948 + $0xa8] sm:$0xff]
        %v971 = vld [vmem:[%s948 + $0xb0] sm:$0xff]
        %v972 = vld [vmem:[%s948 + $0xb8] sm:$0xff]
        %v973 = vpack.c.bf16 %v946, %v944
        %v998 = vunpack.c.l.b16 %v949
        %v999 = vunpack.c.h.b16 %v949
        %v1000 = vunpack.c.l.b16 %v950
        %v1001 = vunpack.c.h.b16 %v950
        %v1002 = vunpack.c.l.b16 %v951
        %v1003 = vunpack.c.h.b16 %v951
        %v1004 = vunpack.c.l.b16 %v952
        %v1005 = vunpack.c.h.b16 %v952
        %v1006 = vunpack.c.l.b16 %v953
        %v1007 = vunpack.c.h.b16 %v953
        %v1008 = vunpack.c.l.b16 %v954
        %v1009 = vunpack.c.h.b16 %v954
        %v1010 = vunpack.c.l.b16 %v955
        %v1011 = vunpack.c.h.b16 %v955
        %v1012 = vunpack.c.l.b16 %v956
        %v1013 = vunpack.c.h.b16 %v956
        %v1014 = vunpack.c.l.b16 %v957
        %v1015 = vunpack.c.h.b16 %v957
        %v1016 = vunpack.c.l.b16 %v958
        %v1017 = vunpack.c.h.b16 %v958
        %v1018 = vunpack.c.l.b16 %v959
        %v1019 = vunpack.c.h.b16 %v959
        %v1020 = vunpack.c.l.b16 %v960
        %v1021 = vunpack.c.h.b16 %v960
        %v1022 = vunpack.c.l.b16 %v961
        %v1023 = vunpack.c.h.b16 %v961
        %v1024 = vunpack.c.l.b16 %v962
        %v1025 = vunpack.c.h.b16 %v962
        %v1026 = vunpack.c.l.b16 %v963
        %v1027 = vunpack.c.h.b16 %v963
        %v1028 = vunpack.c.l.b16 %v964
        %v1029 = vunpack.c.h.b16 %v964
        %v1030 = vunpack.c.l.b16 %v965
        %v1031 = vunpack.c.h.b16 %v965
        %v1032 = vunpack.c.l.b16 %v966
        %v1033 = vunpack.c.h.b16 %v966
        %v1034 = vunpack.c.l.b16 %v967
        %v1035 = vunpack.c.h.b16 %v967
        %v1036 = vunpack.c.l.b16 %v968
        %v1037 = vunpack.c.h.b16 %v968
        %v1038 = vunpack.c.l.b16 %v969
        %v1039 = vunpack.c.h.b16 %v969
        %v1040 = vunpack.c.l.b16 %v970
        %v1041 = vunpack.c.h.b16 %v970
        %v1042 = vunpack.c.l.b16 %v971
        %v1043 = vunpack.c.h.b16 %v971
        %v1044 = vunpack.c.l.b16 %v972
        %v1045 = vunpack.c.h.b16 %v972
        %v1046 = vpack.c.b16 %v1002, %v998
        %v1047 = vpack.c.b16 %v1003, %v999
        %v1048 = vpack.c.b16 %v1004, %v1000
        %v1049 = vpack.c.b16 %v1005, %v1001
        %v1050 = vpack.c.b16 %v1010, %v1006
        %v1051 = vpack.c.b16 %v1011, %v1007
        %v1052 = vpack.c.b16 %v1012, %v1008
        %v1053 = vpack.c.b16 %v1013, %v1009
        %v1054 = vpack.c.b16 %v1018, %v1014
        %v1055 = vpack.c.b16 %v1019, %v1015
        %v1056 = vpack.c.b16 %v1020, %v1016
        %v1057 = vpack.c.b16 %v1021, %v1017
        %v1058 = vpack.c.b16 %v1026, %v1022
        %v1059 = vpack.c.b16 %v1027, %v1023
        %v1060 = vpack.c.b16 %v1028, %v1024
        %v1061 = vpack.c.b16 %v1029, %v1025
        %v1062 = vpack.c.b16 %v1034, %v1030
        %v1063 = vpack.c.b16 %v1035, %v1031
        %v1064 = vpack.c.b16 %v1036, %v1032
        %v1065 = vpack.c.b16 %v1037, %v1033
        %v1066 = vpack.c.b16 %v1042, %v1038
        %v1067 = vpack.c.b16 %v1043, %v1039
        %v1068 = vpack.c.b16 %v1044, %v1040
        %v1069 = vpack.c.b16 %v1045, %v1041
        %v1095 = vsel %vm684, %v973, 0
        %1097 = vmatpush.bf16.msra.mxu0 0
        %1098 = vmatpush.bf16.msra.mxu0 0
        %1099 = vmatpush.bf16.msra.mxu0 %v1066
        %1100 = vmatpush.bf16.msra.mxu0 %v1062
        %1101 = vmatpush.bf16.msra.mxu0 %v1058
        %1102 = vmatpush.bf16.msra.mxu0 %v1054
        %1103 = vmatpush.bf16.msra.mxu0 %v1050
        %1104 = vmatpush.bf16.msra.mxu0 %v1046
        %1105 = vmatmul.bf16.gmra.mxu0 %v1095
        %v1106 = vpop.f32.mrf.mxu0
        %v1107 = vadd.f32 0.0, %v1106
        %v1108 = vpop.f32.mrf.mxu0
        %v1109 = vadd.f32 0.0, %v1108
        %1110 = vdwg.mxu0
        %1111 = vmatpush.bf16.msra.mxu0 0
        %1112 = vmatpush.bf16.msra.mxu0 0
        %1113 = vmatpush.bf16.msra.mxu0 %v1067
        %1114 = vmatpush.bf16.msra.mxu0 %v1063
        %1115 = vmatpush.bf16.msra.mxu0 %v1059
        %1116 = vmatpush.bf16.msra.mxu0 %v1055
        %1117 = vmatpush.bf16.msra.mxu0 %v1051
        %1118 = vmatpush.bf16.msra.mxu0 %v1047
        %1119 = vmatmul.bf16.gmra.mxu0 %v1095
        %v1120 = vpop.f32.mrf.mxu0
        %v1121 = vadd.f32 0.0, %v1120
        %v1122 = vpop.f32.mrf.mxu0
        %v1123 = vadd.f32 0.0, %v1122
        %1124 = vdwg.mxu0
        %1125 = vmatpush.bf16.msra.mxu0 0
        %1126 = vmatpush.bf16.msra.mxu0 0
        %1127 = vmatpush.bf16.msra.mxu0 %v1068
        %1128 = vmatpush.bf16.msra.mxu0 %v1064
        %1129 = vmatpush.bf16.msra.mxu0 %v1060
        %1130 = vmatpush.bf16.msra.mxu0 %v1056
        %1131 = vmatpush.bf16.msra.mxu0 %v1052
        %1132 = vmatpush.bf16.msra.mxu0 %v1048
        %1133 = vmatmul.bf16.gmra.mxu0 %v1095
        %v1134 = vpop.f32.mrf.mxu0
        %v1135 = vadd.f32 0.0, %v1134
        %v1136 = vpop.f32.mrf.mxu0
        %v1137 = vadd.f32 0.0, %v1136
        %1138 = vdwg.mxu0
        %1139 = vmatpush.bf16.msra.mxu0 0
        %1140 = vmatpush.bf16.msra.mxu0 0
        %1141 = vmatpush.bf16.msra.mxu0 %v1069
        %1142 = vmatpush.bf16.msra.mxu0 %v1065
        %1143 = vmatpush.bf16.msra.mxu0 %v1061
        %1144 = vmatpush.bf16.msra.mxu0 %v1057
        %1145 = vmatpush.bf16.msra.mxu0 %v1053
        %1146 = vmatpush.bf16.msra.mxu0 %v1049
        %1147 = vmatmul.bf16.gmra.mxu0 %v1095
        %v1148 = vpop.f32.mrf.mxu0
        %v1149 = vadd.f32 0.0, %v1148
        %v1150 = vpop.f32.mrf.mxu0
        %v1151 = vadd.f32 0.0, %v1150
        %1152 = vdwg.mxu0
        %v1153 = vadd.f32 %v877, %v1107
        %v1154 = vadd.f32 %v891, %v1121
        %v1155 = vadd.f32 %v905, %v1135
        %v1156 = vadd.f32 %v919, %v1149
        %v1157 = vadd.f32 %v879, %v1109
        %v1158 = vadd.f32 %v893, %v1123
        %v1159 = vadd.f32 %v907, %v1137
        %v1160 = vadd.f32 %v921, %v1151
        %v1161 = vmax.f32 %v1153, %v1155
        %v1162 = vmax.f32 %v1154, %v1156
        %v1163 = vmax.f32 %v1157, %v1159
        %v1164 = vmax.f32 %v1158, %v1160
        %s1165 = scalar_lea.vmem %s1, 8
        %v1166 = vld [vmem:[%s1165] sm:$0xf]
        %v1167 = vld [vmem:[%s1165 + $0x4] sm:$0xf]
        %v1170 = vunpack.c.l.b16 %v1166
        %v1171 = vunpack.c.l.b16 %v1167
        %v1172 = vpack.c.b16 %v1171, %v1170
        %v1174 = vsel %vm470, %v1172, 0
        %1176 = vmatpush.bf16.msra.mxu0 0
        %1177 = vmatpush.bf16.msra.mxu0 0
        %1178 = vmatpush.bf16.msra.mxu0 0
        %1179 = vmatpush.bf16.msra.mxu0 0
        %1180 = vmatpush.bf16.msra.mxu0 0
        %1181 = vmatpush.bf16.msra.mxu0 0
        %1182 = vmatpush.bf16.msra.mxu0 %v467
        %1183 = vmatpush.bf16.msra.mxu0 %v466
        %1184 = vmatmul.bf16.gmra.mxu0 %v1174
        %v1185 = vpop.f32.mrf.mxu0
        %v1186 = vadd.f32 0.0, %v1185
        %v1187 = vpop.f32.mrf.mxu0
        %v1188 = vadd.f32 0.0, %v1187
        %1189 = vdwg.mxu0
        %v1190 = vpack.c.bf16 %v1188, %v1186
        %s1191 = scalar_lea.vmem %s1, 24
        %v1192 = vld [vmem:[%s1191] sm:$0xf]
        %v1193 = vld [vmem:[%s1191 + $0x4] sm:$0xf]
        %v1196 = vunpack.c.l.b16 %v1192
        %v1197 = vunpack.c.l.b16 %v1193
        %v1198 = vpack.c.b16 %v1197, %v1196
        %v1200 = vsel %vm470, %v1198, 0
        %1202 = vmatpush.bf16.msra.mxu0 0
        %1203 = vmatpush.bf16.msra.mxu0 0
        %1204 = vmatpush.bf16.msra.mxu0 0
        %1205 = vmatpush.bf16.msra.mxu0 0
        %1206 = vmatpush.bf16.msra.mxu0 0
        %1207 = vmatpush.bf16.msra.mxu0 0
        %1208 = vmatpush.bf16.msra.mxu0 %v467
        %1209 = vmatpush.bf16.msra.mxu0 %v466
        %1210 = vmatmul.bf16.gmra.mxu0 %v1200
        %v1211 = vpop.f32.mrf.mxu0
        %v1212 = vadd.f32 0.0, %v1211
        %v1213 = vpop.f32.mrf.mxu0
        %v1214 = vadd.f32 0.0, %v1213
        %1215 = vdwg.mxu0
        %v1216 = vpack.c.bf16 %v1214, %v1212
        %v1218 = vsel %vm684, %v1216, 0
        %1220 = vmatpush.bf16.msra.mxu0 0
        %1221 = vmatpush.bf16.msra.mxu0 0
        %1222 = vmatpush.bf16.msra.mxu0 %v656
        %1223 = vmatpush.bf16.msra.mxu0 %v652
        %1224 = vmatpush.bf16.msra.mxu0 %v648
        %1225 = vmatpush.bf16.msra.mxu0 %v644
        %1226 = vmatpush.bf16.msra.mxu0 %v640
        %1227 = vmatpush.bf16.msra.mxu0 %v636
        %1228 = vmatmul.bf16.gmra.mxu0 %v1218
        %v1229 = vpop.f32.mrf.mxu0
        %v1230 = vadd.f32 0.0, %v1229
        %v1231 = vpop.f32.mrf.mxu0
        %v1232 = vadd.f32 0.0, %v1231
        %1233 = vdwg.mxu0
        %1234 = vmatpush.bf16.msra.mxu0 0
        %1235 = vmatpush.bf16.msra.mxu0 0
        %1236 = vmatpush.bf16.msra.mxu0 %v657
        %1237 = vmatpush.bf16.msra.mxu0 %v653
        %1238 = vmatpush.bf16.msra.mxu0 %v649
        %1239 = vmatpush.bf16.msra.mxu0 %v645
        %1240 = vmatpush.bf16.msra.mxu0 %v641
        %1241 = vmatpush.bf16.msra.mxu0 %v637
        %1242 = vmatmul.bf16.gmra.mxu0 %v1218
        %v1243 = vpop.f32.mrf.mxu0
        %v1244 = vadd.f32 0.0, %v1243
        %v1245 = vpop.f32.mrf.mxu0
        %v1246 = vadd.f32 0.0, %v1245
        %1247 = vdwg.mxu0
        %1248 = vmatpush.bf16.msra.mxu0 0
        %1249 = vmatpush.bf16.msra.mxu0 0
        %1250 = vmatpush.bf16.msra.mxu0 %v658
        %1251 = vmatpush.bf16.msra.mxu0 %v654
        %1252 = vmatpush.bf16.msra.mxu0 %v650
        %1253 = vmatpush.bf16.msra.mxu0 %v646
        %1254 = vmatpush.bf16.msra.mxu0 %v642
        %1255 = vmatpush.bf16.msra.mxu0 %v638
        %1256 = vmatmul.bf16.gmra.mxu0 %v1218
        %v1257 = vpop.f32.mrf.mxu0
        %v1258 = vadd.f32 0.0, %v1257
        %v1259 = vpop.f32.mrf.mxu0
        %v1260 = vadd.f32 0.0, %v1259
        %1261 = vdwg.mxu0
        %1262 = vmatpush.bf16.msra.mxu0 0
        %1263 = vmatpush.bf16.msra.mxu0 0
        %1264 = vmatpush.bf16.msra.mxu0 %v659
        %1265 = vmatpush.bf16.msra.mxu0 %v655
        %1266 = vmatpush.bf16.msra.mxu0 %v651
        %1267 = vmatpush.bf16.msra.mxu0 %v647
        %1268 = vmatpush.bf16.msra.mxu0 %v643
        %1269 = vmatpush.bf16.msra.mxu0 %v639
        %1270 = vmatmul.bf16.gmra.mxu0 %v1218
        %v1271 = vpop.f32.mrf.mxu0
        %v1272 = vadd.f32 0.0, %v1271
        %v1273 = vpop.f32.mrf.mxu0
        %v1274 = vadd.f32 0.0, %v1273
        %1275 = vdwg.mxu0
        %v1277 = vsel %vm684, %v1190, 0
        %1279 = vmatpush.bf16.msra.mxu0 0
        %1280 = vmatpush.bf16.msra.mxu0 0
        %1281 = vmatpush.bf16.msra.mxu0 %v836
        %1282 = vmatpush.bf16.msra.mxu0 %v832
        %1283 = vmatpush.bf16.msra.mxu0 %v828
        %1284 = vmatpush.bf16.msra.mxu0 %v824
        %1285 = vmatpush.bf16.msra.mxu0 %v820
        %1286 = vmatpush.bf16.msra.mxu0 %v816
        %1287 = vmatmul.bf16.gmra.mxu0 %v1277
        %v1288 = vpop.f32.mrf.mxu0
        %v1289 = vadd.f32 %v1230, %v1288
        %v1290 = vpop.f32.mrf.mxu0
        %v1291 = vadd.f32 %v1232, %v1290
        %1292 = vdwg.mxu0
        %1293 = vmatpush.bf16.msra.mxu0 0
        %1294 = vmatpush.bf16.msra.mxu0 0
        %1295 = vmatpush.bf16.msra.mxu0 %v837
        %1296 = vmatpush.bf16.msra.mxu0 %v833
        %1297 = vmatpush.bf16.msra.mxu0 %v829
        %1298 = vmatpush.bf16.msra.mxu0 %v825
        %1299 = vmatpush.bf16.msra.mxu0 %v821
        %1300 = vmatpush.bf16.msra.mxu0 %v817
        %1301 = vmatmul.bf16.gmra.mxu0 %v1277
        %v1302 = vpop.f32.mrf.mxu0
        %v1303 = vadd.f32 %v1244, %v1302
        %v1304 = vpop.f32.mrf.mxu0
        %v1305 = vadd.f32 %v1246, %v1304
        %1306 = vdwg.mxu0
        %1307 = vmatpush.bf16.msra.mxu0 0
        %1308 = vmatpush.bf16.msra.mxu0 0
        %1309 = vmatpush.bf16.msra.mxu0 %v838
        %1310 = vmatpush.bf16.msra.mxu0 %v834
        %1311 = vmatpush.bf16.msra.mxu0 %v830
        %1312 = vmatpush.bf16.msra.mxu0 %v826
        %1313 = vmatpush.bf16.msra.mxu0 %v822
        %1314 = vmatpush.bf16.msra.mxu0 %v818
        %1315 = vmatmul.bf16.gmra.mxu0 %v1277
        %v1316 = vpop.f32.mrf.mxu0
        %v1317 = vadd.f32 %v1258, %v1316
        %v1318 = vpop.f32.mrf.mxu0
        %v1319 = vadd.f32 %v1260, %v1318
        %1320 = vdwg.mxu0
        %1321 = vmatpush.bf16.msra.mxu0 0
        %1322 = vmatpush.bf16.msra.mxu0 0
        %1323 = vmatpush.bf16.msra.mxu0 %v839
        %1324 = vmatpush.bf16.msra.mxu0 %v835
        %1325 = vmatpush.bf16.msra.mxu0 %v831
        %1326 = vmatpush.bf16.msra.mxu0 %v827
        %1327 = vmatpush.bf16.msra.mxu0 %v823
        %1328 = vmatpush.bf16.msra.mxu0 %v819
        %1329 = vmatmul.bf16.gmra.mxu0 %v1277
        %v1330 = vpop.f32.mrf.mxu0
        %v1331 = vadd.f32 %v1272, %v1330
        %v1332 = vpop.f32.mrf.mxu0
        %v1333 = vadd.f32 %v1274, %v1332
        %1334 = vdwg.mxu0
        %s1335 = scalar_lea.vmem %s1, 40
        %v1336 = vld [vmem:[%s1335] sm:$0xf]
        %v1337 = vld [vmem:[%s1335 + $0x4] sm:$0xf]
        %v1340 = vunpack.c.l.b16 %v1336
        %v1341 = vunpack.c.l.b16 %v1337
        %v1342 = vpack.c.b16 %v1341, %v1340
        %v1344 = vsel %vm470, %v1342, 0
        %1346 = vmatpush.bf16.msra.mxu0 0
        %1347 = vmatpush.bf16.msra.mxu0 0
        %1348 = vmatpush.bf16.msra.mxu0 0
        %1349 = vmatpush.bf16.msra.mxu0 0
        %1350 = vmatpush.bf16.msra.mxu0 0
        %1351 = vmatpush.bf16.msra.mxu0 0
        %1352 = vmatpush.bf16.msra.mxu0 %v467
        %1353 = vmatpush.bf16.msra.mxu0 %v466
        %1354 = vmatmul.bf16.gmra.mxu0 %v1344
        %v1355 = vpop.f32.mrf.mxu0
        %v1356 = vadd.f32 0.0, %v1355
        %v1357 = vpop.f32.mrf.mxu0
        %v1358 = vadd.f32 0.0, %v1357
        %1359 = vdwg.mxu0
        %v1360 = vpack.c.bf16 %v1358, %v1356
        %v1362 = vsel %vm684, %v1360, 0
        %1364 = vmatpush.bf16.msra.mxu0 0
        %1365 = vmatpush.bf16.msra.mxu0 0
        %1366 = vmatpush.bf16.msra.mxu0 %v1066
        %1367 = vmatpush.bf16.msra.mxu0 %v1062
        %1368 = vmatpush.bf16.msra.mxu0 %v1058
        %1369 = vmatpush.bf16.msra.mxu0 %v1054
        %1370 = vmatpush.bf16.msra.mxu0 %v1050
        %1371 = vmatpush.bf16.msra.mxu0 %v1046
        %1372 = vmatmul.bf16.gmra.mxu0 %v1362
        %v1373 = vpop.f32.mrf.mxu0
        %v1374 = vadd.f32 0.0, %v1373
        %v1375 = vpop.f32.mrf.mxu0
        %v1376 = vadd.f32 0.0, %v1375
        %1377 = vdwg.mxu0
        %1378 = vmatpush.bf16.msra.mxu0 0
        %1379 = vmatpush.bf16.msra.mxu0 0
        %1380 = vmatpush.bf16.msra.mxu0 %v1067
        %1381 = vmatpush.bf16.msra.mxu0 %v1063
        %1382 = vmatpush.bf16.msra.mxu0 %v1059
        %1383 = vmatpush.bf16.msra.mxu0 %v1055
        %1384 = vmatpush.bf16.msra.mxu0 %v1051
        %1385 = vmatpush.bf16.msra.mxu0 %v1047
        %1386 = vmatmul.bf16.gmra.mxu0 %v1362
        %v1387 = vpop.f32.mrf.mxu0
        %v1388 = vadd.f32 0.0, %v1387
        %v1389 = vpop.f32.mrf.mxu0
        %v1390 = vadd.f32 0.0, %v1389
        %1391 = vdwg.mxu0
        %1392 = vmatpush.bf16.msra.mxu0 0
        %1393 = vmatpush.bf16.msra.mxu0 0
        %1394 = vmatpush.bf16.msra.mxu0 %v1068
        %1395 = vmatpush.bf16.msra.mxu0 %v1064
        %1396 = vmatpush.bf16.msra.mxu0 %v1060
        %1397 = vmatpush.bf16.msra.mxu0 %v1056
        %1398 = vmatpush.bf16.msra.mxu0 %v1052
        %1399 = vmatpush.bf16.msra.mxu0 %v1048
        %1400 = vmatmul.bf16.gmra.mxu0 %v1362
        %v1401 = vpop.f32.mrf.mxu0
        %v1402 = vadd.f32 0.0, %v1401
        %v1403 = vpop.f32.mrf.mxu0
        %v1404 = vadd.f32 0.0, %v1403
        %1405 = vdwg.mxu0
        %1406 = vmatpush.bf16.msra.mxu0 0
        %1407 = vmatpush.bf16.msra.mxu0 0
        %1408 = vmatpush.bf16.msra.mxu0 %v1069
        %1409 = vmatpush.bf16.msra.mxu0 %v1065
        %1410 = vmatpush.bf16.msra.mxu0 %v1061
        %1411 = vmatpush.bf16.msra.mxu0 %v1057
        %1412 = vmatpush.bf16.msra.mxu0 %v1053
        %1413 = vmatpush.bf16.msra.mxu0 %v1049
        %1414 = vmatmul.bf16.gmra.mxu0 %v1362
        %v1415 = vpop.f32.mrf.mxu0
        %v1416 = vadd.f32 0.0, %v1415
        %v1417 = vpop.f32.mrf.mxu0
        %v1418 = vadd.f32 0.0, %v1417
        %1419 = vdwg.mxu0
        %v1420 = vadd.f32 %v1289, %v1374
        %v1421 = vadd.f32 %v1303, %v1388
        %v1422 = vadd.f32 %v1317, %v1402
        %v1423 = vadd.f32 %v1331, %v1416
        %v1424 = vadd.f32 %v1291, %v1376
        %v1425 = vadd.f32 %v1305, %v1390
        %v1426 = vadd.f32 %v1319, %v1404
        %v1427 = vadd.f32 %v1333, %v1418
        %v1428 = vmax.f32 %v1420, %v1422
        %v1429 = vmax.f32 %v1421, %v1423
        %v1430 = vmax.f32 %v1424, %v1426
        %v1431 = vmax.f32 %v1425, %v1427
        %v1432 = vmax.f32 %v1161, %v1428
        %v1433 = vmax.f32 %v1162, %v1429
        %v1434 = vmax.f32 %v1163, %v1430
        %v1435 = vmax.f32 %v1164, %v1431
        %v1437 = vperm.slane %v450, 0
        %v1438 = vperm.slane %v450, 1
        %v1441 = vadd.f32 %v1432, %v1437
        %v1442 = vadd.f32 %v1433, %v1438
        %v1443 = vadd.f32 %v1434, %v1437
        %v1444 = vadd.f32 %v1435, %v1438
        %v1445 = vtanh.pop %v1441
        %v1446 = vtanh.pop %v1442
        %v1447 = vtanh.pop %v1443
        %v1448 = vtanh.pop %v1444
        %v1449 = vld [vmem:[%s6] sm:$0x1]
        %v1450 = vld [vmem:[%s4] sm:$0xf]
        %v1451 = vpack.c.bf16 %v1447, %v1445
        %v1452 = vpack.c.bf16 %v1448, %v1446
        %vm1453 = vcmask 130048
        %v1455 = vsel %vm1453, %v1450, 0
        %1457 = vmatpush.bf16.msra.mxu0 0
        %1458 = vmatpush.bf16.msra.mxu0 0
        %1459 = vmatpush.bf16.msra.mxu0 0
        %1460 = vmatpush.bf16.msra.mxu0 0
        %1461 = vmatpush.bf16.msra.mxu0 0
        %1462 = vmatpush.bf16.msra.mxu0 0
        %1463 = vmatpush.bf16.msra.mxu0 0
        %1464 = vmatpush.bf16.msra.mxu0 %v1451
        %1465 = vmatmul.bf16.gmra.mxu0 %v1455
        %v1466 = vpop.f32.mrf.mxu0
        %v1467 = vadd.f32 0.0, %v1466
        %v1468 = vpop.f32.mrf.mxu0
        %1469 = vdwg.mxu0
        %1470 = vmatpush.bf16.msra.mxu0 0
        %1471 = vmatpush.bf16.msra.mxu0 0
        %1472 = vmatpush.bf16.msra.mxu0 0
        %1473 = vmatpush.bf16.msra.mxu0 0
        %1474 = vmatpush.bf16.msra.mxu0 0
        %1475 = vmatpush.bf16.msra.mxu0 0
        %1476 = vmatpush.bf16.msra.mxu0 0
        %1477 = vmatpush.bf16.msra.mxu0 %v1452
        %1478 = vmatmul.bf16.gmra.mxu0 %v1455
        %v1479 = vpop.f32.mrf.mxu0
        %v1480 = vadd.f32 0.0, %v1479
        %v1481 = vpop.f32.mrf.mxu0
        %1482 = vdwg.mxu0
        %v1483 = vld [vmem:[%s5] sm:$0xf]
        %v1484 = vld [vmem:[%s5 + $0x4] sm:$0xf]
        %v1485 = vld [vmem:[%s5 + $0x8] sm:$0xf]
        %v1486 = vld [vmem:[%s5 + $0xc] sm:$0xf]
        %v1487 = vld [vmem:[%s5 + $0x10] sm:$0xf]
        %v1488 = vld [vmem:[%s5 + $0x14] sm:$0xf]
        %v1489 = vld [vmem:[%s5 + $0x18] sm:$0xf]
        %v1490 = vld [vmem:[%s5 + $0x1c] sm:$0xf]
        %v1491 = vld [vmem:[%s5 + $0x20] sm:$0xf]
        %v1492 = vld [vmem:[%s5 + $0x24] sm:$0xf]
        %v1493 = vld [vmem:[%s5 + $0x28] sm:$0xf]
        %v1494 = vld [vmem:[%s5 + $0x2c] sm:$0xf]
        %v1495 = vld [vmem:[%s5 + $0x30] sm:$0xf]
        %v1496 = vld [vmem:[%s5 + $0x34] sm:$0xf]
        %v1497 = vld [vmem:[%s5 + $0x38] sm:$0xf]
        %v1498 = vld [vmem:[%s5 + $0x3c] sm:$0xf]
        %v1499 = vld [vmem:[%s5 + $0x40] sm:$0xf]
        %v1500 = vld [vmem:[%s5 + $0x44] sm:$0xf]
        %v1501 = vld [vmem:[%s5 + $0x48] sm:$0xf]
        %v1502 = vld [vmem:[%s5 + $0x4c] sm:$0xf]
        %v1503 = vld [vmem:[%s5 + $0x50] sm:$0xf]
        %v1504 = vld [vmem:[%s5 + $0x54] sm:$0xf]
        %v1505 = vld [vmem:[%s5 + $0x58] sm:$0xf]
        %v1506 = vld [vmem:[%s5 + $0x5c] sm:$0xf]
        %v1507 = vld [vmem:[%s5 + $0x60] sm:$0xf]
        %v1508 = vld [vmem:[%s5 + $0x64] sm:$0xf]
        %v1509 = vld [vmem:[%s5 + $0x68] sm:$0xf]
        %v1510 = vld [vmem:[%s5 + $0x6c] sm:$0xf]
        %v1511 = vld [vmem:[%s5 + $0x70] sm:$0xf]
        %v1512 = vld [vmem:[%s5 + $0x74] sm:$0xf]
        %v1513 = vld [vmem:[%s5 + $0x78] sm:$0xf]
        %v1514 = vld [vmem:[%s5 + $0x7c] sm:$0xf]
        %v1515 = vpack.c.bf16 %v1467, %v1467
        %v1516 = vpack.c.bf16 %v1480, %v1480
        %s1517 = scalar_lea.vmem %s4, 8
        %v1518 = vld [vmem:[%s1517] sm:$0xf]
        %v1520 = vsel %vm1453, %v1518, 0
        %1522 = vmatpush.bf16.msra.mxu0 0
        %1523 = vmatpush.bf16.msra.mxu0 0
        %1524 = vmatpush.bf16.msra.mxu0 0
        %1525 = vmatpush.bf16.msra.mxu0 0
        %1526 = vmatpush.bf16.msra.mxu0 0
        %1527 = vmatpush.bf16.msra.mxu0 0
        %1528 = vmatpush.bf16.msra.mxu0 0
        %1529 = vmatpush.bf16.msra.mxu0 %v1451
        %1530 = vmatmul.bf16.gmra.mxu0 %v1520
        %v1531 = vpop.f32.mrf.mxu0
        %v1532 = vadd.f32 0.0, %v1531
        %v1533 = vpop.f32.mrf.mxu0
        %1534 = vdwg.mxu0
        %1535 = vmatpush.bf16.msra.mxu0 0
        %1536 = vmatpush.bf16.msra.mxu0 0
        %1537 = vmatpush.bf16.msra.mxu0 0
        %1538 = vmatpush.bf16.msra.mxu0 0
        %1539 = vmatpush.bf16.msra.mxu0 0
        %1540 = vmatpush.bf16.msra.mxu0 0
        %1541 = vmatpush.bf16.msra.mxu0 0
        %1542 = vmatpush.bf16.msra.mxu0 %v1452
        %1543 = vmatmul.bf16.gmra.mxu0 %v1520
        %v1544 = vpop.f32.mrf.mxu0
        %v1545 = vadd.f32 0.0, %v1544
        %v1546 = vpop.f32.mrf.mxu0
        %1547 = vdwg.mxu0
        %s1548 = scalar_lea.vmem %s5, 128
        %v1549 = vld [vmem:[%s1548] sm:$0xf]
        %v1550 = vld [vmem:[%s1548 + $0x4] sm:$0xf]
        %v1551 = vld [vmem:[%s1548 + $0x8] sm:$0xf]
        %v1552 = vld [vmem:[%s1548 + $0xc] sm:$0xf]
        %v1553 = vld [vmem:[%s1548 + $0x10] sm:$0xf]
        %v1554 = vld [vmem:[%s1548 + $0x14] sm:$0xf]
        %v1555 = vld [vmem:[%s1548 + $0x18] sm:$0xf]
        %v1556 = vld [vmem:[%s1548 + $0x1c] sm:$0xf]
        %v1557 = vld [vmem:[%s1548 + $0x20] sm:$0xf]
        %v1558 = vld [vmem:[%s1548 + $0x24] sm:$0xf]
        %v1559 = vld [vmem:[%s1548 + $0x28] sm:$0xf]
        %v1560 = vld [vmem:[%s1548 + $0x2c] sm:$0xf]
        %v1561 = vld [vmem:[%s1548 + $0x30] sm:$0xf]
        %v1562 = vld [vmem:[%s1548 + $0x34] sm:$0xf]
        %v1563 = vld [vmem:[%s1548 + $0x38] sm:$0xf]
        %v1564 = vld [vmem:[%s1548 + $0x3c] sm:$0xf]
        %v1565 = vld [vmem:[%s1548 + $0x40] sm:$0xf]
        %v1566 = vld [vmem:[%s1548 + $0x44] sm:$0xf]
        %v1567 = vld [vmem:[%s1548 + $0x48] sm:$0xf]
        %v1568 = vld [vmem:[%s1548 + $0x4c] sm:$0xf]
        %v1569 = vld [vmem:[%s1548 + $0x50] sm:$0xf]
        %v1570 = vld [vmem:[%s1548 + $0x54] sm:$0xf]
        %v1571 = vld [vmem:[%s1548 + $0x58] sm:$0xf]
        %v1572 = vld [vmem:[%s1548 + $0x5c] sm:$0xf]
        %v1573 = vld [vmem:[%s1548 + $0x60] sm:$0xf]
        %v1574 = vld [vmem:[%s1548 + $0x64] sm:$0xf]
        %v1575 = vld [vmem:[%s1548 + $0x68] sm:$0xf]
        %v1576 = vld [vmem:[%s1548 + $0x6c] sm:$0xf]
        %v1577 = vld [vmem:[%s1548 + $0x70] sm:$0xf]
        %v1578 = vld [vmem:[%s1548 + $0x74] sm:$0xf]
        %v1579 = vld [vmem:[%s1548 + $0x78] sm:$0xf]
        %v1580 = vld [vmem:[%s1548 + $0x7c] sm:$0xf]
        %v1581 = vpack.c.bf16 %v1532, %v1532
        %v1582 = vpack.c.bf16 %v1545, %v1545
        %v1615 = vunpack.c.l.b16 %v1549
        %v1616 = vunpack.c.l.b16 %v1550
        %v1617 = vunpack.c.l.b16 %v1551
        %v1618 = vunpack.c.l.b16 %v1552
        %v1619 = vunpack.c.l.b16 %v1553
        %v1620 = vunpack.c.l.b16 %v1554
        %v1621 = vunpack.c.l.b16 %v1555
        %v1622 = vunpack.c.l.b16 %v1556
        %v1623 = vunpack.c.l.b16 %v1557
        %v1624 = vunpack.c.l.b16 %v1558
        %v1625 = vunpack.c.l.b16 %v1559
        %v1626 = vunpack.c.l.b16 %v1560
        %v1627 = vunpack.c.l.b16 %v1561
        %v1628 = vunpack.c.l.b16 %v1562
        %v1629 = vunpack.c.l.b16 %v1563
        %v1630 = vunpack.c.l.b16 %v1564
        %v1631 = vunpack.c.l.b16 %v1565
        %v1632 = vunpack.c.l.b16 %v1566
        %v1633 = vunpack.c.l.b16 %v1567
        %v1634 = vunpack.c.l.b16 %v1568
        %v1635 = vunpack.c.l.b16 %v1569
        %v1636 = vunpack.c.l.b16 %v1570
        %v1637 = vunpack.c.l.b16 %v1571
        %v1638 = vunpack.c.l.b16 %v1572
        %v1639 = vunpack.c.l.b16 %v1573
        %v1640 = vunpack.c.l.b16 %v1574
        %v1641 = vunpack.c.l.b16 %v1575
        %v1642 = vunpack.c.l.b16 %v1576
        %v1643 = vunpack.c.l.b16 %v1577
        %v1644 = vunpack.c.l.b16 %v1578
        %v1645 = vunpack.c.l.b16 %v1579
        %v1646 = vunpack.c.l.b16 %v1580
        %v1647 = vpack.c.b16 %v1616, %v1615
        %v1648 = vpack.c.b16 %v1618, %v1617
        %v1649 = vpack.c.b16 %v1620, %v1619
        %v1650 = vpack.c.b16 %v1622, %v1621
        %v1651 = vpack.c.b16 %v1624, %v1623
        %v1652 = vpack.c.b16 %v1626, %v1625
        %v1653 = vpack.c.b16 %v1628, %v1627
        %v1654 = vpack.c.b16 %v1630, %v1629
        %v1655 = vpack.c.b16 %v1632, %v1631
        %v1656 = vpack.c.b16 %v1634, %v1633
        %v1657 = vpack.c.b16 %v1636, %v1635
        %v1658 = vpack.c.b16 %v1638, %v1637
        %v1659 = vpack.c.b16 %v1640, %v1639
        %v1660 = vpack.c.b16 %v1642, %v1641
        %v1661 = vpack.c.b16 %v1644, %v1643
        %v1662 = vpack.c.b16 %v1646, %v1645
        %1679 = vmatpush.bf16.msra.mxu0 %v1654
        %1680 = vmatpush.bf16.msra.mxu0 %v1653
        %1681 = vmatpush.bf16.msra.mxu0 %v1652
        %1682 = vmatpush.bf16.msra.mxu0 %v1651
        %1683 = vmatpush.bf16.msra.mxu0 %v1650
        %1684 = vmatpush.bf16.msra.mxu0 %v1649
        %1685 = vmatpush.bf16.msra.mxu0 %v1648
        %1686 = vmatpush.bf16.msra.mxu0 %v1647
        %1687 = vmatmul.bf16.gmra.mxu0 %v1581
        %v1688 = vpop.f32.mrf.mxu0
        %v1689 = vadd.f32 0.0, %v1688
        %v1690 = vpop.f32.mrf.mxu0
        %1691 = vdwg.mxu0
        %1692 = vmatpush.bf16.msra.mxu0 %v1662
        %1693 = vmatpush.bf16.msra.mxu0 %v1661
        %1694 = vmatpush.bf16.msra.mxu0 %v1660
        %1695 = vmatpush.bf16.msra.mxu0 %v1659
        %1696 = vmatpush.bf16.msra.mxu0 %v1658
        %1697 = vmatpush.bf16.msra.mxu0 %v1657
        %1698 = vmatpush.bf16.msra.mxu0 %v1656
        %1699 = vmatpush.bf16.msra.mxu0 %v1655
        %1700 = vmatmul.bf16.gmra.mxu0 %v1582
        %v1701 = vpop.f32.mrf.mxu0
        %v1702 = vadd.f32 %v1689, %v1701
        %v1703 = vpop.f32.mrf.mxu0
        %1704 = vdwg.mxu0
        %v1737 = vunpack.c.l.b16 %v1483
        %v1738 = vunpack.c.l.b16 %v1484
        %v1739 = vunpack.c.l.b16 %v1485
        %v1740 = vunpack.c.l.b16 %v1486
        %v1741 = vunpack.c.l.b16 %v1487
        %v1742 = vunpack.c.l.b16 %v1488
        %v1743 = vunpack.c.l.b16 %v1489
        %v1744 = vunpack.c.l.b16 %v1490
        %v1745 = vunpack.c.l.b16 %v1491
        %v1746 = vunpack.c.l.b16 %v1492
        %v1747 = vunpack.c.l.b16 %v1493
        %v1748 = vunpack.c.l.b16 %v1494
        %v1749 = vunpack.c.l.b16 %v1495
        %v1750 = vunpack.c.l.b16 %v1496
        %v1751 = vunpack.c.l.b16 %v1497
        %v1752 = vunpack.c.l.b16 %v1498
        %v1753 = vunpack.c.l.b16 %v1499
        %v1754 = vunpack.c.l.b16 %v1500
        %v1755 = vunpack.c.l.b16 %v1501
        %v1756 = vunpack.c.l.b16 %v1502
        %v1757 = vunpack.c.l.b16 %v1503
        %v1758 = vunpack.c.l.b16 %v1504
        %v1759 = vunpack.c.l.b16 %v1505
        %v1760 = vunpack.c.l.b16 %v1506
        %v1761 = vunpack.c.l.b16 %v1507
        %v1762 = vunpack.c.l.b16 %v1508
        %v1763 = vunpack.c.l.b16 %v1509
        %v1764 = vunpack.c.l.b16 %v1510
        %v1765 = vunpack.c.l.b16 %v1511
        %v1766 = vunpack.c.l.b16 %v1512
        %v1767 = vunpack.c.l.b16 %v1513
        %v1768 = vunpack.c.l.b16 %v1514
        %v1769 = vpack.c.b16 %v1738, %v1737
        %v1770 = vpack.c.b16 %v1740, %v1739
        %v1771 = vpack.c.b16 %v1742, %v1741
        %v1772 = vpack.c.b16 %v1744, %v1743
        %v1773 = vpack.c.b16 %v1746, %v1745
        %v1774 = vpack.c.b16 %v1748, %v1747
        %v1775 = vpack.c.b16 %v1750, %v1749
        %v1776 = vpack.c.b16 %v1752, %v1751
        %v1777 = vpack.c.b16 %v1754, %v1753
        %v1778 = vpack.c.b16 %v1756, %v1755
        %v1779 = vpack.c.b16 %v1758, %v1757
        %v1780 = vpack.c.b16 %v1760, %v1759
        %v1781 = vpack.c.b16 %v1762, %v1761
        %v1782 = vpack.c.b16 %v1764, %v1763
        %v1783 = vpack.c.b16 %v1766, %v1765
        %v1784 = vpack.c.b16 %v1768, %v1767
        %1801 = vmatpush.bf16.msra.mxu0 %v1776
        %1802 = vmatpush.bf16.msra.mxu0 %v1775
        %1803 = vmatpush.bf16.msra.mxu0 %v1774
        %1804 = vmatpush.bf16.msra.mxu0 %v1773
        %1805 = vmatpush.bf16.msra.mxu0 %v1772
        %1806 = vmatpush.bf16.msra.mxu0 %v1771
        %1807 = vmatpush.bf16.msra.mxu0 %v1770
        %1808 = vmatpush.bf16.msra.mxu0 %v1769
        %1809 = vmatmul.bf16.gmra.mxu0 %v1515
        %v1810 = vpop.f32.mrf.mxu0
        %v1811 = vadd.f32 %v1702, %v1810
        %v1812 = vpop.f32.mrf.mxu0
        %1813 = vdwg.mxu0
        %1814 = vmatpush.bf16.msra.mxu0 %v1784
        %1815 = vmatpush.bf16.msra.mxu0 %v1783
        %1816 = vmatpush.bf16.msra.mxu0 %v1782
        %1817 = vmatpush.bf16.msra.mxu0 %v1781
        %1818 = vmatpush.bf16.msra.mxu0 %v1780
        %1819 = vmatpush.bf16.msra.mxu0 %v1779
        %1820 = vmatpush.bf16.msra.mxu0 %v1778
        %1821 = vmatpush.bf16.msra.mxu0 %v1777
        %1822 = vmatmul.bf16.gmra.mxu0 %v1516
        %v1823 = vpop.f32.mrf.mxu0
        %v1824 = vadd.f32 %v1811, %v1823
        %v1825 = vpop.f32.mrf.mxu0
        %1826 = vdwg.mxu0
        %s1827 = scalar_lea.vmem %s4, 16
        %v1828 = vld [vmem:[%s1827] sm:$0xf]
        %v1830 = vsel %vm1453, %v1828, 0
        %1832 = vmatpush.bf16.msra.mxu0 0
        %1833 = vmatpush.bf16.msra.mxu0 0
        %1834 = vmatpush.bf16.msra.mxu0 0
        %1835 = vmatpush.bf16.msra.mxu0 0
        %1836 = vmatpush.bf16.msra.mxu0 0
        %1837 = vmatpush.bf16.msra.mxu0 0
        %1838 = vmatpush.bf16.msra.mxu0 0
        %1839 = vmatpush.bf16.msra.mxu0 %v1451
        %1840 = vmatmul.bf16.gmra.mxu0 %v1830
        %v1841 = vpop.f32.mrf.mxu0
        %v1842 = vadd.f32 0.0, %v1841
        %v1843 = vpop.f32.mrf.mxu0
        %1844 = vdwg.mxu0
        %1845 = vmatpush.bf16.msra.mxu0 0
        %1846 = vmatpush.bf16.msra.mxu0 0
        %1847 = vmatpush.bf16.msra.mxu0 0
        %1848 = vmatpush.bf16.msra.mxu0 0
        %1849 = vmatpush.bf16.msra.mxu0 0
        %1850 = vmatpush.bf16.msra.mxu0 0
        %1851 = vmatpush.bf16.msra.mxu0 0
        %1852 = vmatpush.bf16.msra.mxu0 %v1452
        %1853 = vmatmul.bf16.gmra.mxu0 %v1830
        %v1854 = vpop.f32.mrf.mxu0
        %v1855 = vadd.f32 0.0, %v1854
        %v1856 = vpop.f32.mrf.mxu0
        %1857 = vdwg.mxu0
        %s1858 = scalar_lea.vmem %s5, 256
        %v1859 = vld [vmem:[%s1858] sm:$0xf]
        %v1860 = vld [vmem:[%s1858 + $0x4] sm:$0xf]
        %v1861 = vld [vmem:[%s1858 + $0x8] sm:$0xf]
        %v1862 = vld [vmem:[%s1858 + $0xc] sm:$0xf]
        %v1863 = vld [vmem:[%s1858 + $0x10] sm:$0xf]
        %v1864 = vld [vmem:[%s1858 + $0x14] sm:$0xf]
        %v1865 = vld [vmem:[%s1858 + $0x18] sm:$0xf]
        %v1866 = vld [vmem:[%s1858 + $0x1c] sm:$0xf]
        %v1867 = vld [vmem:[%s1858 + $0x20] sm:$0xf]
        %v1868 = vld [vmem:[%s1858 + $0x24] sm:$0xf]
        %v1869 = vld [vmem:[%s1858 + $0x28] sm:$0xf]
        %v1870 = vld [vmem:[%s1858 + $0x2c] sm:$0xf]
        %v1871 = vld [vmem:[%s1858 + $0x30] sm:$0xf]
        %v1872 = vld [vmem:[%s1858 + $0x34] sm:$0xf]
        %v1873 = vld [vmem:[%s1858 + $0x38] sm:$0xf]
        %v1874 = vld [vmem:[%s1858 + $0x3c] sm:$0xf]
        %v1875 = vld [vmem:[%s1858 + $0x40] sm:$0xf]
        %v1876 = vld [vmem:[%s1858 + $0x44] sm:$0xf]
        %v1877 = vld [vmem:[%s1858 + $0x48] sm:$0xf]
        %v1878 = vld [vmem:[%s1858 + $0x4c] sm:$0xf]
        %v1879 = vld [vmem:[%s1858 + $0x50] sm:$0xf]
        %v1880 = vld [vmem:[%s1858 + $0x54] sm:$0xf]
        %v1881 = vld [vmem:[%s1858 + $0x58] sm:$0xf]
        %v1882 = vld [vmem:[%s1858 + $0x5c] sm:$0xf]
        %v1883 = vld [vmem:[%s1858 + $0x60] sm:$0xf]
        %v1884 = vld [vmem:[%s1858 + $0x64] sm:$0xf]
        %v1885 = vld [vmem:[%s1858 + $0x68] sm:$0xf]
        %v1886 = vld [vmem:[%s1858 + $0x6c] sm:$0xf]
        %v1887 = vld [vmem:[%s1858 + $0x70] sm:$0xf]
        %v1888 = vld [vmem:[%s1858 + $0x74] sm:$0xf]
        %v1889 = vld [vmem:[%s1858 + $0x78] sm:$0xf]
        %v1890 = vld [vmem:[%s1858 + $0x7c] sm:$0xf]
        %v1891 = vpack.c.bf16 %v1842, %v1842
        %v1892 = vpack.c.bf16 %v1855, %v1855
        %v1925 = vunpack.c.l.b16 %v1859
        %v1926 = vunpack.c.l.b16 %v1860
        %v1927 = vunpack.c.l.b16 %v1861
        %v1928 = vunpack.c.l.b16 %v1862
        %v1929 = vunpack.c.l.b16 %v1863
        %v1930 = vunpack.c.l.b16 %v1864
        %v1931 = vunpack.c.l.b16 %v1865
        %v1932 = vunpack.c.l.b16 %v1866
        %v1933 = vunpack.c.l.b16 %v1867
        %v1934 = vunpack.c.l.b16 %v1868
        %v1935 = vunpack.c.l.b16 %v1869
        %v1936 = vunpack.c.l.b16 %v1870
        %v1937 = vunpack.c.l.b16 %v1871
        %v1938 = vunpack.c.l.b16 %v1872
        %v1939 = vunpack.c.l.b16 %v1873
        %v1940 = vunpack.c.l.b16 %v1874
        %v1941 = vunpack.c.l.b16 %v1875
        %v1942 = vunpack.c.l.b16 %v1876
        %v1943 = vunpack.c.l.b16 %v1877
        %v1944 = vunpack.c.l.b16 %v1878
        %v1945 = vunpack.c.l.b16 %v1879
        %v1946 = vunpack.c.l.b16 %v1880
        %v1947 = vunpack.c.l.b16 %v1881
        %v1948 = vunpack.c.l.b16 %v1882
        %v1949 = vunpack.c.l.b16 %v1883
        %v1950 = vunpack.c.l.b16 %v1884
        %v1951 = vunpack.c.l.b16 %v1885
        %v1952 = vunpack.c.l.b16 %v1886
        %v1953 = vunpack.c.l.b16 %v1887
        %v1954 = vunpack.c.l.b16 %v1888
        %v1955 = vunpack.c.l.b16 %v1889
        %v1956 = vunpack.c.l.b16 %v1890
        %v1957 = vpack.c.b16 %v1926, %v1925
        %v1958 = vpack.c.b16 %v1928, %v1927
        %v1959 = vpack.c.b16 %v1930, %v1929
        %v1960 = vpack.c.b16 %v1932, %v1931
        %v1961 = vpack.c.b16 %v1934, %v1933
        %v1962 = vpack.c.b16 %v1936, %v1935
        %v1963 = vpack.c.b16 %v1938, %v1937
        %v1964 = vpack.c.b16 %v1940, %v1939
        %v1965 = vpack.c.b16 %v1942, %v1941
        %v1966 = vpack.c.b16 %v1944, %v1943
        %v1967 = vpack.c.b16 %v1946, %v1945
        %v1968 = vpack.c.b16 %v1948, %v1947
        %v1969 = vpack.c.b16 %v1950, %v1949
        %v1970 = vpack.c.b16 %v1952, %v1951
        %v1971 = vpack.c.b16 %v1954, %v1953
        %v1972 = vpack.c.b16 %v1956, %v1955
        %1989 = vmatpush.bf16.msra.mxu0 %v1964
        %1990 = vmatpush.bf16.msra.mxu0 %v1963
        %1991 = vmatpush.bf16.msra.mxu0 %v1962
        %1992 = vmatpush.bf16.msra.mxu0 %v1961
        %1993 = vmatpush.bf16.msra.mxu0 %v1960
        %1994 = vmatpush.bf16.msra.mxu0 %v1959
        %1995 = vmatpush.bf16.msra.mxu0 %v1958
        %1996 = vmatpush.bf16.msra.mxu0 %v1957
        %1997 = vmatmul.bf16.gmra.mxu0 %v1891
        %v1998 = vpop.f32.mrf.mxu0
        %v1999 = vadd.f32 0.0, %v1998
        %v2000 = vpop.f32.mrf.mxu0
        %2001 = vdwg.mxu0
        %2002 = vmatpush.bf16.msra.mxu0 %v1972
        %2003 = vmatpush.bf16.msra.mxu0 %v1971
        %2004 = vmatpush.bf16.msra.mxu0 %v1970
        %2005 = vmatpush.bf16.msra.mxu0 %v1969
        %2006 = vmatpush.bf16.msra.mxu0 %v1968
        %2007 = vmatpush.bf16.msra.mxu0 %v1967
        %2008 = vmatpush.bf16.msra.mxu0 %v1966
        %2009 = vmatpush.bf16.msra.mxu0 %v1965
        %2010 = vmatmul.bf16.gmra.mxu0 %v1892
        %v2011 = vpop.f32.mrf.mxu0
        %v2012 = vadd.f32 %v1999, %v2011
        %v2013 = vpop.f32.mrf.mxu0
        %2014 = vdwg.mxu0
        %v2015 = vadd.f32 %v1824, %v2012
        %2017 = vrot.lane.b32.xlu0 %v2015, 64
        %v2018 = vpop.permute.xlu0 %2017
        %v2020 = vmax.f32 %v2015, %v2018
        %s2021 = scalar_lea.vmem %s4, 4
        %v2022 = vld [vmem:[%s2021] sm:$0xf]
        %v2024 = vsel %vm1453, %v2022, 0
        %2026 = vmatpush.bf16.msra.mxu0 0
        %2027 = vmatpush.bf16.msra.mxu0 0
        %2028 = vmatpush.bf16.msra.mxu0 0
        %2029 = vmatpush.bf16.msra.mxu0 0
        %2030 = vmatpush.bf16.msra.mxu0 0
        %2031 = vmatpush.bf16.msra.mxu0 0
        %2032 = vmatpush.bf16.msra.mxu0 0
        %2033 = vmatpush.bf16.msra.mxu0 %v1451
        %2034 = vmatmul.bf16.gmra.mxu0 %v2024
        %v2035 = vpop.f32.mrf.mxu0
        %v2036 = vadd.f32 0.0, %v2035
        %v2037 = vpop.f32.mrf.mxu0
        %2038 = vdwg.mxu0
        %2039 = vmatpush.bf16.msra.mxu0 0
        %2040 = vmatpush.bf16.msra.mxu0 0
        %2041 = vmatpush.bf16.msra.mxu0 0
        %2042 = vmatpush.bf16.msra.mxu0 0
        %2043 = vmatpush.bf16.msra.mxu0 0
        %2044 = vmatpush.bf16.msra.mxu0 0
        %2045 = vmatpush.bf16.msra.mxu0 0
        %2046 = vmatpush.bf16.msra.mxu0 %v1452
        %2047 = vmatmul.bf16.gmra.mxu0 %v2024
        %v2048 = vpop.f32.mrf.mxu0
        %v2049 = vadd.f32 0.0, %v2048
        %v2050 = vpop.f32.mrf.mxu0
        %2051 = vdwg.mxu0
        %v2052 = vpack.c.bf16 %v2036, %v2036
        %v2053 = vpack.c.bf16 %v2049, %v2049
        %s2054 = scalar_lea.vmem %s4, 12
        %v2055 = vld [vmem:[%s2054] sm:$0xf]
        %v2057 = vsel %vm1453, %v2055, 0
        %2059 = vmatpush.bf16.msra.mxu0 0
        %2060 = vmatpush.bf16.msra.mxu0 0
        %2061 = vmatpush.bf16.msra.mxu0 0
        %2062 = vmatpush.bf16.msra.mxu0 0
        %2063 = vmatpush.bf16.msra.mxu0 0
        %2064 = vmatpush.bf16.msra.mxu0 0
        %2065 = vmatpush.bf16.msra.mxu0 0
        %2066 = vmatpush.bf16.msra.mxu0 %v1451
        %2067 = vmatmul.bf16.gmra.mxu0 %v2057
        %v2068 = vpop.f32.mrf.mxu0
        %v2069 = vadd.f32 0.0, %v2068
        %v2070 = vpop.f32.mrf.mxu0
        %2071 = vdwg.mxu0
        %2072 = vmatpush.bf16.msra.mxu0 0
        %2073 = vmatpush.bf16.msra.mxu0 0
        %2074 = vmatpush.bf16.msra.mxu0 0
        %2075 = vmatpush.bf16.msra.mxu0 0
        %2076 = vmatpush.bf16.msra.mxu0 0
        %2077 = vmatpush.bf16.msra.mxu0 0
        %2078 = vmatpush.bf16.msra.mxu0 0
        %2079 = vmatpush.bf16.msra.mxu0 %v1452
        %2080 = vmatmul.bf16.gmra.mxu0 %v2057
        %v2081 = vpop.f32.mrf.mxu0
        %v2082 = vadd.f32 0.0, %v2081
        %v2083 = vpop.f32.mrf.mxu0
        %2084 = vdwg.mxu0
        %v2085 = vpack.c.bf16 %v2069, %v2069
        %v2086 = vpack.c.bf16 %v2082, %v2082
        %2087 = vmatpush.bf16.msra.mxu0 %v1654
        %2088 = vmatpush.bf16.msra.mxu0 %v1653
        %2089 = vmatpush.bf16.msra.mxu0 %v1652
        %2090 = vmatpush.bf16.msra.mxu0 %v1651
        %2091 = vmatpush.bf16.msra.mxu0 %v1650
        %2092 = vmatpush.bf16.msra.mxu0 %v1649
        %2093 = vmatpush.bf16.msra.mxu0 %v1648
        %2094 = vmatpush.bf16.msra.mxu0 %v1647
        %2095 = vmatmul.bf16.gmra.mxu0 %v2085
        %v2096 = vpop.f32.mrf.mxu0
        %v2097 = vadd.f32 0.0, %v2096
        %v2098 = vpop.f32.mrf.mxu0
        %2099 = vdwg.mxu0
        %2100 = vmatpush.bf16.msra.mxu0 %v1662
        %2101 = vmatpush.bf16.msra.mxu0 %v1661
        %2102 = vmatpush.bf16.msra.mxu0 %v1660
        %2103 = vmatpush.bf16.msra.mxu0 %v1659
        %2104 = vmatpush.bf16.msra.mxu0 %v1658
        %2105 = vmatpush.bf16.msra.mxu0 %v1657
        %2106 = vmatpush.bf16.msra.mxu0 %v1656
        %2107 = vmatpush.bf16.msra.mxu0 %v1655
        %2108 = vmatmul.bf16.gmra.mxu0 %v2086
        %v2109 = vpop.f32.mrf.mxu0
        %v2110 = vadd.f32 %v2097, %v2109
        %v2111 = vpop.f32.mrf.mxu0
        %2112 = vdwg.mxu0
        %2113 = vmatpush.bf16.msra.mxu0 %v1776
        %2114 = vmatpush.bf16.msra.mxu0 %v1775
        %2115 = vmatpush.bf16.msra.mxu0 %v1774
        %2116 = vmatpush.bf16.msra.mxu0 %v1773
        %2117 = vmatpush.bf16.msra.mxu0 %v1772
        %2118 = vmatpush.bf16.msra.mxu0 %v1771
        %2119 = vmatpush.bf16.msra.mxu0 %v1770
        %2120 = vmatpush.bf16.msra.mxu0 %v1769
        %2121 = vmatmul.bf16.gmra.mxu0 %v2052
        %v2122 = vpop.f32.mrf.mxu0
        %v2123 = vadd.f32 %v2110, %v2122
        %v2124 = vpop.f32.mrf.mxu0
        %2125 = vdwg.mxu0
        %2126 = vmatpush.bf16.msra.mxu0 %v1784
        %2127 = vmatpush.bf16.msra.mxu0 %v1783
        %2128 = vmatpush.bf16.msra.mxu0 %v1782
        %2129 = vmatpush.bf16.msra.mxu0 %v1781
        %2130 = vmatpush.bf16.msra.mxu0 %v1780
        %2131 = vmatpush.bf16.msra.mxu0 %v1779
        %2132 = vmatpush.bf16.msra.mxu0 %v1778
        %2133 = vmatpush.bf16.msra.mxu0 %v1777
        %2134 = vmatmul.bf16.gmra.mxu0 %v2053
        %v2135 = vpop.f32.mrf.mxu0
        %v2136 = vadd.f32 %v2123, %v2135
        %v2137 = vpop.f32.mrf.mxu0
        %2138 = vdwg.mxu0
        %s2139 = scalar_lea.vmem %s4, 20
        %v2140 = vld [vmem:[%s2139] sm:$0xf]
        %v2142 = vsel %vm1453, %v2140, 0
        %2144 = vmatpush.bf16.msra.mxu0 0
        %2145 = vmatpush.bf16.msra.mxu0 0
        %2146 = vmatpush.bf16.msra.mxu0 0
        %2147 = vmatpush.bf16.msra.mxu0 0
        %2148 = vmatpush.bf16.msra.mxu0 0
        %2149 = vmatpush.bf16.msra.mxu0 0
        %2150 = vmatpush.bf16.msra.mxu0 0
        %2151 = vmatpush.bf16.msra.mxu0 %v1451
        %2152 = vmatmul.bf16.gmra.mxu0 %v2142
        %v2153 = vpop.f32.mrf.mxu0
        %v2154 = vadd.f32 0.0, %v2153
        %v2155 = vpop.f32.mrf.mxu0
        %2156 = vdwg.mxu0
        %2157 = vmatpush.bf16.msra.mxu0 0
        %2158 = vmatpush.bf16.msra.mxu0 0
        %2159 = vmatpush.bf16.msra.mxu0 0
        %2160 = vmatpush.bf16.msra.mxu0 0
        %2161 = vmatpush.bf16.msra.mxu0 0
        %2162 = vmatpush.bf16.msra.mxu0 0
        %2163 = vmatpush.bf16.msra.mxu0 0
        %2164 = vmatpush.bf16.msra.mxu0 %v1452
        %2165 = vmatmul.bf16.gmra.mxu0 %v2142
        %v2166 = vpop.f32.mrf.mxu0
        %v2167 = vadd.f32 0.0, %v2166
        %v2168 = vpop.f32.mrf.mxu0
        %2169 = vdwg.mxu0
        %v2170 = vpack.c.bf16 %v2154, %v2154
        %v2171 = vpack.c.bf16 %v2167, %v2167
        %2172 = vmatpush.bf16.msra.mxu0 %v1964
        %2173 = vmatpush.bf16.msra.mxu0 %v1963
        %2174 = vmatpush.bf16.msra.mxu0 %v1962
        %2175 = vmatpush.bf16.msra.mxu0 %v1961
        %2176 = vmatpush.bf16.msra.mxu0 %v1960
        %2177 = vmatpush.bf16.msra.mxu0 %v1959
        %2178 = vmatpush.bf16.msra.mxu0 %v1958
        %2179 = vmatpush.bf16.msra.mxu0 %v1957
        %2180 = vmatmul.bf16.gmra.mxu0 %v2170
        %v2181 = vpop.f32.mrf.mxu0
        %v2182 = vadd.f32 0.0, %v2181
        %v2183 = vpop.f32.mrf.mxu0
        %2184 = vdwg.mxu0
        %2185 = vmatpush.bf16.msra.mxu0 %v1972
        %2186 = vmatpush.bf16.msra.mxu0 %v1971
        %2187 = vmatpush.bf16.msra.mxu0 %v1970
        %2188 = vmatpush.bf16.msra.mxu0 %v1969
        %2189 = vmatpush.bf16.msra.mxu0 %v1968
        %2190 = vmatpush.bf16.msra.mxu0 %v1967
        %2191 = vmatpush.bf16.msra.mxu0 %v1966
        %2192 = vmatpush.bf16.msra.mxu0 %v1965
        %2193 = vmatmul.bf16.gmra.mxu0 %v2171
        %v2194 = vpop.f32.mrf.mxu0
        %v2195 = vadd.f32 %v2182, %v2194
        %v2196 = vpop.f32.mrf.mxu0
        %2197 = vdwg.mxu0
        %v2198 = vadd.f32 %v2136, %v2195
        %2200 = vrot.lane.b32.xlu0 %v2198, 64
        %v2201 = vpop.permute.xlu0 %2200
        %v2203 = vmax.f32 %v2198, %v2201
        %v2204 = vmax.f32 %v2020, %v2203
        %v2206 = vperm.slane %v1449, 0
        %v2208 = vadd.f32 %v2204, %v2206
        %v2209 = vtanh.pop %v2208
        %v2210 = vld [vmem:[%s7] sm:$0xff]
        %v2211 = vld [vmem:[%s7 + $0x8] sm:$0xff]
        %v2212 = vld [vmem:[%s7 + $0x10] sm:$0xff]
        %v2213 = vld [vmem:[%s7 + $0x18] sm:$0xff]
        %v2214 = vld [vmem:[%s7 + $0x20] sm:$0xff]
        %v2215 = vld [vmem:[%s7 + $0x28] sm:$0xff]
        %v2216 = vld [vmem:[%s7 + $0x30] sm:$0xff]
        %v2217 = vld [vmem:[%s7 + $0x38] sm:$0xff]
        %v2218 = vpack.c.bf16 %v2209, %v2209
        %v2227 = vunpack.c.l.b16 %v2210
        %v2228 = vunpack.c.h.b16 %v2210
        %v2229 = vunpack.c.l.b16 %v2211
        %v2230 = vunpack.c.h.b16 %v2211
        %v2231 = vunpack.c.l.b16 %v2212
        %v2232 = vunpack.c.h.b16 %v2212
        %v2233 = vunpack.c.l.b16 %v2213
        %v2234 = vunpack.c.h.b16 %v2213
        %v2235 = vunpack.c.l.b16 %v2214
        %v2236 = vunpack.c.h.b16 %v2214
        %v2237 = vunpack.c.l.b16 %v2215
        %v2238 = vunpack.c.h.b16 %v2215
        %v2239 = vunpack.c.l.b16 %v2216
        %v2240 = vunpack.c.h.b16 %v2216
        %v2241 = vunpack.c.l.b16 %v2217
        %v2242 = vunpack.c.h.b16 %v2217
        %v2243 = vpack.c.b16 %v2229, %v2227
        %v2244 = vpack.c.b16 %v2230, %v2228
        %v2245 = vpack.c.b16 %v2233, %v2231
        %v2246 = vpack.c.b16 %v2234, %v2232
        %v2247 = vpack.c.b16 %v2237, %v2235
        %v2248 = vpack.c.b16 %v2238, %v2236
        %v2249 = vpack.c.b16 %v2241, %v2239
        %v2250 = vpack.c.b16 %v2242, %v2240
        %vm2259 = vcmask 523264
        %v2261 = vsel %vm2259, %v2218, 0
        %2263 = vmatpush.bf16.msra.mxu0 0
        %2264 = vmatpush.bf16.msra.mxu0 0
        %2265 = vmatpush.bf16.msra.mxu0 0
        %2266 = vmatpush.bf16.msra.mxu0 0
        %2267 = vmatpush.bf16.msra.mxu0 %v2249
        %2268 = vmatpush.bf16.msra.mxu0 %v2247
        %2269 = vmatpush.bf16.msra.mxu0 %v2245
        %2270 = vmatpush.bf16.msra.mxu0 %v2243
        %2271 = vmatmul.bf16.gmra.mxu0 %v2261
        %v2272 = vpop.f32.mrf.mxu0
        %v2273 = vadd.f32 0.0, %v2272
        %v2274 = vpop.f32.mrf.mxu0
        %2275 = vdwg.mxu0
        %2276 = vmatpush.bf16.msra.mxu0 0
        %2277 = vmatpush.bf16.msra.mxu0 0
        %2278 = vmatpush.bf16.msra.mxu0 0
        %2279 = vmatpush.bf16.msra.mxu0 0
        %2280 = vmatpush.bf16.msra.mxu0 %v2250
        %2281 = vmatpush.bf16.msra.mxu0 %v2248
        %2282 = vmatpush.bf16.msra.mxu0 %v2246
        %2283 = vmatpush.bf16.msra.mxu0 %v2244
        %2284 = vmatmul.bf16.gmra.mxu0 %v2261
        %v2285 = vpop.f32.mrf.mxu0
        %v2286 = vadd.f32 0.0, %v2285
        %v2287 = vpop.f32.mrf.mxu0
        %2288 = vdwg.mxu0
        %v2289 = vld [vmem:[%s8] sm:$0xff]
        %v2290 = vld [vmem:[%s8 + $0x8] sm:$0xff]
        %v2291 = vmul.f32 %v2273, %v2289
        %v2292 = vmul.f32 %v2286, %v2290
        %v2293 = vld [vmem:[%s9] sm:$0xf]
        %v2294 = vld [vmem:[%s9 + $0x4] sm:$0xf]
        %v2295 = vld [vmem:[%s9 + $0x8] sm:$0xf]
        %v2296 = vld [vmem:[%s9 + $0xc] sm:$0xf]
        %v2297 = vld [vmem:[%s9 + $0x10] sm:$0xf]
        %v2298 = vld [vmem:[%s9 + $0x14] sm:$0xf]
        %v2299 = vld [vmem:[%s9 + $0x18] sm:$0xf]
        %v2300 = vld [vmem:[%s9 + $0x1c] sm:$0xf]
        %v2301 = vld [vmem:[%s9 + $0x20] sm:$0xf]
        %v2302 = vld [vmem:[%s9 + $0x24] sm:$0xf]
        %v2303 = vld [vmem:[%s9 + $0x28] sm:$0xf]
        %v2304 = vld [vmem:[%s9 + $0x2c] sm:$0xf]
        %v2305 = vld [vmem:[%s9 + $0x30] sm:$0xf]
        %v2306 = vld [vmem:[%s9 + $0x34] sm:$0xf]
        %v2307 = vld [vmem:[%s9 + $0x38] sm:$0xf]
        %v2308 = vld [vmem:[%s9 + $0x3c] sm:$0xf]
        %v2309 = vld [vmem:[%s9 + $0x40] sm:$0xf]
        %v2310 = vld [vmem:[%s9 + $0x44] sm:$0xf]
        %v2311 = vld [vmem:[%s9 + $0x48] sm:$0xf]
        %v2312 = vld [vmem:[%s9 + $0x4c] sm:$0xf]
        %v2313 = vld [vmem:[%s9 + $0x50] sm:$0xf]
        %v2314 = vld [vmem:[%s9 + $0x54] sm:$0xf]
        %v2315 = vld [vmem:[%s9 + $0x58] sm:$0xf]
        %v2316 = vld [vmem:[%s9 + $0x5c] sm:$0xf]
        %v2317 = vld [vmem:[%s9 + $0x60] sm:$0xf]
        %v2318 = vld [vmem:[%s9 + $0x64] sm:$0xf]
        %v2319 = vld [vmem:[%s9 + $0x68] sm:$0xf]
        %v2320 = vld [vmem:[%s9 + $0x6c] sm:$0xf]
        %v2321 = vld [vmem:[%s9 + $0x70] sm:$0xf]
        %v2322 = vld [vmem:[%s9 + $0x74] sm:$0xf]
        %v2323 = vld [vmem:[%s9 + $0x78] sm:$0xf]
        %v2324 = vld [vmem:[%s9 + $0x7c] sm:$0xf]
        %v2325 = vpack.c.bf16 %v2291, %v2291
        %v2326 = vpack.c.bf16 %v2292, %v2292
        %v2359 = vunpack.c.l.b16 %v2293
        %v2360 = vunpack.c.l.b16 %v2294
        %v2361 = vunpack.c.l.b16 %v2295
        %v2362 = vunpack.c.l.b16 %v2296
        %v2363 = vunpack.c.l.b16 %v2297
        %v2364 = vunpack.c.l.b16 %v2298
        %v2365 = vunpack.c.l.b16 %v2299
        %v2366 = vunpack.c.l.b16 %v2300
        %v2367 = vunpack.c.l.b16 %v2301
        %v2368 = vunpack.c.l.b16 %v2302
        %v2369 = vunpack.c.l.b16 %v2303
        %v2370 = vunpack.c.l.b16 %v2304
        %v2371 = vunpack.c.l.b16 %v2305
        %v2372 = vunpack.c.l.b16 %v2306
        %v2373 = vunpack.c.l.b16 %v2307
        %v2374 = vunpack.c.l.b16 %v2308
        %v2375 = vunpack.c.l.b16 %v2309
        %v2376 = vunpack.c.l.b16 %v2310
        %v2377 = vunpack.c.l.b16 %v2311
        %v2378 = vunpack.c.l.b16 %v2312
        %v2379 = vunpack.c.l.b16 %v2313
        %v2380 = vunpack.c.l.b16 %v2314
        %v2381 = vunpack.c.l.b16 %v2315
        %v2382 = vunpack.c.l.b16 %v2316
        %v2383 = vunpack.c.l.b16 %v2317
        %v2384 = vunpack.c.l.b16 %v2318
        %v2385 = vunpack.c.l.b16 %v2319
        %v2386 = vunpack.c.l.b16 %v2320
        %v2387 = vunpack.c.l.b16 %v2321
        %v2388 = vunpack.c.l.b16 %v2322
        %v2389 = vunpack.c.l.b16 %v2323
        %v2390 = vunpack.c.l.b16 %v2324
        %v2391 = vpack.c.b16 %v2360, %v2359
        %v2392 = vpack.c.b16 %v2362, %v2361
        %v2393 = vpack.c.b16 %v2364, %v2363
        %v2394 = vpack.c.b16 %v2366, %v2365
        %v2395 = vpack.c.b16 %v2368, %v2367
        %v2396 = vpack.c.b16 %v2370, %v2369
        %v2397 = vpack.c.b16 %v2372, %v2371
        %v2398 = vpack.c.b16 %v2374, %v2373
        %v2399 = vpack.c.b16 %v2376, %v2375
        %v2400 = vpack.c.b16 %v2378, %v2377
        %v2401 = vpack.c.b16 %v2380, %v2379
        %v2402 = vpack.c.b16 %v2382, %v2381
        %v2403 = vpack.c.b16 %v2384, %v2383
        %v2404 = vpack.c.b16 %v2386, %v2385
        %v2405 = vpack.c.b16 %v2388, %v2387
        %v2406 = vpack.c.b16 %v2390, %v2389
        %2423 = vmatpush.bf16.msra.mxu0 %v2398
        %2424 = vmatpush.bf16.msra.mxu0 %v2397
        %2425 = vmatpush.bf16.msra.mxu0 %v2396
        %2426 = vmatpush.bf16.msra.mxu0 %v2395
        %2427 = vmatpush.bf16.msra.mxu0 %v2394
        %2428 = vmatpush.bf16.msra.mxu0 %v2393
        %2429 = vmatpush.bf16.msra.mxu0 %v2392
        %2430 = vmatpush.bf16.msra.mxu0 %v2391
        %2431 = vmatmul.bf16.gmra.mxu0 %v2325
        %v2432 = vpop.f32.mrf.mxu0
        %v2433 = vadd.f32 0.0, %v2432
        %v2434 = vpop.f32.mrf.mxu0
        %2435 = vdwg.mxu0
        %2436 = vmatpush.bf16.msra.mxu0 %v2406
        %2437 = vmatpush.bf16.msra.mxu0 %v2405
        %2438 = vmatpush.bf16.msra.mxu0 %v2404
        %2439 = vmatpush.bf16.msra.mxu0 %v2403
        %2440 = vmatpush.bf16.msra.mxu0 %v2402
        %2441 = vmatpush.bf16.msra.mxu0 %v2401
        %2442 = vmatpush.bf16.msra.mxu0 %v2400
        %2443 = vmatpush.bf16.msra.mxu0 %v2399
        %2444 = vmatmul.bf16.gmra.mxu0 %v2326
        %v2445 = vpop.f32.mrf.mxu0
        %v2446 = vadd.f32 %v2433, %v2445
        %v2447 = vpop.f32.mrf.mxu0
        %2448 = vdwg.mxu0
        %v2449 = vsel %vm470, %v2446, 0.0
        %v2450 = vrot.slane %v2449, 4
        %v2451 = vadd.f32 %v2449, %v2450
        %v2452 = vrot.slane %v2451, 2
        %v2453 = vadd.f32 %v2451, %v2452
        %v2454 = vrot.slane %v2453, 1
        %v2455 = vadd.f32 %v2453, %v2454
        %v2456 = vld [vmem:[%s10] sm:$0x1]
        %v2457 = vadd.f32 %v2455, %v2456
        %v2458 = vtanh.pop %v2457
        %v2459 = vld [vmem:[%s11] sm:$0xf]
        %v2460 = vld [vmem:[%s11 + $0x4] sm:$0xf]
        %v2461 = vld [vmem:[%s11 + $0x8] sm:$0xf]
        %v2462 = vld [vmem:[%s11 + $0xc] sm:$0xf]
        %v2463 = vpack.c.bf16 %v2458, %v2458
        %v2464 = vld [vmem:[%s12] sm:$0x1]
        %v2469 = vunpack.c.l.b16 %v2459
        %v2470 = vunpack.c.l.b16 %v2460
        %v2471 = vunpack.c.l.b16 %v2461
        %v2472 = vunpack.c.l.b16 %v2462
        %v2473 = vpack.c.b16 %v2470, %v2469
        %v2474 = vpack.c.b16 %v2472, %v2471
        %v2478 = vsel %vm470, %v2463, 0
        %2480 = vmatpush.bf16.msra.mxu0 0
        %2481 = vmatpush.bf16.msra.mxu0 0
        %2482 = vmatpush.bf16.msra.mxu0 0
        %2483 = vmatpush.bf16.msra.mxu0 0
        %2484 = vmatpush.bf16.msra.mxu0 0
        %2485 = vmatpush.bf16.msra.mxu0 0
        %2486 = vmatpush.bf16.msra.mxu0 %v2474
        %2487 = vmatpush.bf16.msra.mxu0 %v2473
        %2488 = vmatmul.bf16.gmra.mxu0 %v2478
        %v2489 = vpop.f32.mrf.mxu0
        %v2490 = vadd.f32 %v2464, %v2489
        %v2491 = vpop.f32.mrf.mxu0
        %2492 = vdwg.mxu0
        %vm2493 = vcmask 73728
        %2494 = vst.msk [vmem:[%s436] sm:$0x1] %vm2493, %v2490
        %s2495 = scalar_lea.vmem %s442, 16
        %v2496 = vld [vmem:[%s2495] sm:$0xf]
        %v2497 = vld [vmem:[%s2495 + $0x4] sm:$0xf]
        %v2498 = vld [vmem:[%s2495 + $0x8] sm:$0xf]
        %v2499 = vld [vmem:[%s2495 + $0xc] sm:$0xf]
        %v2500 = vld [vmem:[%s3] sm:$0x3]
        %v2501 = vld [vmem:[%s1] sm:$0xf]
        %v2502 = vld [vmem:[%s1 + $0x4] sm:$0xf]
        %v2505 = vunpack.c.l.b16 %v2501
        %v2506 = vunpack.c.l.b16 %v2502
        %v2507 = vpack.c.b16 %v2506, %v2505
        %v2512 = vunpack.c.l.b16 %v2496
        %v2513 = vunpack.c.l.b16 %v2497
        %v2514 = vunpack.c.l.b16 %v2498
        %v2515 = vunpack.c.l.b16 %v2499
        %v2516 = vpack.c.b16 %v2513, %v2512
        %v2517 = vpack.c.b16 %v2515, %v2514
        %v2521 = vsel %vm470, %v2507, 0
        %2523 = vmatpush.bf16.msra.mxu0 0
        %2524 = vmatpush.bf16.msra.mxu0 0
        %2525 = vmatpush.bf16.msra.mxu0 0
        %2526 = vmatpush.bf16.msra.mxu0 0
        %2527 = vmatpush.bf16.msra.mxu0 0
        %2528 = vmatpush.bf16.msra.mxu0 0
        %2529 = vmatpush.bf16.msra.mxu0 %v2517
        %2530 = vmatpush.bf16.msra.mxu0 %v2516
        %2531 = vmatmul.bf16.gmra.mxu0 %v2521
        %v2532 = vpop.f32.mrf.mxu0
        %v2533 = vadd.f32 0.0, %v2532
        %v2534 = vpop.f32.mrf.mxu0
        %v2535 = vadd.f32 0.0, %v2534
        %2536 = vdwg.mxu0
        %v2537 = vld [vmem:[%s2] sm:$0xff]
        %v2538 = vld [vmem:[%s2 + $0x8] sm:$0xff]
        %v2539 = vld [vmem:[%s2 + $0x10] sm:$0xff]
        %v2540 = vld [vmem:[%s2 + $0x18] sm:$0xff]
        %v2541 = vld [vmem:[%s2 + $0x20] sm:$0xff]
        %v2542 = vld [vmem:[%s2 + $0x28] sm:$0xff]
        %v2543 = vld [vmem:[%s2 + $0x30] sm:$0xff]
        %v2544 = vld [vmem:[%s2 + $0x38] sm:$0xff]
        %v2545 = vld [vmem:[%s2 + $0x40] sm:$0xff]
        %v2546 = vld [vmem:[%s2 + $0x48] sm:$0xff]
        %v2547 = vld [vmem:[%s2 + $0x50] sm:$0xff]
        %v2548 = vld [vmem:[%s2 + $0x58] sm:$0xff]
        %v2549 = vld [vmem:[%s2 + $0x60] sm:$0xff]
        %v2550 = vld [vmem:[%s2 + $0x68] sm:$0xff]
        %v2551 = vld [vmem:[%s2 + $0x70] sm:$0xff]
        %v2552 = vld [vmem:[%s2 + $0x78] sm:$0xff]
        %v2553 = vld [vmem:[%s2 + $0x80] sm:$0xff]
        %v2554 = vld [vmem:[%s2 + $0x88] sm:$0xff]
        %v2555 = vld [vmem:[%s2 + $0x90] sm:$0xff]
        %v2556 = vld [vmem:[%s2 + $0x98] sm:$0xff]
        %v2557 = vld [vmem:[%s2 + $0xa0] sm:$0xff]
        %v2558 = vld [vmem:[%s2 + $0xa8] sm:$0xff]
        %v2559 = vld [vmem:[%s2 + $0xb0] sm:$0xff]
        %v2560 = vld [vmem:[%s2 + $0xb8] sm:$0xff]
        %v2561 = vpack.c.bf16 %v2535, %v2533
        %v2562 = vld [vmem:[%s513] sm:$0xf]
        %v2563 = vld [vmem:[%s513 + $0x4] sm:$0xf]
        %v2566 = vunpack.c.l.b16 %v2562
        %v2567 = vunpack.c.l.b16 %v2563
        %v2568 = vpack.c.b16 %v2567, %v2566
        %v2570 = vsel %vm470, %v2568, 0
        %2572 = vmatpush.bf16.msra.mxu0 0
        %2573 = vmatpush.bf16.msra.mxu0 0
        %2574 = vmatpush.bf16.msra.mxu0 0
        %2575 = vmatpush.bf16.msra.mxu0 0
        %2576 = vmatpush.bf16.msra.mxu0 0
        %2577 = vmatpush.bf16.msra.mxu0 0
        %2578 = vmatpush.bf16.msra.mxu0 %v2517
        %2579 = vmatpush.bf16.msra.mxu0 %v2516
        %2580 = vmatmul.bf16.gmra.mxu0 %v2570
        %v2581 = vpop.f32.mrf.mxu0
        %v2582 = vadd.f32 0.0, %v2581
        %v2583 = vpop.f32.mrf.mxu0
        %v2584 = vadd.f32 0.0, %v2583
        %2585 = vdwg.mxu0
        %v2586 = vld [vmem:[%s538] sm:$0xff]
        %v2587 = vld [vmem:[%s538 + $0x8] sm:$0xff]
        %v2588 = vld [vmem:[%s538 + $0x10] sm:$0xff]
        %v2589 = vld [vmem:[%s538 + $0x18] sm:$0xff]
        %v2590 = vld [vmem:[%s538 + $0x20] sm:$0xff]
        %v2591 = vld [vmem:[%s538 + $0x28] sm:$0xff]
        %v2592 = vld [vmem:[%s538 + $0x30] sm:$0xff]
        %v2593 = vld [vmem:[%s538 + $0x38] sm:$0xff]
        %v2594 = vld [vmem:[%s538 + $0x40] sm:$0xff]
        %v2595 = vld [vmem:[%s538 + $0x48] sm:$0xff]
        %v2596 = vld [vmem:[%s538 + $0x50] sm:$0xff]
        %v2597 = vld [vmem:[%s538 + $0x58] sm:$0xff]
        %v2598 = vld [vmem:[%s538 + $0x60] sm:$0xff]
        %v2599 = vld [vmem:[%s538 + $0x68] sm:$0xff]
        %v2600 = vld [vmem:[%s538 + $0x70] sm:$0xff]
        %v2601 = vld [vmem:[%s538 + $0x78] sm:$0xff]
        %v2602 = vld [vmem:[%s538 + $0x80] sm:$0xff]
        %v2603 = vld [vmem:[%s538 + $0x88] sm:$0xff]
        %v2604 = vld [vmem:[%s538 + $0x90] sm:$0xff]
        %v2605 = vld [vmem:[%s538 + $0x98] sm:$0xff]
        %v2606 = vld [vmem:[%s538 + $0xa0] sm:$0xff]
        %v2607 = vld [vmem:[%s538 + $0xa8] sm:$0xff]
        %v2608 = vld [vmem:[%s538 + $0xb0] sm:$0xff]
        %v2609 = vld [vmem:[%s538 + $0xb8] sm:$0xff]
        %v2610 = vpack.c.bf16 %v2584, %v2582
        %v2635 = vunpack.c.l.b16 %v2586
        %v2636 = vunpack.c.h.b16 %v2586
        %v2637 = vunpack.c.l.b16 %v2587
        %v2638 = vunpack.c.h.b16 %v2587
        %v2639 = vunpack.c.l.b16 %v2588
        %v2640 = vunpack.c.h.b16 %v2588
        %v2641 = vunpack.c.l.b16 %v2589
        %v2642 = vunpack.c.h.b16 %v2589
        %v2643 = vunpack.c.l.b16 %v2590
        %v2644 = vunpack.c.h.b16 %v2590
        %v2645 = vunpack.c.l.b16 %v2591
        %v2646 = vunpack.c.h.b16 %v2591
        %v2647 = vunpack.c.l.b16 %v2592
        %v2648 = vunpack.c.h.b16 %v2592
        %v2649 = vunpack.c.l.b16 %v2593
        %v2650 = vunpack.c.h.b16 %v2593
        %v2651 = vunpack.c.l.b16 %v2594
        %v2652 = vunpack.c.h.b16 %v2594
        %v2653 = vunpack.c.l.b16 %v2595
        %v2654 = vunpack.c.h.b16 %v2595
        %v2655 = vunpack.c.l.b16 %v2596
        %v2656 = vunpack.c.h.b16 %v2596
        %v2657 = vunpack.c.l.b16 %v2597
        %v2658 = vunpack.c.h.b16 %v2597
        %v2659 = vunpack.c.l.b16 %v2598
        %v2660 = vunpack.c.h.b16 %v2598
        %v2661 = vunpack.c.l.b16 %v2599
        %v2662 = vunpack.c.h.b16 %v2599
        %v2663 = vunpack.c.l.b16 %v2600
        %v2664 = vunpack.c.h.b16 %v2600
        %v2665 = vunpack.c.l.b16 %v2601
        %v2666 = vunpack.c.h.b16 %v2601
        %v2667 = vunpack.c.l.b16 %v2602
        %v2668 = vunpack.c.h.b16 %v2602
        %v2669 = vunpack.c.l.b16 %v2603
        %v2670 = vunpack.c.h.b16 %v2603
        %v2671 = vunpack.c.l.b16 %v2604
        %v2672 = vunpack.c.h.b16 %v2604
        %v2673 = vunpack.c.l.b16 %v2605
        %v2674 = vunpack.c.h.b16 %v2605
        %v2675 = vunpack.c.l.b16 %v2606
        %v2676 = vunpack.c.h.b16 %v2606
        %v2677 = vunpack.c.l.b16 %v2607
        %v2678 = vunpack.c.h.b16 %v2607
        %v2679 = vunpack.c.l.b16 %v2608
        %v2680 = vunpack.c.h.b16 %v2608
        %v2681 = vunpack.c.l.b16 %v2609
        %v2682 = vunpack.c.h.b16 %v2609
        %v2683 = vpack.c.b16 %v2639, %v2635
        %v2684 = vpack.c.b16 %v2640, %v2636
        %v2685 = vpack.c.b16 %v2641, %v2637
        %v2686 = vpack.c.b16 %v2642, %v2638
        %v2687 = vpack.c.b16 %v2647, %v2643
        %v2688 = vpack.c.b16 %v2648, %v2644
        %v2689 = vpack.c.b16 %v2649, %v2645
        %v2690 = vpack.c.b16 %v2650, %v2646
        %v2691 = vpack.c.b16 %v2655, %v2651
        %v2692 = vpack.c.b16 %v2656, %v2652
        %v2693 = vpack.c.b16 %v2657, %v2653
        %v2694 = vpack.c.b16 %v2658, %v2654
        %v2695 = vpack.c.b16 %v2663, %v2659
        %v2696 = vpack.c.b16 %v2664, %v2660
        %v2697 = vpack.c.b16 %v2665, %v2661
        %v2698 = vpack.c.b16 %v2666, %v2662
        %v2699 = vpack.c.b16 %v2671, %v2667
        %v2700 = vpack.c.b16 %v2672, %v2668
        %v2701 = vpack.c.b16 %v2673, %v2669
        %v2702 = vpack.c.b16 %v2674, %v2670
        %v2703 = vpack.c.b16 %v2679, %v2675
        %v2704 = vpack.c.b16 %v2680, %v2676
        %v2705 = vpack.c.b16 %v2681, %v2677
        %v2706 = vpack.c.b16 %v2682, %v2678
        %v2732 = vsel %vm684, %v2610, 0
        %2734 = vmatpush.bf16.msra.mxu0 0
        %2735 = vmatpush.bf16.msra.mxu0 0
        %2736 = vmatpush.bf16.msra.mxu0 %v2703
        %2737 = vmatpush.bf16.msra.mxu0 %v2699
        %2738 = vmatpush.bf16.msra.mxu0 %v2695
        %2739 = vmatpush.bf16.msra.mxu0 %v2691
        %2740 = vmatpush.bf16.msra.mxu0 %v2687
        %2741 = vmatpush.bf16.msra.mxu0 %v2683
        %2742 = vmatmul.bf16.gmra.mxu0 %v2732
        %v2743 = vpop.f32.mrf.mxu0
        %v2744 = vadd.f32 0.0, %v2743
        %v2745 = vpop.f32.mrf.mxu0
        %v2746 = vadd.f32 0.0, %v2745
        %2747 = vdwg.mxu0
        %2748 = vmatpush.bf16.msra.mxu0 0
        %2749 = vmatpush.bf16.msra.mxu0 0
        %2750 = vmatpush.bf16.msra.mxu0 %v2704
        %2751 = vmatpush.bf16.msra.mxu0 %v2700
        %2752 = vmatpush.bf16.msra.mxu0 %v2696
        %2753 = vmatpush.bf16.msra.mxu0 %v2692
        %2754 = vmatpush.bf16.msra.mxu0 %v2688
        %2755 = vmatpush.bf16.msra.mxu0 %v2684
        %2756 = vmatmul.bf16.gmra.mxu0 %v2732
        %v2757 = vpop.f32.mrf.mxu0
        %v2758 = vadd.f32 0.0, %v2757
        %v2759 = vpop.f32.mrf.mxu0
        %v2760 = vadd.f32 0.0, %v2759
        %2761 = vdwg.mxu0
        %2762 = vmatpush.bf16.msra.mxu0 0
        %2763 = vmatpush.bf16.msra.mxu0 0
        %2764 = vmatpush.bf16.msra.mxu0 %v2705
        %2765 = vmatpush.bf16.msra.mxu0 %v2701
        %2766 = vmatpush.bf16.msra.mxu0 %v2697
        %2767 = vmatpush.bf16.msra.mxu0 %v2693
        %2768 = vmatpush.bf16.msra.mxu0 %v2689
        %2769 = vmatpush.bf16.msra.mxu0 %v2685
        %2770 = vmatmul.bf16.gmra.mxu0 %v2732
        %v2771 = vpop.f32.mrf.mxu0
        %v2772 = vadd.f32 0.0, %v2771
        %v2773 = vpop.f32.mrf.mxu0
        %v2774 = vadd.f32 0.0, %v2773
        %2775 = vdwg.mxu0
        %2776 = vmatpush.bf16.msra.mxu0 0
        %2777 = vmatpush.bf16.msra.mxu0 0
        %2778 = vmatpush.bf16.msra.mxu0 %v2706
        %2779 = vmatpush.bf16.msra.mxu0 %v2702
        %2780 = vmatpush.bf16.msra.mxu0 %v2698
        %2781 = vmatpush.bf16.msra.mxu0 %v2694
        %2782 = vmatpush.bf16.msra.mxu0 %v2690
        %2783 = vmatpush.bf16.msra.mxu0 %v2686
        %2784 = vmatmul.bf16.gmra.mxu0 %v2732
        %v2785 = vpop.f32.mrf.mxu0
        %v2786 = vadd.f32 0.0, %v2785
        %v2787 = vpop.f32.mrf.mxu0
        %v2788 = vadd.f32 0.0, %v2787
        %2789 = vdwg.mxu0
        %v2814 = vunpack.c.l.b16 %v2537
        %v2815 = vunpack.c.h.b16 %v2537
        %v2816 = vunpack.c.l.b16 %v2538
        %v2817 = vunpack.c.h.b16 %v2538
        %v2818 = vunpack.c.l.b16 %v2539
        %v2819 = vunpack.c.h.b16 %v2539
        %v2820 = vunpack.c.l.b16 %v2540
        %v2821 = vunpack.c.h.b16 %v2540
        %v2822 = vunpack.c.l.b16 %v2541
        %v2823 = vunpack.c.h.b16 %v2541
        %v2824 = vunpack.c.l.b16 %v2542
        %v2825 = vunpack.c.h.b16 %v2542
        %v2826 = vunpack.c.l.b16 %v2543
        %v2827 = vunpack.c.h.b16 %v2543
        %v2828 = vunpack.c.l.b16 %v2544
        %v2829 = vunpack.c.h.b16 %v2544
        %v2830 = vunpack.c.l.b16 %v2545
        %v2831 = vunpack.c.h.b16 %v2545
        %v2832 = vunpack.c.l.b16 %v2546
        %v2833 = vunpack.c.h.b16 %v2546
        %v2834 = vunpack.c.l.b16 %v2547
        %v2835 = vunpack.c.h.b16 %v2547
        %v2836 = vunpack.c.l.b16 %v2548
        %v2837 = vunpack.c.h.b16 %v2548
        %v2838 = vunpack.c.l.b16 %v2549
        %v2839 = vunpack.c.h.b16 %v2549
        %v2840 = vunpack.c.l.b16 %v2550
        %v2841 = vunpack.c.h.b16 %v2550
        %v2842 = vunpack.c.l.b16 %v2551
        %v2843 = vunpack.c.h.b16 %v2551
        %v2844 = vunpack.c.l.b16 %v2552
        %v2845 = vunpack.c.h.b16 %v2552
        %v2846 = vunpack.c.l.b16 %v2553
        %v2847 = vunpack.c.h.b16 %v2553
        %v2848 = vunpack.c.l.b16 %v2554
        %v2849 = vunpack.c.h.b16 %v2554
        %v2850 = vunpack.c.l.b16 %v2555
        %v2851 = vunpack.c.h.b16 %v2555
        %v2852 = vunpack.c.l.b16 %v2556
        %v2853 = vunpack.c.h.b16 %v2556
        %v2854 = vunpack.c.l.b16 %v2557
        %v2855 = vunpack.c.h.b16 %v2557
        %v2856 = vunpack.c.l.b16 %v2558
        %v2857 = vunpack.c.h.b16 %v2558
        %v2858 = vunpack.c.l.b16 %v2559
        %v2859 = vunpack.c.h.b16 %v2559
        %v2860 = vunpack.c.l.b16 %v2560
        %v2861 = vunpack.c.h.b16 %v2560
        %v2862 = vpack.c.b16 %v2818, %v2814
        %v2863 = vpack.c.b16 %v2819, %v2815
        %v2864 = vpack.c.b16 %v2820, %v2816
        %v2865 = vpack.c.b16 %v2821, %v2817
        %v2866 = vpack.c.b16 %v2826, %v2822
        %v2867 = vpack.c.b16 %v2827, %v2823
        %v2868 = vpack.c.b16 %v2828, %v2824
        %v2869 = vpack.c.b16 %v2829, %v2825
        %v2870 = vpack.c.b16 %v2834, %v2830
        %v2871 = vpack.c.b16 %v2835, %v2831
        %v2872 = vpack.c.b16 %v2836, %v2832
        %v2873 = vpack.c.b16 %v2837, %v2833
        %v2874 = vpack.c.b16 %v2842, %v2838
        %v2875 = vpack.c.b16 %v2843, %v2839
        %v2876 = vpack.c.b16 %v2844, %v2840
        %v2877 = vpack.c.b16 %v2845, %v2841
        %v2878 = vpack.c.b16 %v2850, %v2846
        %v2879 = vpack.c.b16 %v2851, %v2847
        %v2880 = vpack.c.b16 %v2852, %v2848
        %v2881 = vpack.c.b16 %v2853, %v2849
        %v2882 = vpack.c.b16 %v2858, %v2854
        %v2883 = vpack.c.b16 %v2859, %v2855
        %v2884 = vpack.c.b16 %v2860, %v2856
        %v2885 = vpack.c.b16 %v2861, %v2857
        %v2911 = vsel %vm684, %v2561, 0
        %2913 = vmatpush.bf16.msra.mxu0 0
        %2914 = vmatpush.bf16.msra.mxu0 0
        %2915 = vmatpush.bf16.msra.mxu0 %v2882
        %2916 = vmatpush.bf16.msra.mxu0 %v2878
        %2917 = vmatpush.bf16.msra.mxu0 %v2874
        %2918 = vmatpush.bf16.msra.mxu0 %v2870
        %2919 = vmatpush.bf16.msra.mxu0 %v2866
        %2920 = vmatpush.bf16.msra.mxu0 %v2862
        %2921 = vmatmul.bf16.gmra.mxu0 %v2911
        %v2922 = vpop.f32.mrf.mxu0
        %v2923 = vadd.f32 %v2744, %v2922
        %v2924 = vpop.f32.mrf.mxu0
        %v2925 = vadd.f32 %v2746, %v2924
        %2926 = vdwg.mxu0
        %2927 = vmatpush.bf16.msra.mxu0 0
        %2928 = vmatpush.bf16.msra.mxu0 0
        %2929 = vmatpush.bf16.msra.mxu0 %v2883
        %2930 = vmatpush.bf16.msra.mxu0 %v2879
        %2931 = vmatpush.bf16.msra.mxu0 %v2875
        %2932 = vmatpush.bf16.msra.mxu0 %v2871
        %2933 = vmatpush.bf16.msra.mxu0 %v2867
        %2934 = vmatpush.bf16.msra.mxu0 %v2863
        %2935 = vmatmul.bf16.gmra.mxu0 %v2911
        %v2936 = vpop.f32.mrf.mxu0
        %v2937 = vadd.f32 %v2758, %v2936
        %v2938 = vpop.f32.mrf.mxu0
        %v2939 = vadd.f32 %v2760, %v2938
        %2940 = vdwg.mxu0
        %2941 = vmatpush.bf16.msra.mxu0 0
        %2942 = vmatpush.bf16.msra.mxu0 0
        %2943 = vmatpush.bf16.msra.mxu0 %v2884
        %2944 = vmatpush.bf16.msra.mxu0 %v2880
        %2945 = vmatpush.bf16.msra.mxu0 %v2876
        %2946 = vmatpush.bf16.msra.mxu0 %v2872
        %2947 = vmatpush.bf16.msra.mxu0 %v2868
        %2948 = vmatpush.bf16.msra.mxu0 %v2864
        %2949 = vmatmul.bf16.gmra.mxu0 %v2911
        %v2950 = vpop.f32.mrf.mxu0
        %v2951 = vadd.f32 %v2772, %v2950
        %v2952 = vpop.f32.mrf.mxu0
        %v2953 = vadd.f32 %v2774, %v2952
        %2954 = vdwg.mxu0
        %2955 = vmatpush.bf16.msra.mxu0 0
        %2956 = vmatpush.bf16.msra.mxu0 0
        %2957 = vmatpush.bf16.msra.mxu0 %v2885
        %2958 = vmatpush.bf16.msra.mxu0 %v2881
        %2959 = vmatpush.bf16.msra.mxu0 %v2877
        %2960 = vmatpush.bf16.msra.mxu0 %v2873
        %2961 = vmatpush.bf16.msra.mxu0 %v2869
        %2962 = vmatpush.bf16.msra.mxu0 %v2865
        %2963 = vmatmul.bf16.gmra.mxu0 %v2911
        %v2964 = vpop.f32.mrf.mxu0
        %v2965 = vadd.f32 %v2786, %v2964
        %v2966 = vpop.f32.mrf.mxu0
        %v2967 = vadd.f32 %v2788, %v2966
        %2968 = vdwg.mxu0
        %v2969 = vld [vmem:[%s923] sm:$0xf]
        %v2970 = vld [vmem:[%s923 + $0x4] sm:$0xf]
        %v2973 = vunpack.c.l.b16 %v2969
        %v2974 = vunpack.c.l.b16 %v2970
        %v2975 = vpack.c.b16 %v2974, %v2973
        %v2977 = vsel %vm470, %v2975, 0
        %2979 = vmatpush.bf16.msra.mxu0 0
        %2980 = vmatpush.bf16.msra.mxu0 0
        %2981 = vmatpush.bf16.msra.mxu0 0
        %2982 = vmatpush.bf16.msra.mxu0 0
        %2983 = vmatpush.bf16.msra.mxu0 0
        %2984 = vmatpush.bf16.msra.mxu0 0
        %2985 = vmatpush.bf16.msra.mxu0 %v2517
        %2986 = vmatpush.bf16.msra.mxu0 %v2516
        %2987 = vmatmul.bf16.gmra.mxu0 %v2977
        %v2988 = vpop.f32.mrf.mxu0
        %v2989 = vadd.f32 0.0, %v2988
        %v2990 = vpop.f32.mrf.mxu0
        %v2991 = vadd.f32 0.0, %v2990
        %2992 = vdwg.mxu0
        %v2993 = vld [vmem:[%s948] sm:$0xff]
        %v2994 = vld [vmem:[%s948 + $0x8] sm:$0xff]
        %v2995 = vld [vmem:[%s948 + $0x10] sm:$0xff]
        %v2996 = vld [vmem:[%s948 + $0x18] sm:$0xff]
        %v2997 = vld [vmem:[%s948 + $0x20] sm:$0xff]
        %v2998 = vld [vmem:[%s948 + $0x28] sm:$0xff]
        %v2999 = vld [vmem:[%s948 + $0x30] sm:$0xff]
        %v3000 = vld [vmem:[%s948 + $0x38] sm:$0xff]
        %v3001 = vld [vmem:[%s948 + $0x40] sm:$0xff]
        %v3002 = vld [vmem:[%s948 + $0x48] sm:$0xff]
        %v3003 = vld [vmem:[%s948 + $0x50] sm:$0xff]
        %v3004 = vld [vmem:[%s948 + $0x58] sm:$0xff]
        %v3005 = vld [vmem:[%s948 + $0x60] sm:$0xff]
        %v3006 = vld [vmem:[%s948 + $0x68] sm:$0xff]
        %v3007 = vld [vmem:[%s948 + $0x70] sm:$0xff]
        %v3008 = vld [vmem:[%s948 + $0x78] sm:$0xff]
        %v3009 = vld [vmem:[%s948 + $0x80] sm:$0xff]
        %v3010 = vld [vmem:[%s948 + $0x88] sm:$0xff]
        %v3011 = vld [vmem:[%s948 + $0x90] sm:$0xff]
        %v3012 = vld [vmem:[%s948 + $0x98] sm:$0xff]
        %v3013 = vld [vmem:[%s948 + $0xa0] sm:$0xff]
        %v3014 = vld [vmem:[%s948 + $0xa8] sm:$0xff]
        %v3015 = vld [vmem:[%s948 + $0xb0] sm:$0xff]
        %v3016 = vld [vmem:[%s948 + $0xb8] sm:$0xff]
        %v3017 = vpack.c.bf16 %v2991, %v2989
        %v3042 = vunpack.c.l.b16 %v2993
        %v3043 = vunpack.c.h.b16 %v2993
        %v3044 = vunpack.c.l.b16 %v2994
        %v3045 = vunpack.c.h.b16 %v2994
        %v3046 = vunpack.c.l.b16 %v2995
        %v3047 = vunpack.c.h.b16 %v2995
        %v3048 = vunpack.c.l.b16 %v2996
        %v3049 = vunpack.c.h.b16 %v2996
        %v3050 = vunpack.c.l.b16 %v2997
        %v3051 = vunpack.c.h.b16 %v2997
        %v3052 = vunpack.c.l.b16 %v2998
        %v3053 = vunpack.c.h.b16 %v2998
        %v3054 = vunpack.c.l.b16 %v2999
        %v3055 = vunpack.c.h.b16 %v2999
        %v3056 = vunpack.c.l.b16 %v3000
        %v3057 = vunpack.c.h.b16 %v3000
        %v3058 = vunpack.c.l.b16 %v3001
        %v3059 = vunpack.c.h.b16 %v3001
        %v3060 = vunpack.c.l.b16 %v3002
        %v3061 = vunpack.c.h.b16 %v3002
        %v3062 = vunpack.c.l.b16 %v3003
        %v3063 = vunpack.c.h.b16 %v3003
        %v3064 = vunpack.c.l.b16 %v3004
        %v3065 = vunpack.c.h.b16 %v3004
        %v3066 = vunpack.c.l.b16 %v3005
        %v3067 = vunpack.c.h.b16 %v3005
        %v3068 = vunpack.c.l.b16 %v3006
        %v3069 = vunpack.c.h.b16 %v3006
        %v3070 = vunpack.c.l.b16 %v3007
        %v3071 = vunpack.c.h.b16 %v3007
        %v3072 = vunpack.c.l.b16 %v3008
        %v3073 = vunpack.c.h.b16 %v3008
        %v3074 = vunpack.c.l.b16 %v3009
        %v3075 = vunpack.c.h.b16 %v3009
        %v3076 = vunpack.c.l.b16 %v3010
        %v3077 = vunpack.c.h.b16 %v3010
        %v3078 = vunpack.c.l.b16 %v3011
        %v3079 = vunpack.c.h.b16 %v3011
        %v3080 = vunpack.c.l.b16 %v3012
        %v3081 = vunpack.c.h.b16 %v3012
        %v3082 = vunpack.c.l.b16 %v3013
        %v3083 = vunpack.c.h.b16 %v3013
        %v3084 = vunpack.c.l.b16 %v3014
        %v3085 = vunpack.c.h.b16 %v3014
        %v3086 = vunpack.c.l.b16 %v3015
        %v3087 = vunpack.c.h.b16 %v3015
        %v3088 = vunpack.c.l.b16 %v3016
        %v3089 = vunpack.c.h.b16 %v3016
        %v3090 = vpack.c.b16 %v3046, %v3042
        %v3091 = vpack.c.b16 %v3047, %v3043
        %v3092 = vpack.c.b16 %v3048, %v3044
        %v3093 = vpack.c.b16 %v3049, %v3045
        %v3094 = vpack.c.b16 %v3054, %v3050
        %v3095 = vpack.c.b16 %v3055, %v3051
        %v3096 = vpack.c.b16 %v3056, %v3052
        %v3097 = vpack.c.b16 %v3057, %v3053
        %v3098 = vpack.c.b16 %v3062, %v3058
        %v3099 = vpack.c.b16 %v3063, %v3059
        %v3100 = vpack.c.b16 %v3064, %v3060
        %v3101 = vpack.c.b16 %v3065, %v3061
        %v3102 = vpack.c.b16 %v3070, %v3066
        %v3103 = vpack.c.b16 %v3071, %v3067
        %v3104 = vpack.c.b16 %v3072, %v3068
        %v3105 = vpack.c.b16 %v3073, %v3069
        %v3106 = vpack.c.b16 %v3078, %v3074
        %v3107 = vpack.c.b16 %v3079, %v3075
        %v3108 = vpack.c.b16 %v3080, %v3076
        %v3109 = vpack.c.b16 %v3081, %v3077
        %v3110 = vpack.c.b16 %v3086, %v3082
        %v3111 = vpack.c.b16 %v3087, %v3083
        %v3112 = vpack.c.b16 %v3088, %v3084
        %v3113 = vpack.c.b16 %v3089, %v3085
        %v3139 = vsel %vm684, %v3017, 0
        %3141 = vmatpush.bf16.msra.mxu0 0
        %3142 = vmatpush.bf16.msra.mxu0 0
        %3143 = vmatpush.bf16.msra.mxu0 %v3110
        %3144 = vmatpush.bf16.msra.mxu0 %v3106
        %3145 = vmatpush.bf16.msra.mxu0 %v3102
        %3146 = vmatpush.bf16.msra.mxu0 %v3098
        %3147 = vmatpush.bf16.msra.mxu0 %v3094
        %3148 = vmatpush.bf16.msra.mxu0 %v3090
        %3149 = vmatmul.bf16.gmra.mxu0 %v3139
        %v3150 = vpop.f32.mrf.mxu0
        %v3151 = vadd.f32 0.0, %v3150
        %v3152 = vpop.f32.mrf.mxu0
        %v3153 = vadd.f32 0.0, %v3152
        %3154 = vdwg.mxu0
        %3155 = vmatpush.bf16.msra.mxu0 0
        %3156 = vmatpush.bf16.msra.mxu0 0
        %3157 = vmatpush.bf16.msra.mxu0 %v3111
        %3158 = vmatpush.bf16.msra.mxu0 %v3107
        %3159 = vmatpush.bf16.msra.mxu0 %v3103
        %3160 = vmatpush.bf16.msra.mxu0 %v3099
        %3161 = vmatpush.bf16.msra.mxu0 %v3095
        %3162 = vmatpush.bf16.msra.mxu0 %v3091
        %3163 = vmatmul.bf16.gmra.mxu0 %v3139
        %v3164 = vpop.f32.mrf.mxu0
        %v3165 = vadd.f32 0.0, %v3164
        %v3166 = vpop.f32.mrf.mxu0
        %v3167 = vadd.f32 0.0, %v3166
        %3168 = vdwg.mxu0
        %3169 = vmatpush.bf16.msra.mxu0 0
        %3170 = vmatpush.bf16.msra.mxu0 0
        %3171 = vmatpush.bf16.msra.mxu0 %v3112
        %3172 = vmatpush.bf16.msra.mxu0 %v3108
        %3173 = vmatpush.bf16.msra.mxu0 %v3104
        %3174 = vmatpush.bf16.msra.mxu0 %v3100
        %3175 = vmatpush.bf16.msra.mxu0 %v3096
        %3176 = vmatpush.bf16.msra.mxu0 %v3092
        %3177 = vmatmul.bf16.gmra.mxu0 %v3139
        %v3178 = vpop.f32.mrf.mxu0
        %v3179 = vadd.f32 0.0, %v3178
        %v3180 = vpop.f32.mrf.mxu0
        %v3181 = vadd.f32 0.0, %v3180
        %3182 = vdwg.mxu0
        %3183 = vmatpush.bf16.msra.mxu0 0
        %3184 = vmatpush.bf16.msra.mxu0 0
        %3185 = vmatpush.bf16.msra.mxu0 %v3113
        %3186 = vmatpush.bf16.msra.mxu0 %v3109
        %3187 = vmatpush.bf16.msra.mxu0 %v3105
        %3188 = vmatpush.bf16.msra.mxu0 %v3101
        %3189 = vmatpush.bf16.msra.mxu0 %v3097
        %3190 = vmatpush.bf16.msra.mxu0 %v3093
        %3191 = vmatmul.bf16.gmra.mxu0 %v3139
        %v3192 = vpop.f32.mrf.mxu0
        %v3193 = vadd.f32 0.0, %v3192
        %v3194 = vpop.f32.mrf.mxu0
        %v3195 = vadd.f32 0.0, %v3194
        %3196 = vdwg.mxu0
        %v3197 = vadd.f32 %v2923, %v3151
        %v3198 = vadd.f32 %v2937, %v3165
        %v3199 = vadd.f32 %v2951, %v3179
        %v3200 = vadd.f32 %v2965, %v3193
        %v3201 = vadd.f32 %v2925, %v3153
        %v3202 = vadd.f32 %v2939, %v3167
        %v3203 = vadd.f32 %v2953, %v3181
        %v3204 = vadd.f32 %v2967, %v3195
        %v3205 = vmax.f32 %v3197, %v3199
        %v3206 = vmax.f32 %v3198, %v3200
        %v3207 = vmax.f32 %v3201, %v3203
        %v3208 = vmax.f32 %v3202, %v3204
        %v3209 = vld [vmem:[%s1165] sm:$0xf]
        %v3210 = vld [vmem:[%s1165 + $0x4] sm:$0xf]
        %v3213 = vunpack.c.l.b16 %v3209
        %v3214 = vunpack.c.l.b16 %v3210
        %v3215 = vpack.c.b16 %v3214, %v3213
        %v3217 = vsel %vm470, %v3215, 0
        %3219 = vmatpush.bf16.msra.mxu0 0
        %3220 = vmatpush.bf16.msra.mxu0 0
        %3221 = vmatpush.bf16.msra.mxu0 0
        %3222 = vmatpush.bf16.msra.mxu0 0
        %3223 = vmatpush.bf16.msra.mxu0 0
        %3224 = vmatpush.bf16.msra.mxu0 0
        %3225 = vmatpush.bf16.msra.mxu0 %v2517
        %3226 = vmatpush.bf16.msra.mxu0 %v2516
        %3227 = vmatmul.bf16.gmra.mxu0 %v3217
        %v3228 = vpop.f32.mrf.mxu0
        %v3229 = vadd.f32 0.0, %v3228
        %v3230 = vpop.f32.mrf.mxu0
        %v3231 = vadd.f32 0.0, %v3230
        %3232 = vdwg.mxu0
        %v3233 = vpack.c.bf16 %v3231, %v3229
        %v3234 = vld [vmem:[%s1191] sm:$0xf]
        %v3235 = vld [vmem:[%s1191 + $0x4] sm:$0xf]
        %v3238 = vunpack.c.l.b16 %v3234
        %v3239 = vunpack.c.l.b16 %v3235
        %v3240 = vpack.c.b16 %v3239, %v3238
        %v3242 = vsel %vm470, %v3240, 0
        %3244 = vmatpush.bf16.msra.mxu0 0
        %3245 = vmatpush.bf16.msra.mxu0 0
        %3246 = vmatpush.bf16.msra.mxu0 0
        %3247 = vmatpush.bf16.msra.mxu0 0
        %3248 = vmatpush.bf16.msra.mxu0 0
        %3249 = vmatpush.bf16.msra.mxu0 0
        %3250 = vmatpush.bf16.msra.mxu0 %v2517
        %3251 = vmatpush.bf16.msra.mxu0 %v2516
        %3252 = vmatmul.bf16.gmra.mxu0 %v3242
        %v3253 = vpop.f32.mrf.mxu0
        %v3254 = vadd.f32 0.0, %v3253
        %v3255 = vpop.f32.mrf.mxu0
        %v3256 = vadd.f32 0.0, %v3255
        %3257 = vdwg.mxu0
        %v3258 = vpack.c.bf16 %v3256, %v3254
        %v3260 = vsel %vm684, %v3258, 0
        %3262 = vmatpush.bf16.msra.mxu0 0
        %3263 = vmatpush.bf16.msra.mxu0 0
        %3264 = vmatpush.bf16.msra.mxu0 %v2703
        %3265 = vmatpush.bf16.msra.mxu0 %v2699
        %3266 = vmatpush.bf16.msra.mxu0 %v2695
        %3267 = vmatpush.bf16.msra.mxu0 %v2691
        %3268 = vmatpush.bf16.msra.mxu0 %v2687
        %3269 = vmatpush.bf16.msra.mxu0 %v2683
        %3270 = vmatmul.bf16.gmra.mxu0 %v3260
        %v3271 = vpop.f32.mrf.mxu0
        %v3272 = vadd.f32 0.0, %v3271
        %v3273 = vpop.f32.mrf.mxu0
        %v3274 = vadd.f32 0.0, %v3273
        %3275 = vdwg.mxu0
        %3276 = vmatpush.bf16.msra.mxu0 0
        %3277 = vmatpush.bf16.msra.mxu0 0
        %3278 = vmatpush.bf16.msra.mxu0 %v2704
        %3279 = vmatpush.bf16.msra.mxu0 %v2700
        %3280 = vmatpush.bf16.msra.mxu0 %v2696
        %3281 = vmatpush.bf16.msra.mxu0 %v2692
        %3282 = vmatpush.bf16.msra.mxu0 %v2688
        %3283 = vmatpush.bf16.msra.mxu0 %v2684
        %3284 = vmatmul.bf16.gmra.mxu0 %v3260
        %v3285 = vpop.f32.mrf.mxu0
        %v3286 = vadd.f32 0.0, %v3285
        %v3287 = vpop.f32.mrf.mxu0
        %v3288 = vadd.f32 0.0, %v3287
        %3289 = vdwg.mxu0
        %3290 = vmatpush.bf16.msra.mxu0 0
        %3291 = vmatpush.bf16.msra.mxu0 0
        %3292 = vmatpush.bf16.msra.mxu0 %v2705
        %3293 = vmatpush.bf16.msra.mxu0 %v2701
        %3294 = vmatpush.bf16.msra.mxu0 %v2697
        %3295 = vmatpush.bf16.msra.mxu0 %v2693
        %3296 = vmatpush.bf16.msra.mxu0 %v2689
        %3297 = vmatpush.bf16.msra.mxu0 %v2685
        %3298 = vmatmul.bf16.gmra.mxu0 %v3260
        %v3299 = vpop.f32.mrf.mxu0
        %v3300 = vadd.f32 0.0, %v3299
        %v3301 = vpop.f32.mrf.mxu0
        %v3302 = vadd.f32 0.0, %v3301
        %3303 = vdwg.mxu0
        %3304 = vmatpush.bf16.msra.mxu0 0
        %3305 = vmatpush.bf16.msra.mxu0 0
        %3306 = vmatpush.bf16.msra.mxu0 %v2706
        %3307 = vmatpush.bf16.msra.mxu0 %v2702
        %3308 = vmatpush.bf16.msra.mxu0 %v2698
        %3309 = vmatpush.bf16.msra.mxu0 %v2694
        %3310 = vmatpush.bf16.msra.mxu0 %v2690
        %3311 = vmatpush.bf16.msra.mxu0 %v2686
        %3312 = vmatmul.bf16.gmra.mxu0 %v3260
        %v3313 = vpop.f32.mrf.mxu0
        %v3314 = vadd.f32 0.0, %v3313
        %v3315 = vpop.f32.mrf.mxu0
        %v3316 = vadd.f32 0.0, %v3315
        %3317 = vdwg.mxu0
        %v3319 = vsel %vm684, %v3233, 0
        %3321 = vmatpush.bf16.msra.mxu0 0
        %3322 = vmatpush.bf16.msra.mxu0 0
        %3323 = vmatpush.bf16.msra.mxu0 %v2882
        %3324 = vmatpush.bf16.msra.mxu0 %v2878
        %3325 = vmatpush.bf16.msra.mxu0 %v2874
        %3326 = vmatpush.bf16.msra.mxu0 %v2870
        %3327 = vmatpush.bf16.msra.mxu0 %v2866
        %3328 = vmatpush.bf16.msra.mxu0 %v2862
        %3329 = vmatmul.bf16.gmra.mxu0 %v3319
        %v3330 = vpop.f32.mrf.mxu0
        %v3331 = vadd.f32 %v3272, %v3330
        %v3332 = vpop.f32.mrf.mxu0
        %v3333 = vadd.f32 %v3274, %v3332
        %3334 = vdwg.mxu0
        %3335 = vmatpush.bf16.msra.mxu0 0
        %3336 = vmatpush.bf16.msra.mxu0 0
        %3337 = vmatpush.bf16.msra.mxu0 %v2883
        %3338 = vmatpush.bf16.msra.mxu0 %v2879
        %3339 = vmatpush.bf16.msra.mxu0 %v2875
        %3340 = vmatpush.bf16.msra.mxu0 %v2871
        %3341 = vmatpush.bf16.msra.mxu0 %v2867
        %3342 = vmatpush.bf16.msra.mxu0 %v2863
        %3343 = vmatmul.bf16.gmra.mxu0 %v3319
        %v3344 = vpop.f32.mrf.mxu0
        %v3345 = vadd.f32 %v3286, %v3344
        %v3346 = vpop.f32.mrf.mxu0
        %v3347 = vadd.f32 %v3288, %v3346
        %3348 = vdwg.mxu0
        %3349 = vmatpush.bf16.msra.mxu0 0
        %3350 = vmatpush.bf16.msra.mxu0 0
        %3351 = vmatpush.bf16.msra.mxu0 %v2884
        %3352 = vmatpush.bf16.msra.mxu0 %v2880
        %3353 = vmatpush.bf16.msra.mxu0 %v2876
        %3354 = vmatpush.bf16.msra.mxu0 %v2872
        %3355 = vmatpush.bf16.msra.mxu0 %v2868
        %3356 = vmatpush.bf16.msra.mxu0 %v2864
        %3357 = vmatmul.bf16.gmra.mxu0 %v3319
        %v3358 = vpop.f32.mrf.mxu0
        %v3359 = vadd.f32 %v3300, %v3358
        %v3360 = vpop.f32.mrf.mxu0
        %v3361 = vadd.f32 %v3302, %v3360
        %3362 = vdwg.mxu0
        %3363 = vmatpush.bf16.msra.mxu0 0
        %3364 = vmatpush.bf16.msra.mxu0 0
        %3365 = vmatpush.bf16.msra.mxu0 %v2885
        %3366 = vmatpush.bf16.msra.mxu0 %v2881
        %3367 = vmatpush.bf16.msra.mxu0 %v2877
        %3368 = vmatpush.bf16.msra.mxu0 %v2873
        %3369 = vmatpush.bf16.msra.mxu0 %v2869
        %3370 = vmatpush.bf16.msra.mxu0 %v2865
        %3371 = vmatmul.bf16.gmra.mxu0 %v3319
        %v3372 = vpop.f32.mrf.mxu0
        %v3373 = vadd.f32 %v3314, %v3372
        %v3374 = vpop.f32.mrf.mxu0
        %v3375 = vadd.f32 %v3316, %v3374
        %3376 = vdwg.mxu0
        %v3377 = vld [vmem:[%s1335] sm:$0xf]
        %v3378 = vld [vmem:[%s1335 + $0x4] sm:$0xf]
        %v3381 = vunpack.c.l.b16 %v3377
        %v3382 = vunpack.c.l.b16 %v3378
        %v3383 = vpack.c.b16 %v3382, %v3381
        %v3385 = vsel %vm470, %v3383, 0
        %3387 = vmatpush.bf16.msra.mxu0 0
        %3388 = vmatpush.bf16.msra.mxu0 0
        %3389 = vmatpush.bf16.msra.mxu0 0
        %3390 = vmatpush.bf16.msra.mxu0 0
        %3391 = vmatpush.bf16.msra.mxu0 0
        %3392 = vmatpush.bf16.msra.mxu0 0
        %3393 = vmatpush.bf16.msra.mxu0 %v2517
        %3394 = vmatpush.bf16.msra.mxu0 %v2516
        %3395 = vmatmul.bf16.gmra.mxu0 %v3385
        %v3396 = vpop.f32.mrf.mxu0
        %v3397 = vadd.f32 0.0, %v3396
        %v3398 = vpop.f32.mrf.mxu0
        %v3399 = vadd.f32 0.0, %v3398
        %3400 = vdwg.mxu0
        %v3401 = vpack.c.bf16 %v3399, %v3397
        %v3403 = vsel %vm684, %v3401, 0
        %3405 = vmatpush.bf16.msra.mxu0 0
        %3406 = vmatpush.bf16.msra.mxu0 0
        %3407 = vmatpush.bf16.msra.mxu0 %v3110
        %3408 = vmatpush.bf16.msra.mxu0 %v3106
        %3409 = vmatpush.bf16.msra.mxu0 %v3102
        %3410 = vmatpush.bf16.msra.mxu0 %v3098
        %3411 = vmatpush.bf16.msra.mxu0 %v3094
        %3412 = vmatpush.bf16.msra.mxu0 %v3090
        %3413 = vmatmul.bf16.gmra.mxu0 %v3403
        %v3414 = vpop.f32.mrf.mxu0
        %v3415 = vadd.f32 0.0, %v3414
        %v3416 = vpop.f32.mrf.mxu0
        %v3417 = vadd.f32 0.0, %v3416
        %3418 = vdwg.mxu0
        %3419 = vmatpush.bf16.msra.mxu0 0
        %3420 = vmatpush.bf16.msra.mxu0 0
        %3421 = vmatpush.bf16.msra.mxu0 %v3111
        %3422 = vmatpush.bf16.msra.mxu0 %v3107
        %3423 = vmatpush.bf16.msra.mxu0 %v3103
        %3424 = vmatpush.bf16.msra.mxu0 %v3099
        %3425 = vmatpush.bf16.msra.mxu0 %v3095
        %3426 = vmatpush.bf16.msra.mxu0 %v3091
        %3427 = vmatmul.bf16.gmra.mxu0 %v3403
        %v3428 = vpop.f32.mrf.mxu0
        %v3429 = vadd.f32 0.0, %v3428
        %v3430 = vpop.f32.mrf.mxu0
        %v3431 = vadd.f32 0.0, %v3430
        %3432 = vdwg.mxu0
        %3433 = vmatpush.bf16.msra.mxu0 0
        %3434 = vmatpush.bf16.msra.mxu0 0
        %3435 = vmatpush.bf16.msra.mxu0 %v3112
        %3436 = vmatpush.bf16.msra.mxu0 %v3108
        %3437 = vmatpush.bf16.msra.mxu0 %v3104
        %3438 = vmatpush.bf16.msra.mxu0 %v3100
        %3439 = vmatpush.bf16.msra.mxu0 %v3096
        %3440 = vmatpush.bf16.msra.mxu0 %v3092
        %3441 = vmatmul.bf16.gmra.mxu0 %v3403
        %v3442 = vpop.f32.mrf.mxu0
        %v3443 = vadd.f32 0.0, %v3442
        %v3444 = vpop.f32.mrf.mxu0
        %v3445 = vadd.f32 0.0, %v3444
        %3446 = vdwg.mxu0
        %3447 = vmatpush.bf16.msra.mxu0 0
        %3448 = vmatpush.bf16.msra.mxu0 0
        %3449 = vmatpush.bf16.msra.mxu0 %v3113
        %3450 = vmatpush.bf16.msra.mxu0 %v3109
        %3451 = vmatpush.bf16.msra.mxu0 %v3105
        %3452 = vmatpush.bf16.msra.mxu0 %v3101
        %3453 = vmatpush.bf16.msra.mxu0 %v3097
        %3454 = vmatpush.bf16.msra.mxu0 %v3093
        %3455 = vmatmul.bf16.gmra.mxu0 %v3403
        %v3456 = vpop.f32.mrf.mxu0
        %v3457 = vadd.f32 0.0, %v3456
        %v3458 = vpop.f32.mrf.mxu0
        %v3459 = vadd.f32 0.0, %v3458
        %3460 = vdwg.mxu0
        %v3461 = vadd.f32 %v3331, %v3415
        %v3462 = vadd.f32 %v3345, %v3429
        %v3463 = vadd.f32 %v3359, %v3443
        %v3464 = vadd.f32 %v3373, %v3457
        %v3465 = vadd.f32 %v3333, %v3417
        %v3466 = vadd.f32 %v3347, %v3431
        %v3467 = vadd.f32 %v3361, %v3445
        %v3468 = vadd.f32 %v3375, %v3459
        %v3469 = vmax.f32 %v3461, %v3463
        %v3470 = vmax.f32 %v3462, %v3464
        %v3471 = vmax.f32 %v3465, %v3467
        %v3472 = vmax.f32 %v3466, %v3468
        %v3473 = vmax.f32 %v3205, %v3469
        %v3474 = vmax.f32 %v3206, %v3470
        %v3475 = vmax.f32 %v3207, %v3471
        %v3476 = vmax.f32 %v3208, %v3472
        %v3478 = vperm.slane %v2500, 0
        %v3479 = vperm.slane %v2500, 1
        %v3482 = vadd.f32 %v3473, %v3478
        %v3483 = vadd.f32 %v3474, %v3479
        %v3484 = vadd.f32 %v3475, %v3478
        %v3485 = vadd.f32 %v3476, %v3479
        %v3486 = vtanh.pop %v3482
        %v3487 = vtanh.pop %v3483
        %v3488 = vtanh.pop %v3484
        %v3489 = vtanh.pop %v3485
        %v3490 = vld [vmem:[%s6] sm:$0x1]
        %v3491 = vld [vmem:[%s4] sm:$0xf]
        %v3492 = vpack.c.bf16 %v3488, %v3486
        %v3493 = vpack.c.bf16 %v3489, %v3487
        %v3495 = vsel %vm1453, %v3491, 0
        %3497 = vmatpush.bf16.msra.mxu0 0
        %3498 = vmatpush.bf16.msra.mxu0 0
        %3499 = vmatpush.bf16.msra.mxu0 0
        %3500 = vmatpush.bf16.msra.mxu0 0
        %3501 = vmatpush.bf16.msra.mxu0 0
        %3502 = vmatpush.bf16.msra.mxu0 0
        %3503 = vmatpush.bf16.msra.mxu0 0
        %3504 = vmatpush.bf16.msra.mxu0 %v3492
        %3505 = vmatmul.bf16.gmra.mxu0 %v3495
        %v3506 = vpop.f32.mrf.mxu0
        %v3507 = vadd.f32 0.0, %v3506
        %v3508 = vpop.f32.mrf.mxu0
        %3509 = vdwg.mxu0
        %3510 = vmatpush.bf16.msra.mxu0 0
        %3511 = vmatpush.bf16.msra.mxu0 0
        %3512 = vmatpush.bf16.msra.mxu0 0
        %3513 = vmatpush.bf16.msra.mxu0 0
        %3514 = vmatpush.bf16.msra.mxu0 0
        %3515 = vmatpush.bf16.msra.mxu0 0
        %3516 = vmatpush.bf16.msra.mxu0 0
        %3517 = vmatpush.bf16.msra.mxu0 %v3493
        %3518 = vmatmul.bf16.gmra.mxu0 %v3495
        %v3519 = vpop.f32.mrf.mxu0
        %v3520 = vadd.f32 0.0, %v3519
        %v3521 = vpop.f32.mrf.mxu0
        %3522 = vdwg.mxu0
        %v3523 = vld [vmem:[%s5] sm:$0xf]
        %v3524 = vld [vmem:[%s5 + $0x4] sm:$0xf]
        %v3525 = vld [vmem:[%s5 + $0x8] sm:$0xf]
        %v3526 = vld [vmem:[%s5 + $0xc] sm:$0xf]
        %v3527 = vld [vmem:[%s5 + $0x10] sm:$0xf]
        %v3528 = vld [vmem:[%s5 + $0x14] sm:$0xf]
        %v3529 = vld [vmem:[%s5 + $0x18] sm:$0xf]
        %v3530 = vld [vmem:[%s5 + $0x1c] sm:$0xf]
        %v3531 = vld [vmem:[%s5 + $0x20] sm:$0xf]
        %v3532 = vld [vmem:[%s5 + $0x24] sm:$0xf]
        %v3533 = vld [vmem:[%s5 + $0x28] sm:$0xf]
        %v3534 = vld [vmem:[%s5 + $0x2c] sm:$0xf]
        %v3535 = vld [vmem:[%s5 + $0x30] sm:$0xf]
        %v3536 = vld [vmem:[%s5 + $0x34] sm:$0xf]
        %v3537 = vld [vmem:[%s5 + $0x38] sm:$0xf]
        %v3538 = vld [vmem:[%s5 + $0x3c] sm:$0xf]
        %v3539 = vld [vmem:[%s5 + $0x40] sm:$0xf]
        %v3540 = vld [vmem:[%s5 + $0x44] sm:$0xf]
        %v3541 = vld [vmem:[%s5 + $0x48] sm:$0xf]
        %v3542 = vld [vmem:[%s5 + $0x4c] sm:$0xf]
        %v3543 = vld [vmem:[%s5 + $0x50] sm:$0xf]
        %v3544 = vld [vmem:[%s5 + $0x54] sm:$0xf]
        %v3545 = vld [vmem:[%s5 + $0x58] sm:$0xf]
        %v3546 = vld [vmem:[%s5 + $0x5c] sm:$0xf]
        %v3547 = vld [vmem:[%s5 + $0x60] sm:$0xf]
        %v3548 = vld [vmem:[%s5 + $0x64] sm:$0xf]
        %v3549 = vld [vmem:[%s5 + $0x68] sm:$0xf]
        %v3550 = vld [vmem:[%s5 + $0x6c] sm:$0xf]
        %v3551 = vld [vmem:[%s5 + $0x70] sm:$0xf]
        %v3552 = vld [vmem:[%s5 + $0x74] sm:$0xf]
        %v3553 = vld [vmem:[%s5 + $0x78] sm:$0xf]
        %v3554 = vld [vmem:[%s5 + $0x7c] sm:$0xf]
        %v3555 = vpack.c.bf16 %v3507, %v3507
        %v3556 = vpack.c.bf16 %v3520, %v3520
        %v3557 = vld [vmem:[%s1517] sm:$0xf]
        %v3559 = vsel %vm1453, %v3557, 0
        %3561 = vmatpush.bf16.msra.mxu0 0
        %3562 = vmatpush.bf16.msra.mxu0 0
        %3563 = vmatpush.bf16.msra.mxu0 0
        %3564 = vmatpush.bf16.msra.mxu0 0
        %3565 = vmatpush.bf16.msra.mxu0 0
        %3566 = vmatpush.bf16.msra.mxu0 0
        %3567 = vmatpush.bf16.msra.mxu0 0
        %3568 = vmatpush.bf16.msra.mxu0 %v3492
        %3569 = vmatmul.bf16.gmra.mxu0 %v3559
        %v3570 = vpop.f32.mrf.mxu0
        %v3571 = vadd.f32 0.0, %v3570
        %v3572 = vpop.f32.mrf.mxu0
        %3573 = vdwg.mxu0
        %3574 = vmatpush.bf16.msra.mxu0 0
        %3575 = vmatpush.bf16.msra.mxu0 0
        %3576 = vmatpush.bf16.msra.mxu0 0
        %3577 = vmatpush.bf16.msra.mxu0 0
        %3578 = vmatpush.bf16.msra.mxu0 0
        %3579 = vmatpush.bf16.msra.mxu0 0
        %3580 = vmatpush.bf16.msra.mxu0 0
        %3581 = vmatpush.bf16.msra.mxu0 %v3493
        %3582 = vmatmul.bf16.gmra.mxu0 %v3559
        %v3583 = vpop.f32.mrf.mxu0
        %v3584 = vadd.f32 0.0, %v3583
        %v3585 = vpop.f32.mrf.mxu0
        %3586 = vdwg.mxu0
        %v3587 = vld [vmem:[%s1548] sm:$0xf]
        %v3588 = vld [vmem:[%s1548 + $0x4] sm:$0xf]
        %v3589 = vld [vmem:[%s1548 + $0x8] sm:$0xf]
        %v3590 = vld [vmem:[%s1548 + $0xc] sm:$0xf]
        %v3591 = vld [vmem:[%s1548 + $0x10] sm:$0xf]
        %v3592 = vld [vmem:[%s1548 + $0x14] sm:$0xf]
        %v3593 = vld [vmem:[%s1548 + $0x18] sm:$0xf]
        %v3594 = vld [vmem:[%s1548 + $0x1c] sm:$0xf]
        %v3595 = vld [vmem:[%s1548 + $0x20] sm:$0xf]
        %v3596 = vld [vmem:[%s1548 + $0x24] sm:$0xf]
        %v3597 = vld [vmem:[%s1548 + $0x28] sm:$0xf]
        %v3598 = vld [vmem:[%s1548 + $0x2c] sm:$0xf]
        %v3599 = vld [vmem:[%s1548 + $0x30] sm:$0xf]
        %v3600 = vld [vmem:[%s1548 + $0x34] sm:$0xf]
        %v3601 = vld [vmem:[%s1548 + $0x38] sm:$0xf]
        %v3602 = vld [vmem:[%s1548 + $0x3c] sm:$0xf]
        %v3603 = vld [vmem:[%s1548 + $0x40] sm:$0xf]
        %v3604 = vld [vmem:[%s1548 + $0x44] sm:$0xf]
        %v3605 = vld [vmem:[%s1548 + $0x48] sm:$0xf]
        %v3606 = vld [vmem:[%s1548 + $0x4c] sm:$0xf]
        %v3607 = vld [vmem:[%s1548 + $0x50] sm:$0xf]
        %v3608 = vld [vmem:[%s1548 + $0x54] sm:$0xf]
        %v3609 = vld [vmem:[%s1548 + $0x58] sm:$0xf]
        %v3610 = vld [vmem:[%s1548 + $0x5c] sm:$0xf]
        %v3611 = vld [vmem:[%s1548 + $0x60] sm:$0xf]
        %v3612 = vld [vmem:[%s1548 + $0x64] sm:$0xf]
        %v3613 = vld [vmem:[%s1548 + $0x68] sm:$0xf]
        %v3614 = vld [vmem:[%s1548 + $0x6c] sm:$0xf]
        %v3615 = vld [vmem:[%s1548 + $0x70] sm:$0xf]
        %v3616 = vld [vmem:[%s1548 + $0x74] sm:$0xf]
        %v3617 = vld [vmem:[%s1548 + $0x78] sm:$0xf]
        %v3618 = vld [vmem:[%s1548 + $0x7c] sm:$0xf]
        %v3619 = vpack.c.bf16 %v3571, %v3571
        %v3620 = vpack.c.bf16 %v3584, %v3584
        %v3653 = vunpack.c.l.b16 %v3587
        %v3654 = vunpack.c.l.b16 %v3588
        %v3655 = vunpack.c.l.b16 %v3589
        %v3656 = vunpack.c.l.b16 %v3590
        %v3657 = vunpack.c.l.b16 %v3591
        %v3658 = vunpack.c.l.b16 %v3592
        %v3659 = vunpack.c.l.b16 %v3593
        %v3660 = vunpack.c.l.b16 %v3594
        %v3661 = vunpack.c.l.b16 %v3595
        %v3662 = vunpack.c.l.b16 %v3596
        %v3663 = vunpack.c.l.b16 %v3597
        %v3664 = vunpack.c.l.b16 %v3598
        %v3665 = vunpack.c.l.b16 %v3599
        %v3666 = vunpack.c.l.b16 %v3600
        %v3667 = vunpack.c.l.b16 %v3601
        %v3668 = vunpack.c.l.b16 %v3602
        %v3669 = vunpack.c.l.b16 %v3603
        %v3670 = vunpack.c.l.b16 %v3604
        %v3671 = vunpack.c.l.b16 %v3605
        %v3672 = vunpack.c.l.b16 %v3606
        %v3673 = vunpack.c.l.b16 %v3607
        %v3674 = vunpack.c.l.b16 %v3608
        %v3675 = vunpack.c.l.b16 %v3609
        %v3676 = vunpack.c.l.b16 %v3610
        %v3677 = vunpack.c.l.b16 %v3611
        %v3678 = vunpack.c.l.b16 %v3612
        %v3679 = vunpack.c.l.b16 %v3613
        %v3680 = vunpack.c.l.b16 %v3614
        %v3681 = vunpack.c.l.b16 %v3615
        %v3682 = vunpack.c.l.b16 %v3616
        %v3683 = vunpack.c.l.b16 %v3617
        %v3684 = vunpack.c.l.b16 %v3618
        %v3685 = vpack.c.b16 %v3654, %v3653
        %v3686 = vpack.c.b16 %v3656, %v3655
        %v3687 = vpack.c.b16 %v3658, %v3657
        %v3688 = vpack.c.b16 %v3660, %v3659
        %v3689 = vpack.c.b16 %v3662, %v3661
        %v3690 = vpack.c.b16 %v3664, %v3663
        %v3691 = vpack.c.b16 %v3666, %v3665
        %v3692 = vpack.c.b16 %v3668, %v3667
        %v3693 = vpack.c.b16 %v3670, %v3669
        %v3694 = vpack.c.b16 %v3672, %v3671
        %v3695 = vpack.c.b16 %v3674, %v3673
        %v3696 = vpack.c.b16 %v3676, %v3675
        %v3697 = vpack.c.b16 %v3678, %v3677
        %v3698 = vpack.c.b16 %v3680, %v3679
        %v3699 = vpack.c.b16 %v3682, %v3681
        %v3700 = vpack.c.b16 %v3684, %v3683
        %3717 = vmatpush.bf16.msra.mxu0 %v3692
        %3718 = vmatpush.bf16.msra.mxu0 %v3691
        %3719 = vmatpush.bf16.msra.mxu0 %v3690
        %3720 = vmatpush.bf16.msra.mxu0 %v3689
        %3721 = vmatpush.bf16.msra.mxu0 %v3688
        %3722 = vmatpush.bf16.msra.mxu0 %v3687
        %3723 = vmatpush.bf16.msra.mxu0 %v3686
        %3724 = vmatpush.bf16.msra.mxu0 %v3685
        %3725 = vmatmul.bf16.gmra.mxu0 %v3619
        %v3726 = vpop.f32.mrf.mxu0
        %v3727 = vadd.f32 0.0, %v3726
        %v3728 = vpop.f32.mrf.mxu0
        %3729 = vdwg.mxu0
        %3730 = vmatpush.bf16.msra.mxu0 %v3700
        %3731 = vmatpush.bf16.msra.mxu0 %v3699
        %3732 = vmatpush.bf16.msra.mxu0 %v3698
        %3733 = vmatpush.bf16.msra.mxu0 %v3697
        %3734 = vmatpush.bf16.msra.mxu0 %v3696
        %3735 = vmatpush.bf16.msra.mxu0 %v3695
        %3736 = vmatpush.bf16.msra.mxu0 %v3694
        %3737 = vmatpush.bf16.msra.mxu0 %v3693
        %3738 = vmatmul.bf16.gmra.mxu0 %v3620
        %v3739 = vpop.f32.mrf.mxu0
        %v3740 = vadd.f32 %v3727, %v3739
        %v3741 = vpop.f32.mrf.mxu0
        %3742 = vdwg.mxu0
        %v3775 = vunpack.c.l.b16 %v3523
        %v3776 = vunpack.c.l.b16 %v3524
        %v3777 = vunpack.c.l.b16 %v3525
        %v3778 = vunpack.c.l.b16 %v3526
        %v3779 = vunpack.c.l.b16 %v3527
        %v3780 = vunpack.c.l.b16 %v3528
        %v3781 = vunpack.c.l.b16 %v3529
        %v3782 = vunpack.c.l.b16 %v3530
        %v3783 = vunpack.c.l.b16 %v3531
        %v3784 = vunpack.c.l.b16 %v3532
        %v3785 = vunpack.c.l.b16 %v3533
        %v3786 = vunpack.c.l.b16 %v3534
        %v3787 = vunpack.c.l.b16 %v3535
        %v3788 = vunpack.c.l.b16 %v3536
        %v3789 = vunpack.c.l.b16 %v3537
        %v3790 = vunpack.c.l.b16 %v3538
        %v3791 = vunpack.c.l.b16 %v3539
        %v3792 = vunpack.c.l.b16 %v3540
        %v3793 = vunpack.c.l.b16 %v3541
        %v3794 = vunpack.c.l.b16 %v3542
        %v3795 = vunpack.c.l.b16 %v3543
        %v3796 = vunpack.c.l.b16 %v3544
        %v3797 = vunpack.c.l.b16 %v3545
        %v3798 = vunpack.c.l.b16 %v3546
        %v3799 = vunpack.c.l.b16 %v3547
        %v3800 = vunpack.c.l.b16 %v3548
        %v3801 = vunpack.c.l.b16 %v3549
        %v3802 = vunpack.c.l.b16 %v3550
        %v3803 = vunpack.c.l.b16 %v3551
        %v3804 = vunpack.c.l.b16 %v3552
        %v3805 = vunpack.c.l.b16 %v3553
        %v3806 = vunpack.c.l.b16 %v3554
        %v3807 = vpack.c.b16 %v3776, %v3775
        %v3808 = vpack.c.b16 %v3778, %v3777
        %v3809 = vpack.c.b16 %v3780, %v3779
        %v3810 = vpack.c.b16 %v3782, %v3781
        %v3811 = vpack.c.b16 %v3784, %v3783
        %v3812 = vpack.c.b16 %v3786, %v3785
        %v3813 = vpack.c.b16 %v3788, %v3787
        %v3814 = vpack.c.b16 %v3790, %v3789
        %v3815 = vpack.c.b16 %v3792, %v3791
        %v3816 = vpack.c.b16 %v3794, %v3793
        %v3817 = vpack.c.b16 %v3796, %v3795
        %v3818 = vpack.c.b16 %v3798, %v3797
        %v3819 = vpack.c.b16 %v3800, %v3799
        %v3820 = vpack.c.b16 %v3802, %v3801
        %v3821 = vpack.c.b16 %v3804, %v3803
        %v3822 = vpack.c.b16 %v3806, %v3805
        %3839 = vmatpush.bf16.msra.mxu0 %v3814
        %3840 = vmatpush.bf16.msra.mxu0 %v3813
        %3841 = vmatpush.bf16.msra.mxu0 %v3812
        %3842 = vmatpush.bf16.msra.mxu0 %v3811
        %3843 = vmatpush.bf16.msra.mxu0 %v3810
        %3844 = vmatpush.bf16.msra.mxu0 %v3809
        %3845 = vmatpush.bf16.msra.mxu0 %v3808
        %3846 = vmatpush.bf16.msra.mxu0 %v3807
        %3847 = vmatmul.bf16.gmra.mxu0 %v3555
        %v3848 = vpop.f32.mrf.mxu0
        %v3849 = vadd.f32 %v3740, %v3848
        %v3850 = vpop.f32.mrf.mxu0
        %3851 = vdwg.mxu0
        %3852 = vmatpush.bf16.msra.mxu0 %v3822
        %3853 = vmatpush.bf16.msra.mxu0 %v3821
        %3854 = vmatpush.bf16.msra.mxu0 %v3820
        %3855 = vmatpush.bf16.msra.mxu0 %v3819
        %3856 = vmatpush.bf16.msra.mxu0 %v3818
        %3857 = vmatpush.bf16.msra.mxu0 %v3817
        %3858 = vmatpush.bf16.msra.mxu0 %v3816
        %3859 = vmatpush.bf16.msra.mxu0 %v3815
        %3860 = vmatmul.bf16.gmra.mxu0 %v3556
        %v3861 = vpop.f32.mrf.mxu0
        %v3862 = vadd.f32 %v3849, %v3861
        %v3863 = vpop.f32.mrf.mxu0
        %3864 = vdwg.mxu0
        %v3865 = vld [vmem:[%s1827] sm:$0xf]
        %v3867 = vsel %vm1453, %v3865, 0
        %3869 = vmatpush.bf16.msra.mxu0 0
        %3870 = vmatpush.bf16.msra.mxu0 0
        %3871 = vmatpush.bf16.msra.mxu0 0
        %3872 = vmatpush.bf16.msra.mxu0 0
        %3873 = vmatpush.bf16.msra.mxu0 0
        %3874 = vmatpush.bf16.msra.mxu0 0
        %3875 = vmatpush.bf16.msra.mxu0 0
        %3876 = vmatpush.bf16.msra.mxu0 %v3492
        %3877 = vmatmul.bf16.gmra.mxu0 %v3867
        %v3878 = vpop.f32.mrf.mxu0
        %v3879 = vadd.f32 0.0, %v3878
        %v3880 = vpop.f32.mrf.mxu0
        %3881 = vdwg.mxu0
        %3882 = vmatpush.bf16.msra.mxu0 0
        %3883 = vmatpush.bf16.msra.mxu0 0
        %3884 = vmatpush.bf16.msra.mxu0 0
        %3885 = vmatpush.bf16.msra.mxu0 0
        %3886 = vmatpush.bf16.msra.mxu0 0
        %3887 = vmatpush.bf16.msra.mxu0 0
        %3888 = vmatpush.bf16.msra.mxu0 0
        %3889 = vmatpush.bf16.msra.mxu0 %v3493
        %3890 = vmatmul.bf16.gmra.mxu0 %v3867
        %v3891 = vpop.f32.mrf.mxu0
        %v3892 = vadd.f32 0.0, %v3891
        %v3893 = vpop.f32.mrf.mxu0
        %3894 = vdwg.mxu0
        %v3895 = vld [vmem:[%s1858] sm:$0xf]
        %v3896 = vld [vmem:[%s1858 + $0x4] sm:$0xf]
        %v3897 = vld [vmem:[%s1858 + $0x8] sm:$0xf]
        %v3898 = vld [vmem:[%s1858 + $0xc] sm:$0xf]
        %v3899 = vld [vmem:[%s1858 + $0x10] sm:$0xf]
        %v3900 = vld [vmem:[%s1858 + $0x14] sm:$0xf]
        %v3901 = vld [vmem:[%s1858 + $0x18] sm:$0xf]
        %v3902 = vld [vmem:[%s1858 + $0x1c] sm:$0xf]
        %v3903 = vld [vmem:[%s1858 + $0x20] sm:$0xf]
        %v3904 = vld [vmem:[%s1858 + $0x24] sm:$0xf]
        %v3905 = vld [vmem:[%s1858 + $0x28] sm:$0xf]
        %v3906 = vld [vmem:[%s1858 + $0x2c] sm:$0xf]
        %v3907 = vld [vmem:[%s1858 + $0x30] sm:$0xf]
        %v3908 = vld [vmem:[%s1858 + $0x34] sm:$0xf]
        %v3909 = vld [vmem:[%s1858 + $0x38] sm:$0xf]
        %v3910 = vld [vmem:[%s1858 + $0x3c] sm:$0xf]
        %v3911 = vld [vmem:[%s1858 + $0x40] sm:$0xf]
        %v3912 = vld [vmem:[%s1858 + $0x44] sm:$0xf]
        %v3913 = vld [vmem:[%s1858 + $0x48] sm:$0xf]
        %v3914 = vld [vmem:[%s1858 + $0x4c] sm:$0xf]
        %v3915 = vld [vmem:[%s1858 + $0x50] sm:$0xf]
        %v3916 = vld [vmem:[%s1858 + $0x54] sm:$0xf]
        %v3917 = vld [vmem:[%s1858 + $0x58] sm:$0xf]
        %v3918 = vld [vmem:[%s1858 + $0x5c] sm:$0xf]
        %v3919 = vld [vmem:[%s1858 + $0x60] sm:$0xf]
        %v3920 = vld [vmem:[%s1858 + $0x64] sm:$0xf]
        %v3921 = vld [vmem:[%s1858 + $0x68] sm:$0xf]
        %v3922 = vld [vmem:[%s1858 + $0x6c] sm:$0xf]
        %v3923 = vld [vmem:[%s1858 + $0x70] sm:$0xf]
        %v3924 = vld [vmem:[%s1858 + $0x74] sm:$0xf]
        %v3925 = vld [vmem:[%s1858 + $0x78] sm:$0xf]
        %v3926 = vld [vmem:[%s1858 + $0x7c] sm:$0xf]
        %v3927 = vpack.c.bf16 %v3879, %v3879
        %v3928 = vpack.c.bf16 %v3892, %v3892
        %v3961 = vunpack.c.l.b16 %v3895
        %v3962 = vunpack.c.l.b16 %v3896
        %v3963 = vunpack.c.l.b16 %v3897
        %v3964 = vunpack.c.l.b16 %v3898
        %v3965 = vunpack.c.l.b16 %v3899
        %v3966 = vunpack.c.l.b16 %v3900
        %v3967 = vunpack.c.l.b16 %v3901
        %v3968 = vunpack.c.l.b16 %v3902
        %v3969 = vunpack.c.l.b16 %v3903
        %v3970 = vunpack.c.l.b16 %v3904
        %v3971 = vunpack.c.l.b16 %v3905
        %v3972 = vunpack.c.l.b16 %v3906
        %v3973 = vunpack.c.l.b16 %v3907
        %v3974 = vunpack.c.l.b16 %v3908
        %v3975 = vunpack.c.l.b16 %v3909
        %v3976 = vunpack.c.l.b16 %v3910
        %v3977 = vunpack.c.l.b16 %v3911
        %v3978 = vunpack.c.l.b16 %v3912
        %v3979 = vunpack.c.l.b16 %v3913
        %v3980 = vunpack.c.l.b16 %v3914
        %v3981 = vunpack.c.l.b16 %v3915
        %v3982 = vunpack.c.l.b16 %v3916
        %v3983 = vunpack.c.l.b16 %v3917
        %v3984 = vunpack.c.l.b16 %v3918
        %v3985 = vunpack.c.l.b16 %v3919
        %v3986 = vunpack.c.l.b16 %v3920
        %v3987 = vunpack.c.l.b16 %v3921
        %v3988 = vunpack.c.l.b16 %v3922
        %v3989 = vunpack.c.l.b16 %v3923
        %v3990 = vunpack.c.l.b16 %v3924
        %v3991 = vunpack.c.l.b16 %v3925
        %v3992 = vunpack.c.l.b16 %v3926
        %v3993 = vpack.c.b16 %v3962, %v3961
        %v3994 = vpack.c.b16 %v3964, %v3963
        %v3995 = vpack.c.b16 %v3966, %v3965
        %v3996 = vpack.c.b16 %v3968, %v3967
        %v3997 = vpack.c.b16 %v3970, %v3969
        %v3998 = vpack.c.b16 %v3972, %v3971
        %v3999 = vpack.c.b16 %v3974, %v3973
        %v4000 = vpack.c.b16 %v3976, %v3975
        %v4001 = vpack.c.b16 %v3978, %v3977
        %v4002 = vpack.c.b16 %v3980, %v3979
        %v4003 = vpack.c.b16 %v3982, %v3981
        %v4004 = vpack.c.b16 %v3984, %v3983
        %v4005 = vpack.c.b16 %v3986, %v3985
        %v4006 = vpack.c.b16 %v3988, %v3987
        %v4007 = vpack.c.b16 %v3990, %v3989
        %v4008 = vpack.c.b16 %v3992, %v3991
        %4025 = vmatpush.bf16.msra.mxu0 %v4000
        %4026 = vmatpush.bf16.msra.mxu0 %v3999
        %4027 = vmatpush.bf16.msra.mxu0 %v3998
        %4028 = vmatpush.bf16.msra.mxu0 %v3997
        %4029 = vmatpush.bf16.msra.mxu0 %v3996
        %4030 = vmatpush.bf16.msra.mxu0 %v3995
        %4031 = vmatpush.bf16.msra.mxu0 %v3994
        %4032 = vmatpush.bf16.msra.mxu0 %v3993
        %4033 = vmatmul.bf16.gmra.mxu0 %v3927
        %v4034 = vpop.f32.mrf.mxu0
        %v4035 = vadd.f32 0.0, %v4034
        %v4036 = vpop.f32.mrf.mxu0
        %4037 = vdwg.mxu0
        %4038 = vmatpush.bf16.msra.mxu0 %v4008
        %4039 = vmatpush.bf16.msra.mxu0 %v4007
        %4040 = vmatpush.bf16.msra.mxu0 %v4006
        %4041 = vmatpush.bf16.msra.mxu0 %v4005
        %4042 = vmatpush.bf16.msra.mxu0 %v4004
        %4043 = vmatpush.bf16.msra.mxu0 %v4003
        %4044 = vmatpush.bf16.msra.mxu0 %v4002
        %4045 = vmatpush.bf16.msra.mxu0 %v4001
        %4046 = vmatmul.bf16.gmra.mxu0 %v3928
        %v4047 = vpop.f32.mrf.mxu0
        %v4048 = vadd.f32 %v4035, %v4047
        %v4049 = vpop.f32.mrf.mxu0
        %4050 = vdwg.mxu0
        %v4051 = vadd.f32 %v3862, %v4048
        %4053 = vrot.lane.b32.xlu0 %v4051, 64
        %v4054 = vpop.permute.xlu0 %4053
        %v4056 = vmax.f32 %v4051, %v4054
        %v4057 = vld [vmem:[%s2021] sm:$0xf]
        %v4059 = vsel %vm1453, %v4057, 0
        %4061 = vmatpush.bf16.msra.mxu0 0
        %4062 = vmatpush.bf16.msra.mxu0 0
        %4063 = vmatpush.bf16.msra.mxu0 0
        %4064 = vmatpush.bf16.msra.mxu0 0
        %4065 = vmatpush.bf16.msra.mxu0 0
        %4066 = vmatpush.bf16.msra.mxu0 0
        %4067 = vmatpush.bf16.msra.mxu0 0
        %4068 = vmatpush.bf16.msra.mxu0 %v3492
        %4069 = vmatmul.bf16.gmra.mxu0 %v4059
        %v4070 = vpop.f32.mrf.mxu0
        %v4071 = vadd.f32 0.0, %v4070
        %v4072 = vpop.f32.mrf.mxu0
        %4073 = vdwg.mxu0
        %4074 = vmatpush.bf16.msra.mxu0 0
        %4075 = vmatpush.bf16.msra.mxu0 0
        %4076 = vmatpush.bf16.msra.mxu0 0
        %4077 = vmatpush.bf16.msra.mxu0 0
        %4078 = vmatpush.bf16.msra.mxu0 0
        %4079 = vmatpush.bf16.msra.mxu0 0
        %4080 = vmatpush.bf16.msra.mxu0 0
        %4081 = vmatpush.bf16.msra.mxu0 %v3493
        %4082 = vmatmul.bf16.gmra.mxu0 %v4059
        %v4083 = vpop.f32.mrf.mxu0
        %v4084 = vadd.f32 0.0, %v4083
        %v4085 = vpop.f32.mrf.mxu0
        %4086 = vdwg.mxu0
        %v4087 = vpack.c.bf16 %v4071, %v4071
        %v4088 = vpack.c.bf16 %v4084, %v4084
        %v4089 = vld [vmem:[%s2054] sm:$0xf]
        %v4091 = vsel %vm1453, %v4089, 0
        %4093 = vmatpush.bf16.msra.mxu0 0
        %4094 = vmatpush.bf16.msra.mxu0 0
        %4095 = vmatpush.bf16.msra.mxu0 0
        %4096 = vmatpush.bf16.msra.mxu0 0
        %4097 = vmatpush.bf16.msra.mxu0 0
        %4098 = vmatpush.bf16.msra.mxu0 0
        %4099 = vmatpush.bf16.msra.mxu0 0
        %4100 = vmatpush.bf16.msra.mxu0 %v3492
        %4101 = vmatmul.bf16.gmra.mxu0 %v4091
        %v4102 = vpop.f32.mrf.mxu0
        %v4103 = vadd.f32 0.0, %v4102
        %v4104 = vpop.f32.mrf.mxu0
        %4105 = vdwg.mxu0
        %4106 = vmatpush.bf16.msra.mxu0 0
        %4107 = vmatpush.bf16.msra.mxu0 0
        %4108 = vmatpush.bf16.msra.mxu0 0
        %4109 = vmatpush.bf16.msra.mxu0 0
        %4110 = vmatpush.bf16.msra.mxu0 0
        %4111 = vmatpush.bf16.msra.mxu0 0
        %4112 = vmatpush.bf16.msra.mxu0 0
        %4113 = vmatpush.bf16.msra.mxu0 %v3493
        %4114 = vmatmul.bf16.gmra.mxu0 %v4091
        %v4115 = vpop.f32.mrf.mxu0
        %v4116 = vadd.f32 0.0, %v4115
        %v4117 = vpop.f32.mrf.mxu0
        %4118 = vdwg.mxu0
        %v4119 = vpack.c.bf16 %v4103, %v4103
        %v4120 = vpack.c.bf16 %v4116, %v4116
        %4121 = vmatpush.bf16.msra.mxu0 %v3692
        %4122 = vmatpush.bf16.msra.mxu0 %v3691
        %4123 = vmatpush.bf16.msra.mxu0 %v3690
        %4124 = vmatpush.bf16.msra.mxu0 %v3689
        %4125 = vmatpush.bf16.msra.mxu0 %v3688
        %4126 = vmatpush.bf16.msra.mxu0 %v3687
        %4127 = vmatpush.bf16.msra.mxu0 %v3686
        %4128 = vmatpush.bf16.msra.mxu0 %v3685
        %4129 = vmatmul.bf16.gmra.mxu0 %v4119
        %v4130 = vpop.f32.mrf.mxu0
        %v4131 = vadd.f32 0.0, %v4130
        %v4132 = vpop.f32.mrf.mxu0
        %4133 = vdwg.mxu0
        %4134 = vmatpush.bf16.msra.mxu0 %v3700
        %4135 = vmatpush.bf16.msra.mxu0 %v3699
        %4136 = vmatpush.bf16.msra.mxu0 %v3698
        %4137 = vmatpush.bf16.msra.mxu0 %v3697
        %4138 = vmatpush.bf16.msra.mxu0 %v3696
        %4139 = vmatpush.bf16.msra.mxu0 %v3695
        %4140 = vmatpush.bf16.msra.mxu0 %v3694
        %4141 = vmatpush.bf16.msra.mxu0 %v3693
        %4142 = vmatmul.bf16.gmra.mxu0 %v4120
        %v4143 = vpop.f32.mrf.mxu0
        %v4144 = vadd.f32 %v4131, %v4143
        %v4145 = vpop.f32.mrf.mxu0
        %4146 = vdwg.mxu0
        %4147 = vmatpush.bf16.msra.mxu0 %v3814
        %4148 = vmatpush.bf16.msra.mxu0 %v3813
        %4149 = vmatpush.bf16.msra.mxu0 %v3812
        %4150 = vmatpush.bf16.msra.mxu0 %v3811
        %4151 = vmatpush.bf16.msra.mxu0 %v3810
        %4152 = vmatpush.bf16.msra.mxu0 %v3809
        %4153 = vmatpush.bf16.msra.mxu0 %v3808
        %4154 = vmatpush.bf16.msra.mxu0 %v3807
        %4155 = vmatmul.bf16.gmra.mxu0 %v4087
        %v4156 = vpop.f32.mrf.mxu0
        %v4157 = vadd.f32 %v4144, %v4156
        %v4158 = vpop.f32.mrf.mxu0
        %4159 = vdwg.mxu0
        %4160 = vmatpush.bf16.msra.mxu0 %v3822
        %4161 = vmatpush.bf16.msra.mxu0 %v3821
        %4162 = vmatpush.bf16.msra.mxu0 %v3820
        %4163 = vmatpush.bf16.msra.mxu0 %v3819
        %4164 = vmatpush.bf16.msra.mxu0 %v3818
        %4165 = vmatpush.bf16.msra.mxu0 %v3817
        %4166 = vmatpush.bf16.msra.mxu0 %v3816
        %4167 = vmatpush.bf16.msra.mxu0 %v3815
        %4168 = vmatmul.bf16.gmra.mxu0 %v4088
        %v4169 = vpop.f32.mrf.mxu0
        %v4170 = vadd.f32 %v4157, %v4169
        %v4171 = vpop.f32.mrf.mxu0
        %4172 = vdwg.mxu0
        %v4173 = vld [vmem:[%s2139] sm:$0xf]
        %v4175 = vsel %vm1453, %v4173, 0
        %4177 = vmatpush.bf16.msra.mxu0 0
        %4178 = vmatpush.bf16.msra.mxu0 0
        %4179 = vmatpush.bf16.msra.mxu0 0
        %4180 = vmatpush.bf16.msra.mxu0 0
        %4181 = vmatpush.bf16.msra.mxu0 0
        %4182 = vmatpush.bf16.msra.mxu0 0
        %4183 = vmatpush.bf16.msra.mxu0 0
        %4184 = vmatpush.bf16.msra.mxu0 %v3492
        %4185 = vmatmul.bf16.gmra.mxu0 %v4175
        %v4186 = vpop.f32.mrf.mxu0
        %v4187 = vadd.f32 0.0, %v4186
        %v4188 = vpop.f32.mrf.mxu0
        %4189 = vdwg.mxu0
        %4190 = vmatpush.bf16.msra.mxu0 0
        %4191 = vmatpush.bf16.msra.mxu0 0
        %4192 = vmatpush.bf16.msra.mxu0 0
        %4193 = vmatpush.bf16.msra.mxu0 0
        %4194 = vmatpush.bf16.msra.mxu0 0
        %4195 = vmatpush.bf16.msra.mxu0 0
        %4196 = vmatpush.bf16.msra.mxu0 0
        %4197 = vmatpush.bf16.msra.mxu0 %v3493
        %4198 = vmatmul.bf16.gmra.mxu0 %v4175
        %v4199 = vpop.f32.mrf.mxu0
        %v4200 = vadd.f32 0.0, %v4199
        %v4201 = vpop.f32.mrf.mxu0
        %4202 = vdwg.mxu0
        %v4203 = vpack.c.bf16 %v4187, %v4187
        %v4204 = vpack.c.bf16 %v4200, %v4200
        %4205 = vmatpush.bf16.msra.mxu0 %v4000
        %4206 = vmatpush.bf16.msra.mxu0 %v3999
        %4207 = vmatpush.bf16.msra.mxu0 %v3998
        %4208 = vmatpush.bf16.msra.mxu0 %v3997
        %4209 = vmatpush.bf16.msra.mxu0 %v3996
        %4210 = vmatpush.bf16.msra.mxu0 %v3995
        %4211 = vmatpush.bf16.msra.mxu0 %v3994
        %4212 = vmatpush.bf16.msra.mxu0 %v3993
        %4213 = vmatmul.bf16.gmra.mxu0 %v4203
        %v4214 = vpop.f32.mrf.mxu0
        %v4215 = vadd.f32 0.0, %v4214
        %v4216 = vpop.f32.mrf.mxu0
        %4217 = vdwg.mxu0
        %4218 = vmatpush.bf16.msra.mxu0 %v4008
        %4219 = vmatpush.bf16.msra.mxu0 %v4007
        %4220 = vmatpush.bf16.msra.mxu0 %v4006
        %4221 = vmatpush.bf16.msra.mxu0 %v4005
        %4222 = vmatpush.bf16.msra.mxu0 %v4004
        %4223 = vmatpush.bf16.msra.mxu0 %v4003
        %4224 = vmatpush.bf16.msra.mxu0 %v4002
        %4225 = vmatpush.bf16.msra.mxu0 %v4001
        %4226 = vmatmul.bf16.gmra.mxu0 %v4204
        %v4227 = vpop.f32.mrf.mxu0
        %v4228 = vadd.f32 %v4215, %v4227
        %v4229 = vpop.f32.mrf.mxu0
        %4230 = vdwg.mxu0
        %v4231 = vadd.f32 %v4170, %v4228
        %4233 = vrot.lane.b32.xlu0 %v4231, 64
        %v4234 = vpop.permute.xlu0 %4233
        %v4236 = vmax.f32 %v4231, %v4234
        %v4237 = vmax.f32 %v4056, %v4236
        %v4239 = vperm.slane %v3490, 0
        %v4241 = vadd.f32 %v4237, %v4239
        %v4242 = vtanh.pop %v4241
        %v4243 = vld [vmem:[%s7] sm:$0xff]
        %v4244 = vld [vmem:[%s7 + $0x8] sm:$0xff]
        %v4245 = vld [vmem:[%s7 + $0x10] sm:$0xff]
        %v4246 = vld [vmem:[%s7 + $0x18] sm:$0xff]
        %v4247 = vld [vmem:[%s7 + $0x20] sm:$0xff]
        %v4248 = vld [vmem:[%s7 + $0x28] sm:$0xff]
        %v4249 = vld [vmem:[%s7 + $0x30] sm:$0xff]
        %v4250 = vld [vmem:[%s7 + $0x38] sm:$0xff]
        %v4251 = vpack.c.bf16 %v4242, %v4242
        %v4260 = vunpack.c.l.b16 %v4243
        %v4261 = vunpack.c.h.b16 %v4243
        %v4262 = vunpack.c.l.b16 %v4244
        %v4263 = vunpack.c.h.b16 %v4244
        %v4264 = vunpack.c.l.b16 %v4245
        %v4265 = vunpack.c.h.b16 %v4245
        %v4266 = vunpack.c.l.b16 %v4246
        %v4267 = vunpack.c.h.b16 %v4246
        %v4268 = vunpack.c.l.b16 %v4247
        %v4269 = vunpack.c.h.b16 %v4247
        %v4270 = vunpack.c.l.b16 %v4248
        %v4271 = vunpack.c.h.b16 %v4248
        %v4272 = vunpack.c.l.b16 %v4249
        %v4273 = vunpack.c.h.b16 %v4249
        %v4274 = vunpack.c.l.b16 %v4250
        %v4275 = vunpack.c.h.b16 %v4250
        %v4276 = vpack.c.b16 %v4262, %v4260
        %v4277 = vpack.c.b16 %v4263, %v4261
        %v4278 = vpack.c.b16 %v4266, %v4264
        %v4279 = vpack.c.b16 %v4267, %v4265
        %v4280 = vpack.c.b16 %v4270, %v4268
        %v4281 = vpack.c.b16 %v4271, %v4269
        %v4282 = vpack.c.b16 %v4274, %v4272
        %v4283 = vpack.c.b16 %v4275, %v4273
        %v4293 = vsel %vm2259, %v4251, 0
        %4295 = vmatpush.bf16.msra.mxu0 0
        %4296 = vmatpush.bf16.msra.mxu0 0
        %4297 = vmatpush.bf16.msra.mxu0 0
        %4298 = vmatpush.bf16.msra.mxu0 0
        %4299 = vmatpush.bf16.msra.mxu0 %v4282
        %4300 = vmatpush.bf16.msra.mxu0 %v4280
        %4301 = vmatpush.bf16.msra.mxu0 %v4278
        %4302 = vmatpush.bf16.msra.mxu0 %v4276
        %4303 = vmatmul.bf16.gmra.mxu0 %v4293
        %v4304 = vpop.f32.mrf.mxu0
        %v4305 = vadd.f32 0.0, %v4304
        %v4306 = vpop.f32.mrf.mxu0
        %4307 = vdwg.mxu0
        %4308 = vmatpush.bf16.msra.mxu0 0
        %4309 = vmatpush.bf16.msra.mxu0 0
        %4310 = vmatpush.bf16.msra.mxu0 0
        %4311 = vmatpush.bf16.msra.mxu0 0
        %4312 = vmatpush.bf16.msra.mxu0 %v4283
        %4313 = vmatpush.bf16.msra.mxu0 %v4281
        %4314 = vmatpush.bf16.msra.mxu0 %v4279
        %4315 = vmatpush.bf16.msra.mxu0 %v4277
        %4316 = vmatmul.bf16.gmra.mxu0 %v4293
        %v4317 = vpop.f32.mrf.mxu0
        %v4318 = vadd.f32 0.0, %v4317
        %v4319 = vpop.f32.mrf.mxu0
        %4320 = vdwg.mxu0
        %v4321 = vld [vmem:[%s8] sm:$0xff]
        %v4322 = vld [vmem:[%s8 + $0x8] sm:$0xff]
        %v4323 = vmul.f32 %v4305, %v4321
        %v4324 = vmul.f32 %v4318, %v4322
        %v4325 = vld [vmem:[%s9] sm:$0xf]
        %v4326 = vld [vmem:[%s9 + $0x4] sm:$0xf]
        %v4327 = vld [vmem:[%s9 + $0x8] sm:$0xf]
        %v4328 = vld [vmem:[%s9 + $0xc] sm:$0xf]
        %v4329 = vld [vmem:[%s9 + $0x10] sm:$0xf]
        %v4330 = vld [vmem:[%s9 + $0x14] sm:$0xf]
        %v4331 = vld [vmem:[%s9 + $0x18] sm:$0xf]
        %v4332 = vld [vmem:[%s9 + $0x1c] sm:$0xf]
        %v4333 = vld [vmem:[%s9 + $0x20] sm:$0xf]
        %v4334 = vld [vmem:[%s9 + $0x24] sm:$0xf]
        %v4335 = vld [vmem:[%s9 + $0x28] sm:$0xf]
        %v4336 = vld [vmem:[%s9 + $0x2c] sm:$0xf]
        %v4337 = vld [vmem:[%s9 + $0x30] sm:$0xf]
        %v4338 = vld [vmem:[%s9 + $0x34] sm:$0xf]
        %v4339 = vld [vmem:[%s9 + $0x38] sm:$0xf]
        %v4340 = vld [vmem:[%s9 + $0x3c] sm:$0xf]
        %v4341 = vld [vmem:[%s9 + $0x40] sm:$0xf]
        %v4342 = vld [vmem:[%s9 + $0x44] sm:$0xf]
        %v4343 = vld [vmem:[%s9 + $0x48] sm:$0xf]
        %v4344 = vld [vmem:[%s9 + $0x4c] sm:$0xf]
        %v4345 = vld [vmem:[%s9 + $0x50] sm:$0xf]
        %v4346 = vld [vmem:[%s9 + $0x54] sm:$0xf]
        %v4347 = vld [vmem:[%s9 + $0x58] sm:$0xf]
        %v4348 = vld [vmem:[%s9 + $0x5c] sm:$0xf]
        %v4349 = vld [vmem:[%s9 + $0x60] sm:$0xf]
        %v4350 = vld [vmem:[%s9 + $0x64] sm:$0xf]
        %v4351 = vld [vmem:[%s9 + $0x68] sm:$0xf]
        %v4352 = vld [vmem:[%s9 + $0x6c] sm:$0xf]
        %v4353 = vld [vmem:[%s9 + $0x70] sm:$0xf]
        %v4354 = vld [vmem:[%s9 + $0x74] sm:$0xf]
        %v4355 = vld [vmem:[%s9 + $0x78] sm:$0xf]
        %v4356 = vld [vmem:[%s9 + $0x7c] sm:$0xf]
        %v4357 = vpack.c.bf16 %v4323, %v4323
        %v4358 = vpack.c.bf16 %v4324, %v4324
        %v4391 = vunpack.c.l.b16 %v4325
        %v4392 = vunpack.c.l.b16 %v4326
        %v4393 = vunpack.c.l.b16 %v4327
        %v4394 = vunpack.c.l.b16 %v4328
        %v4395 = vunpack.c.l.b16 %v4329
        %v4396 = vunpack.c.l.b16 %v4330
        %v4397 = vunpack.c.l.b16 %v4331
        %v4398 = vunpack.c.l.b16 %v4332
        %v4399 = vunpack.c.l.b16 %v4333
        %v4400 = vunpack.c.l.b16 %v4334
        %v4401 = vunpack.c.l.b16 %v4335
        %v4402 = vunpack.c.l.b16 %v4336
        %v4403 = vunpack.c.l.b16 %v4337
        %v4404 = vunpack.c.l.b16 %v4338
        %v4405 = vunpack.c.l.b16 %v4339
        %v4406 = vunpack.c.l.b16 %v4340
        %v4407 = vunpack.c.l.b16 %v4341
        %v4408 = vunpack.c.l.b16 %v4342
        %v4409 = vunpack.c.l.b16 %v4343
        %v4410 = vunpack.c.l.b16 %v4344
        %v4411 = vunpack.c.l.b16 %v4345
        %v4412 = vunpack.c.l.b16 %v4346
        %v4413 = vunpack.c.l.b16 %v4347
        %v4414 = vunpack.c.l.b16 %v4348
        %v4415 = vunpack.c.l.b16 %v4349
        %v4416 = vunpack.c.l.b16 %v4350
        %v4417 = vunpack.c.l.b16 %v4351
        %v4418 = vunpack.c.l.b16 %v4352
        %v4419 = vunpack.c.l.b16 %v4353
        %v4420 = vunpack.c.l.b16 %v4354
        %v4421 = vunpack.c.l.b16 %v4355
        %v4422 = vunpack.c.l.b16 %v4356
        %v4423 = vpack.c.b16 %v4392, %v4391
        %v4424 = vpack.c.b16 %v4394, %v4393
        %v4425 = vpack.c.b16 %v4396, %v4395
        %v4426 = vpack.c.b16 %v4398, %v4397
        %v4427 = vpack.c.b16 %v4400, %v4399
        %v4428 = vpack.c.b16 %v4402, %v4401
        %v4429 = vpack.c.b16 %v4404, %v4403
        %v4430 = vpack.c.b16 %v4406, %v4405
        %v4431 = vpack.c.b16 %v4408, %v4407
        %v4432 = vpack.c.b16 %v4410, %v4409
        %v4433 = vpack.c.b16 %v4412, %v4411
        %v4434 = vpack.c.b16 %v4414, %v4413
        %v4435 = vpack.c.b16 %v4416, %v4415
        %v4436 = vpack.c.b16 %v4418, %v4417
        %v4437 = vpack.c.b16 %v4420, %v4419
        %v4438 = vpack.c.b16 %v4422, %v4421
        %4455 = vmatpush.bf16.msra.mxu0 %v4430
        %4456 = vmatpush.bf16.msra.mxu0 %v4429
        %4457 = vmatpush.bf16.msra.mxu0 %v4428
        %4458 = vmatpush.bf16.msra.mxu0 %v4427
        %4459 = vmatpush.bf16.msra.mxu0 %v4426
        %4460 = vmatpush.bf16.msra.mxu0 %v4425
        %4461 = vmatpush.bf16.msra.mxu0 %v4424
        %4462 = vmatpush.bf16.msra.mxu0 %v4423
        %4463 = vmatmul.bf16.gmra.mxu0 %v4357
        %v4464 = vpop.f32.mrf.mxu0
        %v4465 = vadd.f32 0.0, %v4464
        %v4466 = vpop.f32.mrf.mxu0
        %4467 = vdwg.mxu0
        %4468 = vmatpush.bf16.msra.mxu0 %v4438
        %4469 = vmatpush.bf16.msra.mxu0 %v4437
        %4470 = vmatpush.bf16.msra.mxu0 %v4436
        %4471 = vmatpush.bf16.msra.mxu0 %v4435
        %4472 = vmatpush.bf16.msra.mxu0 %v4434
        %4473 = vmatpush.bf16.msra.mxu0 %v4433
        %4474 = vmatpush.bf16.msra.mxu0 %v4432
        %4475 = vmatpush.bf16.msra.mxu0 %v4431
        %4476 = vmatmul.bf16.gmra.mxu0 %v4358
        %v4477 = vpop.f32.mrf.mxu0
        %v4478 = vadd.f32 %v4465, %v4477
        %v4479 = vpop.f32.mrf.mxu0
        %4480 = vdwg.mxu0
        %v4481 = vsel %vm470, %v4478, 0.0
        %v4482 = vrot.slane %v4481, 4
        %v4483 = vadd.f32 %v4481, %v4482
        %v4484 = vrot.slane %v4483, 2
        %v4485 = vadd.f32 %v4483, %v4484
        %v4486 = vrot.slane %v4485, 1
        %v4487 = vadd.f32 %v4485, %v4486
        %v4488 = vld [vmem:[%s10] sm:$0x1]
        %v4489 = vadd.f32 %v4487, %v4488
        %v4490 = vtanh.pop %v4489
        %v4491 = vld [vmem:[%s11] sm:$0xf]
        %v4492 = vld [vmem:[%s11 + $0x4] sm:$0xf]
        %v4493 = vld [vmem:[%s11 + $0x8] sm:$0xf]
        %v4494 = vld [vmem:[%s11 + $0xc] sm:$0xf]
        %v4495 = vpack.c.bf16 %v4490, %v4490
        %v4496 = vld [vmem:[%s12] sm:$0x1]
        %v4501 = vunpack.c.l.b16 %v4491
        %v4502 = vunpack.c.l.b16 %v4492
        %v4503 = vunpack.c.l.b16 %v4493
        %v4504 = vunpack.c.l.b16 %v4494
        %v4505 = vpack.c.b16 %v4502, %v4501
        %v4506 = vpack.c.b16 %v4504, %v4503
        %v4510 = vsel %vm470, %v4495, 0
        %4512 = vmatpush.bf16.msra.mxu0 0
        %4513 = vmatpush.bf16.msra.mxu0 0
        %4514 = vmatpush.bf16.msra.mxu0 0
        %4515 = vmatpush.bf16.msra.mxu0 0
        %4516 = vmatpush.bf16.msra.mxu0 0
        %4517 = vmatpush.bf16.msra.mxu0 0
        %4518 = vmatpush.bf16.msra.mxu0 %v4506
        %4519 = vmatpush.bf16.msra.mxu0 %v4505
        %4520 = vmatmul.bf16.gmra.mxu0 %v4510
        %v4521 = vpop.f32.mrf.mxu0
        %v4522 = vadd.f32 %v4496, %v4521
        %v4523 = vpop.f32.mrf.mxu0
        %4524 = vdwg.mxu0
        %s4525 = scalar_lea.vmem %s436, 1 [#allocation2]
        %4526 = vst.msk [vmem:[%s4525] sm:$0x1] %vm2493, %v4522
        %s4527 = scalar_lea.vmem %s442, 32
        %v4528 = vld [vmem:[%s4527] sm:$0xf]
        %v4529 = vld [vmem:[%s4527 + $0x4] sm:$0xf]
        %v4530 = vld [vmem:[%s4527 + $0x8] sm:$0xf]
        %v4531 = vld [vmem:[%s4527 + $0xc] sm:$0xf]
        %v4532 = vld [vmem:[%s3] sm:$0x3]
        %v4533 = vld [vmem:[%s1] sm:$0xf]
        %v4534 = vld [vmem:[%s1 + $0x4] sm:$0xf]
        %v4537 = vunpack.c.l.b16 %v4533
        %v4538 = vunpack.c.l.b16 %v4534
        %v4539 = vpack.c.b16 %v4538, %v4537
        %v4544 = vunpack.c.l.b16 %v4528
        %v4545 = vunpack.c.l.b16 %v4529
        %v4546 = vunpack.c.l.b16 %v4530
        %v4547 = vunpack.c.l.b16 %v4531
        %v4548 = vpack.c.b16 %v4545, %v4544
        %v4549 = vpack.c.b16 %v4547, %v4546
        %v4553 = vsel %vm470, %v4539, 0
        %4555 = vmatpush.bf16.msra.mxu0 0
        %4556 = vmatpush.bf16.msra.mxu0 0
        %4557 = vmatpush.bf16.msra.mxu0 0
        %4558 = vmatpush.bf16.msra.mxu0 0
        %4559 = vmatpush.bf16.msra.mxu0 0
        %4560 = vmatpush.bf16.msra.mxu0 0
        %4561 = vmatpush.bf16.msra.mxu0 %v4549
        %4562 = vmatpush.bf16.msra.mxu0 %v4548
        %4563 = vmatmul.bf16.gmra.mxu0 %v4553
        %v4564 = vpop.f32.mrf.mxu0
        %v4565 = vadd.f32 0.0, %v4564
        %v4566 = vpop.f32.mrf.mxu0
        %v4567 = vadd.f32 0.0, %v4566
        %4568 = vdwg.mxu0
        %v4569 = vld [vmem:[%s2] sm:$0xff]
        %v4570 = vld [vmem:[%s2 + $0x8] sm:$0xff]
        %v4571 = vld [vmem:[%s2 + $0x10] sm:$0xff]
        %v4572 = vld [vmem:[%s2 + $0x18] sm:$0xff]
        %v4573 = vld [vmem:[%s2 + $0x20] sm:$0xff]
        %v4574 = vld [vmem:[%s2 + $0x28] sm:$0xff]
        %v4575 = vld [vmem:[%s2 + $0x30] sm:$0xff]
        %v4576 = vld [vmem:[%s2 + $0x38] sm:$0xff]
        %v4577 = vld [vmem:[%s2 + $0x40] sm:$0xff]
        %v4578 = vld [vmem:[%s2 + $0x48] sm:$0xff]
        %v4579 = vld [vmem:[%s2 + $0x50] sm:$0xff]
        %v4580 = vld [vmem:[%s2 + $0x58] sm:$0xff]
        %v4581 = vld [vmem:[%s2 + $0x60] sm:$0xff]
        %v4582 = vld [vmem:[%s2 + $0x68] sm:$0xff]
        %v4583 = vld [vmem:[%s2 + $0x70] sm:$0xff]
        %v4584 = vld [vmem:[%s2 + $0x78] sm:$0xff]
        %v4585 = vld [vmem:[%s2 + $0x80] sm:$0xff]
        %v4586 = vld [vmem:[%s2 + $0x88] sm:$0xff]
        %v4587 = vld [vmem:[%s2 + $0x90] sm:$0xff]
        %v4588 = vld [vmem:[%s2 + $0x98] sm:$0xff]
        %v4589 = vld [vmem:[%s2 + $0xa0] sm:$0xff]
        %v4590 = vld [vmem:[%s2 + $0xa8] sm:$0xff]
        %v4591 = vld [vmem:[%s2 + $0xb0] sm:$0xff]
        %v4592 = vld [vmem:[%s2 + $0xb8] sm:$0xff]
        %v4593 = vpack.c.bf16 %v4567, %v4565
        %v4594 = vld [vmem:[%s513] sm:$0xf]
        %v4595 = vld [vmem:[%s513 + $0x4] sm:$0xf]
        %v4598 = vunpack.c.l.b16 %v4594
        %v4599 = vunpack.c.l.b16 %v4595
        %v4600 = vpack.c.b16 %v4599, %v4598
        %v4602 = vsel %vm470, %v4600, 0
        %4604 = vmatpush.bf16.msra.mxu0 0
        %4605 = vmatpush.bf16.msra.mxu0 0
        %4606 = vmatpush.bf16.msra.mxu0 0
        %4607 = vmatpush.bf16.msra.mxu0 0
        %4608 = vmatpush.bf16.msra.mxu0 0
        %4609 = vmatpush.bf16.msra.mxu0 0
        %4610 = vmatpush.bf16.msra.mxu0 %v4549
        %4611 = vmatpush.bf16.msra.mxu0 %v4548
        %4612 = vmatmul.bf16.gmra.mxu0 %v4602
        %v4613 = vpop.f32.mrf.mxu0
        %v4614 = vadd.f32 0.0, %v4613
        %v4615 = vpop.f32.mrf.mxu0
        %v4616 = vadd.f32 0.0, %v4615
        %4617 = vdwg.mxu0
        %v4618 = vld [vmem:[%s538] sm:$0xff]
        %v4619 = vld [vmem:[%s538 + $0x8] sm:$0xff]
        %v4620 = vld [vmem:[%s538 + $0x10] sm:$0xff]
        %v4621 = vld [vmem:[%s538 + $0x18] sm:$0xff]
        %v4622 = vld [vmem:[%s538 + $0x20] sm:$0xff]
        %v4623 = vld [vmem:[%s538 + $0x28] sm:$0xff]
        %v4624 = vld [vmem:[%s538 + $0x30] sm:$0xff]
        %v4625 = vld [vmem:[%s538 + $0x38] sm:$0xff]
        %v4626 = vld [vmem:[%s538 + $0x40] sm:$0xff]
        %v4627 = vld [vmem:[%s538 + $0x48] sm:$0xff]
        %v4628 = vld [vmem:[%s538 + $0x50] sm:$0xff]
        %v4629 = vld [vmem:[%s538 + $0x58] sm:$0xff]
        %v4630 = vld [vmem:[%s538 + $0x60] sm:$0xff]
        %v4631 = vld [vmem:[%s538 + $0x68] sm:$0xff]
        %v4632 = vld [vmem:[%s538 + $0x70] sm:$0xff]
        %v4633 = vld [vmem:[%s538 + $0x78] sm:$0xff]
        %v4634 = vld [vmem:[%s538 + $0x80] sm:$0xff]
        %v4635 = vld [vmem:[%s538 + $0x88] sm:$0xff]
        %v4636 = vld [vmem:[%s538 + $0x90] sm:$0xff]
        %v4637 = vld [vmem:[%s538 + $0x98] sm:$0xff]
        %v4638 = vld [vmem:[%s538 + $0xa0] sm:$0xff]
        %v4639 = vld [vmem:[%s538 + $0xa8] sm:$0xff]
        %v4640 = vld [vmem:[%s538 + $0xb0] sm:$0xff]
        %v4641 = vld [vmem:[%s538 + $0xb8] sm:$0xff]
        %v4642 = vpack.c.bf16 %v4616, %v4614
        %v4667 = vunpack.c.l.b16 %v4618
        %v4668 = vunpack.c.h.b16 %v4618
        %v4669 = vunpack.c.l.b16 %v4619
        %v4670 = vunpack.c.h.b16 %v4619
        %v4671 = vunpack.c.l.b16 %v4620
        %v4672 = vunpack.c.h.b16 %v4620
        %v4673 = vunpack.c.l.b16 %v4621
        %v4674 = vunpack.c.h.b16 %v4621
        %v4675 = vunpack.c.l.b16 %v4622
        %v4676 = vunpack.c.h.b16 %v4622
        %v4677 = vunpack.c.l.b16 %v4623
        %v4678 = vunpack.c.h.b16 %v4623
        %v4679 = vunpack.c.l.b16 %v4624
        %v4680 = vunpack.c.h.b16 %v4624
        %v4681 = vunpack.c.l.b16 %v4625
        %v4682 = vunpack.c.h.b16 %v4625
        %v4683 = vunpack.c.l.b16 %v4626
        %v4684 = vunpack.c.h.b16 %v4626
        %v4685 = vunpack.c.l.b16 %v4627
        %v4686 = vunpack.c.h.b16 %v4627
        %v4687 = vunpack.c.l.b16 %v4628
        %v4688 = vunpack.c.h.b16 %v4628
        %v4689 = vunpack.c.l.b16 %v4629
        %v4690 = vunpack.c.h.b16 %v4629
        %v4691 = vunpack.c.l.b16 %v4630
        %v4692 = vunpack.c.h.b16 %v4630
        %v4693 = vunpack.c.l.b16 %v4631
        %v4694 = vunpack.c.h.b16 %v4631
        %v4695 = vunpack.c.l.b16 %v4632
        %v4696 = vunpack.c.h.b16 %v4632
        %v4697 = vunpack.c.l.b16 %v4633
        %v4698 = vunpack.c.h.b16 %v4633
        %v4699 = vunpack.c.l.b16 %v4634
        %v4700 = vunpack.c.h.b16 %v4634
        %v4701 = vunpack.c.l.b16 %v4635
        %v4702 = vunpack.c.h.b16 %v4635
        %v4703 = vunpack.c.l.b16 %v4636
        %v4704 = vunpack.c.h.b16 %v4636
        %v4705 = vunpack.c.l.b16 %v4637
        %v4706 = vunpack.c.h.b16 %v4637
        %v4707 = vunpack.c.l.b16 %v4638
        %v4708 = vunpack.c.h.b16 %v4638
        %v4709 = vunpack.c.l.b16 %v4639
        %v4710 = vunpack.c.h.b16 %v4639
        %v4711 = vunpack.c.l.b16 %v4640
        %v4712 = vunpack.c.h.b16 %v4640
        %v4713 = vunpack.c.l.b16 %v4641
        %v4714 = vunpack.c.h.b16 %v4641
        %v4715 = vpack.c.b16 %v4671, %v4667
        %v4716 = vpack.c.b16 %v4672, %v4668
        %v4717 = vpack.c.b16 %v4673, %v4669
        %v4718 = vpack.c.b16 %v4674, %v4670
        %v4719 = vpack.c.b16 %v4679, %v4675
        %v4720 = vpack.c.b16 %v4680, %v4676
        %v4721 = vpack.c.b16 %v4681, %v4677
        %v4722 = vpack.c.b16 %v4682, %v4678
        %v4723 = vpack.c.b16 %v4687, %v4683
        %v4724 = vpack.c.b16 %v4688, %v4684
        %v4725 = vpack.c.b16 %v4689, %v4685
        %v4726 = vpack.c.b16 %v4690, %v4686
        %v4727 = vpack.c.b16 %v4695, %v4691
        %v4728 = vpack.c.b16 %v4696, %v4692
        %v4729 = vpack.c.b16 %v4697, %v4693
        %v4730 = vpack.c.b16 %v4698, %v4694
        %v4731 = vpack.c.b16 %v4703, %v4699
        %v4732 = vpack.c.b16 %v4704, %v4700
        %v4733 = vpack.c.b16 %v4705, %v4701
        %v4734 = vpack.c.b16 %v4706, %v4702
        %v4735 = vpack.c.b16 %v4711, %v4707
        %v4736 = vpack.c.b16 %v4712, %v4708
        %v4737 = vpack.c.b16 %v4713, %v4709
        %v4738 = vpack.c.b16 %v4714, %v4710
        %v4764 = vsel %vm684, %v4642, 0
        %4766 = vmatpush.bf16.msra.mxu0 0
        %4767 = vmatpush.bf16.msra.mxu0 0
        %4768 = vmatpush.bf16.msra.mxu0 %v4735
        %4769 = vmatpush.bf16.msra.mxu0 %v4731
        %4770 = vmatpush.bf16.msra.mxu0 %v4727
        %4771 = vmatpush.bf16.msra.mxu0 %v4723
        %4772 = vmatpush.bf16.msra.mxu0 %v4719
        %4773 = vmatpush.bf16.msra.mxu0 %v4715
        %4774 = vmatmul.bf16.gmra.mxu0 %v4764
        %v4775 = vpop.f32.mrf.mxu0
        %v4776 = vadd.f32 0.0, %v4775
        %v4777 = vpop.f32.mrf.mxu0
        %v4778 = vadd.f32 0.0, %v4777
        %4779 = vdwg.mxu0
        %4780 = vmatpush.bf16.msra.mxu0 0
        %4781 = vmatpush.bf16.msra.mxu0 0
        %4782 = vmatpush.bf16.msra.mxu0 %v4736
        %4783 = vmatpush.bf16.msra.mxu0 %v4732
        %4784 = vmatpush.bf16.msra.mxu0 %v4728
        %4785 = vmatpush.bf16.msra.mxu0 %v4724
        %4786 = vmatpush.bf16.msra.mxu0 %v4720
        %4787 = vmatpush.bf16.msra.mxu0 %v4716
        %4788 = vmatmul.bf16.gmra.mxu0 %v4764
        %v4789 = vpop.f32.mrf.mxu0
        %v4790 = vadd.f32 0.0, %v4789
        %v4791 = vpop.f32.mrf.mxu0
        %v4792 = vadd.f32 0.0, %v4791
        %4793 = vdwg.mxu0
        %4794 = vmatpush.bf16.msra.mxu0 0
        %4795 = vmatpush.bf16.msra.mxu0 0
        %4796 = vmatpush.bf16.msra.mxu0 %v4737
        %4797 = vmatpush.bf16.msra.mxu0 %v4733
        %4798 = vmatpush.bf16.msra.mxu0 %v4729
        %4799 = vmatpush.bf16.msra.mxu0 %v4725
        %4800 = vmatpush.bf16.msra.mxu0 %v4721
        %4801 = vmatpush.bf16.msra.mxu0 %v4717
        %4802 = vmatmul.bf16.gmra.mxu0 %v4764
        %v4803 = vpop.f32.mrf.mxu0
        %v4804 = vadd.f32 0.0, %v4803
        %v4805 = vpop.f32.mrf.mxu0
        %v4806 = vadd.f32 0.0, %v4805
        %4807 = vdwg.mxu0
        %4808 = vmatpush.bf16.msra.mxu0 0
        %4809 = vmatpush.bf16.msra.mxu0 0
        %4810 = vmatpush.bf16.msra.mxu0 %v4738
        %4811 = vmatpush.bf16.msra.mxu0 %v4734
        %4812 = vmatpush.bf16.msra.mxu0 %v4730
        %4813 = vmatpush.bf16.msra.mxu0 %v4726
        %4814 = vmatpush.bf16.msra.mxu0 %v4722
        %4815 = vmatpush.bf16.msra.mxu0 %v4718
        %4816 = vmatmul.bf16.gmra.mxu0 %v4764
        %v4817 = vpop.f32.mrf.mxu0
        %v4818 = vadd.f32 0.0, %v4817
        %v4819 = vpop.f32.mrf.mxu0
        %v4820 = vadd.f32 0.0, %v4819
        %4821 = vdwg.mxu0
        %v4846 = vunpack.c.l.b16 %v4569
        %v4847 = vunpack.c.h.b16 %v4569
        %v4848 = vunpack.c.l.b16 %v4570
        %v4849 = vunpack.c.h.b16 %v4570
        %v4850 = vunpack.c.l.b16 %v4571
        %v4851 = vunpack.c.h.b16 %v4571
        %v4852 = vunpack.c.l.b16 %v4572
        %v4853 = vunpack.c.h.b16 %v4572
        %v4854 = vunpack.c.l.b16 %v4573
        %v4855 = vunpack.c.h.b16 %v4573
        %v4856 = vunpack.c.l.b16 %v4574
        %v4857 = vunpack.c.h.b16 %v4574
        %v4858 = vunpack.c.l.b16 %v4575
        %v4859 = vunpack.c.h.b16 %v4575
        %v4860 = vunpack.c.l.b16 %v4576
        %v4861 = vunpack.c.h.b16 %v4576
        %v4862 = vunpack.c.l.b16 %v4577
        %v4863 = vunpack.c.h.b16 %v4577
        %v4864 = vunpack.c.l.b16 %v4578
        %v4865 = vunpack.c.h.b16 %v4578
        %v4866 = vunpack.c.l.b16 %v4579
        %v4867 = vunpack.c.h.b16 %v4579
        %v4868 = vunpack.c.l.b16 %v4580
        %v4869 = vunpack.c.h.b16 %v4580
        %v4870 = vunpack.c.l.b16 %v4581
        %v4871 = vunpack.c.h.b16 %v4581
        %v4872 = vunpack.c.l.b16 %v4582
        %v4873 = vunpack.c.h.b16 %v4582
        %v4874 = vunpack.c.l.b16 %v4583
        %v4875 = vunpack.c.h.b16 %v4583
        %v4876 = vunpack.c.l.b16 %v4584
        %v4877 = vunpack.c.h.b16 %v4584
        %v4878 = vunpack.c.l.b16 %v4585
        %v4879 = vunpack.c.h.b16 %v4585
        %v4880 = vunpack.c.l.b16 %v4586
        %v4881 = vunpack.c.h.b16 %v4586
        %v4882 = vunpack.c.l.b16 %v4587
        %v4883 = vunpack.c.h.b16 %v4587
        %v4884 = vunpack.c.l.b16 %v4588
        %v4885 = vunpack.c.h.b16 %v4588
        %v4886 = vunpack.c.l.b16 %v4589
        %v4887 = vunpack.c.h.b16 %v4589
        %v4888 = vunpack.c.l.b16 %v4590
        %v4889 = vunpack.c.h.b16 %v4590
        %v4890 = vunpack.c.l.b16 %v4591
        %v4891 = vunpack.c.h.b16 %v4591
        %v4892 = vunpack.c.l.b16 %v4592
        %v4893 = vunpack.c.h.b16 %v4592
        %v4894 = vpack.c.b16 %v4850, %v4846
        %v4895 = vpack.c.b16 %v4851, %v4847
        %v4896 = vpack.c.b16 %v4852, %v4848
        %v4897 = vpack.c.b16 %v4853, %v4849
        %v4898 = vpack.c.b16 %v4858, %v4854
        %v4899 = vpack.c.b16 %v4859, %v4855
        %v4900 = vpack.c.b16 %v4860, %v4856
        %v4901 = vpack.c.b16 %v4861, %v4857
        %v4902 = vpack.c.b16 %v4866, %v4862
        %v4903 = vpack.c.b16 %v4867, %v4863
        %v4904 = vpack.c.b16 %v4868, %v4864
        %v4905 = vpack.c.b16 %v4869, %v4865
        %v4906 = vpack.c.b16 %v4874, %v4870
        %v4907 = vpack.c.b16 %v4875, %v4871
        %v4908 = vpack.c.b16 %v4876, %v4872
        %v4909 = vpack.c.b16 %v4877, %v4873
        %v4910 = vpack.c.b16 %v4882, %v4878
        %v4911 = vpack.c.b16 %v4883, %v4879
        %v4912 = vpack.c.b16 %v4884, %v4880
        %v4913 = vpack.c.b16 %v4885, %v4881
        %v4914 = vpack.c.b16 %v4890, %v4886
        %v4915 = vpack.c.b16 %v4891, %v4887
        %v4916 = vpack.c.b16 %v4892, %v4888
        %v4917 = vpack.c.b16 %v4893, %v4889
        %v4943 = vsel %vm684, %v4593, 0
        %4945 = vmatpush.bf16.msra.mxu0 0
        %4946 = vmatpush.bf16.msra.mxu0 0
        %4947 = vmatpush.bf16.msra.mxu0 %v4914
        %4948 = vmatpush.bf16.msra.mxu0 %v4910
        %4949 = vmatpush.bf16.msra.mxu0 %v4906
        %4950 = vmatpush.bf16.msra.mxu0 %v4902
        %4951 = vmatpush.bf16.msra.mxu0 %v4898
        %4952 = vmatpush.bf16.msra.mxu0 %v4894
        %4953 = vmatmul.bf16.gmra.mxu0 %v4943
        %v4954 = vpop.f32.mrf.mxu0
        %v4955 = vadd.f32 %v4776, %v4954
        %v4956 = vpop.f32.mrf.mxu0
        %v4957 = vadd.f32 %v4778, %v4956
        %4958 = vdwg.mxu0
        %4959 = vmatpush.bf16.msra.mxu0 0
        %4960 = vmatpush.bf16.msra.mxu0 0
        %4961 = vmatpush.bf16.msra.mxu0 %v4915
        %4962 = vmatpush.bf16.msra.mxu0 %v4911
        %4963 = vmatpush.bf16.msra.mxu0 %v4907
        %4964 = vmatpush.bf16.msra.mxu0 %v4903
        %4965 = vmatpush.bf16.msra.mxu0 %v4899
        %4966 = vmatpush.bf16.msra.mxu0 %v4895
        %4967 = vmatmul.bf16.gmra.mxu0 %v4943
        %v4968 = vpop.f32.mrf.mxu0
        %v4969 = vadd.f32 %v4790, %v4968
        %v4970 = vpop.f32.mrf.mxu0
        %v4971 = vadd.f32 %v4792, %v4970
        %4972 = vdwg.mxu0
        %4973 = vmatpush.bf16.msra.mxu0 0
        %4974 = vmatpush.bf16.msra.mxu0 0
        %4975 = vmatpush.bf16.msra.mxu0 %v4916
        %4976 = vmatpush.bf16.msra.mxu0 %v4912
        %4977 = vmatpush.bf16.msra.mxu0 %v4908
        %4978 = vmatpush.bf16.msra.mxu0 %v4904
        %4979 = vmatpush.bf16.msra.mxu0 %v4900
        %4980 = vmatpush.bf16.msra.mxu0 %v4896
        %4981 = vmatmul.bf16.gmra.mxu0 %v4943
        %v4982 = vpop.f32.mrf.mxu0
        %v4983 = vadd.f32 %v4804, %v4982
        %v4984 = vpop.f32.mrf.mxu0
        %v4985 = vadd.f32 %v4806, %v4984
        %4986 = vdwg.mxu0
        %4987 = vmatpush.bf16.msra.mxu0 0
        %4988 = vmatpush.bf16.msra.mxu0 0
        %4989 = vmatpush.bf16.msra.mxu0 %v4917
        %4990 = vmatpush.bf16.msra.mxu0 %v4913
        %4991 = vmatpush.bf16.msra.mxu0 %v4909
        %4992 = vmatpush.bf16.msra.mxu0 %v4905
        %4993 = vmatpush.bf16.msra.mxu0 %v4901
        %4994 = vmatpush.bf16.msra.mxu0 %v4897
        %4995 = vmatmul.bf16.gmra.mxu0 %v4943
        %v4996 = vpop.f32.mrf.mxu0
        %v4997 = vadd.f32 %v4818, %v4996
        %v4998 = vpop.f32.mrf.mxu0
        %v4999 = vadd.f32 %v4820, %v4998
        %5000 = vdwg.mxu0
        %v5001 = vld [vmem:[%s923] sm:$0xf]
        %v5002 = vld [vmem:[%s923 + $0x4] sm:$0xf]
        %v5005 = vunpack.c.l.b16 %v5001
        %v5006 = vunpack.c.l.b16 %v5002
        %v5007 = vpack.c.b16 %v5006, %v5005
        %v5009 = vsel %vm470, %v5007, 0
        %5011 = vmatpush.bf16.msra.mxu0 0
        %5012 = vmatpush.bf16.msra.mxu0 0
        %5013 = vmatpush.bf16.msra.mxu0 0
        %5014 = vmatpush.bf16.msra.mxu0 0
        %5015 = vmatpush.bf16.msra.mxu0 0
        %5016 = vmatpush.bf16.msra.mxu0 0
        %5017 = vmatpush.bf16.msra.mxu0 %v4549
        %5018 = vmatpush.bf16.msra.mxu0 %v4548
        %5019 = vmatmul.bf16.gmra.mxu0 %v5009
        %v5020 = vpop.f32.mrf.mxu0
        %v5021 = vadd.f32 0.0, %v5020
        %v5022 = vpop.f32.mrf.mxu0
        %v5023 = vadd.f32 0.0, %v5022
        %5024 = vdwg.mxu0
        %v5025 = vld [vmem:[%s948] sm:$0xff]
        %v5026 = vld [vmem:[%s948 + $0x8] sm:$0xff]
        %v5027 = vld [vmem:[%s948 + $0x10] sm:$0xff]
        %v5028 = vld [vmem:[%s948 + $0x18] sm:$0xff]
        %v5029 = vld [vmem:[%s948 + $0x20] sm:$0xff]
        %v5030 = vld [vmem:[%s948 + $0x28] sm:$0xff]
        %v5031 = vld [vmem:[%s948 + $0x30] sm:$0xff]
        %v5032 = vld [vmem:[%s948 + $0x38] sm:$0xff]
        %v5033 = vld [vmem:[%s948 + $0x40] sm:$0xff]
        %v5034 = vld [vmem:[%s948 + $0x48] sm:$0xff]
        %v5035 = vld [vmem:[%s948 + $0x50] sm:$0xff]
        %v5036 = vld [vmem:[%s948 + $0x58] sm:$0xff]
        %v5037 = vld [vmem:[%s948 + $0x60] sm:$0xff]
        %v5038 = vld [vmem:[%s948 + $0x68] sm:$0xff]
        %v5039 = vld [vmem:[%s948 + $0x70] sm:$0xff]
        %v5040 = vld [vmem:[%s948 + $0x78] sm:$0xff]
        %v5041 = vld [vmem:[%s948 + $0x80] sm:$0xff]
        %v5042 = vld [vmem:[%s948 + $0x88] sm:$0xff]
        %v5043 = vld [vmem:[%s948 + $0x90] sm:$0xff]
        %v5044 = vld [vmem:[%s948 + $0x98] sm:$0xff]
        %v5045 = vld [vmem:[%s948 + $0xa0] sm:$0xff]
        %v5046 = vld [vmem:[%s948 + $0xa8] sm:$0xff]
        %v5047 = vld [vmem:[%s948 + $0xb0] sm:$0xff]
        %v5048 = vld [vmem:[%s948 + $0xb8] sm:$0xff]
        %v5049 = vpack.c.bf16 %v5023, %v5021
        %v5074 = vunpack.c.l.b16 %v5025
        %v5075 = vunpack.c.h.b16 %v5025
        %v5076 = vunpack.c.l.b16 %v5026
        %v5077 = vunpack.c.h.b16 %v5026
        %v5078 = vunpack.c.l.b16 %v5027
        %v5079 = vunpack.c.h.b16 %v5027
        %v5080 = vunpack.c.l.b16 %v5028
        %v5081 = vunpack.c.h.b16 %v5028
        %v5082 = vunpack.c.l.b16 %v5029
        %v5083 = vunpack.c.h.b16 %v5029
        %v5084 = vunpack.c.l.b16 %v5030
        %v5085 = vunpack.c.h.b16 %v5030
        %v5086 = vunpack.c.l.b16 %v5031
        %v5087 = vunpack.c.h.b16 %v5031
        %v5088 = vunpack.c.l.b16 %v5032
        %v5089 = vunpack.c.h.b16 %v5032
        %v5090 = vunpack.c.l.b16 %v5033
        %v5091 = vunpack.c.h.b16 %v5033
        %v5092 = vunpack.c.l.b16 %v5034
        %v5093 = vunpack.c.h.b16 %v5034
        %v5094 = vunpack.c.l.b16 %v5035
        %v5095 = vunpack.c.h.b16 %v5035
        %v5096 = vunpack.c.l.b16 %v5036
        %v5097 = vunpack.c.h.b16 %v5036
        %v5098 = vunpack.c.l.b16 %v5037
        %v5099 = vunpack.c.h.b16 %v5037
        %v5100 = vunpack.c.l.b16 %v5038
        %v5101 = vunpack.c.h.b16 %v5038
        %v5102 = vunpack.c.l.b16 %v5039
        %v5103 = vunpack.c.h.b16 %v5039
        %v5104 = vunpack.c.l.b16 %v5040
        %v5105 = vunpack.c.h.b16 %v5040
        %v5106 = vunpack.c.l.b16 %v5041
        %v5107 = vunpack.c.h.b16 %v5041
        %v5108 = vunpack.c.l.b16 %v5042
        %v5109 = vunpack.c.h.b16 %v5042
        %v5110 = vunpack.c.l.b16 %v5043
        %v5111 = vunpack.c.h.b16 %v5043
        %v5112 = vunpack.c.l.b16 %v5044
        %v5113 = vunpack.c.h.b16 %v5044
        %v5114 = vunpack.c.l.b16 %v5045
        %v5115 = vunpack.c.h.b16 %v5045
        %v5116 = vunpack.c.l.b16 %v5046
        %v5117 = vunpack.c.h.b16 %v5046
        %v5118 = vunpack.c.l.b16 %v5047
        %v5119 = vunpack.c.h.b16 %v5047
        %v5120 = vunpack.c.l.b16 %v5048
        %v5121 = vunpack.c.h.b16 %v5048
        %v5122 = vpack.c.b16 %v5078, %v5074
        %v5123 = vpack.c.b16 %v5079, %v5075
        %v5124 = vpack.c.b16 %v5080, %v5076
        %v5125 = vpack.c.b16 %v5081, %v5077
        %v5126 = vpack.c.b16 %v5086, %v5082
        %v5127 = vpack.c.b16 %v5087, %v5083
        %v5128 = vpack.c.b16 %v5088, %v5084
        %v5129 = vpack.c.b16 %v5089, %v5085
        %v5130 = vpack.c.b16 %v5094, %v5090
        %v5131 = vpack.c.b16 %v5095, %v5091
        %v5132 = vpack.c.b16 %v5096, %v5092
        %v5133 = vpack.c.b16 %v5097, %v5093
        %v5134 = vpack.c.b16 %v5102, %v5098
        %v5135 = vpack.c.b16 %v5103, %v5099
        %v5136 = vpack.c.b16 %v5104, %v5100
        %v5137 = vpack.c.b16 %v5105, %v5101
        %v5138 = vpack.c.b16 %v5110, %v5106
        %v5139 = vpack.c.b16 %v5111, %v5107
        %v5140 = vpack.c.b16 %v5112, %v5108
        %v5141 = vpack.c.b16 %v5113, %v5109
        %v5142 = vpack.c.b16 %v5118, %v5114
        %v5143 = vpack.c.b16 %v5119, %v5115
        %v5144 = vpack.c.b16 %v5120, %v5116
        %v5145 = vpack.c.b16 %v5121, %v5117
        %v5171 = vsel %vm684, %v5049, 0
        %5173 = vmatpush.bf16.msra.mxu0 0
        %5174 = vmatpush.bf16.msra.mxu0 0
        %5175 = vmatpush.bf16.msra.mxu0 %v5142
        %5176 = vmatpush.bf16.msra.mxu0 %v5138
        %5177 = vmatpush.bf16.msra.mxu0 %v5134
        %5178 = vmatpush.bf16.msra.mxu0 %v5130
        %5179 = vmatpush.bf16.msra.mxu0 %v5126
        %5180 = vmatpush.bf16.msra.mxu0 %v5122
        %5181 = vmatmul.bf16.gmra.mxu0 %v5171
        %v5182 = vpop.f32.mrf.mxu0
        %v5183 = vadd.f32 0.0, %v5182
        %v5184 = vpop.f32.mrf.mxu0
        %v5185 = vadd.f32 0.0, %v5184
        %5186 = vdwg.mxu0
        %5187 = vmatpush.bf16.msra.mxu0 0
        %5188 = vmatpush.bf16.msra.mxu0 0
        %5189 = vmatpush.bf16.msra.mxu0 %v5143
        %5190 = vmatpush.bf16.msra.mxu0 %v5139
        %5191 = vmatpush.bf16.msra.mxu0 %v5135
        %5192 = vmatpush.bf16.msra.mxu0 %v5131
        %5193 = vmatpush.bf16.msra.mxu0 %v5127
        %5194 = vmatpush.bf16.msra.mxu0 %v5123
        %5195 = vmatmul.bf16.gmra.mxu0 %v5171
        %v5196 = vpop.f32.mrf.mxu0
        %v5197 = vadd.f32 0.0, %v5196
        %v5198 = vpop.f32.mrf.mxu0
        %v5199 = vadd.f32 0.0, %v5198
        %5200 = vdwg.mxu0
        %5201 = vmatpush.bf16.msra.mxu0 0
        %5202 = vmatpush.bf16.msra.mxu0 0
        %5203 = vmatpush.bf16.msra.mxu0 %v5144
        %5204 = vmatpush.bf16.msra.mxu0 %v5140
        %5205 = vmatpush.bf16.msra.mxu0 %v5136
        %5206 = vmatpush.bf16.msra.mxu0 %v5132
        %5207 = vmatpush.bf16.msra.mxu0 %v5128
        %5208 = vmatpush.bf16.msra.mxu0 %v5124
        %5209 = vmatmul.bf16.gmra.mxu0 %v5171
        %v5210 = vpop.f32.mrf.mxu0
        %v5211 = vadd.f32 0.0, %v5210
        %v5212 = vpop.f32.mrf.mxu0
        %v5213 = vadd.f32 0.0, %v5212
        %5214 = vdwg.mxu0
        %5215 = vmatpush.bf16.msra.mxu0 0
        %5216 = vmatpush.bf16.msra.mxu0 0
        %5217 = vmatpush.bf16.msra.mxu0 %v5145
        %5218 = vmatpush.bf16.msra.mxu0 %v5141
        %5219 = vmatpush.bf16.msra.mxu0 %v5137
        %5220 = vmatpush.bf16.msra.mxu0 %v5133
        %5221 = vmatpush.bf16.msra.mxu0 %v5129
        %5222 = vmatpush.bf16.msra.mxu0 %v5125
        %5223 = vmatmul.bf16.gmra.mxu0 %v5171
        %v5224 = vpop.f32.mrf.mxu0
        %v5225 = vadd.f32 0.0, %v5224
        %v5226 = vpop.f32.mrf.mxu0
        %v5227 = vadd.f32 0.0, %v5226
        %5228 = vdwg.mxu0
        %v5229 = vadd.f32 %v4955, %v5183
        %v5230 = vadd.f32 %v4969, %v5197
        %v5231 = vadd.f32 %v4983, %v5211
        %v5232 = vadd.f32 %v4997, %v5225
        %v5233 = vadd.f32 %v4957, %v5185
        %v5234 = vadd.f32 %v4971, %v5199
        %v5235 = vadd.f32 %v4985, %v5213
        %v5236 = vadd.f32 %v4999, %v5227
        %v5237 = vmax.f32 %v5229, %v5231
        %v5238 = vmax.f32 %v5230, %v5232
        %v5239 = vmax.f32 %v5233, %v5235
        %v5240 = vmax.f32 %v5234, %v5236
        %v5241 = vld [vmem:[%s1165] sm:$0xf]
        %v5242 = vld [vmem:[%s1165 + $0x4] sm:$0xf]
        %v5245 = vunpack.c.l.b16 %v5241
        %v5246 = vunpack.c.l.b16 %v5242
        %v5247 = vpack.c.b16 %v5246, %v5245
        %v5249 = vsel %vm470, %v5247, 0
        %5251 = vmatpush.bf16.msra.mxu0 0
        %5252 = vmatpush.bf16.msra.mxu0 0
        %5253 = vmatpush.bf16.msra.mxu0 0
        %5254 = vmatpush.bf16.msra.mxu0 0
        %5255 = vmatpush.bf16.msra.mxu0 0
        %5256 = vmatpush.bf16.msra.mxu0 0
        %5257 = vmatpush.bf16.msra.mxu0 %v4549
        %5258 = vmatpush.bf16.msra.mxu0 %v4548
        %5259 = vmatmul.bf16.gmra.mxu0 %v5249
        %v5260 = vpop.f32.mrf.mxu0
        %v5261 = vadd.f32 0.0, %v5260
        %v5262 = vpop.f32.mrf.mxu0
        %v5263 = vadd.f32 0.0, %v5262
        %5264 = vdwg.mxu0
        %v5265 = vpack.c.bf16 %v5263, %v5261
        %v5266 = vld [vmem:[%s1191] sm:$0xf]
        %v5267 = vld [vmem:[%s1191 + $0x4] sm:$0xf]
        %v5270 = vunpack.c.l.b16 %v5266
        %v5271 = vunpack.c.l.b16 %v5267
        %v5272 = vpack.c.b16 %v5271, %v5270
        %v5274 = vsel %vm470, %v5272, 0
        %5276 = vmatpush.bf16.msra.mxu0 0
        %5277 = vmatpush.bf16.msra.mxu0 0
        %5278 = vmatpush.bf16.msra.mxu0 0
        %5279 = vmatpush.bf16.msra.mxu0 0
        %5280 = vmatpush.bf16.msra.mxu0 0
        %5281 = vmatpush.bf16.msra.mxu0 0
        %5282 = vmatpush.bf16.msra.mxu0 %v4549
        %5283 = vmatpush.bf16.msra.mxu0 %v4548
        %5284 = vmatmul.bf16.gmra.mxu0 %v5274
        %v5285 = vpop.f32.mrf.mxu0
        %v5286 = vadd.f32 0.0, %v5285
        %v5287 = vpop.f32.mrf.mxu0
        %v5288 = vadd.f32 0.0, %v5287
        %5289 = vdwg.mxu0
        %v5290 = vpack.c.bf16 %v5288, %v5286
        %v5292 = vsel %vm684, %v5290, 0
        %5294 = vmatpush.bf16.msra.mxu0 0
        %5295 = vmatpush.bf16.msra.mxu0 0
        %5296 = vmatpush.bf16.msra.mxu0 %v4735
        %5297 = vmatpush.bf16.msra.mxu0 %v4731
        %5298 = vmatpush.bf16.msra.mxu0 %v4727
        %5299 = vmatpush.bf16.msra.mxu0 %v4723
        %5300 = vmatpush.bf16.msra.mxu0 %v4719
        %5301 = vmatpush.bf16.msra.mxu0 %v4715
        %5302 = vmatmul.bf16.gmra.mxu0 %v5292
        %v5303 = vpop.f32.mrf.mxu0
        %v5304 = vadd.f32 0.0, %v5303
        %v5305 = vpop.f32.mrf.mxu0
        %v5306 = vadd.f32 0.0, %v5305
        %5307 = vdwg.mxu0
        %5308 = vmatpush.bf16.msra.mxu0 0
        %5309 = vmatpush.bf16.msra.mxu0 0
        %5310 = vmatpush.bf16.msra.mxu0 %v4736
        %5311 = vmatpush.bf16.msra.mxu0 %v4732
        %5312 = vmatpush.bf16.msra.mxu0 %v4728
        %5313 = vmatpush.bf16.msra.mxu0 %v4724
        %5314 = vmatpush.bf16.msra.mxu0 %v4720
        %5315 = vmatpush.bf16.msra.mxu0 %v4716
        %5316 = vmatmul.bf16.gmra.mxu0 %v5292
        %v5317 = vpop.f32.mrf.mxu0
        %v5318 = vadd.f32 0.0, %v5317
        %v5319 = vpop.f32.mrf.mxu0
        %v5320 = vadd.f32 0.0, %v5319
        %5321 = vdwg.mxu0
        %5322 = vmatpush.bf16.msra.mxu0 0
        %5323 = vmatpush.bf16.msra.mxu0 0
        %5324 = vmatpush.bf16.msra.mxu0 %v4737
        %5325 = vmatpush.bf16.msra.mxu0 %v4733
        %5326 = vmatpush.bf16.msra.mxu0 %v4729
        %5327 = vmatpush.bf16.msra.mxu0 %v4725
        %5328 = vmatpush.bf16.msra.mxu0 %v4721
        %5329 = vmatpush.bf16.msra.mxu0 %v4717
        %5330 = vmatmul.bf16.gmra.mxu0 %v5292
        %v5331 = vpop.f32.mrf.mxu0
        %v5332 = vadd.f32 0.0, %v5331
        %v5333 = vpop.f32.mrf.mxu0
        %v5334 = vadd.f32 0.0, %v5333
        %5335 = vdwg.mxu0
        %5336 = vmatpush.bf16.msra.mxu0 0
        %5337 = vmatpush.bf16.msra.mxu0 0
        %5338 = vmatpush.bf16.msra.mxu0 %v4738
        %5339 = vmatpush.bf16.msra.mxu0 %v4734
        %5340 = vmatpush.bf16.msra.mxu0 %v4730
        %5341 = vmatpush.bf16.msra.mxu0 %v4726
        %5342 = vmatpush.bf16.msra.mxu0 %v4722
        %5343 = vmatpush.bf16.msra.mxu0 %v4718
        %5344 = vmatmul.bf16.gmra.mxu0 %v5292
        %v5345 = vpop.f32.mrf.mxu0
        %v5346 = vadd.f32 0.0, %v5345
        %v5347 = vpop.f32.mrf.mxu0
        %v5348 = vadd.f32 0.0, %v5347
        %5349 = vdwg.mxu0
        %v5351 = vsel %vm684, %v5265, 0
        %5353 = vmatpush.bf16.msra.mxu0 0
        %5354 = vmatpush.bf16.msra.mxu0 0
        %5355 = vmatpush.bf16.msra.mxu0 %v4914
        %5356 = vmatpush.bf16.msra.mxu0 %v4910
        %5357 = vmatpush.bf16.msra.mxu0 %v4906
        %5358 = vmatpush.bf16.msra.mxu0 %v4902
        %5359 = vmatpush.bf16.msra.mxu0 %v4898
        %5360 = vmatpush.bf16.msra.mxu0 %v4894
        %5361 = vmatmul.bf16.gmra.mxu0 %v5351
        %v5362 = vpop.f32.mrf.mxu0
        %v5363 = vadd.f32 %v5304, %v5362
        %v5364 = vpop.f32.mrf.mxu0
        %v5365 = vadd.f32 %v5306, %v5364
        %5366 = vdwg.mxu0
        %5367 = vmatpush.bf16.msra.mxu0 0
        %5368 = vmatpush.bf16.msra.mxu0 0
        %5369 = vmatpush.bf16.msra.mxu0 %v4915
        %5370 = vmatpush.bf16.msra.mxu0 %v4911
        %5371 = vmatpush.bf16.msra.mxu0 %v4907
        %5372 = vmatpush.bf16.msra.mxu0 %v4903
        %5373 = vmatpush.bf16.msra.mxu0 %v4899
        %5374 = vmatpush.bf16.msra.mxu0 %v4895
        %5375 = vmatmul.bf16.gmra.mxu0 %v5351
        %v5376 = vpop.f32.mrf.mxu0
        %v5377 = vadd.f32 %v5318, %v5376
        %v5378 = vpop.f32.mrf.mxu0
        %v5379 = vadd.f32 %v5320, %v5378
        %5380 = vdwg.mxu0
        %5381 = vmatpush.bf16.msra.mxu0 0
        %5382 = vmatpush.bf16.msra.mxu0 0
        %5383 = vmatpush.bf16.msra.mxu0 %v4916
        %5384 = vmatpush.bf16.msra.mxu0 %v4912
        %5385 = vmatpush.bf16.msra.mxu0 %v4908
        %5386 = vmatpush.bf16.msra.mxu0 %v4904
        %5387 = vmatpush.bf16.msra.mxu0 %v4900
        %5388 = vmatpush.bf16.msra.mxu0 %v4896
        %5389 = vmatmul.bf16.gmra.mxu0 %v5351
        %v5390 = vpop.f32.mrf.mxu0
        %v5391 = vadd.f32 %v5332, %v5390
        %v5392 = vpop.f32.mrf.mxu0
        %v5393 = vadd.f32 %v5334, %v5392
        %5394 = vdwg.mxu0
        %5395 = vmatpush.bf16.msra.mxu0 0
        %5396 = vmatpush.bf16.msra.mxu0 0
        %5397 = vmatpush.bf16.msra.mxu0 %v4917
        %5398 = vmatpush.bf16.msra.mxu0 %v4913
        %5399 = vmatpush.bf16.msra.mxu0 %v4909
        %5400 = vmatpush.bf16.msra.mxu0 %v4905
        %5401 = vmatpush.bf16.msra.mxu0 %v4901
        %5402 = vmatpush.bf16.msra.mxu0 %v4897
        %5403 = vmatmul.bf16.gmra.mxu0 %v5351
        %v5404 = vpop.f32.mrf.mxu0
        %v5405 = vadd.f32 %v5346, %v5404
        %v5406 = vpop.f32.mrf.mxu0
        %v5407 = vadd.f32 %v5348, %v5406
        %5408 = vdwg.mxu0
        %v5409 = vld [vmem:[%s1335] sm:$0xf]
        %v5410 = vld [vmem:[%s1335 + $0x4] sm:$0xf]
        %v5413 = vunpack.c.l.b16 %v5409
        %v5414 = vunpack.c.l.b16 %v5410
        %v5415 = vpack.c.b16 %v5414, %v5413
        %v5417 = vsel %vm470, %v5415, 0
        %5419 = vmatpush.bf16.msra.mxu0 0
        %5420 = vmatpush.bf16.msra.mxu0 0
        %5421 = vmatpush.bf16.msra.mxu0 0
        %5422 = vmatpush.bf16.msra.mxu0 0
        %5423 = vmatpush.bf16.msra.mxu0 0
        %5424 = vmatpush.bf16.msra.mxu0 0
        %5425 = vmatpush.bf16.msra.mxu0 %v4549
        %5426 = vmatpush.bf16.msra.mxu0 %v4548
        %5427 = vmatmul.bf16.gmra.mxu0 %v5417
        %v5428 = vpop.f32.mrf.mxu0
        %v5429 = vadd.f32 0.0, %v5428
        %v5430 = vpop.f32.mrf.mxu0
        %v5431 = vadd.f32 0.0, %v5430
        %5432 = vdwg.mxu0
        %v5433 = vpack.c.bf16 %v5431, %v5429
        %v5435 = vsel %vm684, %v5433, 0
        %5437 = vmatpush.bf16.msra.mxu0 0
        %5438 = vmatpush.bf16.msra.mxu0 0
        %5439 = vmatpush.bf16.msra.mxu0 %v5142
        %5440 = vmatpush.bf16.msra.mxu0 %v5138
        %5441 = vmatpush.bf16.msra.mxu0 %v5134
        %5442 = vmatpush.bf16.msra.mxu0 %v5130
        %5443 = vmatpush.bf16.msra.mxu0 %v5126
        %5444 = vmatpush.bf16.msra.mxu0 %v5122
        %5445 = vmatmul.bf16.gmra.mxu0 %v5435
        %v5446 = vpop.f32.mrf.mxu0
        %v5447 = vadd.f32 0.0, %v5446
        %v5448 = vpop.f32.mrf.mxu0
        %v5449 = vadd.f32 0.0, %v5448
        %5450 = vdwg.mxu0
        %5451 = vmatpush.bf16.msra.mxu0 0
        %5452 = vmatpush.bf16.msra.mxu0 0
        %5453 = vmatpush.bf16.msra.mxu0 %v5143
        %5454 = vmatpush.bf16.msra.mxu0 %v5139
        %5455 = vmatpush.bf16.msra.mxu0 %v5135
        %5456 = vmatpush.bf16.msra.mxu0 %v5131
        %5457 = vmatpush.bf16.msra.mxu0 %v5127
        %5458 = vmatpush.bf16.msra.mxu0 %v5123
        %5459 = vmatmul.bf16.gmra.mxu0 %v5435
        %v5460 = vpop.f32.mrf.mxu0
        %v5461 = vadd.f32 0.0, %v5460
        %v5462 = vpop.f32.mrf.mxu0
        %v5463 = vadd.f32 0.0, %v5462
        %5464 = vdwg.mxu0
        %5465 = vmatpush.bf16.msra.mxu0 0
        %5466 = vmatpush.bf16.msra.mxu0 0
        %5467 = vmatpush.bf16.msra.mxu0 %v5144
        %5468 = vmatpush.bf16.msra.mxu0 %v5140
        %5469 = vmatpush.bf16.msra.mxu0 %v5136
        %5470 = vmatpush.bf16.msra.mxu0 %v5132
        %5471 = vmatpush.bf16.msra.mxu0 %v5128
        %5472 = vmatpush.bf16.msra.mxu0 %v5124
        %5473 = vmatmul.bf16.gmra.mxu0 %v5435
        %v5474 = vpop.f32.mrf.mxu0
        %v5475 = vadd.f32 0.0, %v5474
        %v5476 = vpop.f32.mrf.mxu0
        %v5477 = vadd.f32 0.0, %v5476
        %5478 = vdwg.mxu0
        %5479 = vmatpush.bf16.msra.mxu0 0
        %5480 = vmatpush.bf16.msra.mxu0 0
        %5481 = vmatpush.bf16.msra.mxu0 %v5145
        %5482 = vmatpush.bf16.msra.mxu0 %v5141
        %5483 = vmatpush.bf16.msra.mxu0 %v5137
        %5484 = vmatpush.bf16.msra.mxu0 %v5133
        %5485 = vmatpush.bf16.msra.mxu0 %v5129
        %5486 = vmatpush.bf16.msra.mxu0 %v5125
        %5487 = vmatmul.bf16.gmra.mxu0 %v5435
        %v5488 = vpop.f32.mrf.mxu0
        %v5489 = vadd.f32 0.0, %v5488
        %v5490 = vpop.f32.mrf.mxu0
        %v5491 = vadd.f32 0.0, %v5490
        %5492 = vdwg.mxu0
        %v5493 = vadd.f32 %v5363, %v5447
        %v5494 = vadd.f32 %v5377, %v5461
        %v5495 = vadd.f32 %v5391, %v5475
        %v5496 = vadd.f32 %v5405, %v5489
        %v5497 = vadd.f32 %v5365, %v5449
        %v5498 = vadd.f32 %v5379, %v5463
        %v5499 = vadd.f32 %v5393, %v5477
        %v5500 = vadd.f32 %v5407, %v5491
        %v5501 = vmax.f32 %v5493, %v5495
        %v5502 = vmax.f32 %v5494, %v5496
        %v5503 = vmax.f32 %v5497, %v5499
        %v5504 = vmax.f32 %v5498, %v5500
        %v5505 = vmax.f32 %v5237, %v5501
        %v5506 = vmax.f32 %v5238, %v5502
        %v5507 = vmax.f32 %v5239, %v5503
        %v5508 = vmax.f32 %v5240, %v5504
        %v5510 = vperm.slane %v4532, 0
        %v5511 = vperm.slane %v4532, 1
        %v5514 = vadd.f32 %v5505, %v5510
        %v5515 = vadd.f32 %v5506, %v5511
        %v5516 = vadd.f32 %v5507, %v5510
        %v5517 = vadd.f32 %v5508, %v5511
        %v5518 = vtanh.pop %v5514
        %v5519 = vtanh.pop %v5515
        %v5520 = vtanh.pop %v5516
        %v5521 = vtanh.pop %v5517
        %v5522 = vld [vmem:[%s6] sm:$0x1]
        %v5523 = vld [vmem:[%s4] sm:$0xf]
        %v5524 = vpack.c.bf16 %v5520, %v5518
        %v5525 = vpack.c.bf16 %v5521, %v5519
        %v5527 = vsel %vm1453, %v5523, 0
        %5529 = vmatpush.bf16.msra.mxu0 0
        %5530 = vmatpush.bf16.msra.mxu0 0
        %5531 = vmatpush.bf16.msra.mxu0 0
        %5532 = vmatpush.bf16.msra.mxu0 0
        %5533 = vmatpush.bf16.msra.mxu0 0
        %5534 = vmatpush.bf16.msra.mxu0 0
        %5535 = vmatpush.bf16.msra.mxu0 0
        %5536 = vmatpush.bf16.msra.mxu0 %v5524
        %5537 = vmatmul.bf16.gmra.mxu0 %v5527
        %v5538 = vpop.f32.mrf.mxu0
        %v5539 = vadd.f32 0.0, %v5538
        %v5540 = vpop.f32.mrf.mxu0
        %5541 = vdwg.mxu0
        %5542 = vmatpush.bf16.msra.mxu0 0
        %5543 = vmatpush.bf16.msra.mxu0 0
        %5544 = vmatpush.bf16.msra.mxu0 0
        %5545 = vmatpush.bf16.msra.mxu0 0
        %5546 = vmatpush.bf16.msra.mxu0 0
        %5547 = vmatpush.bf16.msra.mxu0 0
        %5548 = vmatpush.bf16.msra.mxu0 0
        %5549 = vmatpush.bf16.msra.mxu0 %v5525
        %5550 = vmatmul.bf16.gmra.mxu0 %v5527
        %v5551 = vpop.f32.mrf.mxu0
        %v5552 = vadd.f32 0.0, %v5551
        %v5553 = vpop.f32.mrf.mxu0
        %5554 = vdwg.mxu0
        %v5555 = vld [vmem:[%s5] sm:$0xf]
        %v5556 = vld [vmem:[%s5 + $0x4] sm:$0xf]
        %v5557 = vld [vmem:[%s5 + $0x8] sm:$0xf]
        %v5558 = vld [vmem:[%s5 + $0xc] sm:$0xf]
        %v5559 = vld [vmem:[%s5 + $0x10] sm:$0xf]
        %v5560 = vld [vmem:[%s5 + $0x14] sm:$0xf]
        %v5561 = vld [vmem:[%s5 + $0x18] sm:$0xf]
        %v5562 = vld [vmem:[%s5 + $0x1c] sm:$0xf]
        %v5563 = vld [vmem:[%s5 + $0x20] sm:$0xf]
        %v5564 = vld [vmem:[%s5 + $0x24] sm:$0xf]
        %v5565 = vld [vmem:[%s5 + $0x28] sm:$0xf]
        %v5566 = vld [vmem:[%s5 + $0x2c] sm:$0xf]
        %v5567 = vld [vmem:[%s5 + $0x30] sm:$0xf]
        %v5568 = vld [vmem:[%s5 + $0x34] sm:$0xf]
        %v5569 = vld [vmem:[%s5 + $0x38] sm:$0xf]
        %v5570 = vld [vmem:[%s5 + $0x3c] sm:$0xf]
        %v5571 = vld [vmem:[%s5 + $0x40] sm:$0xf]
        %v5572 = vld [vmem:[%s5 + $0x44] sm:$0xf]
        %v5573 = vld [vmem:[%s5 + $0x48] sm:$0xf]
        %v5574 = vld [vmem:[%s5 + $0x4c] sm:$0xf]
        %v5575 = vld [vmem:[%s5 + $0x50] sm:$0xf]
        %v5576 = vld [vmem:[%s5 + $0x54] sm:$0xf]
        %v5577 = vld [vmem:[%s5 + $0x58] sm:$0xf]
        %v5578 = vld [vmem:[%s5 + $0x5c] sm:$0xf]
        %v5579 = vld [vmem:[%s5 + $0x60] sm:$0xf]
        %v5580 = vld [vmem:[%s5 + $0x64] sm:$0xf]
        %v5581 = vld [vmem:[%s5 + $0x68] sm:$0xf]
        %v5582 = vld [vmem:[%s5 + $0x6c] sm:$0xf]
        %v5583 = vld [vmem:[%s5 + $0x70] sm:$0xf]
        %v5584 = vld [vmem:[%s5 + $0x74] sm:$0xf]
        %v5585 = vld [vmem:[%s5 + $0x78] sm:$0xf]
        %v5586 = vld [vmem:[%s5 + $0x7c] sm:$0xf]
        %v5587 = vpack.c.bf16 %v5539, %v5539
        %v5588 = vpack.c.bf16 %v5552, %v5552
        %v5589 = vld [vmem:[%s1517] sm:$0xf]
        %v5591 = vsel %vm1453, %v5589, 0
        %5593 = vmatpush.bf16.msra.mxu0 0
        %5594 = vmatpush.bf16.msra.mxu0 0
        %5595 = vmatpush.bf16.msra.mxu0 0
        %5596 = vmatpush.bf16.msra.mxu0 0
        %5597 = vmatpush.bf16.msra.mxu0 0
        %5598 = vmatpush.bf16.msra.mxu0 0
        %5599 = vmatpush.bf16.msra.mxu0 0
        %5600 = vmatpush.bf16.msra.mxu0 %v5524
        %5601 = vmatmul.bf16.gmra.mxu0 %v5591
        %v5602 = vpop.f32.mrf.mxu0
        %v5603 = vadd.f32 0.0, %v5602
        %v5604 = vpop.f32.mrf.mxu0
        %5605 = vdwg.mxu0
        %5606 = vmatpush.bf16.msra.mxu0 0
        %5607 = vmatpush.bf16.msra.mxu0 0
        %5608 = vmatpush.bf16.msra.mxu0 0
        %5609 = vmatpush.bf16.msra.mxu0 0
        %5610 = vmatpush.bf16.msra.mxu0 0
        %5611 = vmatpush.bf16.msra.mxu0 0
        %5612 = vmatpush.bf16.msra.mxu0 0
        %5613 = vmatpush.bf16.msra.mxu0 %v5525
        %5614 = vmatmul.bf16.gmra.mxu0 %v5591
        %v5615 = vpop.f32.mrf.mxu0
        %v5616 = vadd.f32 0.0, %v5615
        %v5617 = vpop.f32.mrf.mxu0
        %5618 = vdwg.mxu0
        %v5619 = vld [vmem:[%s1548] sm:$0xf]
        %v5620 = vld [vmem:[%s1548 + $0x4] sm:$0xf]
        %v5621 = vld [vmem:[%s1548 + $0x8] sm:$0xf]
        %v5622 = vld [vmem:[%s1548 + $0xc] sm:$0xf]
        %v5623 = vld [vmem:[%s1548 + $0x10] sm:$0xf]
        %v5624 = vld [vmem:[%s1548 + $0x14] sm:$0xf]
        %v5625 = vld [vmem:[%s1548 + $0x18] sm:$0xf]
        %v5626 = vld [vmem:[%s1548 + $0x1c] sm:$0xf]
        %v5627 = vld [vmem:[%s1548 + $0x20] sm:$0xf]
        %v5628 = vld [vmem:[%s1548 + $0x24] sm:$0xf]
        %v5629 = vld [vmem:[%s1548 + $0x28] sm:$0xf]
        %v5630 = vld [vmem:[%s1548 + $0x2c] sm:$0xf]
        %v5631 = vld [vmem:[%s1548 + $0x30] sm:$0xf]
        %v5632 = vld [vmem:[%s1548 + $0x34] sm:$0xf]
        %v5633 = vld [vmem:[%s1548 + $0x38] sm:$0xf]
        %v5634 = vld [vmem:[%s1548 + $0x3c] sm:$0xf]
        %v5635 = vld [vmem:[%s1548 + $0x40] sm:$0xf]
        %v5636 = vld [vmem:[%s1548 + $0x44] sm:$0xf]
        %v5637 = vld [vmem:[%s1548 + $0x48] sm:$0xf]
        %v5638 = vld [vmem:[%s1548 + $0x4c] sm:$0xf]
        %v5639 = vld [vmem:[%s1548 + $0x50] sm:$0xf]
        %v5640 = vld [vmem:[%s1548 + $0x54] sm:$0xf]
        %v5641 = vld [vmem:[%s1548 + $0x58] sm:$0xf]
        %v5642 = vld [vmem:[%s1548 + $0x5c] sm:$0xf]
        %v5643 = vld [vmem:[%s1548 + $0x60] sm:$0xf]
        %v5644 = vld [vmem:[%s1548 + $0x64] sm:$0xf]
        %v5645 = vld [vmem:[%s1548 + $0x68] sm:$0xf]
        %v5646 = vld [vmem:[%s1548 + $0x6c] sm:$0xf]
        %v5647 = vld [vmem:[%s1548 + $0x70] sm:$0xf]
        %v5648 = vld [vmem:[%s1548 + $0x74] sm:$0xf]
        %v5649 = vld [vmem:[%s1548 + $0x78] sm:$0xf]
        %v5650 = vld [vmem:[%s1548 + $0x7c] sm:$0xf]
        %v5651 = vpack.c.bf16 %v5603, %v5603
        %v5652 = vpack.c.bf16 %v5616, %v5616
        %v5685 = vunpack.c.l.b16 %v5619
        %v5686 = vunpack.c.l.b16 %v5620
        %v5687 = vunpack.c.l.b16 %v5621
        %v5688 = vunpack.c.l.b16 %v5622
        %v5689 = vunpack.c.l.b16 %v5623
        %v5690 = vunpack.c.l.b16 %v5624
        %v5691 = vunpack.c.l.b16 %v5625
        %v5692 = vunpack.c.l.b16 %v5626
        %v5693 = vunpack.c.l.b16 %v5627
        %v5694 = vunpack.c.l.b16 %v5628
        %v5695 = vunpack.c.l.b16 %v5629
        %v5696 = vunpack.c.l.b16 %v5630
        %v5697 = vunpack.c.l.b16 %v5631
        %v5698 = vunpack.c.l.b16 %v5632
        %v5699 = vunpack.c.l.b16 %v5633
        %v5700 = vunpack.c.l.b16 %v5634
        %v5701 = vunpack.c.l.b16 %v5635
        %v5702 = vunpack.c.l.b16 %v5636
        %v5703 = vunpack.c.l.b16 %v5637
        %v5704 = vunpack.c.l.b16 %v5638
        %v5705 = vunpack.c.l.b16 %v5639
        %v5706 = vunpack.c.l.b16 %v5640
        %v5707 = vunpack.c.l.b16 %v5641
        %v5708 = vunpack.c.l.b16 %v5642
        %v5709 = vunpack.c.l.b16 %v5643
        %v5710 = vunpack.c.l.b16 %v5644
        %v5711 = vunpack.c.l.b16 %v5645
        %v5712 = vunpack.c.l.b16 %v5646
        %v5713 = vunpack.c.l.b16 %v5647
        %v5714 = vunpack.c.l.b16 %v5648
        %v5715 = vunpack.c.l.b16 %v5649
        %v5716 = vunpack.c.l.b16 %v5650
        %v5717 = vpack.c.b16 %v5686, %v5685
        %v5718 = vpack.c.b16 %v5688, %v5687
        %v5719 = vpack.c.b16 %v5690, %v5689
        %v5720 = vpack.c.b16 %v5692, %v5691
        %v5721 = vpack.c.b16 %v5694, %v5693
        %v5722 = vpack.c.b16 %v5696, %v5695
        %v5723 = vpack.c.b16 %v5698, %v5697
        %v5724 = vpack.c.b16 %v5700, %v5699
        %v5725 = vpack.c.b16 %v5702, %v5701
        %v5726 = vpack.c.b16 %v5704, %v5703
        %v5727 = vpack.c.b16 %v5706, %v5705
        %v5728 = vpack.c.b16 %v5708, %v5707
        %v5729 = vpack.c.b16 %v5710, %v5709
        %v5730 = vpack.c.b16 %v5712, %v5711
        %v5731 = vpack.c.b16 %v5714, %v5713
        %v5732 = vpack.c.b16 %v5716, %v5715
        %5749 = vmatpush.bf16.msra.mxu0 %v5724
        %5750 = vmatpush.bf16.msra.mxu0 %v5723
        %5751 = vmatpush.bf16.msra.mxu0 %v5722
        %5752 = vmatpush.bf16.msra.mxu0 %v5721
        %5753 = vmatpush.bf16.msra.mxu0 %v5720
        %5754 = vmatpush.bf16.msra.mxu0 %v5719
        %5755 = vmatpush.bf16.msra.mxu0 %v5718
        %5756 = vmatpush.bf16.msra.mxu0 %v5717
        %5757 = vmatmul.bf16.gmra.mxu0 %v5651
        %v5758 = vpop.f32.mrf.mxu0
        %v5759 = vadd.f32 0.0, %v5758
        %v5760 = vpop.f32.mrf.mxu0
        %5761 = vdwg.mxu0
        %5762 = vmatpush.bf16.msra.mxu0 %v5732
        %5763 = vmatpush.bf16.msra.mxu0 %v5731
        %5764 = vmatpush.bf16.msra.mxu0 %v5730
        %5765 = vmatpush.bf16.msra.mxu0 %v5729
        %5766 = vmatpush.bf16.msra.mxu0 %v5728
        %5767 = vmatpush.bf16.msra.mxu0 %v5727
        %5768 = vmatpush.bf16.msra.mxu0 %v5726
        %5769 = vmatpush.bf16.msra.mxu0 %v5725
        %5770 = vmatmul.bf16.gmra.mxu0 %v5652
        %v5771 = vpop.f32.mrf.mxu0
        %v5772 = vadd.f32 %v5759, %v5771
        %v5773 = vpop.f32.mrf.mxu0
        %5774 = vdwg.mxu0
        %v5807 = vunpack.c.l.b16 %v5555
        %v5808 = vunpack.c.l.b16 %v5556
        %v5809 = vunpack.c.l.b16 %v5557
        %v5810 = vunpack.c.l.b16 %v5558
        %v5811 = vunpack.c.l.b16 %v5559
        %v5812 = vunpack.c.l.b16 %v5560
        %v5813 = vunpack.c.l.b16 %v5561
        %v5814 = vunpack.c.l.b16 %v5562
        %v5815 = vunpack.c.l.b16 %v5563
        %v5816 = vunpack.c.l.b16 %v5564
        %v5817 = vunpack.c.l.b16 %v5565
        %v5818 = vunpack.c.l.b16 %v5566
        %v5819 = vunpack.c.l.b16 %v5567
        %v5820 = vunpack.c.l.b16 %v5568
        %v5821 = vunpack.c.l.b16 %v5569
        %v5822 = vunpack.c.l.b16 %v5570
        %v5823 = vunpack.c.l.b16 %v5571
        %v5824 = vunpack.c.l.b16 %v5572
        %v5825 = vunpack.c.l.b16 %v5573
        %v5826 = vunpack.c.l.b16 %v5574
        %v5827 = vunpack.c.l.b16 %v5575
        %v5828 = vunpack.c.l.b16 %v5576
        %v5829 = vunpack.c.l.b16 %v5577
        %v5830 = vunpack.c.l.b16 %v5578
        %v5831 = vunpack.c.l.b16 %v5579
        %v5832 = vunpack.c.l.b16 %v5580
        %v5833 = vunpack.c.l.b16 %v5581
        %v5834 = vunpack.c.l.b16 %v5582
        %v5835 = vunpack.c.l.b16 %v5583
        %v5836 = vunpack.c.l.b16 %v5584
        %v5837 = vunpack.c.l.b16 %v5585
        %v5838 = vunpack.c.l.b16 %v5586
        %v5839 = vpack.c.b16 %v5808, %v5807
        %v5840 = vpack.c.b16 %v5810, %v5809
        %v5841 = vpack.c.b16 %v5812, %v5811
        %v5842 = vpack.c.b16 %v5814, %v5813
        %v5843 = vpack.c.b16 %v5816, %v5815
        %v5844 = vpack.c.b16 %v5818, %v5817
        %v5845 = vpack.c.b16 %v5820, %v5819
        %v5846 = vpack.c.b16 %v5822, %v5821
        %v5847 = vpack.c.b16 %v5824, %v5823
        %v5848 = vpack.c.b16 %v5826, %v5825
        %v5849 = vpack.c.b16 %v5828, %v5827
        %v5850 = vpack.c.b16 %v5830, %v5829
        %v5851 = vpack.c.b16 %v5832, %v5831
        %v5852 = vpack.c.b16 %v5834, %v5833
        %v5853 = vpack.c.b16 %v5836, %v5835
        %v5854 = vpack.c.b16 %v5838, %v5837
        %5871 = vmatpush.bf16.msra.mxu0 %v5846
        %5872 = vmatpush.bf16.msra.mxu0 %v5845
        %5873 = vmatpush.bf16.msra.mxu0 %v5844
        %5874 = vmatpush.bf16.msra.mxu0 %v5843
        %5875 = vmatpush.bf16.msra.mxu0 %v5842
        %5876 = vmatpush.bf16.msra.mxu0 %v5841
        %5877 = vmatpush.bf16.msra.mxu0 %v5840
        %5878 = vmatpush.bf16.msra.mxu0 %v5839
        %5879 = vmatmul.bf16.gmra.mxu0 %v5587
        %v5880 = vpop.f32.mrf.mxu0
        %v5881 = vadd.f32 %v5772, %v5880
        %v5882 = vpop.f32.mrf.mxu0
        %5883 = vdwg.mxu0
        %5884 = vmatpush.bf16.msra.mxu0 %v5854
        %5885 = vmatpush.bf16.msra.mxu0 %v5853
        %5886 = vmatpush.bf16.msra.mxu0 %v5852
        %5887 = vmatpush.bf16.msra.mxu0 %v5851
        %5888 = vmatpush.bf16.msra.mxu0 %v5850
        %5889 = vmatpush.bf16.msra.mxu0 %v5849
        %5890 = vmatpush.bf16.msra.mxu0 %v5848
        %5891 = vmatpush.bf16.msra.mxu0 %v5847
        %5892 = vmatmul.bf16.gmra.mxu0 %v5588
        %v5893 = vpop.f32.mrf.mxu0
        %v5894 = vadd.f32 %v5881, %v5893
        %v5895 = vpop.f32.mrf.mxu0
        %5896 = vdwg.mxu0
        %v5897 = vld [vmem:[%s1827] sm:$0xf]
        %v5899 = vsel %vm1453, %v5897, 0
        %5901 = vmatpush.bf16.msra.mxu0 0
        %5902 = vmatpush.bf16.msra.mxu0 0
        %5903 = vmatpush.bf16.msra.mxu0 0
        %5904 = vmatpush.bf16.msra.mxu0 0
        %5905 = vmatpush.bf16.msra.mxu0 0
        %5906 = vmatpush.bf16.msra.mxu0 0
        %5907 = vmatpush.bf16.msra.mxu0 0
        %5908 = vmatpush.bf16.msra.mxu0 %v5524
        %5909 = vmatmul.bf16.gmra.mxu0 %v5899
        %v5910 = vpop.f32.mrf.mxu0
        %v5911 = vadd.f32 0.0, %v5910
        %v5912 = vpop.f32.mrf.mxu0
        %5913 = vdwg.mxu0
        %5914 = vmatpush.bf16.msra.mxu0 0
        %5915 = vmatpush.bf16.msra.mxu0 0
        %5916 = vmatpush.bf16.msra.mxu0 0
        %5917 = vmatpush.bf16.msra.mxu0 0
        %5918 = vmatpush.bf16.msra.mxu0 0
        %5919 = vmatpush.bf16.msra.mxu0 0
        %5920 = vmatpush.bf16.msra.mxu0 0
        %5921 = vmatpush.bf16.msra.mxu0 %v5525
        %5922 = vmatmul.bf16.gmra.mxu0 %v5899
        %v5923 = vpop.f32.mrf.mxu0
        %v5924 = vadd.f32 0.0, %v5923
        %v5925 = vpop.f32.mrf.mxu0
        %5926 = vdwg.mxu0
        %v5927 = vld [vmem:[%s1858] sm:$0xf]
        %v5928 = vld [vmem:[%s1858 + $0x4] sm:$0xf]
        %v5929 = vld [vmem:[%s1858 + $0x8] sm:$0xf]
        %v5930 = vld [vmem:[%s1858 + $0xc] sm:$0xf]
        %v5931 = vld [vmem:[%s1858 + $0x10] sm:$0xf]
        %v5932 = vld [vmem:[%s1858 + $0x14] sm:$0xf]
        %v5933 = vld [vmem:[%s1858 + $0x18] sm:$0xf]
        %v5934 = vld [vmem:[%s1858 + $0x1c] sm:$0xf]
        %v5935 = vld [vmem:[%s1858 + $0x20] sm:$0xf]
        %v5936 = vld [vmem:[%s1858 + $0x24] sm:$0xf]
        %v5937 = vld [vmem:[%s1858 + $0x28] sm:$0xf]
        %v5938 = vld [vmem:[%s1858 + $0x2c] sm:$0xf]
        %v5939 = vld [vmem:[%s1858 + $0x30] sm:$0xf]
        %v5940 = vld [vmem:[%s1858 + $0x34] sm:$0xf]
        %v5941 = vld [vmem:[%s1858 + $0x38] sm:$0xf]
        %v5942 = vld [vmem:[%s1858 + $0x3c] sm:$0xf]
        %v5943 = vld [vmem:[%s1858 + $0x40] sm:$0xf]
        %v5944 = vld [vmem:[%s1858 + $0x44] sm:$0xf]
        %v5945 = vld [vmem:[%s1858 + $0x48] sm:$0xf]
        %v5946 = vld [vmem:[%s1858 + $0x4c] sm:$0xf]
        %v5947 = vld [vmem:[%s1858 + $0x50] sm:$0xf]
        %v5948 = vld [vmem:[%s1858 + $0x54] sm:$0xf]
        %v5949 = vld [vmem:[%s1858 + $0x58] sm:$0xf]
        %v5950 = vld [vmem:[%s1858 + $0x5c] sm:$0xf]
        %v5951 = vld [vmem:[%s1858 + $0x60] sm:$0xf]
        %v5952 = vld [vmem:[%s1858 + $0x64] sm:$0xf]
        %v5953 = vld [vmem:[%s1858 + $0x68] sm:$0xf]
        %v5954 = vld [vmem:[%s1858 + $0x6c] sm:$0xf]
        %v5955 = vld [vmem:[%s1858 + $0x70] sm:$0xf]
        %v5956 = vld [vmem:[%s1858 + $0x74] sm:$0xf]
        %v5957 = vld [vmem:[%s1858 + $0x78] sm:$0xf]
        %v5958 = vld [vmem:[%s1858 + $0x7c] sm:$0xf]
        %v5959 = vpack.c.bf16 %v5911, %v5911
        %v5960 = vpack.c.bf16 %v5924, %v5924
        %v5993 = vunpack.c.l.b16 %v5927
        %v5994 = vunpack.c.l.b16 %v5928
        %v5995 = vunpack.c.l.b16 %v5929
        %v5996 = vunpack.c.l.b16 %v5930
        %v5997 = vunpack.c.l.b16 %v5931
        %v5998 = vunpack.c.l.b16 %v5932
        %v5999 = vunpack.c.l.b16 %v5933
        %v6000 = vunpack.c.l.b16 %v5934
        %v6001 = vunpack.c.l.b16 %v5935
        %v6002 = vunpack.c.l.b16 %v5936
        %v6003 = vunpack.c.l.b16 %v5937
        %v6004 = vunpack.c.l.b16 %v5938
        %v6005 = vunpack.c.l.b16 %v5939
        %v6006 = vunpack.c.l.b16 %v5940
        %v6007 = vunpack.c.l.b16 %v5941
        %v6008 = vunpack.c.l.b16 %v5942
        %v6009 = vunpack.c.l.b16 %v5943
        %v6010 = vunpack.c.l.b16 %v5944
        %v6011 = vunpack.c.l.b16 %v5945
        %v6012 = vunpack.c.l.b16 %v5946
        %v6013 = vunpack.c.l.b16 %v5947
        %v6014 = vunpack.c.l.b16 %v5948
        %v6015 = vunpack.c.l.b16 %v5949
        %v6016 = vunpack.c.l.b16 %v5950
        %v6017 = vunpack.c.l.b16 %v5951
        %v6018 = vunpack.c.l.b16 %v5952
        %v6019 = vunpack.c.l.b16 %v5953
        %v6020 = vunpack.c.l.b16 %v5954
        %v6021 = vunpack.c.l.b16 %v5955
        %v6022 = vunpack.c.l.b16 %v5956
        %v6023 = vunpack.c.l.b16 %v5957
        %v6024 = vunpack.c.l.b16 %v5958
        %v6025 = vpack.c.b16 %v5994, %v5993
        %v6026 = vpack.c.b16 %v5996, %v5995
        %v6027 = vpack.c.b16 %v5998, %v5997
        %v6028 = vpack.c.b16 %v6000, %v5999
        %v6029 = vpack.c.b16 %v6002, %v6001
        %v6030 = vpack.c.b16 %v6004, %v6003
        %v6031 = vpack.c.b16 %v6006, %v6005
        %v6032 = vpack.c.b16 %v6008, %v6007
        %v6033 = vpack.c.b16 %v6010, %v6009
        %v6034 = vpack.c.b16 %v6012, %v6011
        %v6035 = vpack.c.b16 %v6014, %v6013
        %v6036 = vpack.c.b16 %v6016, %v6015
        %v6037 = vpack.c.b16 %v6018, %v6017
        %v6038 = vpack.c.b16 %v6020, %v6019
        %v6039 = vpack.c.b16 %v6022, %v6021
        %v6040 = vpack.c.b16 %v6024, %v6023
        %6057 = vmatpush.bf16.msra.mxu0 %v6032
        %6058 = vmatpush.bf16.msra.mxu0 %v6031
        %6059 = vmatpush.bf16.msra.mxu0 %v6030
        %6060 = vmatpush.bf16.msra.mxu0 %v6029
        %6061 = vmatpush.bf16.msra.mxu0 %v6028
        %6062 = vmatpush.bf16.msra.mxu0 %v6027
        %6063 = vmatpush.bf16.msra.mxu0 %v6026
        %6064 = vmatpush.bf16.msra.mxu0 %v6025
        %6065 = vmatmul.bf16.gmra.mxu0 %v5959
        %v6066 = vpop.f32.mrf.mxu0
        %v6067 = vadd.f32 0.0, %v6066
        %v6068 = vpop.f32.mrf.mxu0
        %6069 = vdwg.mxu0
        %6070 = vmatpush.bf16.msra.mxu0 %v6040
        %6071 = vmatpush.bf16.msra.mxu0 %v6039
        %6072 = vmatpush.bf16.msra.mxu0 %v6038
        %6073 = vmatpush.bf16.msra.mxu0 %v6037
        %6074 = vmatpush.bf16.msra.mxu0 %v6036
        %6075 = vmatpush.bf16.msra.mxu0 %v6035
        %6076 = vmatpush.bf16.msra.mxu0 %v6034
        %6077 = vmatpush.bf16.msra.mxu0 %v6033
        %6078 = vmatmul.bf16.gmra.mxu0 %v5960
        %v6079 = vpop.f32.mrf.mxu0
        %v6080 = vadd.f32 %v6067, %v6079
        %v6081 = vpop.f32.mrf.mxu0
        %6082 = vdwg.mxu0
        %v6083 = vadd.f32 %v5894, %v6080
        %6085 = vrot.lane.b32.xlu0 %v6083, 64
        %v6086 = vpop.permute.xlu0 %6085
        %v6088 = vmax.f32 %v6083, %v6086
        %v6089 = vld [vmem:[%s2021] sm:$0xf]
        %v6091 = vsel %vm1453, %v6089, 0
        %6093 = vmatpush.bf16.msra.mxu0 0
        %6094 = vmatpush.bf16.msra.mxu0 0
        %6095 = vmatpush.bf16.msra.mxu0 0
        %6096 = vmatpush.bf16.msra.mxu0 0
        %6097 = vmatpush.bf16.msra.mxu0 0
        %6098 = vmatpush.bf16.msra.mxu0 0
        %6099 = vmatpush.bf16.msra.mxu0 0
        %6100 = vmatpush.bf16.msra.mxu0 %v5524
        %6101 = vmatmul.bf16.gmra.mxu0 %v6091
        %v6102 = vpop.f32.mrf.mxu0
        %v6103 = vadd.f32 0.0, %v6102
        %v6104 = vpop.f32.mrf.mxu0
        %6105 = vdwg.mxu0
        %6106 = vmatpush.bf16.msra.mxu0 0
        %6107 = vmatpush.bf16.msra.mxu0 0
        %6108 = vmatpush.bf16.msra.mxu0 0
        %6109 = vmatpush.bf16.msra.mxu0 0
        %6110 = vmatpush.bf16.msra.mxu0 0
        %6111 = vmatpush.bf16.msra.mxu0 0
        %6112 = vmatpush.bf16.msra.mxu0 0
        %6113 = vmatpush.bf16.msra.mxu0 %v5525
        %6114 = vmatmul.bf16.gmra.mxu0 %v6091
        %v6115 = vpop.f32.mrf.mxu0
        %v6116 = vadd.f32 0.0, %v6115
        %v6117 = vpop.f32.mrf.mxu0
        %6118 = vdwg.mxu0
        %v6119 = vpack.c.bf16 %v6103, %v6103
        %v6120 = vpack.c.bf16 %v6116, %v6116
        %v6121 = vld [vmem:[%s2054] sm:$0xf]
        %v6123 = vsel %vm1453, %v6121, 0
        %6125 = vmatpush.bf16.msra.mxu0 0
        %6126 = vmatpush.bf16.msra.mxu0 0
        %6127 = vmatpush.bf16.msra.mxu0 0
        %6128 = vmatpush.bf16.msra.mxu0 0
        %6129 = vmatpush.bf16.msra.mxu0 0
        %6130 = vmatpush.bf16.msra.mxu0 0
        %6131 = vmatpush.bf16.msra.mxu0 0
        %6132 = vmatpush.bf16.msra.mxu0 %v5524
        %6133 = vmatmul.bf16.gmra.mxu0 %v6123
        %v6134 = vpop.f32.mrf.mxu0
        %v6135 = vadd.f32 0.0, %v6134
        %v6136 = vpop.f32.mrf.mxu0
        %6137 = vdwg.mxu0
        %6138 = vmatpush.bf16.msra.mxu0 0
        %6139 = vmatpush.bf16.msra.mxu0 0
        %6140 = vmatpush.bf16.msra.mxu0 0
        %6141 = vmatpush.bf16.msra.mxu0 0
        %6142 = vmatpush.bf16.msra.mxu0 0
        %6143 = vmatpush.bf16.msra.mxu0 0
        %6144 = vmatpush.bf16.msra.mxu0 0
        %6145 = vmatpush.bf16.msra.mxu0 %v5525
        %6146 = vmatmul.bf16.gmra.mxu0 %v6123
        %v6147 = vpop.f32.mrf.mxu0
        %v6148 = vadd.f32 0.0, %v6147
        %v6149 = vpop.f32.mrf.mxu0
        %6150 = vdwg.mxu0
        %v6151 = vpack.c.bf16 %v6135, %v6135
        %v6152 = vpack.c.bf16 %v6148, %v6148
        %6153 = vmatpush.bf16.msra.mxu0 %v5724
        %6154 = vmatpush.bf16.msra.mxu0 %v5723
        %6155 = vmatpush.bf16.msra.mxu0 %v5722
        %6156 = vmatpush.bf16.msra.mxu0 %v5721
        %6157 = vmatpush.bf16.msra.mxu0 %v5720
        %6158 = vmatpush.bf16.msra.mxu0 %v5719
        %6159 = vmatpush.bf16.msra.mxu0 %v5718
        %6160 = vmatpush.bf16.msra.mxu0 %v5717
        %6161 = vmatmul.bf16.gmra.mxu0 %v6151
        %v6162 = vpop.f32.mrf.mxu0
        %v6163 = vadd.f32 0.0, %v6162
        %v6164 = vpop.f32.mrf.mxu0
        %6165 = vdwg.mxu0
        %6166 = vmatpush.bf16.msra.mxu0 %v5732
        %6167 = vmatpush.bf16.msra.mxu0 %v5731
        %6168 = vmatpush.bf16.msra.mxu0 %v5730
        %6169 = vmatpush.bf16.msra.mxu0 %v5729
        %6170 = vmatpush.bf16.msra.mxu0 %v5728
        %6171 = vmatpush.bf16.msra.mxu0 %v5727
        %6172 = vmatpush.bf16.msra.mxu0 %v5726
        %6173 = vmatpush.bf16.msra.mxu0 %v5725
        %6174 = vmatmul.bf16.gmra.mxu0 %v6152
        %v6175 = vpop.f32.mrf.mxu0
        %v6176 = vadd.f32 %v6163, %v6175
        %v6177 = vpop.f32.mrf.mxu0
        %6178 = vdwg.mxu0
        %6179 = vmatpush.bf16.msra.mxu0 %v5846
        %6180 = vmatpush.bf16.msra.mxu0 %v5845
        %6181 = vmatpush.bf16.msra.mxu0 %v5844
        %6182 = vmatpush.bf16.msra.mxu0 %v5843
        %6183 = vmatpush.bf16.msra.mxu0 %v5842
        %6184 = vmatpush.bf16.msra.mxu0 %v5841
        %6185 = vmatpush.bf16.msra.mxu0 %v5840
        %6186 = vmatpush.bf16.msra.mxu0 %v5839
        %6187 = vmatmul.bf16.gmra.mxu0 %v6119
        %v6188 = vpop.f32.mrf.mxu0
        %v6189 = vadd.f32 %v6176, %v6188
        %v6190 = vpop.f32.mrf.mxu0
        %6191 = vdwg.mxu0
        %6192 = vmatpush.bf16.msra.mxu0 %v5854
        %6193 = vmatpush.bf16.msra.mxu0 %v5853
        %6194 = vmatpush.bf16.msra.mxu0 %v5852
        %6195 = vmatpush.bf16.msra.mxu0 %v5851
        %6196 = vmatpush.bf16.msra.mxu0 %v5850
        %6197 = vmatpush.bf16.msra.mxu0 %v5849
        %6198 = vmatpush.bf16.msra.mxu0 %v5848
        %6199 = vmatpush.bf16.msra.mxu0 %v5847
        %6200 = vmatmul.bf16.gmra.mxu0 %v6120
        %v6201 = vpop.f32.mrf.mxu0
        %v6202 = vadd.f32 %v6189, %v6201
        %v6203 = vpop.f32.mrf.mxu0
        %6204 = vdwg.mxu0
        %v6205 = vld [vmem:[%s2139] sm:$0xf]
        %v6207 = vsel %vm1453, %v6205, 0
        %6209 = vmatpush.bf16.msra.mxu0 0
        %6210 = vmatpush.bf16.msra.mxu0 0
        %6211 = vmatpush.bf16.msra.mxu0 0
        %6212 = vmatpush.bf16.msra.mxu0 0
        %6213 = vmatpush.bf16.msra.mxu0 0
        %6214 = vmatpush.bf16.msra.mxu0 0
        %6215 = vmatpush.bf16.msra.mxu0 0
        %6216 = vmatpush.bf16.msra.mxu0 %v5524
        %6217 = vmatmul.bf16.gmra.mxu0 %v6207
        %v6218 = vpop.f32.mrf.mxu0
        %v6219 = vadd.f32 0.0, %v6218
        %v6220 = vpop.f32.mrf.mxu0
        %6221 = vdwg.mxu0
        %6222 = vmatpush.bf16.msra.mxu0 0
        %6223 = vmatpush.bf16.msra.mxu0 0
        %6224 = vmatpush.bf16.msra.mxu0 0
        %6225 = vmatpush.bf16.msra.mxu0 0
        %6226 = vmatpush.bf16.msra.mxu0 0
        %6227 = vmatpush.bf16.msra.mxu0 0
        %6228 = vmatpush.bf16.msra.mxu0 0
        %6229 = vmatpush.bf16.msra.mxu0 %v5525
        %6230 = vmatmul.bf16.gmra.mxu0 %v6207
        %v6231 = vpop.f32.mrf.mxu0
        %v6232 = vadd.f32 0.0, %v6231
        %v6233 = vpop.f32.mrf.mxu0
        %6234 = vdwg.mxu0
        %v6235 = vpack.c.bf16 %v6219, %v6219
        %v6236 = vpack.c.bf16 %v6232, %v6232
        %6237 = vmatpush.bf16.msra.mxu0 %v6032
        %6238 = vmatpush.bf16.msra.mxu0 %v6031
        %6239 = vmatpush.bf16.msra.mxu0 %v6030
        %6240 = vmatpush.bf16.msra.mxu0 %v6029
        %6241 = vmatpush.bf16.msra.mxu0 %v6028
        %6242 = vmatpush.bf16.msra.mxu0 %v6027
        %6243 = vmatpush.bf16.msra.mxu0 %v6026
        %6244 = vmatpush.bf16.msra.mxu0 %v6025
        %6245 = vmatmul.bf16.gmra.mxu0 %v6235
        %v6246 = vpop.f32.mrf.mxu0
        %v6247 = vadd.f32 0.0, %v6246
        %v6248 = vpop.f32.mrf.mxu0
        %6249 = vdwg.mxu0
        %6250 = vmatpush.bf16.msra.mxu0 %v6040
        %6251 = vmatpush.bf16.msra.mxu0 %v6039
        %6252 = vmatpush.bf16.msra.mxu0 %v6038
        %6253 = vmatpush.bf16.msra.mxu0 %v6037
        %6254 = vmatpush.bf16.msra.mxu0 %v6036
        %6255 = vmatpush.bf16.msra.mxu0 %v6035
        %6256 = vmatpush.bf16.msra.mxu0 %v6034
        %6257 = vmatpush.bf16.msra.mxu0 %v6033
        %6258 = vmatmul.bf16.gmra.mxu0 %v6236
        %v6259 = vpop.f32.mrf.mxu0
        %v6260 = vadd.f32 %v6247, %v6259
        %v6261 = vpop.f32.mrf.mxu0
        %6262 = vdwg.mxu0
        %v6263 = vadd.f32 %v6202, %v6260
        %6265 = vrot.lane.b32.xlu0 %v6263, 64
        %v6266 = vpop.permute.xlu0 %6265
        %v6268 = vmax.f32 %v6263, %v6266
        %v6269 = vmax.f32 %v6088, %v6268
        %v6271 = vperm.slane %v5522, 0
        %v6273 = vadd.f32 %v6269, %v6271
        %v6274 = vtanh.pop %v6273
        %v6275 = vld [vmem:[%s7] sm:$0xff]
        %v6276 = vld [vmem:[%s7 + $0x8] sm:$0xff]
        %v6277 = vld [vmem:[%s7 + $0x10] sm:$0xff]
        %v6278 = vld [vmem:[%s7 + $0x18] sm:$0xff]
        %v6279 = vld [vmem:[%s7 + $0x20] sm:$0xff]
        %v6280 = vld [vmem:[%s7 + $0x28] sm:$0xff]
        %v6281 = vld [vmem:[%s7 + $0x30] sm:$0xff]
        %v6282 = vld [vmem:[%s7 + $0x38] sm:$0xff]
        %v6283 = vpack.c.bf16 %v6274, %v6274
        %v6292 = vunpack.c.l.b16 %v6275
        %v6293 = vunpack.c.h.b16 %v6275
        %v6294 = vunpack.c.l.b16 %v6276
        %v6295 = vunpack.c.h.b16 %v6276
        %v6296 = vunpack.c.l.b16 %v6277
        %v6297 = vunpack.c.h.b16 %v6277
        %v6298 = vunpack.c.l.b16 %v6278
        %v6299 = vunpack.c.h.b16 %v6278
        %v6300 = vunpack.c.l.b16 %v6279
        %v6301 = vunpack.c.h.b16 %v6279
        %v6302 = vunpack.c.l.b16 %v6280
        %v6303 = vunpack.c.h.b16 %v6280
        %v6304 = vunpack.c.l.b16 %v6281
        %v6305 = vunpack.c.h.b16 %v6281
        %v6306 = vunpack.c.l.b16 %v6282
        %v6307 = vunpack.c.h.b16 %v6282
        %v6308 = vpack.c.b16 %v6294, %v6292
        %v6309 = vpack.c.b16 %v6295, %v6293
        %v6310 = vpack.c.b16 %v6298, %v6296
        %v6311 = vpack.c.b16 %v6299, %v6297
        %v6312 = vpack.c.b16 %v6302, %v6300
        %v6313 = vpack.c.b16 %v6303, %v6301
        %v6314 = vpack.c.b16 %v6306, %v6304
        %v6315 = vpack.c.b16 %v6307, %v6305
        %v6325 = vsel %vm2259, %v6283, 0
        %6327 = vmatpush.bf16.msra.mxu0 0
        %6328 = vmatpush.bf16.msra.mxu0 0
        %6329 = vmatpush.bf16.msra.mxu0 0
        %6330 = vmatpush.bf16.msra.mxu0 0
        %6331 = vmatpush.bf16.msra.mxu0 %v6314
        %6332 = vmatpush.bf16.msra.mxu0 %v6312
        %6333 = vmatpush.bf16.msra.mxu0 %v6310
        %6334 = vmatpush.bf16.msra.mxu0 %v6308
        %6335 = vmatmul.bf16.gmra.mxu0 %v6325
        %v6336 = vpop.f32.mrf.mxu0
        %v6337 = vadd.f32 0.0, %v6336
        %v6338 = vpop.f32.mrf.mxu0
        %6339 = vdwg.mxu0
        %6340 = vmatpush.bf16.msra.mxu0 0
        %6341 = vmatpush.bf16.msra.mxu0 0
        %6342 = vmatpush.bf16.msra.mxu0 0
        %6343 = vmatpush.bf16.msra.mxu0 0
        %6344 = vmatpush.bf16.msra.mxu0 %v6315
        %6345 = vmatpush.bf16.msra.mxu0 %v6313
        %6346 = vmatpush.bf16.msra.mxu0 %v6311
        %6347 = vmatpush.bf16.msra.mxu0 %v6309
        %6348 = vmatmul.bf16.gmra.mxu0 %v6325
        %v6349 = vpop.f32.mrf.mxu0
        %v6350 = vadd.f32 0.0, %v6349
        %v6351 = vpop.f32.mrf.mxu0
        %6352 = vdwg.mxu0
        %v6353 = vld [vmem:[%s8] sm:$0xff]
        %v6354 = vld [vmem:[%s8 + $0x8] sm:$0xff]
        %v6355 = vmul.f32 %v6337, %v6353
        %v6356 = vmul.f32 %v6350, %v6354
        %v6357 = vld [vmem:[%s9] sm:$0xf]
        %v6358 = vld [vmem:[%s9 + $0x4] sm:$0xf]
        %v6359 = vld [vmem:[%s9 + $0x8] sm:$0xf]
        %v6360 = vld [vmem:[%s9 + $0xc] sm:$0xf]
        %v6361 = vld [vmem:[%s9 + $0x10] sm:$0xf]
        %v6362 = vld [vmem:[%s9 + $0x14] sm:$0xf]
        %v6363 = vld [vmem:[%s9 + $0x18] sm:$0xf]
        %v6364 = vld [vmem:[%s9 + $0x1c] sm:$0xf]
        %v6365 = vld [vmem:[%s9 + $0x20] sm:$0xf]
        %v6366 = vld [vmem:[%s9 + $0x24] sm:$0xf]
        %v6367 = vld [vmem:[%s9 + $0x28] sm:$0xf]
        %v6368 = vld [vmem:[%s9 + $0x2c] sm:$0xf]
        %v6369 = vld [vmem:[%s9 + $0x30] sm:$0xf]
        %v6370 = vld [vmem:[%s9 + $0x34] sm:$0xf]
        %v6371 = vld [vmem:[%s9 + $0x38] sm:$0xf]
        %v6372 = vld [vmem:[%s9 + $0x3c] sm:$0xf]
        %v6373 = vld [vmem:[%s9 + $0x40] sm:$0xf]
        %v6374 = vld [vmem:[%s9 + $0x44] sm:$0xf]
        %v6375 = vld [vmem:[%s9 + $0x48] sm:$0xf]
        %v6376 = vld [vmem:[%s9 + $0x4c] sm:$0xf]
        %v6377 = vld [vmem:[%s9 + $0x50] sm:$0xf]
        %v6378 = vld [vmem:[%s9 + $0x54] sm:$0xf]
        %v6379 = vld [vmem:[%s9 + $0x58] sm:$0xf]
        %v6380 = vld [vmem:[%s9 + $0x5c] sm:$0xf]
        %v6381 = vld [vmem:[%s9 + $0x60] sm:$0xf]
        %v6382 = vld [vmem:[%s9 + $0x64] sm:$0xf]
        %v6383 = vld [vmem:[%s9 + $0x68] sm:$0xf]
        %v6384 = vld [vmem:[%s9 + $0x6c] sm:$0xf]
        %v6385 = vld [vmem:[%s9 + $0x70] sm:$0xf]
        %v6386 = vld [vmem:[%s9 + $0x74] sm:$0xf]
        %v6387 = vld [vmem:[%s9 + $0x78] sm:$0xf]
        %v6388 = vld [vmem:[%s9 + $0x7c] sm:$0xf]
        %v6389 = vpack.c.bf16 %v6355, %v6355
        %v6390 = vpack.c.bf16 %v6356, %v6356
        %v6423 = vunpack.c.l.b16 %v6357
        %v6424 = vunpack.c.l.b16 %v6358
        %v6425 = vunpack.c.l.b16 %v6359
        %v6426 = vunpack.c.l.b16 %v6360
        %v6427 = vunpack.c.l.b16 %v6361
        %v6428 = vunpack.c.l.b16 %v6362
        %v6429 = vunpack.c.l.b16 %v6363
        %v6430 = vunpack.c.l.b16 %v6364
        %v6431 = vunpack.c.l.b16 %v6365
        %v6432 = vunpack.c.l.b16 %v6366
        %v6433 = vunpack.c.l.b16 %v6367
        %v6434 = vunpack.c.l.b16 %v6368
        %v6435 = vunpack.c.l.b16 %v6369
        %v6436 = vunpack.c.l.b16 %v6370
        %v6437 = vunpack.c.l.b16 %v6371
        %v6438 = vunpack.c.l.b16 %v6372
        %v6439 = vunpack.c.l.b16 %v6373
        %v6440 = vunpack.c.l.b16 %v6374
        %v6441 = vunpack.c.l.b16 %v6375
        %v6442 = vunpack.c.l.b16 %v6376
        %v6443 = vunpack.c.l.b16 %v6377
        %v6444 = vunpack.c.l.b16 %v6378
        %v6445 = vunpack.c.l.b16 %v6379
        %v6446 = vunpack.c.l.b16 %v6380
        %v6447 = vunpack.c.l.b16 %v6381
        %v6448 = vunpack.c.l.b16 %v6382
        %v6449 = vunpack.c.l.b16 %v6383
        %v6450 = vunpack.c.l.b16 %v6384
        %v6451 = vunpack.c.l.b16 %v6385
        %v6452 = vunpack.c.l.b16 %v6386
        %v6453 = vunpack.c.l.b16 %v6387
        %v6454 = vunpack.c.l.b16 %v6388
        %v6455 = vpack.c.b16 %v6424, %v6423
        %v6456 = vpack.c.b16 %v6426, %v6425
        %v6457 = vpack.c.b16 %v6428, %v6427
        %v6458 = vpack.c.b16 %v6430, %v6429
        %v6459 = vpack.c.b16 %v6432, %v6431
        %v6460 = vpack.c.b16 %v6434, %v6433
        %v6461 = vpack.c.b16 %v6436, %v6435
        %v6462 = vpack.c.b16 %v6438, %v6437
        %v6463 = vpack.c.b16 %v6440, %v6439
        %v6464 = vpack.c.b16 %v6442, %v6441
        %v6465 = vpack.c.b16 %v6444, %v6443
        %v6466 = vpack.c.b16 %v6446, %v6445
        %v6467 = vpack.c.b16 %v6448, %v6447
        %v6468 = vpack.c.b16 %v6450, %v6449
        %v6469 = vpack.c.b16 %v6452, %v6451
        %v6470 = vpack.c.b16 %v6454, %v6453
        %6487 = vmatpush.bf16.msra.mxu0 %v6462
        %6488 = vmatpush.bf16.msra.mxu0 %v6461
        %6489 = vmatpush.bf16.msra.mxu0 %v6460
        %6490 = vmatpush.bf16.msra.mxu0 %v6459
        %6491 = vmatpush.bf16.msra.mxu0 %v6458
        %6492 = vmatpush.bf16.msra.mxu0 %v6457
        %6493 = vmatpush.bf16.msra.mxu0 %v6456
        %6494 = vmatpush.bf16.msra.mxu0 %v6455
        %6495 = vmatmul.bf16.gmra.mxu0 %v6389
        %v6496 = vpop.f32.mrf.mxu0
        %v6497 = vadd.f32 0.0, %v6496
        %v6498 = vpop.f32.mrf.mxu0
        %6499 = vdwg.mxu0
        %6500 = vmatpush.bf16.msra.mxu0 %v6470
        %6501 = vmatpush.bf16.msra.mxu0 %v6469
        %6502 = vmatpush.bf16.msra.mxu0 %v6468
        %6503 = vmatpush.bf16.msra.mxu0 %v6467
        %6504 = vmatpush.bf16.msra.mxu0 %v6466
        %6505 = vmatpush.bf16.msra.mxu0 %v6465
        %6506 = vmatpush.bf16.msra.mxu0 %v6464
        %6507 = vmatpush.bf16.msra.mxu0 %v6463
        %6508 = vmatmul.bf16.gmra.mxu0 %v6390
        %v6509 = vpop.f32.mrf.mxu0
        %v6510 = vadd.f32 %v6497, %v6509
        %v6511 = vpop.f32.mrf.mxu0
        %6512 = vdwg.mxu0
        %v6513 = vsel %vm470, %v6510, 0.0
        %v6514 = vrot.slane %v6513, 4
        %v6515 = vadd.f32 %v6513, %v6514
        %v6516 = vrot.slane %v6515, 2
        %v6517 = vadd.f32 %v6515, %v6516
        %v6518 = vrot.slane %v6517, 1
        %v6519 = vadd.f32 %v6517, %v6518
        %v6520 = vld [vmem:[%s10] sm:$0x1]
        %v6521 = vadd.f32 %v6519, %v6520
        %v6522 = vtanh.pop %v6521
        %v6523 = vld [vmem:[%s11] sm:$0xf]
        %v6524 = vld [vmem:[%s11 + $0x4] sm:$0xf]
        %v6525 = vld [vmem:[%s11 + $0x8] sm:$0xf]
        %v6526 = vld [vmem:[%s11 + $0xc] sm:$0xf]
        %v6527 = vpack.c.bf16 %v6522, %v6522
        %v6528 = vld [vmem:[%s12] sm:$0x1]
        %v6533 = vunpack.c.l.b16 %v6523
        %v6534 = vunpack.c.l.b16 %v6524
        %v6535 = vunpack.c.l.b16 %v6525
        %v6536 = vunpack.c.l.b16 %v6526
        %v6537 = vpack.c.b16 %v6534, %v6533
        %v6538 = vpack.c.b16 %v6536, %v6535
        %v6542 = vsel %vm470, %v6527, 0
        %6544 = vmatpush.bf16.msra.mxu0 0
        %6545 = vmatpush.bf16.msra.mxu0 0
        %6546 = vmatpush.bf16.msra.mxu0 0
        %6547 = vmatpush.bf16.msra.mxu0 0
        %6548 = vmatpush.bf16.msra.mxu0 0
        %6549 = vmatpush.bf16.msra.mxu0 0
        %6550 = vmatpush.bf16.msra.mxu0 %v6538
        %6551 = vmatpush.bf16.msra.mxu0 %v6537
        %6552 = vmatmul.bf16.gmra.mxu0 %v6542
        %v6553 = vpop.f32.mrf.mxu0
        %v6554 = vadd.f32 %v6528, %v6553
        %v6555 = vpop.f32.mrf.mxu0
        %6556 = vdwg.mxu0
        %s6557 = scalar_lea.vmem %s436, 2 [#allocation2]
        %6558 = vst.msk [vmem:[%s6557] sm:$0x1] %vm2493, %v6554
        %s6559 = scalar_lea.vmem %s442, 48
        %v6560 = vld [vmem:[%s6559] sm:$0xf]
        %v6561 = vld [vmem:[%s6559 + $0x4] sm:$0xf]
        %v6562 = vld [vmem:[%s6559 + $0x8] sm:$0xf]
        %v6563 = vld [vmem:[%s6559 + $0xc] sm:$0xf]
        %v6564 = vld [vmem:[%s3] sm:$0x3]
        %v6565 = vld [vmem:[%s1] sm:$0xf]
        %v6566 = vld [vmem:[%s1 + $0x4] sm:$0xf]
        %v6569 = vunpack.c.l.b16 %v6565
        %v6570 = vunpack.c.l.b16 %v6566
        %v6571 = vpack.c.b16 %v6570, %v6569
        %v6576 = vunpack.c.l.b16 %v6560
        %v6577 = vunpack.c.l.b16 %v6561
        %v6578 = vunpack.c.l.b16 %v6562
        %v6579 = vunpack.c.l.b16 %v6563
        %v6580 = vpack.c.b16 %v6577, %v6576
        %v6581 = vpack.c.b16 %v6579, %v6578
        %v6585 = vsel %vm470, %v6571, 0
        %6587 = vmatpush.bf16.msra.mxu0 0
        %6588 = vmatpush.bf16.msra.mxu0 0
        %6589 = vmatpush.bf16.msra.mxu0 0
        %6590 = vmatpush.bf16.msra.mxu0 0
        %6591 = vmatpush.bf16.msra.mxu0 0
        %6592 = vmatpush.bf16.msra.mxu0 0
        %6593 = vmatpush.bf16.msra.mxu0 %v6581
        %6594 = vmatpush.bf16.msra.mxu0 %v6580
        %6595 = vmatmul.bf16.gmra.mxu0 %v6585
        %v6596 = vpop.f32.mrf.mxu0
        %v6597 = vadd.f32 0.0, %v6596
        %v6598 = vpop.f32.mrf.mxu0
        %v6599 = vadd.f32 0.0, %v6598
        %6600 = vdwg.mxu0
        %v6601 = vld [vmem:[%s2] sm:$0xff]
        %v6602 = vld [vmem:[%s2 + $0x8] sm:$0xff]
        %v6603 = vld [vmem:[%s2 + $0x10] sm:$0xff]
        %v6604 = vld [vmem:[%s2 + $0x18] sm:$0xff]
        %v6605 = vld [vmem:[%s2 + $0x20] sm:$0xff]
        %v6606 = vld [vmem:[%s2 + $0x28] sm:$0xff]
        %v6607 = vld [vmem:[%s2 + $0x30] sm:$0xff]
        %v6608 = vld [vmem:[%s2 + $0x38] sm:$0xff]
        %v6609 = vld [vmem:[%s2 + $0x40] sm:$0xff]
        %v6610 = vld [vmem:[%s2 + $0x48] sm:$0xff]
        %v6611 = vld [vmem:[%s2 + $0x50] sm:$0xff]
        %v6612 = vld [vmem:[%s2 + $0x58] sm:$0xff]
        %v6613 = vld [vmem:[%s2 + $0x60] sm:$0xff]
        %v6614 = vld [vmem:[%s2 + $0x68] sm:$0xff]
        %v6615 = vld [vmem:[%s2 + $0x70] sm:$0xff]
        %v6616 = vld [vmem:[%s2 + $0x78] sm:$0xff]
        %v6617 = vld [vmem:[%s2 + $0x80] sm:$0xff]
        %v6618 = vld [vmem:[%s2 + $0x88] sm:$0xff]
        %v6619 = vld [vmem:[%s2 + $0x90] sm:$0xff]
        %v6620 = vld [vmem:[%s2 + $0x98] sm:$0xff]
        %v6621 = vld [vmem:[%s2 + $0xa0] sm:$0xff]
        %v6622 = vld [vmem:[%s2 + $0xa8] sm:$0xff]
        %v6623 = vld [vmem:[%s2 + $0xb0] sm:$0xff]
        %v6624 = vld [vmem:[%s2 + $0xb8] sm:$0xff]
        %v6625 = vpack.c.bf16 %v6599, %v6597
        %v6626 = vld [vmem:[%s513] sm:$0xf]
        %v6627 = vld [vmem:[%s513 + $0x4] sm:$0xf]
        %v6630 = vunpack.c.l.b16 %v6626
        %v6631 = vunpack.c.l.b16 %v6627
        %v6632 = vpack.c.b16 %v6631, %v6630
        %v6634 = vsel %vm470, %v6632, 0
        %6636 = vmatpush.bf16.msra.mxu0 0
        %6637 = vmatpush.bf16.msra.mxu0 0
        %6638 = vmatpush.bf16.msra.mxu0 0
        %6639 = vmatpush.bf16.msra.mxu0 0
        %6640 = vmatpush.bf16.msra.mxu0 0
        %6641 = vmatpush.bf16.msra.mxu0 0
        %6642 = vmatpush.bf16.msra.mxu0 %v6581
        %6643 = vmatpush.bf16.msra.mxu0 %v6580
        %6644 = vmatmul.bf16.gmra.mxu0 %v6634
        %v6645 = vpop.f32.mrf.mxu0
        %v6646 = vadd.f32 0.0, %v6645
        %v6647 = vpop.f32.mrf.mxu0
        %v6648 = vadd.f32 0.0, %v6647
        %6649 = vdwg.mxu0
        %v6650 = vld [vmem:[%s538] sm:$0xff]
        %v6651 = vld [vmem:[%s538 + $0x8] sm:$0xff]
        %v6652 = vld [vmem:[%s538 + $0x10] sm:$0xff]
        %v6653 = vld [vmem:[%s538 + $0x18] sm:$0xff]
        %v6654 = vld [vmem:[%s538 + $0x20] sm:$0xff]
        %v6655 = vld [vmem:[%s538 + $0x28] sm:$0xff]
        %v6656 = vld [vmem:[%s538 + $0x30] sm:$0xff]
        %v6657 = vld [vmem:[%s538 + $0x38] sm:$0xff]
        %v6658 = vld [vmem:[%s538 + $0x40] sm:$0xff]
        %v6659 = vld [vmem:[%s538 + $0x48] sm:$0xff]
        %v6660 = vld [vmem:[%s538 + $0x50] sm:$0xff]
        %v6661 = vld [vmem:[%s538 + $0x58] sm:$0xff]
        %v6662 = vld [vmem:[%s538 + $0x60] sm:$0xff]
        %v6663 = vld [vmem:[%s538 + $0x68] sm:$0xff]
        %v6664 = vld [vmem:[%s538 + $0x70] sm:$0xff]
        %v6665 = vld [vmem:[%s538 + $0x78] sm:$0xff]
        %v6666 = vld [vmem:[%s538 + $0x80] sm:$0xff]
        %v6667 = vld [vmem:[%s538 + $0x88] sm:$0xff]
        %v6668 = vld [vmem:[%s538 + $0x90] sm:$0xff]
        %v6669 = vld [vmem:[%s538 + $0x98] sm:$0xff]
        %v6670 = vld [vmem:[%s538 + $0xa0] sm:$0xff]
        %v6671 = vld [vmem:[%s538 + $0xa8] sm:$0xff]
        %v6672 = vld [vmem:[%s538 + $0xb0] sm:$0xff]
        %v6673 = vld [vmem:[%s538 + $0xb8] sm:$0xff]
        %v6674 = vpack.c.bf16 %v6648, %v6646
        %v6699 = vunpack.c.l.b16 %v6650
        %v6700 = vunpack.c.h.b16 %v6650
        %v6701 = vunpack.c.l.b16 %v6651
        %v6702 = vunpack.c.h.b16 %v6651
        %v6703 = vunpack.c.l.b16 %v6652
        %v6704 = vunpack.c.h.b16 %v6652
        %v6705 = vunpack.c.l.b16 %v6653
        %v6706 = vunpack.c.h.b16 %v6653
        %v6707 = vunpack.c.l.b16 %v6654
        %v6708 = vunpack.c.h.b16 %v6654
        %v6709 = vunpack.c.l.b16 %v6655
        %v6710 = vunpack.c.h.b16 %v6655
        %v6711 = vunpack.c.l.b16 %v6656
        %v6712 = vunpack.c.h.b16 %v6656
        %v6713 = vunpack.c.l.b16 %v6657
        %v6714 = vunpack.c.h.b16 %v6657
        %v6715 = vunpack.c.l.b16 %v6658
        %v6716 = vunpack.c.h.b16 %v6658
        %v6717 = vunpack.c.l.b16 %v6659
        %v6718 = vunpack.c.h.b16 %v6659
        %v6719 = vunpack.c.l.b16 %v6660
        %v6720 = vunpack.c.h.b16 %v6660
        %v6721 = vunpack.c.l.b16 %v6661
        %v6722 = vunpack.c.h.b16 %v6661
        %v6723 = vunpack.c.l.b16 %v6662
        %v6724 = vunpack.c.h.b16 %v6662
        %v6725 = vunpack.c.l.b16 %v6663
        %v6726 = vunpack.c.h.b16 %v6663
        %v6727 = vunpack.c.l.b16 %v6664
        %v6728 = vunpack.c.h.b16 %v6664
        %v6729 = vunpack.c.l.b16 %v6665
        %v6730 = vunpack.c.h.b16 %v6665
        %v6731 = vunpack.c.l.b16 %v6666
        %v6732 = vunpack.c.h.b16 %v6666
        %v6733 = vunpack.c.l.b16 %v6667
        %v6734 = vunpack.c.h.b16 %v6667
        %v6735 = vunpack.c.l.b16 %v6668
        %v6736 = vunpack.c.h.b16 %v6668
        %v6737 = vunpack.c.l.b16 %v6669
        %v6738 = vunpack.c.h.b16 %v6669
        %v6739 = vunpack.c.l.b16 %v6670
        %v6740 = vunpack.c.h.b16 %v6670
        %v6741 = vunpack.c.l.b16 %v6671
        %v6742 = vunpack.c.h.b16 %v6671
        %v6743 = vunpack.c.l.b16 %v6672
        %v6744 = vunpack.c.h.b16 %v6672
        %v6745 = vunpack.c.l.b16 %v6673
        %v6746 = vunpack.c.h.b16 %v6673
        %v6747 = vpack.c.b16 %v6703, %v6699
        %v6748 = vpack.c.b16 %v6704, %v6700
        %v6749 = vpack.c.b16 %v6705, %v6701
        %v6750 = vpack.c.b16 %v6706, %v6702
        %v6751 = vpack.c.b16 %v6711, %v6707
        %v6752 = vpack.c.b16 %v6712, %v6708
        %v6753 = vpack.c.b16 %v6713, %v6709
        %v6754 = vpack.c.b16 %v6714, %v6710
        %v6755 = vpack.c.b16 %v6719, %v6715
        %v6756 = vpack.c.b16 %v6720, %v6716
        %v6757 = vpack.c.b16 %v6721, %v6717
        %v6758 = vpack.c.b16 %v6722, %v6718
        %v6759 = vpack.c.b16 %v6727, %v6723
        %v6760 = vpack.c.b16 %v6728, %v6724
        %v6761 = vpack.c.b16 %v6729, %v6725
        %v6762 = vpack.c.b16 %v6730, %v6726
        %v6763 = vpack.c.b16 %v6735, %v6731
        %v6764 = vpack.c.b16 %v6736, %v6732
        %v6765 = vpack.c.b16 %v6737, %v6733
        %v6766 = vpack.c.b16 %v6738, %v6734
        %v6767 = vpack.c.b16 %v6743, %v6739
        %v6768 = vpack.c.b16 %v6744, %v6740
        %v6769 = vpack.c.b16 %v6745, %v6741
        %v6770 = vpack.c.b16 %v6746, %v6742
        %v6796 = vsel %vm684, %v6674, 0
        %6798 = vmatpush.bf16.msra.mxu0 0
        %6799 = vmatpush.bf16.msra.mxu0 0
        %6800 = vmatpush.bf16.msra.mxu0 %v6767
        %6801 = vmatpush.bf16.msra.mxu0 %v6763
        %6802 = vmatpush.bf16.msra.mxu0 %v6759
        %6803 = vmatpush.bf16.msra.mxu0 %v6755
        %6804 = vmatpush.bf16.msra.mxu0 %v6751
        %6805 = vmatpush.bf16.msra.mxu0 %v6747
        %6806 = vmatmul.bf16.gmra.mxu0 %v6796
        %v6807 = vpop.f32.mrf.mxu0
        %v6808 = vadd.f32 0.0, %v6807
        %v6809 = vpop.f32.mrf.mxu0
        %v6810 = vadd.f32 0.0, %v6809
        %6811 = vdwg.mxu0
        %6812 = vmatpush.bf16.msra.mxu0 0
        %6813 = vmatpush.bf16.msra.mxu0 0
        %6814 = vmatpush.bf16.msra.mxu0 %v6768
        %6815 = vmatpush.bf16.msra.mxu0 %v6764
        %6816 = vmatpush.bf16.msra.mxu0 %v6760
        %6817 = vmatpush.bf16.msra.mxu0 %v6756
        %6818 = vmatpush.bf16.msra.mxu0 %v6752
        %6819 = vmatpush.bf16.msra.mxu0 %v6748
        %6820 = vmatmul.bf16.gmra.mxu0 %v6796
        %v6821 = vpop.f32.mrf.mxu0
        %v6822 = vadd.f32 0.0, %v6821
        %v6823 = vpop.f32.mrf.mxu0
        %v6824 = vadd.f32 0.0, %v6823
        %6825 = vdwg.mxu0
        %6826 = vmatpush.bf16.msra.mxu0 0
        %6827 = vmatpush.bf16.msra.mxu0 0
        %6828 = vmatpush.bf16.msra.mxu0 %v6769
        %6829 = vmatpush.bf16.msra.mxu0 %v6765
        %6830 = vmatpush.bf16.msra.mxu0 %v6761
        %6831 = vmatpush.bf16.msra.mxu0 %v6757
        %6832 = vmatpush.bf16.msra.mxu0 %v6753
        %6833 = vmatpush.bf16.msra.mxu0 %v6749
        %6834 = vmatmul.bf16.gmra.mxu0 %v6796
        %v6835 = vpop.f32.mrf.mxu0
        %v6836 = vadd.f32 0.0, %v6835
        %v6837 = vpop.f32.mrf.mxu0
        %v6838 = vadd.f32 0.0, %v6837
        %6839 = vdwg.mxu0
        %6840 = vmatpush.bf16.msra.mxu0 0
        %6841 = vmatpush.bf16.msra.mxu0 0
        %6842 = vmatpush.bf16.msra.mxu0 %v6770
        %6843 = vmatpush.bf16.msra.mxu0 %v6766
        %6844 = vmatpush.bf16.msra.mxu0 %v6762
        %6845 = vmatpush.bf16.msra.mxu0 %v6758
        %6846 = vmatpush.bf16.msra.mxu0 %v6754
        %6847 = vmatpush.bf16.msra.mxu0 %v6750
        %6848 = vmatmul.bf16.gmra.mxu0 %v6796
        %v6849 = vpop.f32.mrf.mxu0
        %v6850 = vadd.f32 0.0, %v6849
        %v6851 = vpop.f32.mrf.mxu0
        %v6852 = vadd.f32 0.0, %v6851
        %6853 = vdwg.mxu0
        %v6878 = vunpack.c.l.b16 %v6601
        %v6879 = vunpack.c.h.b16 %v6601
        %v6880 = vunpack.c.l.b16 %v6602
        %v6881 = vunpack.c.h.b16 %v6602
        %v6882 = vunpack.c.l.b16 %v6603
        %v6883 = vunpack.c.h.b16 %v6603
        %v6884 = vunpack.c.l.b16 %v6604
        %v6885 = vunpack.c.h.b16 %v6604
        %v6886 = vunpack.c.l.b16 %v6605
        %v6887 = vunpack.c.h.b16 %v6605
        %v6888 = vunpack.c.l.b16 %v6606
        %v6889 = vunpack.c.h.b16 %v6606
        %v6890 = vunpack.c.l.b16 %v6607
        %v6891 = vunpack.c.h.b16 %v6607
        %v6892 = vunpack.c.l.b16 %v6608
        %v6893 = vunpack.c.h.b16 %v6608
        %v6894 = vunpack.c.l.b16 %v6609
        %v6895 = vunpack.c.h.b16 %v6609
        %v6896 = vunpack.c.l.b16 %v6610
        %v6897 = vunpack.c.h.b16 %v6610
        %v6898 = vunpack.c.l.b16 %v6611
        %v6899 = vunpack.c.h.b16 %v6611
        %v6900 = vunpack.c.l.b16 %v6612
        %v6901 = vunpack.c.h.b16 %v6612
        %v6902 = vunpack.c.l.b16 %v6613
        %v6903 = vunpack.c.h.b16 %v6613
        %v6904 = vunpack.c.l.b16 %v6614
        %v6905 = vunpack.c.h.b16 %v6614
        %v6906 = vunpack.c.l.b16 %v6615
        %v6907 = vunpack.c.h.b16 %v6615
        %v6908 = vunpack.c.l.b16 %v6616
        %v6909 = vunpack.c.h.b16 %v6616
        %v6910 = vunpack.c.l.b16 %v6617
        %v6911 = vunpack.c.h.b16 %v6617
        %v6912 = vunpack.c.l.b16 %v6618
        %v6913 = vunpack.c.h.b16 %v6618
        %v6914 = vunpack.c.l.b16 %v6619
        %v6915 = vunpack.c.h.b16 %v6619
        %v6916 = vunpack.c.l.b16 %v6620
        %v6917 = vunpack.c.h.b16 %v6620
        %v6918 = vunpack.c.l.b16 %v6621
        %v6919 = vunpack.c.h.b16 %v6621
        %v6920 = vunpack.c.l.b16 %v6622
        %v6921 = vunpack.c.h.b16 %v6622
        %v6922 = vunpack.c.l.b16 %v6623
        %v6923 = vunpack.c.h.b16 %v6623
        %v6924 = vunpack.c.l.b16 %v6624
        %v6925 = vunpack.c.h.b16 %v6624
        %v6926 = vpack.c.b16 %v6882, %v6878
        %v6927 = vpack.c.b16 %v6883, %v6879
        %v6928 = vpack.c.b16 %v6884, %v6880
        %v6929 = vpack.c.b16 %v6885, %v6881
        %v6930 = vpack.c.b16 %v6890, %v6886
        %v6931 = vpack.c.b16 %v6891, %v6887
        %v6932 = vpack.c.b16 %v6892, %v6888
        %v6933 = vpack.c.b16 %v6893, %v6889
        %v6934 = vpack.c.b16 %v6898, %v6894
        %v6935 = vpack.c.b16 %v6899, %v6895
        %v6936 = vpack.c.b16 %v6900, %v6896
        %v6937 = vpack.c.b16 %v6901, %v6897
        %v6938 = vpack.c.b16 %v6906, %v6902
        %v6939 = vpack.c.b16 %v6907, %v6903
        %v6940 = vpack.c.b16 %v6908, %v6904
        %v6941 = vpack.c.b16 %v6909, %v6905
        %v6942 = vpack.c.b16 %v6914, %v6910
        %v6943 = vpack.c.b16 %v6915, %v6911
        %v6944 = vpack.c.b16 %v6916, %v6912
        %v6945 = vpack.c.b16 %v6917, %v6913
        %v6946 = vpack.c.b16 %v6922, %v6918
        %v6947 = vpack.c.b16 %v6923, %v6919
        %v6948 = vpack.c.b16 %v6924, %v6920
        %v6949 = vpack.c.b16 %v6925, %v6921
        %v6975 = vsel %vm684, %v6625, 0
        %6977 = vmatpush.bf16.msra.mxu0 0
        %6978 = vmatpush.bf16.msra.mxu0 0
        %6979 = vmatpush.bf16.msra.mxu0 %v6946
        %6980 = vmatpush.bf16.msra.mxu0 %v6942
        %6981 = vmatpush.bf16.msra.mxu0 %v6938
        %6982 = vmatpush.bf16.msra.mxu0 %v6934
        %6983 = vmatpush.bf16.msra.mxu0 %v6930
        %6984 = vmatpush.bf16.msra.mxu0 %v6926
        %6985 = vmatmul.bf16.gmra.mxu0 %v6975
        %v6986 = vpop.f32.mrf.mxu0
        %v6987 = vadd.f32 %v6808, %v6986
        %v6988 = vpop.f32.mrf.mxu0
        %v6989 = vadd.f32 %v6810, %v6988
        %6990 = vdwg.mxu0
        %6991 = vmatpush.bf16.msra.mxu0 0
        %6992 = vmatpush.bf16.msra.mxu0 0
        %6993 = vmatpush.bf16.msra.mxu0 %v6947
        %6994 = vmatpush.bf16.msra.mxu0 %v6943
        %6995 = vmatpush.bf16.msra.mxu0 %v6939
        %6996 = vmatpush.bf16.msra.mxu0 %v6935
        %6997 = vmatpush.bf16.msra.mxu0 %v6931
        %6998 = vmatpush.bf16.msra.mxu0 %v6927
        %6999 = vmatmul.bf16.gmra.mxu0 %v6975
        %v7000 = vpop.f32.mrf.mxu0
        %v7001 = vadd.f32 %v6822, %v7000
        %v7002 = vpop.f32.mrf.mxu0
        %v7003 = vadd.f32 %v6824, %v7002
        %7004 = vdwg.mxu0
        %7005 = vmatpush.bf16.msra.mxu0 0
        %7006 = vmatpush.bf16.msra.mxu0 0
        %7007 = vmatpush.bf16.msra.mxu0 %v6948
        %7008 = vmatpush.bf16.msra.mxu0 %v6944
        %7009 = vmatpush.bf16.msra.mxu0 %v6940
        %7010 = vmatpush.bf16.msra.mxu0 %v6936
        %7011 = vmatpush.bf16.msra.mxu0 %v6932
        %7012 = vmatpush.bf16.msra.mxu0 %v6928
        %7013 = vmatmul.bf16.gmra.mxu0 %v6975
        %v7014 = vpop.f32.mrf.mxu0
        %v7015 = vadd.f32 %v6836, %v7014
        %v7016 = vpop.f32.mrf.mxu0
        %v7017 = vadd.f32 %v6838, %v7016
        %7018 = vdwg.mxu0
        %7019 = vmatpush.bf16.msra.mxu0 0
        %7020 = vmatpush.bf16.msra.mxu0 0
        %7021 = vmatpush.bf16.msra.mxu0 %v6949
        %7022 = vmatpush.bf16.msra.mxu0 %v6945
        %7023 = vmatpush.bf16.msra.mxu0 %v6941
        %7024 = vmatpush.bf16.msra.mxu0 %v6937
        %7025 = vmatpush.bf16.msra.mxu0 %v6933
        %7026 = vmatpush.bf16.msra.mxu0 %v6929
        %7027 = vmatmul.bf16.gmra.mxu0 %v6975
        %v7028 = vpop.f32.mrf.mxu0
        %v7029 = vadd.f32 %v6850, %v7028
        %v7030 = vpop.f32.mrf.mxu0
        %v7031 = vadd.f32 %v6852, %v7030
        %7032 = vdwg.mxu0
        %v7033 = vld [vmem:[%s923] sm:$0xf]
        %v7034 = vld [vmem:[%s923 + $0x4] sm:$0xf]
        %v7037 = vunpack.c.l.b16 %v7033
        %v7038 = vunpack.c.l.b16 %v7034
        %v7039 = vpack.c.b16 %v7038, %v7037
        %v7041 = vsel %vm470, %v7039, 0
        %7043 = vmatpush.bf16.msra.mxu0 0
        %7044 = vmatpush.bf16.msra.mxu0 0
        %7045 = vmatpush.bf16.msra.mxu0 0
        %7046 = vmatpush.bf16.msra.mxu0 0
        %7047 = vmatpush.bf16.msra.mxu0 0
        %7048 = vmatpush.bf16.msra.mxu0 0
        %7049 = vmatpush.bf16.msra.mxu0 %v6581
        %7050 = vmatpush.bf16.msra.mxu0 %v6580
        %7051 = vmatmul.bf16.gmra.mxu0 %v7041
        %v7052 = vpop.f32.mrf.mxu0
        %v7053 = vadd.f32 0.0, %v7052
        %v7054 = vpop.f32.mrf.mxu0
        %v7055 = vadd.f32 0.0, %v7054
        %7056 = vdwg.mxu0
        %v7057 = vld [vmem:[%s948] sm:$0xff]
        %v7058 = vld [vmem:[%s948 + $0x8] sm:$0xff]
        %v7059 = vld [vmem:[%s948 + $0x10] sm:$0xff]
        %v7060 = vld [vmem:[%s948 + $0x18] sm:$0xff]
        %v7061 = vld [vmem:[%s948 + $0x20] sm:$0xff]
        %v7062 = vld [vmem:[%s948 + $0x28] sm:$0xff]
        %v7063 = vld [vmem:[%s948 + $0x30] sm:$0xff]
        %v7064 = vld [vmem:[%s948 + $0x38] sm:$0xff]
        %v7065 = vld [vmem:[%s948 + $0x40] sm:$0xff]
        %v7066 = vld [vmem:[%s948 + $0x48] sm:$0xff]
        %v7067 = vld [vmem:[%s948 + $0x50] sm:$0xff]
        %v7068 = vld [vmem:[%s948 + $0x58] sm:$0xff]
        %v7069 = vld [vmem:[%s948 + $0x60] sm:$0xff]
        %v7070 = vld [vmem:[%s948 + $0x68] sm:$0xff]
        %v7071 = vld [vmem:[%s948 + $0x70] sm:$0xff]
        %v7072 = vld [vmem:[%s948 + $0x78] sm:$0xff]
        %v7073 = vld [vmem:[%s948 + $0x80] sm:$0xff]
        %v7074 = vld [vmem:[%s948 + $0x88] sm:$0xff]
        %v7075 = vld [vmem:[%s948 + $0x90] sm:$0xff]
        %v7076 = vld [vmem:[%s948 + $0x98] sm:$0xff]
        %v7077 = vld [vmem:[%s948 + $0xa0] sm:$0xff]
        %v7078 = vld [vmem:[%s948 + $0xa8] sm:$0xff]
        %v7079 = vld [vmem:[%s948 + $0xb0] sm:$0xff]
        %v7080 = vld [vmem:[%s948 + $0xb8] sm:$0xff]
        %v7081 = vpack.c.bf16 %v7055, %v7053
        %v7106 = vunpack.c.l.b16 %v7057
        %v7107 = vunpack.c.h.b16 %v7057
        %v7108 = vunpack.c.l.b16 %v7058
        %v7109 = vunpack.c.h.b16 %v7058
        %v7110 = vunpack.c.l.b16 %v7059
        %v7111 = vunpack.c.h.b16 %v7059
        %v7112 = vunpack.c.l.b16 %v7060
        %v7113 = vunpack.c.h.b16 %v7060
        %v7114 = vunpack.c.l.b16 %v7061
        %v7115 = vunpack.c.h.b16 %v7061
        %v7116 = vunpack.c.l.b16 %v7062
        %v7117 = vunpack.c.h.b16 %v7062
        %v7118 = vunpack.c.l.b16 %v7063
        %v7119 = vunpack.c.h.b16 %v7063
        %v7120 = vunpack.c.l.b16 %v7064
        %v7121 = vunpack.c.h.b16 %v7064
        %v7122 = vunpack.c.l.b16 %v7065
        %v7123 = vunpack.c.h.b16 %v7065
        %v7124 = vunpack.c.l.b16 %v7066
        %v7125 = vunpack.c.h.b16 %v7066
        %v7126 = vunpack.c.l.b16 %v7067
        %v7127 = vunpack.c.h.b16 %v7067
        %v7128 = vunpack.c.l.b16 %v7068
        %v7129 = vunpack.c.h.b16 %v7068
        %v7130 = vunpack.c.l.b16 %v7069
        %v7131 = vunpack.c.h.b16 %v7069
        %v7132 = vunpack.c.l.b16 %v7070
        %v7133 = vunpack.c.h.b16 %v7070
        %v7134 = vunpack.c.l.b16 %v7071
        %v7135 = vunpack.c.h.b16 %v7071
        %v7136 = vunpack.c.l.b16 %v7072
        %v7137 = vunpack.c.h.b16 %v7072
        %v7138 = vunpack.c.l.b16 %v7073
        %v7139 = vunpack.c.h.b16 %v7073
        %v7140 = vunpack.c.l.b16 %v7074
        %v7141 = vunpack.c.h.b16 %v7074
        %v7142 = vunpack.c.l.b16 %v7075
        %v7143 = vunpack.c.h.b16 %v7075
        %v7144 = vunpack.c.l.b16 %v7076
        %v7145 = vunpack.c.h.b16 %v7076
        %v7146 = vunpack.c.l.b16 %v7077
        %v7147 = vunpack.c.h.b16 %v7077
        %v7148 = vunpack.c.l.b16 %v7078
        %v7149 = vunpack.c.h.b16 %v7078
        %v7150 = vunpack.c.l.b16 %v7079
        %v7151 = vunpack.c.h.b16 %v7079
        %v7152 = vunpack.c.l.b16 %v7080
        %v7153 = vunpack.c.h.b16 %v7080
        %v7154 = vpack.c.b16 %v7110, %v7106
        %v7155 = vpack.c.b16 %v7111, %v7107
        %v7156 = vpack.c.b16 %v7112, %v7108
        %v7157 = vpack.c.b16 %v7113, %v7109
        %v7158 = vpack.c.b16 %v7118, %v7114
        %v7159 = vpack.c.b16 %v7119, %v7115
        %v7160 = vpack.c.b16 %v7120, %v7116
        %v7161 = vpack.c.b16 %v7121, %v7117
        %v7162 = vpack.c.b16 %v7126, %v7122
        %v7163 = vpack.c.b16 %v7127, %v7123
        %v7164 = vpack.c.b16 %v7128, %v7124
        %v7165 = vpack.c.b16 %v7129, %v7125
        %v7166 = vpack.c.b16 %v7134, %v7130
        %v7167 = vpack.c.b16 %v7135, %v7131
        %v7168 = vpack.c.b16 %v7136, %v7132
        %v7169 = vpack.c.b16 %v7137, %v7133
        %v7170 = vpack.c.b16 %v7142, %v7138
        %v7171 = vpack.c.b16 %v7143, %v7139
        %v7172 = vpack.c.b16 %v7144, %v7140
        %v7173 = vpack.c.b16 %v7145, %v7141
        %v7174 = vpack.c.b16 %v7150, %v7146
        %v7175 = vpack.c.b16 %v7151, %v7147
        %v7176 = vpack.c.b16 %v7152, %v7148
        %v7177 = vpack.c.b16 %v7153, %v7149
        %v7203 = vsel %vm684, %v7081, 0
        %7205 = vmatpush.bf16.msra.mxu0 0
        %7206 = vmatpush.bf16.msra.mxu0 0
        %7207 = vmatpush.bf16.msra.mxu0 %v7174
        %7208 = vmatpush.bf16.msra.mxu0 %v7170
        %7209 = vmatpush.bf16.msra.mxu0 %v7166
        %7210 = vmatpush.bf16.msra.mxu0 %v7162
        %7211 = vmatpush.bf16.msra.mxu0 %v7158
        %7212 = vmatpush.bf16.msra.mxu0 %v7154
        %7213 = vmatmul.bf16.gmra.mxu0 %v7203
        %v7214 = vpop.f32.mrf.mxu0
        %v7215 = vadd.f32 0.0, %v7214
        %v7216 = vpop.f32.mrf.mxu0
        %v7217 = vadd.f32 0.0, %v7216
        %7218 = vdwg.mxu0
        %7219 = vmatpush.bf16.msra.mxu0 0
        %7220 = vmatpush.bf16.msra.mxu0 0
        %7221 = vmatpush.bf16.msra.mxu0 %v7175
        %7222 = vmatpush.bf16.msra.mxu0 %v7171
        %7223 = vmatpush.bf16.msra.mxu0 %v7167
        %7224 = vmatpush.bf16.msra.mxu0 %v7163
        %7225 = vmatpush.bf16.msra.mxu0 %v7159
        %7226 = vmatpush.bf16.msra.mxu0 %v7155
        %7227 = vmatmul.bf16.gmra.mxu0 %v7203
        %v7228 = vpop.f32.mrf.mxu0
        %v7229 = vadd.f32 0.0, %v7228
        %v7230 = vpop.f32.mrf.mxu0
        %v7231 = vadd.f32 0.0, %v7230
        %7232 = vdwg.mxu0
        %7233 = vmatpush.bf16.msra.mxu0 0
        %7234 = vmatpush.bf16.msra.mxu0 0
        %7235 = vmatpush.bf16.msra.mxu0 %v7176
        %7236 = vmatpush.bf16.msra.mxu0 %v7172
        %7237 = vmatpush.bf16.msra.mxu0 %v7168
        %7238 = vmatpush.bf16.msra.mxu0 %v7164
        %7239 = vmatpush.bf16.msra.mxu0 %v7160
        %7240 = vmatpush.bf16.msra.mxu0 %v7156
        %7241 = vmatmul.bf16.gmra.mxu0 %v7203
        %v7242 = vpop.f32.mrf.mxu0
        %v7243 = vadd.f32 0.0, %v7242
        %v7244 = vpop.f32.mrf.mxu0
        %v7245 = vadd.f32 0.0, %v7244
        %7246 = vdwg.mxu0
        %7247 = vmatpush.bf16.msra.mxu0 0
        %7248 = vmatpush.bf16.msra.mxu0 0
        %7249 = vmatpush.bf16.msra.mxu0 %v7177
        %7250 = vmatpush.bf16.msra.mxu0 %v7173
        %7251 = vmatpush.bf16.msra.mxu0 %v7169
        %7252 = vmatpush.bf16.msra.mxu0 %v7165
        %7253 = vmatpush.bf16.msra.mxu0 %v7161
        %7254 = vmatpush.bf16.msra.mxu0 %v7157
        %7255 = vmatmul.bf16.gmra.mxu0 %v7203
        %v7256 = vpop.f32.mrf.mxu0
        %v7257 = vadd.f32 0.0, %v7256
        %v7258 = vpop.f32.mrf.mxu0
        %v7259 = vadd.f32 0.0, %v7258
        %7260 = vdwg.mxu0
        %v7261 = vadd.f32 %v6987, %v7215
        %v7262 = vadd.f32 %v7001, %v7229
        %v7263 = vadd.f32 %v7015, %v7243
        %v7264 = vadd.f32 %v7029, %v7257
        %v7265 = vadd.f32 %v6989, %v7217
        %v7266 = vadd.f32 %v7003, %v7231
        %v7267 = vadd.f32 %v7017, %v7245
        %v7268 = vadd.f32 %v7031, %v7259
        %v7269 = vmax.f32 %v7261, %v7263
        %v7270 = vmax.f32 %v7262, %v7264
        %v7271 = vmax.f32 %v7265, %v7267
        %v7272 = vmax.f32 %v7266, %v7268
        %v7273 = vld [vmem:[%s1165] sm:$0xf]
        %v7274 = vld [vmem:[%s1165 + $0x4] sm:$0xf]
        %v7277 = vunpack.c.l.b16 %v7273
        %v7278 = vunpack.c.l.b16 %v7274
        %v7279 = vpack.c.b16 %v7278, %v7277
        %v7281 = vsel %vm470, %v7279, 0
        %7283 = vmatpush.bf16.msra.mxu0 0
        %7284 = vmatpush.bf16.msra.mxu0 0
        %7285 = vmatpush.bf16.msra.mxu0 0
        %7286 = vmatpush.bf16.msra.mxu0 0
        %7287 = vmatpush.bf16.msra.mxu0 0
        %7288 = vmatpush.bf16.msra.mxu0 0
        %7289 = vmatpush.bf16.msra.mxu0 %v6581
        %7290 = vmatpush.bf16.msra.mxu0 %v6580
        %7291 = vmatmul.bf16.gmra.mxu0 %v7281
        %v7292 = vpop.f32.mrf.mxu0
        %v7293 = vadd.f32 0.0, %v7292
        %v7294 = vpop.f32.mrf.mxu0
        %v7295 = vadd.f32 0.0, %v7294
        %7296 = vdwg.mxu0
        %v7297 = vpack.c.bf16 %v7295, %v7293
        %v7298 = vld [vmem:[%s1191] sm:$0xf]
        %v7299 = vld [vmem:[%s1191 + $0x4] sm:$0xf]
        %v7302 = vunpack.c.l.b16 %v7298
        %v7303 = vunpack.c.l.b16 %v7299
        %v7304 = vpack.c.b16 %v7303, %v7302
        %v7306 = vsel %vm470, %v7304, 0
        %7308 = vmatpush.bf16.msra.mxu0 0
        %7309 = vmatpush.bf16.msra.mxu0 0
        %7310 = vmatpush.bf16.msra.mxu0 0
        %7311 = vmatpush.bf16.msra.mxu0 0
        %7312 = vmatpush.bf16.msra.mxu0 0
        %7313 = vmatpush.bf16.msra.mxu0 0
        %7314 = vmatpush.bf16.msra.mxu0 %v6581
        %7315 = vmatpush.bf16.msra.mxu0 %v6580
        %7316 = vmatmul.bf16.gmra.mxu0 %v7306
        %v7317 = vpop.f32.mrf.mxu0
        %v7318 = vadd.f32 0.0, %v7317
        %v7319 = vpop.f32.mrf.mxu0
        %v7320 = vadd.f32 0.0, %v7319
        %7321 = vdwg.mxu0
        %v7322 = vpack.c.bf16 %v7320, %v7318
        %v7324 = vsel %vm684, %v7322, 0
        %7326 = vmatpush.bf16.msra.mxu0 0
        %7327 = vmatpush.bf16.msra.mxu0 0
        %7328 = vmatpush.bf16.msra.mxu0 %v6767
        %7329 = vmatpush.bf16.msra.mxu0 %v6763
        %7330 = vmatpush.bf16.msra.mxu0 %v6759
        %7331 = vmatpush.bf16.msra.mxu0 %v6755
        %7332 = vmatpush.bf16.msra.mxu0 %v6751
        %7333 = vmatpush.bf16.msra.mxu0 %v6747
        %7334 = vmatmul.bf16.gmra.mxu0 %v7324
        %v7335 = vpop.f32.mrf.mxu0
        %v7336 = vadd.f32 0.0, %v7335
        %v7337 = vpop.f32.mrf.mxu0
        %v7338 = vadd.f32 0.0, %v7337
        %7339 = vdwg.mxu0
        %7340 = vmatpush.bf16.msra.mxu0 0
        %7341 = vmatpush.bf16.msra.mxu0 0
        %7342 = vmatpush.bf16.msra.mxu0 %v6768
        %7343 = vmatpush.bf16.msra.mxu0 %v6764
        %7344 = vmatpush.bf16.msra.mxu0 %v6760
        %7345 = vmatpush.bf16.msra.mxu0 %v6756
        %7346 = vmatpush.bf16.msra.mxu0 %v6752
        %7347 = vmatpush.bf16.msra.mxu0 %v6748
        %7348 = vmatmul.bf16.gmra.mxu0 %v7324
        %v7349 = vpop.f32.mrf.mxu0
        %v7350 = vadd.f32 0.0, %v7349
        %v7351 = vpop.f32.mrf.mxu0
        %v7352 = vadd.f32 0.0, %v7351
        %7353 = vdwg.mxu0
        %7354 = vmatpush.bf16.msra.mxu0 0
        %7355 = vmatpush.bf16.msra.mxu0 0
        %7356 = vmatpush.bf16.msra.mxu0 %v6769
        %7357 = vmatpush.bf16.msra.mxu0 %v6765
        %7358 = vmatpush.bf16.msra.mxu0 %v6761
        %7359 = vmatpush.bf16.msra.mxu0 %v6757
        %7360 = vmatpush.bf16.msra.mxu0 %v6753
        %7361 = vmatpush.bf16.msra.mxu0 %v6749
        %7362 = vmatmul.bf16.gmra.mxu0 %v7324
        %v7363 = vpop.f32.mrf.mxu0
        %v7364 = vadd.f32 0.0, %v7363
        %v7365 = vpop.f32.mrf.mxu0
        %v7366 = vadd.f32 0.0, %v7365
        %7367 = vdwg.mxu0
        %7368 = vmatpush.bf16.msra.mxu0 0
        %7369 = vmatpush.bf16.msra.mxu0 0
        %7370 = vmatpush.bf16.msra.mxu0 %v6770
        %7371 = vmatpush.bf16.msra.mxu0 %v6766
        %7372 = vmatpush.bf16.msra.mxu0 %v6762
        %7373 = vmatpush.bf16.msra.mxu0 %v6758
        %7374 = vmatpush.bf16.msra.mxu0 %v6754
        %7375 = vmatpush.bf16.msra.mxu0 %v6750
        %7376 = vmatmul.bf16.gmra.mxu0 %v7324
        %v7377 = vpop.f32.mrf.mxu0
        %v7378 = vadd.f32 0.0, %v7377
        %v7379 = vpop.f32.mrf.mxu0
        %v7380 = vadd.f32 0.0, %v7379
        %7381 = vdwg.mxu0
        %v7383 = vsel %vm684, %v7297, 0
        %7385 = vmatpush.bf16.msra.mxu0 0
        %7386 = vmatpush.bf16.msra.mxu0 0
        %7387 = vmatpush.bf16.msra.mxu0 %v6946
        %7388 = vmatpush.bf16.msra.mxu0 %v6942
        %7389 = vmatpush.bf16.msra.mxu0 %v6938
        %7390 = vmatpush.bf16.msra.mxu0 %v6934
        %7391 = vmatpush.bf16.msra.mxu0 %v6930
        %7392 = vmatpush.bf16.msra.mxu0 %v6926
        %7393 = vmatmul.bf16.gmra.mxu0 %v7383
        %v7394 = vpop.f32.mrf.mxu0
        %v7395 = vadd.f32 %v7336, %v7394
        %v7396 = vpop.f32.mrf.mxu0
        %v7397 = vadd.f32 %v7338, %v7396
        %7398 = vdwg.mxu0
        %7399 = vmatpush.bf16.msra.mxu0 0
        %7400 = vmatpush.bf16.msra.mxu0 0
        %7401 = vmatpush.bf16.msra.mxu0 %v6947
        %7402 = vmatpush.bf16.msra.mxu0 %v6943
        %7403 = vmatpush.bf16.msra.mxu0 %v6939
        %7404 = vmatpush.bf16.msra.mxu0 %v6935
        %7405 = vmatpush.bf16.msra.mxu0 %v6931
        %7406 = vmatpush.bf16.msra.mxu0 %v6927
        %7407 = vmatmul.bf16.gmra.mxu0 %v7383
        %v7408 = vpop.f32.mrf.mxu0
        %v7409 = vadd.f32 %v7350, %v7408
        %v7410 = vpop.f32.mrf.mxu0
        %v7411 = vadd.f32 %v7352, %v7410
        %7412 = vdwg.mxu0
        %7413 = vmatpush.bf16.msra.mxu0 0
        %7414 = vmatpush.bf16.msra.mxu0 0
        %7415 = vmatpush.bf16.msra.mxu0 %v6948
        %7416 = vmatpush.bf16.msra.mxu0 %v6944
        %7417 = vmatpush.bf16.msra.mxu0 %v6940
        %7418 = vmatpush.bf16.msra.mxu0 %v6936
        %7419 = vmatpush.bf16.msra.mxu0 %v6932
        %7420 = vmatpush.bf16.msra.mxu0 %v6928
        %7421 = vmatmul.bf16.gmra.mxu0 %v7383
        %v7422 = vpop.f32.mrf.mxu0
        %v7423 = vadd.f32 %v7364, %v7422
        %v7424 = vpop.f32.mrf.mxu0
        %v7425 = vadd.f32 %v7366, %v7424
        %7426 = vdwg.mxu0
        %7427 = vmatpush.bf16.msra.mxu0 0
        %7428 = vmatpush.bf16.msra.mxu0 0
        %7429 = vmatpush.bf16.msra.mxu0 %v6949
        %7430 = vmatpush.bf16.msra.mxu0 %v6945
        %7431 = vmatpush.bf16.msra.mxu0 %v6941
        %7432 = vmatpush.bf16.msra.mxu0 %v6937
        %7433 = vmatpush.bf16.msra.mxu0 %v6933
        %7434 = vmatpush.bf16.msra.mxu0 %v6929
        %7435 = vmatmul.bf16.gmra.mxu0 %v7383
        %v7436 = vpop.f32.mrf.mxu0
        %v7437 = vadd.f32 %v7378, %v7436
        %v7438 = vpop.f32.mrf.mxu0
        %v7439 = vadd.f32 %v7380, %v7438
        %7440 = vdwg.mxu0
        %v7441 = vld [vmem:[%s1335] sm:$0xf]
        %v7442 = vld [vmem:[%s1335 + $0x4] sm:$0xf]
        %v7445 = vunpack.c.l.b16 %v7441
        %v7446 = vunpack.c.l.b16 %v7442
        %v7447 = vpack.c.b16 %v7446, %v7445
        %v7449 = vsel %vm470, %v7447, 0
        %7451 = vmatpush.bf16.msra.mxu0 0
        %7452 = vmatpush.bf16.msra.mxu0 0
        %7453 = vmatpush.bf16.msra.mxu0 0
        %7454 = vmatpush.bf16.msra.mxu0 0
        %7455 = vmatpush.bf16.msra.mxu0 0
        %7456 = vmatpush.bf16.msra.mxu0 0
        %7457 = vmatpush.bf16.msra.mxu0 %v6581
        %7458 = vmatpush.bf16.msra.mxu0 %v6580
        %7459 = vmatmul.bf16.gmra.mxu0 %v7449
        %v7460 = vpop.f32.mrf.mxu0
        %v7461 = vadd.f32 0.0, %v7460
        %v7462 = vpop.f32.mrf.mxu0
        %v7463 = vadd.f32 0.0, %v7462
        %7464 = vdwg.mxu0
        %v7465 = vpack.c.bf16 %v7463, %v7461
        %v7467 = vsel %vm684, %v7465, 0
        %7469 = vmatpush.bf16.msra.mxu0 0
        %7470 = vmatpush.bf16.msra.mxu0 0
        %7471 = vmatpush.bf16.msra.mxu0 %v7174
        %7472 = vmatpush.bf16.msra.mxu0 %v7170
        %7473 = vmatpush.bf16.msra.mxu0 %v7166
        %7474 = vmatpush.bf16.msra.mxu0 %v7162
        %7475 = vmatpush.bf16.msra.mxu0 %v7158
        %7476 = vmatpush.bf16.msra.mxu0 %v7154
        %7477 = vmatmul.bf16.gmra.mxu0 %v7467
        %v7478 = vpop.f32.mrf.mxu0
        %v7479 = vadd.f32 0.0, %v7478
        %v7480 = vpop.f32.mrf.mxu0
        %v7481 = vadd.f32 0.0, %v7480
        %7482 = vdwg.mxu0
        %7483 = vmatpush.bf16.msra.mxu0 0
        %7484 = vmatpush.bf16.msra.mxu0 0
        %7485 = vmatpush.bf16.msra.mxu0 %v7175
        %7486 = vmatpush.bf16.msra.mxu0 %v7171
        %7487 = vmatpush.bf16.msra.mxu0 %v7167
        %7488 = vmatpush.bf16.msra.mxu0 %v7163
        %7489 = vmatpush.bf16.msra.mxu0 %v7159
        %7490 = vmatpush.bf16.msra.mxu0 %v7155
        %7491 = vmatmul.bf16.gmra.mxu0 %v7467
        %v7492 = vpop.f32.mrf.mxu0
        %v7493 = vadd.f32 0.0, %v7492
        %v7494 = vpop.f32.mrf.mxu0
        %v7495 = vadd.f32 0.0, %v7494
        %7496 = vdwg.mxu0
        %7497 = vmatpush.bf16.msra.mxu0 0
        %7498 = vmatpush.bf16.msra.mxu0 0
        %7499 = vmatpush.bf16.msra.mxu0 %v7176
        %7500 = vmatpush.bf16.msra.mxu0 %v7172
        %7501 = vmatpush.bf16.msra.mxu0 %v7168
        %7502 = vmatpush.bf16.msra.mxu0 %v7164
        %7503 = vmatpush.bf16.msra.mxu0 %v7160
        %7504 = vmatpush.bf16.msra.mxu0 %v7156
        %7505 = vmatmul.bf16.gmra.mxu0 %v7467
        %v7506 = vpop.f32.mrf.mxu0
        %v7507 = vadd.f32 0.0, %v7506
        %v7508 = vpop.f32.mrf.mxu0
        %v7509 = vadd.f32 0.0, %v7508
        %7510 = vdwg.mxu0
        %7511 = vmatpush.bf16.msra.mxu0 0
        %7512 = vmatpush.bf16.msra.mxu0 0
        %7513 = vmatpush.bf16.msra.mxu0 %v7177
        %7514 = vmatpush.bf16.msra.mxu0 %v7173
        %7515 = vmatpush.bf16.msra.mxu0 %v7169
        %7516 = vmatpush.bf16.msra.mxu0 %v7165
        %7517 = vmatpush.bf16.msra.mxu0 %v7161
        %7518 = vmatpush.bf16.msra.mxu0 %v7157
        %7519 = vmatmul.bf16.gmra.mxu0 %v7467
        %v7520 = vpop.f32.mrf.mxu0
        %v7521 = vadd.f32 0.0, %v7520
        %v7522 = vpop.f32.mrf.mxu0
        %v7523 = vadd.f32 0.0, %v7522
        %7524 = vdwg.mxu0
        %v7525 = vadd.f32 %v7395, %v7479
        %v7526 = vadd.f32 %v7409, %v7493
        %v7527 = vadd.f32 %v7423, %v7507
        %v7528 = vadd.f32 %v7437, %v7521
        %v7529 = vadd.f32 %v7397, %v7481
        %v7530 = vadd.f32 %v7411, %v7495
        %v7531 = vadd.f32 %v7425, %v7509
        %v7532 = vadd.f32 %v7439, %v7523
        %v7533 = vmax.f32 %v7525, %v7527
        %v7534 = vmax.f32 %v7526, %v7528
        %v7535 = vmax.f32 %v7529, %v7531
        %v7536 = vmax.f32 %v7530, %v7532
        %v7537 = vmax.f32 %v7269, %v7533
        %v7538 = vmax.f32 %v7270, %v7534
        %v7539 = vmax.f32 %v7271, %v7535
        %v7540 = vmax.f32 %v7272, %v7536
        %v7542 = vperm.slane %v6564, 0
        %v7543 = vperm.slane %v6564, 1
        %v7546 = vadd.f32 %v7537, %v7542
        %v7547 = vadd.f32 %v7538, %v7543
        %v7548 = vadd.f32 %v7539, %v7542
        %v7549 = vadd.f32 %v7540, %v7543
        %v7550 = vtanh.pop %v7546
        %v7551 = vtanh.pop %v7547
        %v7552 = vtanh.pop %v7548
        %v7553 = vtanh.pop %v7549
        %v7554 = vld [vmem:[%s6] sm:$0x1]
        %v7555 = vld [vmem:[%s4] sm:$0xf]
        %v7556 = vpack.c.bf16 %v7552, %v7550
        %v7557 = vpack.c.bf16 %v7553, %v7551
        %v7559 = vsel %vm1453, %v7555, 0
        %7561 = vmatpush.bf16.msra.mxu0 0
        %7562 = vmatpush.bf16.msra.mxu0 0
        %7563 = vmatpush.bf16.msra.mxu0 0
        %7564 = vmatpush.bf16.msra.mxu0 0
        %7565 = vmatpush.bf16.msra.mxu0 0
        %7566 = vmatpush.bf16.msra.mxu0 0
        %7567 = vmatpush.bf16.msra.mxu0 0
        %7568 = vmatpush.bf16.msra.mxu0 %v7556
        %7569 = vmatmul.bf16.gmra.mxu0 %v7559
        %v7570 = vpop.f32.mrf.mxu0
        %v7571 = vadd.f32 0.0, %v7570
        %v7572 = vpop.f32.mrf.mxu0
        %7573 = vdwg.mxu0
        %7574 = vmatpush.bf16.msra.mxu0 0
        %7575 = vmatpush.bf16.msra.mxu0 0
        %7576 = vmatpush.bf16.msra.mxu0 0
        %7577 = vmatpush.bf16.msra.mxu0 0
        %7578 = vmatpush.bf16.msra.mxu0 0
        %7579 = vmatpush.bf16.msra.mxu0 0
        %7580 = vmatpush.bf16.msra.mxu0 0
        %7581 = vmatpush.bf16.msra.mxu0 %v7557
        %7582 = vmatmul.bf16.gmra.mxu0 %v7559
        %v7583 = vpop.f32.mrf.mxu0
        %v7584 = vadd.f32 0.0, %v7583
        %v7585 = vpop.f32.mrf.mxu0
        %7586 = vdwg.mxu0
        %v7587 = vld [vmem:[%s5] sm:$0xf]
        %v7588 = vld [vmem:[%s5 + $0x4] sm:$0xf]
        %v7589 = vld [vmem:[%s5 + $0x8] sm:$0xf]
        %v7590 = vld [vmem:[%s5 + $0xc] sm:$0xf]
        %v7591 = vld [vmem:[%s5 + $0x10] sm:$0xf]
        %v7592 = vld [vmem:[%s5 + $0x14] sm:$0xf]
        %v7593 = vld [vmem:[%s5 + $0x18] sm:$0xf]
        %v7594 = vld [vmem:[%s5 + $0x1c] sm:$0xf]
        %v7595 = vld [vmem:[%s5 + $0x20] sm:$0xf]
        %v7596 = vld [vmem:[%s5 + $0x24] sm:$0xf]
        %v7597 = vld [vmem:[%s5 + $0x28] sm:$0xf]
        %v7598 = vld [vmem:[%s5 + $0x2c] sm:$0xf]
        %v7599 = vld [vmem:[%s5 + $0x30] sm:$0xf]
        %v7600 = vld [vmem:[%s5 + $0x34] sm:$0xf]
        %v7601 = vld [vmem:[%s5 + $0x38] sm:$0xf]
        %v7602 = vld [vmem:[%s5 + $0x3c] sm:$0xf]
        %v7603 = vld [vmem:[%s5 + $0x40] sm:$0xf]
        %v7604 = vld [vmem:[%s5 + $0x44] sm:$0xf]
        %v7605 = vld [vmem:[%s5 + $0x48] sm:$0xf]
        %v7606 = vld [vmem:[%s5 + $0x4c] sm:$0xf]
        %v7607 = vld [vmem:[%s5 + $0x50] sm:$0xf]
        %v7608 = vld [vmem:[%s5 + $0x54] sm:$0xf]
        %v7609 = vld [vmem:[%s5 + $0x58] sm:$0xf]
        %v7610 = vld [vmem:[%s5 + $0x5c] sm:$0xf]
        %v7611 = vld [vmem:[%s5 + $0x60] sm:$0xf]
        %v7612 = vld [vmem:[%s5 + $0x64] sm:$0xf]
        %v7613 = vld [vmem:[%s5 + $0x68] sm:$0xf]
        %v7614 = vld [vmem:[%s5 + $0x6c] sm:$0xf]
        %v7615 = vld [vmem:[%s5 + $0x70] sm:$0xf]
        %v7616 = vld [vmem:[%s5 + $0x74] sm:$0xf]
        %v7617 = vld [vmem:[%s5 + $0x78] sm:$0xf]
        %v7618 = vld [vmem:[%s5 + $0x7c] sm:$0xf]
        %v7619 = vpack.c.bf16 %v7571, %v7571
        %v7620 = vpack.c.bf16 %v7584, %v7584
        %v7621 = vld [vmem:[%s1517] sm:$0xf]
        %v7623 = vsel %vm1453, %v7621, 0
        %7625 = vmatpush.bf16.msra.mxu0 0
        %7626 = vmatpush.bf16.msra.mxu0 0
        %7627 = vmatpush.bf16.msra.mxu0 0
        %7628 = vmatpush.bf16.msra.mxu0 0
        %7629 = vmatpush.bf16.msra.mxu0 0
        %7630 = vmatpush.bf16.msra.mxu0 0
        %7631 = vmatpush.bf16.msra.mxu0 0
        %7632 = vmatpush.bf16.msra.mxu0 %v7556
        %7633 = vmatmul.bf16.gmra.mxu0 %v7623
        %v7634 = vpop.f32.mrf.mxu0
        %v7635 = vadd.f32 0.0, %v7634
        %v7636 = vpop.f32.mrf.mxu0
        %7637 = vdwg.mxu0
        %7638 = vmatpush.bf16.msra.mxu0 0
        %7639 = vmatpush.bf16.msra.mxu0 0
        %7640 = vmatpush.bf16.msra.mxu0 0
        %7641 = vmatpush.bf16.msra.mxu0 0
        %7642 = vmatpush.bf16.msra.mxu0 0
        %7643 = vmatpush.bf16.msra.mxu0 0
        %7644 = vmatpush.bf16.msra.mxu0 0
        %7645 = vmatpush.bf16.msra.mxu0 %v7557
        %7646 = vmatmul.bf16.gmra.mxu0 %v7623
        %v7647 = vpop.f32.mrf.mxu0
        %v7648 = vadd.f32 0.0, %v7647
        %v7649 = vpop.f32.mrf.mxu0
        %7650 = vdwg.mxu0
        %v7651 = vld [vmem:[%s1548] sm:$0xf]
        %v7652 = vld [vmem:[%s1548 + $0x4] sm:$0xf]
        %v7653 = vld [vmem:[%s1548 + $0x8] sm:$0xf]
        %v7654 = vld [vmem:[%s1548 + $0xc] sm:$0xf]
        %v7655 = vld [vmem:[%s1548 + $0x10] sm:$0xf]
        %v7656 = vld [vmem:[%s1548 + $0x14] sm:$0xf]
        %v7657 = vld [vmem:[%s1548 + $0x18] sm:$0xf]
        %v7658 = vld [vmem:[%s1548 + $0x1c] sm:$0xf]
        %v7659 = vld [vmem:[%s1548 + $0x20] sm:$0xf]
        %v7660 = vld [vmem:[%s1548 + $0x24] sm:$0xf]
        %v7661 = vld [vmem:[%s1548 + $0x28] sm:$0xf]
        %v7662 = vld [vmem:[%s1548 + $0x2c] sm:$0xf]
        %v7663 = vld [vmem:[%s1548 + $0x30] sm:$0xf]
        %v7664 = vld [vmem:[%s1548 + $0x34] sm:$0xf]
        %v7665 = vld [vmem:[%s1548 + $0x38] sm:$0xf]
        %v7666 = vld [vmem:[%s1548 + $0x3c] sm:$0xf]
        %v7667 = vld [vmem:[%s1548 + $0x40] sm:$0xf]
        %v7668 = vld [vmem:[%s1548 + $0x44] sm:$0xf]
        %v7669 = vld [vmem:[%s1548 + $0x48] sm:$0xf]
        %v7670 = vld [vmem:[%s1548 + $0x4c] sm:$0xf]
        %v7671 = vld [vmem:[%s1548 + $0x50] sm:$0xf]
        %v7672 = vld [vmem:[%s1548 + $0x54] sm:$0xf]
        %v7673 = vld [vmem:[%s1548 + $0x58] sm:$0xf]
        %v7674 = vld [vmem:[%s1548 + $0x5c] sm:$0xf]
        %v7675 = vld [vmem:[%s1548 + $0x60] sm:$0xf]
        %v7676 = vld [vmem:[%s1548 + $0x64] sm:$0xf]
        %v7677 = vld [vmem:[%s1548 + $0x68] sm:$0xf]
        %v7678 = vld [vmem:[%s1548 + $0x6c] sm:$0xf]
        %v7679 = vld [vmem:[%s1548 + $0x70] sm:$0xf]
        %v7680 = vld [vmem:[%s1548 + $0x74] sm:$0xf]
        %v7681 = vld [vmem:[%s1548 + $0x78] sm:$0xf]
        %v7682 = vld [vmem:[%s1548 + $0x7c] sm:$0xf]
        %v7683 = vpack.c.bf16 %v7635, %v7635
        %v7684 = vpack.c.bf16 %v7648, %v7648
        %v7717 = vunpack.c.l.b16 %v7651
        %v7718 = vunpack.c.l.b16 %v7652
        %v7719 = vunpack.c.l.b16 %v7653
        %v7720 = vunpack.c.l.b16 %v7654
        %v7721 = vunpack.c.l.b16 %v7655
        %v7722 = vunpack.c.l.b16 %v7656
        %v7723 = vunpack.c.l.b16 %v7657
        %v7724 = vunpack.c.l.b16 %v7658
        %v7725 = vunpack.c.l.b16 %v7659
        %v7726 = vunpack.c.l.b16 %v7660
        %v7727 = vunpack.c.l.b16 %v7661
        %v7728 = vunpack.c.l.b16 %v7662
        %v7729 = vunpack.c.l.b16 %v7663
        %v7730 = vunpack.c.l.b16 %v7664
        %v7731 = vunpack.c.l.b16 %v7665
        %v7732 = vunpack.c.l.b16 %v7666
        %v7733 = vunpack.c.l.b16 %v7667
        %v7734 = vunpack.c.l.b16 %v7668
        %v7735 = vunpack.c.l.b16 %v7669
        %v7736 = vunpack.c.l.b16 %v7670
        %v7737 = vunpack.c.l.b16 %v7671
        %v7738 = vunpack.c.l.b16 %v7672
        %v7739 = vunpack.c.l.b16 %v7673
        %v7740 = vunpack.c.l.b16 %v7674
        %v7741 = vunpack.c.l.b16 %v7675
        %v7742 = vunpack.c.l.b16 %v7676
        %v7743 = vunpack.c.l.b16 %v7677
        %v7744 = vunpack.c.l.b16 %v7678
        %v7745 = vunpack.c.l.b16 %v7679
        %v7746 = vunpack.c.l.b16 %v7680
        %v7747 = vunpack.c.l.b16 %v7681
        %v7748 = vunpack.c.l.b16 %v7682
        %v7749 = vpack.c.b16 %v7718, %v7717
        %v7750 = vpack.c.b16 %v7720, %v7719
        %v7751 = vpack.c.b16 %v7722, %v7721
        %v7752 = vpack.c.b16 %v7724, %v7723
        %v7753 = vpack.c.b16 %v7726, %v7725
        %v7754 = vpack.c.b16 %v7728, %v7727
        %v7755 = vpack.c.b16 %v7730, %v7729
        %v7756 = vpack.c.b16 %v7732, %v7731
        %v7757 = vpack.c.b16 %v7734, %v7733
        %v7758 = vpack.c.b16 %v7736, %v7735
        %v7759 = vpack.c.b16 %v7738, %v7737
        %v7760 = vpack.c.b16 %v7740, %v7739
        %v7761 = vpack.c.b16 %v7742, %v7741
        %v7762 = vpack.c.b16 %v7744, %v7743
        %v7763 = vpack.c.b16 %v7746, %v7745
        %v7764 = vpack.c.b16 %v7748, %v7747
        %7781 = vmatpush.bf16.msra.mxu0 %v7756
        %7782 = vmatpush.bf16.msra.mxu0 %v7755
        %7783 = vmatpush.bf16.msra.mxu0 %v7754
        %7784 = vmatpush.bf16.msra.mxu0 %v7753
        %7785 = vmatpush.bf16.msra.mxu0 %v7752
        %7786 = vmatpush.bf16.msra.mxu0 %v7751
        %7787 = vmatpush.bf16.msra.mxu0 %v7750
        %7788 = vmatpush.bf16.msra.mxu0 %v7749
        %7789 = vmatmul.bf16.gmra.mxu0 %v7683
        %v7790 = vpop.f32.mrf.mxu0
        %v7791 = vadd.f32 0.0, %v7790
        %v7792 = vpop.f32.mrf.mxu0
        %7793 = vdwg.mxu0
        %7794 = vmatpush.bf16.msra.mxu0 %v7764
        %7795 = vmatpush.bf16.msra.mxu0 %v7763
        %7796 = vmatpush.bf16.msra.mxu0 %v7762
        %7797 = vmatpush.bf16.msra.mxu0 %v7761
        %7798 = vmatpush.bf16.msra.mxu0 %v7760
        %7799 = vmatpush.bf16.msra.mxu0 %v7759
        %7800 = vmatpush.bf16.msra.mxu0 %v7758
        %7801 = vmatpush.bf16.msra.mxu0 %v7757
        %7802 = vmatmul.bf16.gmra.mxu0 %v7684
        %v7803 = vpop.f32.mrf.mxu0
        %v7804 = vadd.f32 %v7791, %v7803
        %v7805 = vpop.f32.mrf.mxu0
        %7806 = vdwg.mxu0
        %v7839 = vunpack.c.l.b16 %v7587
        %v7840 = vunpack.c.l.b16 %v7588
        %v7841 = vunpack.c.l.b16 %v7589
        %v7842 = vunpack.c.l.b16 %v7590
        %v7843 = vunpack.c.l.b16 %v7591
        %v7844 = vunpack.c.l.b16 %v7592
        %v7845 = vunpack.c.l.b16 %v7593
        %v7846 = vunpack.c.l.b16 %v7594
        %v7847 = vunpack.c.l.b16 %v7595
        %v7848 = vunpack.c.l.b16 %v7596
        %v7849 = vunpack.c.l.b16 %v7597
        %v7850 = vunpack.c.l.b16 %v7598
        %v7851 = vunpack.c.l.b16 %v7599
        %v7852 = vunpack.c.l.b16 %v7600
        %v7853 = vunpack.c.l.b16 %v7601
        %v7854 = vunpack.c.l.b16 %v7602
        %v7855 = vunpack.c.l.b16 %v7603
        %v7856 = vunpack.c.l.b16 %v7604
        %v7857 = vunpack.c.l.b16 %v7605
        %v7858 = vunpack.c.l.b16 %v7606
        %v7859 = vunpack.c.l.b16 %v7607
        %v7860 = vunpack.c.l.b16 %v7608
        %v7861 = vunpack.c.l.b16 %v7609
        %v7862 = vunpack.c.l.b16 %v7610
        %v7863 = vunpack.c.l.b16 %v7611
        %v7864 = vunpack.c.l.b16 %v7612
        %v7865 = vunpack.c.l.b16 %v7613
        %v7866 = vunpack.c.l.b16 %v7614
        %v7867 = vunpack.c.l.b16 %v7615
        %v7868 = vunpack.c.l.b16 %v7616
        %v7869 = vunpack.c.l.b16 %v7617
        %v7870 = vunpack.c.l.b16 %v7618
        %v7871 = vpack.c.b16 %v7840, %v7839
        %v7872 = vpack.c.b16 %v7842, %v7841
        %v7873 = vpack.c.b16 %v7844, %v7843
        %v7874 = vpack.c.b16 %v7846, %v7845
        %v7875 = vpack.c.b16 %v7848, %v7847
        %v7876 = vpack.c.b16 %v7850, %v7849
        %v7877 = vpack.c.b16 %v7852, %v7851
        %v7878 = vpack.c.b16 %v7854, %v7853
        %v7879 = vpack.c.b16 %v7856, %v7855
        %v7880 = vpack.c.b16 %v7858, %v7857
        %v7881 = vpack.c.b16 %v7860, %v7859
        %v7882 = vpack.c.b16 %v7862, %v7861
        %v7883 = vpack.c.b16 %v7864, %v7863
        %v7884 = vpack.c.b16 %v7866, %v7865
        %v7885 = vpack.c.b16 %v7868, %v7867
        %v7886 = vpack.c.b16 %v7870, %v7869
        %7903 = vmatpush.bf16.msra.mxu0 %v7878
        %7904 = vmatpush.bf16.msra.mxu0 %v7877
        %7905 = vmatpush.bf16.msra.mxu0 %v7876
        %7906 = vmatpush.bf16.msra.mxu0 %v7875
        %7907 = vmatpush.bf16.msra.mxu0 %v7874
        %7908 = vmatpush.bf16.msra.mxu0 %v7873
        %7909 = vmatpush.bf16.msra.mxu0 %v7872
        %7910 = vmatpush.bf16.msra.mxu0 %v7871
        %7911 = vmatmul.bf16.gmra.mxu0 %v7619
        %v7912 = vpop.f32.mrf.mxu0
        %v7913 = vadd.f32 %v7804, %v7912
        %v7914 = vpop.f32.mrf.mxu0
        %7915 = vdwg.mxu0
        %7916 = vmatpush.bf16.msra.mxu0 %v7886
        %7917 = vmatpush.bf16.msra.mxu0 %v7885
        %7918 = vmatpush.bf16.msra.mxu0 %v7884
        %7919 = vmatpush.bf16.msra.mxu0 %v7883
        %7920 = vmatpush.bf16.msra.mxu0 %v7882
        %7921 = vmatpush.bf16.msra.mxu0 %v7881
        %7922 = vmatpush.bf16.msra.mxu0 %v7880
        %7923 = vmatpush.bf16.msra.mxu0 %v7879
        %7924 = vmatmul.bf16.gmra.mxu0 %v7620
        %v7925 = vpop.f32.mrf.mxu0
        %v7926 = vadd.f32 %v7913, %v7925
        %v7927 = vpop.f32.mrf.mxu0
        %7928 = vdwg.mxu0
        %v7929 = vld [vmem:[%s1827] sm:$0xf]
        %v7931 = vsel %vm1453, %v7929, 0
        %7933 = vmatpush.bf16.msra.mxu0 0
        %7934 = vmatpush.bf16.msra.mxu0 0
        %7935 = vmatpush.bf16.msra.mxu0 0
        %7936 = vmatpush.bf16.msra.mxu0 0
        %7937 = vmatpush.bf16.msra.mxu0 0
        %7938 = vmatpush.bf16.msra.mxu0 0
        %7939 = vmatpush.bf16.msra.mxu0 0
        %7940 = vmatpush.bf16.msra.mxu0 %v7556
        %7941 = vmatmul.bf16.gmra.mxu0 %v7931
        %v7942 = vpop.f32.mrf.mxu0
        %v7943 = vadd.f32 0.0, %v7942
        %v7944 = vpop.f32.mrf.mxu0
        %7945 = vdwg.mxu0
        %7946 = vmatpush.bf16.msra.mxu0 0
        %7947 = vmatpush.bf16.msra.mxu0 0
        %7948 = vmatpush.bf16.msra.mxu0 0
        %7949 = vmatpush.bf16.msra.mxu0 0
        %7950 = vmatpush.bf16.msra.mxu0 0
        %7951 = vmatpush.bf16.msra.mxu0 0
        %7952 = vmatpush.bf16.msra.mxu0 0
        %7953 = vmatpush.bf16.msra.mxu0 %v7557
        %7954 = vmatmul.bf16.gmra.mxu0 %v7931
        %v7955 = vpop.f32.mrf.mxu0
        %v7956 = vadd.f32 0.0, %v7955
        %v7957 = vpop.f32.mrf.mxu0
        %7958 = vdwg.mxu0
        %v7959 = vld [vmem:[%s1858] sm:$0xf]
        %v7960 = vld [vmem:[%s1858 + $0x4] sm:$0xf]
        %v7961 = vld [vmem:[%s1858 + $0x8] sm:$0xf]
        %v7962 = vld [vmem:[%s1858 + $0xc] sm:$0xf]
        %v7963 = vld [vmem:[%s1858 + $0x10] sm:$0xf]
        %v7964 = vld [vmem:[%s1858 + $0x14] sm:$0xf]
        %v7965 = vld [vmem:[%s1858 + $0x18] sm:$0xf]
        %v7966 = vld [vmem:[%s1858 + $0x1c] sm:$0xf]
        %v7967 = vld [vmem:[%s1858 + $0x20] sm:$0xf]
        %v7968 = vld [vmem:[%s1858 + $0x24] sm:$0xf]
        %v7969 = vld [vmem:[%s1858 + $0x28] sm:$0xf]
        %v7970 = vld [vmem:[%s1858 + $0x2c] sm:$0xf]
        %v7971 = vld [vmem:[%s1858 + $0x30] sm:$0xf]
        %v7972 = vld [vmem:[%s1858 + $0x34] sm:$0xf]
        %v7973 = vld [vmem:[%s1858 + $0x38] sm:$0xf]
        %v7974 = vld [vmem:[%s1858 + $0x3c] sm:$0xf]
        %v7975 = vld [vmem:[%s1858 + $0x40] sm:$0xf]
        %v7976 = vld [vmem:[%s1858 + $0x44] sm:$0xf]
        %v7977 = vld [vmem:[%s1858 + $0x48] sm:$0xf]
        %v7978 = vld [vmem:[%s1858 + $0x4c] sm:$0xf]
        %v7979 = vld [vmem:[%s1858 + $0x50] sm:$0xf]
        %v7980 = vld [vmem:[%s1858 + $0x54] sm:$0xf]
        %v7981 = vld [vmem:[%s1858 + $0x58] sm:$0xf]
        %v7982 = vld [vmem:[%s1858 + $0x5c] sm:$0xf]
        %v7983 = vld [vmem:[%s1858 + $0x60] sm:$0xf]
        %v7984 = vld [vmem:[%s1858 + $0x64] sm:$0xf]
        %v7985 = vld [vmem:[%s1858 + $0x68] sm:$0xf]
        %v7986 = vld [vmem:[%s1858 + $0x6c] sm:$0xf]
        %v7987 = vld [vmem:[%s1858 + $0x70] sm:$0xf]
        %v7988 = vld [vmem:[%s1858 + $0x74] sm:$0xf]
        %v7989 = vld [vmem:[%s1858 + $0x78] sm:$0xf]
        %v7990 = vld [vmem:[%s1858 + $0x7c] sm:$0xf]
        %v7991 = vpack.c.bf16 %v7943, %v7943
        %v7992 = vpack.c.bf16 %v7956, %v7956
        %v8025 = vunpack.c.l.b16 %v7959
        %v8026 = vunpack.c.l.b16 %v7960
        %v8027 = vunpack.c.l.b16 %v7961
        %v8028 = vunpack.c.l.b16 %v7962
        %v8029 = vunpack.c.l.b16 %v7963
        %v8030 = vunpack.c.l.b16 %v7964
        %v8031 = vunpack.c.l.b16 %v7965
        %v8032 = vunpack.c.l.b16 %v7966
        %v8033 = vunpack.c.l.b16 %v7967
        %v8034 = vunpack.c.l.b16 %v7968
        %v8035 = vunpack.c.l.b16 %v7969
        %v8036 = vunpack.c.l.b16 %v7970
        %v8037 = vunpack.c.l.b16 %v7971
        %v8038 = vunpack.c.l.b16 %v7972
        %v8039 = vunpack.c.l.b16 %v7973
        %v8040 = vunpack.c.l.b16 %v7974
        %v8041 = vunpack.c.l.b16 %v7975
        %v8042 = vunpack.c.l.b16 %v7976
        %v8043 = vunpack.c.l.b16 %v7977
        %v8044 = vunpack.c.l.b16 %v7978
        %v8045 = vunpack.c.l.b16 %v7979
        %v8046 = vunpack.c.l.b16 %v7980
        %v8047 = vunpack.c.l.b16 %v7981
        %v8048 = vunpack.c.l.b16 %v7982
        %v8049 = vunpack.c.l.b16 %v7983
        %v8050 = vunpack.c.l.b16 %v7984
        %v8051 = vunpack.c.l.b16 %v7985
        %v8052 = vunpack.c.l.b16 %v7986
        %v8053 = vunpack.c.l.b16 %v7987
        %v8054 = vunpack.c.l.b16 %v7988
        %v8055 = vunpack.c.l.b16 %v7989
        %v8056 = vunpack.c.l.b16 %v7990
        %v8057 = vpack.c.b16 %v8026, %v8025
        %v8058 = vpack.c.b16 %v8028, %v8027
        %v8059 = vpack.c.b16 %v8030, %v8029
        %v8060 = vpack.c.b16 %v8032, %v8031
        %v8061 = vpack.c.b16 %v8034, %v8033
        %v8062 = vpack.c.b16 %v8036, %v8035
        %v8063 = vpack.c.b16 %v8038, %v8037
        %v8064 = vpack.c.b16 %v8040, %v8039
        %v8065 = vpack.c.b16 %v8042, %v8041
        %v8066 = vpack.c.b16 %v8044, %v8043
        %v8067 = vpack.c.b16 %v8046, %v8045
        %v8068 = vpack.c.b16 %v8048, %v8047
        %v8069 = vpack.c.b16 %v8050, %v8049
        %v8070 = vpack.c.b16 %v8052, %v8051
        %v8071 = vpack.c.b16 %v8054, %v8053
        %v8072 = vpack.c.b16 %v8056, %v8055
        %8089 = vmatpush.bf16.msra.mxu0 %v8064
        %8090 = vmatpush.bf16.msra.mxu0 %v8063
        %8091 = vmatpush.bf16.msra.mxu0 %v8062
        %8092 = vmatpush.bf16.msra.mxu0 %v8061
        %8093 = vmatpush.bf16.msra.mxu0 %v8060
        %8094 = vmatpush.bf16.msra.mxu0 %v8059
        %8095 = vmatpush.bf16.msra.mxu0 %v8058
        %8096 = vmatpush.bf16.msra.mxu0 %v8057
        %8097 = vmatmul.bf16.gmra.mxu0 %v7991
        %v8098 = vpop.f32.mrf.mxu0
        %v8099 = vadd.f32 0.0, %v8098
        %v8100 = vpop.f32.mrf.mxu0
        %8101 = vdwg.mxu0
        %8102 = vmatpush.bf16.msra.mxu0 %v8072
        %8103 = vmatpush.bf16.msra.mxu0 %v8071
        %8104 = vmatpush.bf16.msra.mxu0 %v8070
        %8105 = vmatpush.bf16.msra.mxu0 %v8069
        %8106 = vmatpush.bf16.msra.mxu0 %v8068
        %8107 = vmatpush.bf16.msra.mxu0 %v8067
        %8108 = vmatpush.bf16.msra.mxu0 %v8066
        %8109 = vmatpush.bf16.msra.mxu0 %v8065
        %8110 = vmatmul.bf16.gmra.mxu0 %v7992
        %v8111 = vpop.f32.mrf.mxu0
        %v8112 = vadd.f32 %v8099, %v8111
        %v8113 = vpop.f32.mrf.mxu0
        %8114 = vdwg.mxu0
        %v8115 = vadd.f32 %v7926, %v8112
        %8117 = vrot.lane.b32.xlu0 %v8115, 64
        %v8118 = vpop.permute.xlu0 %8117
        %v8120 = vmax.f32 %v8115, %v8118
        %v8121 = vld [vmem:[%s2021] sm:$0xf]
        %v8123 = vsel %vm1453, %v8121, 0
        %8125 = vmatpush.bf16.msra.mxu0 0
        %8126 = vmatpush.bf16.msra.mxu0 0
        %8127 = vmatpush.bf16.msra.mxu0 0
        %8128 = vmatpush.bf16.msra.mxu0 0
        %8129 = vmatpush.bf16.msra.mxu0 0
        %8130 = vmatpush.bf16.msra.mxu0 0
        %8131 = vmatpush.bf16.msra.mxu0 0
        %8132 = vmatpush.bf16.msra.mxu0 %v7556
        %8133 = vmatmul.bf16.gmra.mxu0 %v8123
        %v8134 = vpop.f32.mrf.mxu0
        %v8135 = vadd.f32 0.0, %v8134
        %v8136 = vpop.f32.mrf.mxu0
        %8137 = vdwg.mxu0
        %8138 = vmatpush.bf16.msra.mxu0 0
        %8139 = vmatpush.bf16.msra.mxu0 0
        %8140 = vmatpush.bf16.msra.mxu0 0
        %8141 = vmatpush.bf16.msra.mxu0 0
        %8142 = vmatpush.bf16.msra.mxu0 0
        %8143 = vmatpush.bf16.msra.mxu0 0
        %8144 = vmatpush.bf16.msra.mxu0 0
        %8145 = vmatpush.bf16.msra.mxu0 %v7557
        %8146 = vmatmul.bf16.gmra.mxu0 %v8123
        %v8147 = vpop.f32.mrf.mxu0
        %v8148 = vadd.f32 0.0, %v8147
        %v8149 = vpop.f32.mrf.mxu0
        %8150 = vdwg.mxu0
        %v8151 = vpack.c.bf16 %v8135, %v8135
        %v8152 = vpack.c.bf16 %v8148, %v8148
        %v8153 = vld [vmem:[%s2054] sm:$0xf]
        %v8155 = vsel %vm1453, %v8153, 0
        %8157 = vmatpush.bf16.msra.mxu0 0
        %8158 = vmatpush.bf16.msra.mxu0 0
        %8159 = vmatpush.bf16.msra.mxu0 0
        %8160 = vmatpush.bf16.msra.mxu0 0
        %8161 = vmatpush.bf16.msra.mxu0 0
        %8162 = vmatpush.bf16.msra.mxu0 0
        %8163 = vmatpush.bf16.msra.mxu0 0
        %8164 = vmatpush.bf16.msra.mxu0 %v7556
        %8165 = vmatmul.bf16.gmra.mxu0 %v8155
        %v8166 = vpop.f32.mrf.mxu0
        %v8167 = vadd.f32 0.0, %v8166
        %v8168 = vpop.f32.mrf.mxu0
        %8169 = vdwg.mxu0
        %8170 = vmatpush.bf16.msra.mxu0 0
        %8171 = vmatpush.bf16.msra.mxu0 0
        %8172 = vmatpush.bf16.msra.mxu0 0
        %8173 = vmatpush.bf16.msra.mxu0 0
        %8174 = vmatpush.bf16.msra.mxu0 0
        %8175 = vmatpush.bf16.msra.mxu0 0
        %8176 = vmatpush.bf16.msra.mxu0 0
        %8177 = vmatpush.bf16.msra.mxu0 %v7557
        %8178 = vmatmul.bf16.gmra.mxu0 %v8155
        %v8179 = vpop.f32.mrf.mxu0
        %v8180 = vadd.f32 0.0, %v8179
        %v8181 = vpop.f32.mrf.mxu0
        %8182 = vdwg.mxu0
        %v8183 = vpack.c.bf16 %v8167, %v8167
        %v8184 = vpack.c.bf16 %v8180, %v8180
        %8185 = vmatpush.bf16.msra.mxu0 %v7756
        %8186 = vmatpush.bf16.msra.mxu0 %v7755
        %8187 = vmatpush.bf16.msra.mxu0 %v7754
        %8188 = vmatpush.bf16.msra.mxu0 %v7753
        %8189 = vmatpush.bf16.msra.mxu0 %v7752
        %8190 = vmatpush.bf16.msra.mxu0 %v7751
        %8191 = vmatpush.bf16.msra.mxu0 %v7750
        %8192 = vmatpush.bf16.msra.mxu0 %v7749
        %8193 = vmatmul.bf16.gmra.mxu0 %v8183
        %v8194 = vpop.f32.mrf.mxu0
        %v8195 = vadd.f32 0.0, %v8194
        %v8196 = vpop.f32.mrf.mxu0
        %8197 = vdwg.mxu0
        %8198 = vmatpush.bf16.msra.mxu0 %v7764
        %8199 = vmatpush.bf16.msra.mxu0 %v7763
        %8200 = vmatpush.bf16.msra.mxu0 %v7762
        %8201 = vmatpush.bf16.msra.mxu0 %v7761
        %8202 = vmatpush.bf16.msra.mxu0 %v7760
        %8203 = vmatpush.bf16.msra.mxu0 %v7759
        %8204 = vmatpush.bf16.msra.mxu0 %v7758
        %8205 = vmatpush.bf16.msra.mxu0 %v7757
        %8206 = vmatmul.bf16.gmra.mxu0 %v8184
        %v8207 = vpop.f32.mrf.mxu0
        %v8208 = vadd.f32 %v8195, %v8207
        %v8209 = vpop.f32.mrf.mxu0
        %8210 = vdwg.mxu0
        %8211 = vmatpush.bf16.msra.mxu0 %v7878
        %8212 = vmatpush.bf16.msra.mxu0 %v7877
        %8213 = vmatpush.bf16.msra.mxu0 %v7876
        %8214 = vmatpush.bf16.msra.mxu0 %v7875
        %8215 = vmatpush.bf16.msra.mxu0 %v7874
        %8216 = vmatpush.bf16.msra.mxu0 %v7873
        %8217 = vmatpush.bf16.msra.mxu0 %v7872
        %8218 = vmatpush.bf16.msra.mxu0 %v7871
        %8219 = vmatmul.bf16.gmra.mxu0 %v8151
        %v8220 = vpop.f32.mrf.mxu0
        %v8221 = vadd.f32 %v8208, %v8220
        %v8222 = vpop.f32.mrf.mxu0
        %8223 = vdwg.mxu0
        %8224 = vmatpush.bf16.msra.mxu0 %v7886
        %8225 = vmatpush.bf16.msra.mxu0 %v7885
        %8226 = vmatpush.bf16.msra.mxu0 %v7884
        %8227 = vmatpush.bf16.msra.mxu0 %v7883
        %8228 = vmatpush.bf16.msra.mxu0 %v7882
        %8229 = vmatpush.bf16.msra.mxu0 %v7881
        %8230 = vmatpush.bf16.msra.mxu0 %v7880
        %8231 = vmatpush.bf16.msra.mxu0 %v7879
        %8232 = vmatmul.bf16.gmra.mxu0 %v8152
        %v8233 = vpop.f32.mrf.mxu0
        %v8234 = vadd.f32 %v8221, %v8233
        %v8235 = vpop.f32.mrf.mxu0
        %8236 = vdwg.mxu0
        %v8237 = vld [vmem:[%s2139] sm:$0xf]
        %v8239 = vsel %vm1453, %v8237, 0
        %8241 = vmatpush.bf16.msra.mxu0 0
        %8242 = vmatpush.bf16.msra.mxu0 0
        %8243 = vmatpush.bf16.msra.mxu0 0
        %8244 = vmatpush.bf16.msra.mxu0 0
        %8245 = vmatpush.bf16.msra.mxu0 0
        %8246 = vmatpush.bf16.msra.mxu0 0
        %8247 = vmatpush.bf16.msra.mxu0 0
        %8248 = vmatpush.bf16.msra.mxu0 %v7556
        %8249 = vmatmul.bf16.gmra.mxu0 %v8239
        %v8250 = vpop.f32.mrf.mxu0
        %v8251 = vadd.f32 0.0, %v8250
        %v8252 = vpop.f32.mrf.mxu0
        %8253 = vdwg.mxu0
        %8254 = vmatpush.bf16.msra.mxu0 0
        %8255 = vmatpush.bf16.msra.mxu0 0
        %8256 = vmatpush.bf16.msra.mxu0 0
        %8257 = vmatpush.bf16.msra.mxu0 0
        %8258 = vmatpush.bf16.msra.mxu0 0
        %8259 = vmatpush.bf16.msra.mxu0 0
        %8260 = vmatpush.bf16.msra.mxu0 0
        %8261 = vmatpush.bf16.msra.mxu0 %v7557
        %8262 = vmatmul.bf16.gmra.mxu0 %v8239
        %v8263 = vpop.f32.mrf.mxu0
        %v8264 = vadd.f32 0.0, %v8263
        %v8265 = vpop.f32.mrf.mxu0
        %8266 = vdwg.mxu0
        %v8267 = vpack.c.bf16 %v8251, %v8251
        %v8268 = vpack.c.bf16 %v8264, %v8264
        %8269 = vmatpush.bf16.msra.mxu0 %v8064
        %8270 = vmatpush.bf16.msra.mxu0 %v8063
        %8271 = vmatpush.bf16.msra.mxu0 %v8062
        %8272 = vmatpush.bf16.msra.mxu0 %v8061
        %8273 = vmatpush.bf16.msra.mxu0 %v8060
        %8274 = vmatpush.bf16.msra.mxu0 %v8059
        %8275 = vmatpush.bf16.msra.mxu0 %v8058
        %8276 = vmatpush.bf16.msra.mxu0 %v8057
        %8277 = vmatmul.bf16.gmra.mxu0 %v8267
        %v8278 = vpop.f32.mrf.mxu0
        %v8279 = vadd.f32 0.0, %v8278
        %v8280 = vpop.f32.mrf.mxu0
        %8281 = vdwg.mxu0
        %8282 = vmatpush.bf16.msra.mxu0 %v8072
        %8283 = vmatpush.bf16.msra.mxu0 %v8071
        %8284 = vmatpush.bf16.msra.mxu0 %v8070
        %8285 = vmatpush.bf16.msra.mxu0 %v8069
        %8286 = vmatpush.bf16.msra.mxu0 %v8068
        %8287 = vmatpush.bf16.msra.mxu0 %v8067
        %8288 = vmatpush.bf16.msra.mxu0 %v8066
        %8289 = vmatpush.bf16.msra.mxu0 %v8065
        %8290 = vmatmul.bf16.gmra.mxu0 %v8268
        %v8291 = vpop.f32.mrf.mxu0
        %v8292 = vadd.f32 %v8279, %v8291
        %v8293 = vpop.f32.mrf.mxu0
        %8294 = vdwg.mxu0
        %v8295 = vadd.f32 %v8234, %v8292
        %8297 = vrot.lane.b32.xlu0 %v8295, 64
        %v8298 = vpop.permute.xlu0 %8297
        %v8300 = vmax.f32 %v8295, %v8298
        %v8301 = vmax.f32 %v8120, %v8300
        %v8303 = vperm.slane %v7554, 0
        %v8305 = vadd.f32 %v8301, %v8303
        %v8306 = vtanh.pop %v8305
        %v8307 = vld [vmem:[%s7] sm:$0xff]
        %v8308 = vld [vmem:[%s7 + $0x8] sm:$0xff]
        %v8309 = vld [vmem:[%s7 + $0x10] sm:$0xff]
        %v8310 = vld [vmem:[%s7 + $0x18] sm:$0xff]
        %v8311 = vld [vmem:[%s7 + $0x20] sm:$0xff]
        %v8312 = vld [vmem:[%s7 + $0x28] sm:$0xff]
        %v8313 = vld [vmem:[%s7 + $0x30] sm:$0xff]
        %v8314 = vld [vmem:[%s7 + $0x38] sm:$0xff]
        %v8315 = vpack.c.bf16 %v8306, %v8306
        %v8324 = vunpack.c.l.b16 %v8307
        %v8325 = vunpack.c.h.b16 %v8307
        %v8326 = vunpack.c.l.b16 %v8308
        %v8327 = vunpack.c.h.b16 %v8308
        %v8328 = vunpack.c.l.b16 %v8309
        %v8329 = vunpack.c.h.b16 %v8309
        %v8330 = vunpack.c.l.b16 %v8310
        %v8331 = vunpack.c.h.b16 %v8310
        %v8332 = vunpack.c.l.b16 %v8311
        %v8333 = vunpack.c.h.b16 %v8311
        %v8334 = vunpack.c.l.b16 %v8312
        %v8335 = vunpack.c.h.b16 %v8312
        %v8336 = vunpack.c.l.b16 %v8313
        %v8337 = vunpack.c.h.b16 %v8313
        %v8338 = vunpack.c.l.b16 %v8314
        %v8339 = vunpack.c.h.b16 %v8314
        %v8340 = vpack.c.b16 %v8326, %v8324
        %v8341 = vpack.c.b16 %v8327, %v8325
        %v8342 = vpack.c.b16 %v8330, %v8328
        %v8343 = vpack.c.b16 %v8331, %v8329
        %v8344 = vpack.c.b16 %v8334, %v8332
        %v8345 = vpack.c.b16 %v8335, %v8333
        %v8346 = vpack.c.b16 %v8338, %v8336
        %v8347 = vpack.c.b16 %v8339, %v8337
        %v8357 = vsel %vm2259, %v8315, 0
        %8359 = vmatpush.bf16.msra.mxu0 0
        %8360 = vmatpush.bf16.msra.mxu0 0
        %8361 = vmatpush.bf16.msra.mxu0 0
        %8362 = vmatpush.bf16.msra.mxu0 0
        %8363 = vmatpush.bf16.msra.mxu0 %v8346
        %8364 = vmatpush.bf16.msra.mxu0 %v8344
        %8365 = vmatpush.bf16.msra.mxu0 %v8342
        %8366 = vmatpush.bf16.msra.mxu0 %v8340
        %8367 = vmatmul.bf16.gmra.mxu0 %v8357
        %v8368 = vpop.f32.mrf.mxu0
        %v8369 = vadd.f32 0.0, %v8368
        %v8370 = vpop.f32.mrf.mxu0
        %8371 = vdwg.mxu0
        %8372 = vmatpush.bf16.msra.mxu0 0
        %8373 = vmatpush.bf16.msra.mxu0 0
        %8374 = vmatpush.bf16.msra.mxu0 0
        %8375 = vmatpush.bf16.msra.mxu0 0
        %8376 = vmatpush.bf16.msra.mxu0 %v8347
        %8377 = vmatpush.bf16.msra.mxu0 %v8345
        %8378 = vmatpush.bf16.msra.mxu0 %v8343
        %8379 = vmatpush.bf16.msra.mxu0 %v8341
        %8380 = vmatmul.bf16.gmra.mxu0 %v8357
        %v8381 = vpop.f32.mrf.mxu0
        %v8382 = vadd.f32 0.0, %v8381
        %v8383 = vpop.f32.mrf.mxu0
        %8384 = vdwg.mxu0
        %v8385 = vld [vmem:[%s8] sm:$0xff]
        %v8386 = vld [vmem:[%s8 + $0x8] sm:$0xff]
        %v8387 = vmul.f32 %v8369, %v8385
        %v8388 = vmul.f32 %v8382, %v8386
        %v8389 = vld [vmem:[%s9] sm:$0xf]
        %v8390 = vld [vmem:[%s9 + $0x4] sm:$0xf]
        %v8391 = vld [vmem:[%s9 + $0x8] sm:$0xf]
        %v8392 = vld [vmem:[%s9 + $0xc] sm:$0xf]
        %v8393 = vld [vmem:[%s9 + $0x10] sm:$0xf]
        %v8394 = vld [vmem:[%s9 + $0x14] sm:$0xf]
        %v8395 = vld [vmem:[%s9 + $0x18] sm:$0xf]
        %v8396 = vld [vmem:[%s9 + $0x1c] sm:$0xf]
        %v8397 = vld [vmem:[%s9 + $0x20] sm:$0xf]
        %v8398 = vld [vmem:[%s9 + $0x24] sm:$0xf]
        %v8399 = vld [vmem:[%s9 + $0x28] sm:$0xf]
        %v8400 = vld [vmem:[%s9 + $0x2c] sm:$0xf]
        %v8401 = vld [vmem:[%s9 + $0x30] sm:$0xf]
        %v8402 = vld [vmem:[%s9 + $0x34] sm:$0xf]
        %v8403 = vld [vmem:[%s9 + $0x38] sm:$0xf]
        %v8404 = vld [vmem:[%s9 + $0x3c] sm:$0xf]
        %v8405 = vld [vmem:[%s9 + $0x40] sm:$0xf]
        %v8406 = vld [vmem:[%s9 + $0x44] sm:$0xf]
        %v8407 = vld [vmem:[%s9 + $0x48] sm:$0xf]
        %v8408 = vld [vmem:[%s9 + $0x4c] sm:$0xf]
        %v8409 = vld [vmem:[%s9 + $0x50] sm:$0xf]
        %v8410 = vld [vmem:[%s9 + $0x54] sm:$0xf]
        %v8411 = vld [vmem:[%s9 + $0x58] sm:$0xf]
        %v8412 = vld [vmem:[%s9 + $0x5c] sm:$0xf]
        %v8413 = vld [vmem:[%s9 + $0x60] sm:$0xf]
        %v8414 = vld [vmem:[%s9 + $0x64] sm:$0xf]
        %v8415 = vld [vmem:[%s9 + $0x68] sm:$0xf]
        %v8416 = vld [vmem:[%s9 + $0x6c] sm:$0xf]
        %v8417 = vld [vmem:[%s9 + $0x70] sm:$0xf]
        %v8418 = vld [vmem:[%s9 + $0x74] sm:$0xf]
        %v8419 = vld [vmem:[%s9 + $0x78] sm:$0xf]
        %v8420 = vld [vmem:[%s9 + $0x7c] sm:$0xf]
        %v8421 = vpack.c.bf16 %v8387, %v8387
        %v8422 = vpack.c.bf16 %v8388, %v8388
        %v8455 = vunpack.c.l.b16 %v8389
        %v8456 = vunpack.c.l.b16 %v8390
        %v8457 = vunpack.c.l.b16 %v8391
        %v8458 = vunpack.c.l.b16 %v8392
        %v8459 = vunpack.c.l.b16 %v8393
        %v8460 = vunpack.c.l.b16 %v8394
        %v8461 = vunpack.c.l.b16 %v8395
        %v8462 = vunpack.c.l.b16 %v8396
        %v8463 = vunpack.c.l.b16 %v8397
        %v8464 = vunpack.c.l.b16 %v8398
        %v8465 = vunpack.c.l.b16 %v8399
        %v8466 = vunpack.c.l.b16 %v8400
        %v8467 = vunpack.c.l.b16 %v8401
        %v8468 = vunpack.c.l.b16 %v8402
        %v8469 = vunpack.c.l.b16 %v8403
        %v8470 = vunpack.c.l.b16 %v8404
        %v8471 = vunpack.c.l.b16 %v8405
        %v8472 = vunpack.c.l.b16 %v8406
        %v8473 = vunpack.c.l.b16 %v8407
        %v8474 = vunpack.c.l.b16 %v8408
        %v8475 = vunpack.c.l.b16 %v8409
        %v8476 = vunpack.c.l.b16 %v8410
        %v8477 = vunpack.c.l.b16 %v8411
        %v8478 = vunpack.c.l.b16 %v8412
        %v8479 = vunpack.c.l.b16 %v8413
        %v8480 = vunpack.c.l.b16 %v8414
        %v8481 = vunpack.c.l.b16 %v8415
        %v8482 = vunpack.c.l.b16 %v8416
        %v8483 = vunpack.c.l.b16 %v8417
        %v8484 = vunpack.c.l.b16 %v8418
        %v8485 = vunpack.c.l.b16 %v8419
        %v8486 = vunpack.c.l.b16 %v8420
        %v8487 = vpack.c.b16 %v8456, %v8455
        %v8488 = vpack.c.b16 %v8458, %v8457
        %v8489 = vpack.c.b16 %v8460, %v8459
        %v8490 = vpack.c.b16 %v8462, %v8461
        %v8491 = vpack.c.b16 %v8464, %v8463
        %v8492 = vpack.c.b16 %v8466, %v8465
        %v8493 = vpack.c.b16 %v8468, %v8467
        %v8494 = vpack.c.b16 %v8470, %v8469
        %v8495 = vpack.c.b16 %v8472, %v8471
        %v8496 = vpack.c.b16 %v8474, %v8473
        %v8497 = vpack.c.b16 %v8476, %v8475
        %v8498 = vpack.c.b16 %v8478, %v8477
        %v8499 = vpack.c.b16 %v8480, %v8479
        %v8500 = vpack.c.b16 %v8482, %v8481
        %v8501 = vpack.c.b16 %v8484, %v8483
        %v8502 = vpack.c.b16 %v8486, %v8485
        %8519 = vmatpush.bf16.msra.mxu0 %v8494
        %8520 = vmatpush.bf16.msra.mxu0 %v8493
        %8521 = vmatpush.bf16.msra.mxu0 %v8492
        %8522 = vmatpush.bf16.msra.mxu0 %v8491
        %8523 = vmatpush.bf16.msra.mxu0 %v8490
        %8524 = vmatpush.bf16.msra.mxu0 %v8489
        %8525 = vmatpush.bf16.msra.mxu0 %v8488
        %8526 = vmatpush.bf16.msra.mxu0 %v8487
        %8527 = vmatmul.bf16.gmra.mxu0 %v8421
        %v8528 = vpop.f32.mrf.mxu0
        %v8529 = vadd.f32 0.0, %v8528
        %v8530 = vpop.f32.mrf.mxu0
        %8531 = vdwg.mxu0
        %8532 = vmatpush.bf16.msra.mxu0 %v8502
        %8533 = vmatpush.bf16.msra.mxu0 %v8501
        %8534 = vmatpush.bf16.msra.mxu0 %v8500
        %8535 = vmatpush.bf16.msra.mxu0 %v8499
        %8536 = vmatpush.bf16.msra.mxu0 %v8498
        %8537 = vmatpush.bf16.msra.mxu0 %v8497
        %8538 = vmatpush.bf16.msra.mxu0 %v8496
        %8539 = vmatpush.bf16.msra.mxu0 %v8495
        %8540 = vmatmul.bf16.gmra.mxu0 %v8422
        %v8541 = vpop.f32.mrf.mxu0
        %v8542 = vadd.f32 %v8529, %v8541
        %v8543 = vpop.f32.mrf.mxu0
        %8544 = vdwg.mxu0
        %v8545 = vsel %vm470, %v8542, 0.0
        %v8546 = vrot.slane %v8545, 4
        %v8547 = vadd.f32 %v8545, %v8546
        %v8548 = vrot.slane %v8547, 2
        %v8549 = vadd.f32 %v8547, %v8548
        %v8550 = vrot.slane %v8549, 1
        %v8551 = vadd.f32 %v8549, %v8550
        %v8552 = vld [vmem:[%s10] sm:$0x1]
        %v8553 = vadd.f32 %v8551, %v8552
        %v8554 = vtanh.pop %v8553
        %v8555 = vld [vmem:[%s11] sm:$0xf]
        %v8556 = vld [vmem:[%s11 + $0x4] sm:$0xf]
        %v8557 = vld [vmem:[%s11 + $0x8] sm:$0xf]
        %v8558 = vld [vmem:[%s11 + $0xc] sm:$0xf]
        %v8559 = vpack.c.bf16 %v8554, %v8554
        %v8560 = vld [vmem:[%s12] sm:$0x1]
        %v8565 = vunpack.c.l.b16 %v8555
        %v8566 = vunpack.c.l.b16 %v8556
        %v8567 = vunpack.c.l.b16 %v8557
        %v8568 = vunpack.c.l.b16 %v8558
        %v8569 = vpack.c.b16 %v8566, %v8565
        %v8570 = vpack.c.b16 %v8568, %v8567
        %v8574 = vsel %vm470, %v8559, 0
        %8576 = vmatpush.bf16.msra.mxu0 0
        %8577 = vmatpush.bf16.msra.mxu0 0
        %8578 = vmatpush.bf16.msra.mxu0 0
        %8579 = vmatpush.bf16.msra.mxu0 0
        %8580 = vmatpush.bf16.msra.mxu0 0
        %8581 = vmatpush.bf16.msra.mxu0 0
        %8582 = vmatpush.bf16.msra.mxu0 %v8570
        %8583 = vmatpush.bf16.msra.mxu0 %v8569
        %8584 = vmatmul.bf16.gmra.mxu0 %v8574
        %v8585 = vpop.f32.mrf.mxu0
        %v8586 = vadd.f32 %v8560, %v8585
        %v8587 = vpop.f32.mrf.mxu0
        %8588 = vdwg.mxu0
        %s8589 = scalar_lea.vmem %s436, 3 [#allocation2]
        %8590 = vst.msk [vmem:[%s8589] sm:$0x1] %vm2493, %v8586
        %s8591 = sand.u32 %s313, 1
        %s8592 = scalar_lea.sflag [#allocation3], %s8591
        %s8593 = sand.u32 %s313, 1
        %s8594 = smul.addr %s8593, 4
        %s8595 = scalar_lea.vmem [#allocation2], %s8594
        // Predicated region
        $region73: #{net_forward.1} parent=71 // pred_check
          %p8596 = pneg %p323
        $region74: #{net_forward.1} parent=71 // pred_check_branch
          %8598 = sbr.rel (%p8596) target = $region76
        $region75: #{net_forward.1} parent=71 // pred_region
          %s8599 = smul.u32 4, %s27
          %8601 = vsyncadd %s8592, 0
          %s8602 = scalar_lea.hbm %s13, %s8599
          %s8603 = sshll.u32 %s8595, 4
          %s8604 = int_to_ptr.vmem [resolvable:$true] %s8603
          %s8605 = sshll.u32 %s8602, 4
          %s8606 = int_to_ptr.hbm [resolvable:$true] %s8605
          %8611 = dma.vmem_to_hbm [thread:$0]  %s8604, 64, %s8606, %s8592, 16, 16, 1
        $region76: #{net_forward.1} parent=71 // pred_fallthru
          _
      $region72: #{net_forward.1} parent=5 // pred_fallthru
        _
      %p8612 = scmp.le.s32.totalorder 2, %s22
      // Predicated region
      $region77: #{net_forward.1} parent=5 // pred_check
        %p8613 = pneg %p8612
      $region78: #{net_forward.1} parent=5 // pred_check_branch
        %8615 = sbr.rel (%p8613) target = $region80
      $region79: #{net_forward.1} parent=5 // pred_region
        %s8616 = ssub.s32 %s22, 2
        // Predicated region
        $region81: #{net_forward.1} parent=79 // pred_check
          %p8617 = pneg %p329
        $region82: #{net_forward.1} parent=79 // pred_check_branch
          %8619 = sbr.rel (%p8617) target = $region84
        $region83: #{net_forward.1} parent=79 // pred_region
          %s8620 = sand.u32 %s314, 1
          %s8621 = scalar_lea.sflag [#allocation3], %s8620
          %s8622 = sand.u32 %s314, 1
          %s8623 = smul.addr %s8622, 4
          %s8624 = scalar_lea.vmem [#allocation2], %s8623
          %8626 = dma.done %s8621, 64
        $region84: #{net_forward.1} parent=79 // pred_fallthru
          _
      $region80: #{net_forward.1} parent=5 // pred_fallthru
        _
    $region6: #{net_forward.1} parent=1 // loop_footer
      %s26 = sadd.s32 1, %s22
    $region7: #{net_forward.1} parent=1 // loop_footer_branch
      %21 = sbr.rel target = $region3
    $region8: #{net_forward.1} parent=1 // loop_exit
      _
    %8627 = vsyncpa [#allocation3], 1
    %s8628 = scalar_lea.sflag [#allocation3], 1
    %8629 = vsyncpa %s8628, 1

</llo_original>
